<compile_context>
chip_gen: v7x
topology: tpu7x:2x2x1
jax: 0.10.0
libtpu: 0.0.40
codegen_flags: <defaults>
</compile_context>

<pallas_src>
import numpy as np

import jax
import jax.numpy as jnp
from jax.experimental import pallas as pl
from jax.experimental.pallas import tpu as pltpu


# ----------------------------------------------------------------------------
# Static geometry of the three spatial stages (32x32 -> 16x16 -> 8x8 -> 4x4).
# ----------------------------------------------------------------------------
def _round_up(n, m):
    return ((n + m - 1) // m) * m


_H1, _H2, _H3 = 32, 16, 8                       # unpadded spatial sizes
_WP1, _WP2, _WP3 = _H1 + 2, _H2 + 2, _H3 + 2    # padded widths (pad=1)
_NP1 = _round_up(_WP1 * _WP1, 128)              # 1280 lanes
_NP2 = _round_up(_WP2 * _WP2, 128)              # 384 lanes
_NP3 = _round_up(_WP3 * _WP3, 128)              # 128 lanes
_MARGIN = 128                                   # halo margin in the scratch


def _interior_mask(h, np_len):
    """(1, np_len) mask: 1 at interior pixels of the padded h+2 grid, else 0."""
    wp = h + 2
    m = np.zeros((1, np_len), np.float32)
    for y in range(1, h + 1):
        m[0, y * wp + 1: y * wp + 1 + h] = 1.0
    return m


def _pool_selector(h_in, np_in, np_out, pad_out):
    """0/1 matrix: picks the 2x2-pool anchor positions and scatters them into
    the next stage's padded flattened layout (or the raw 4x4 layout)."""
    wp_in = h_in + 2
    h_out = h_in // 2
    wp_out = h_out + 2
    s = np.zeros((np_in, np_out), np.float32)
    for y2 in range(h_out):
        for x2 in range(h_out):
            p_in = (2 * y2 + 1) * wp_in + (2 * x2 + 1)
            p_out = (y2 + 1) * wp_out + (x2 + 1) if pad_out else y2 * h_out + x2
            s[p_in, p_out] = 1.0
    return s


# Masks stay f32 (element-wise multiply); selectors are exact 0/1 so bf16 is
# lossless and halves the operand bytes of the big S1 matmul.
_M1 = jnp.asarray(_interior_mask(_H1, _NP1))
_M3 = jnp.asarray(_interior_mask(_H2, _NP2))
_M5 = jnp.asarray(_interior_mask(_H3, _NP3))
_S1 = jnp.asarray(_pool_selector(_H1, _NP1, _NP2, True), dtype=jnp.bfloat16)   # (1280, 384)
_S2 = jnp.asarray(_pool_selector(_H2, _NP2, _NP3, True), dtype=jnp.bfloat16)   # (384, 128)
_S3 = jnp.asarray(_pool_selector(_H3, _NP3, 16, False), dtype=jnp.bfloat16)    # (128, 16)


# ----------------------------------------------------------------------------
# Fused feature extractor: 6 convs + 3 pools in a single kernel, one image per
# grid step.  "parallel" lets v7x shard the batch across its two TensorCores.
# ----------------------------------------------------------------------------
def _vgg_features_kernel(x_ref,
                         w1, b1, w2, b2, w3, b3, w4, b4, w5, b5, w6, b6,
                         m1, m3, m5, s1, s2, s3,
                         out_ref, pad_ref, slab_ref):
    # pad_ref : (32, MARGIN + NP1 + MARGIN) f32 zero-margined halo staging buffer.
    # slab_ref: (288, NP1) f32 persistent 9-tap slab fed (as bf16) to the MXU.
    # Zero the staging buffer ONCE per image (margins must be 0; everything else
    # that is stale is provably masked away downstream — see header comment).
    pad_ref[...] = jnp.zeros_like(pad_ref)

    def load_padded(x):
        cin, npad = x.shape
        pad_ref[0:cin, _MARGIN:_MARGIN + npad] = x
        return cin, npad

    def shifted(cin, npad, off):
        return pad_ref[0:cin, _MARGIN + off: _MARGIN + off + npad]

    def conv3x3(x, w_ref, b_ref, wp, mask_ref=None):
        cin, npad = load_padded(x)
        t = 0
        for dy in (-1, 0, 1):
            for dx in (-1, 0, 1):
                if dy == 0 and dx == 0:
                    slab_ref[t * cin:(t + 1) * cin, 0:npad] = x      # reuse, no re-read
                else:
                    slab_ref[t * cin:(t + 1) * cin, 0:npad] = shifted(
                        cin, npad, dy * wp + dx)
                t += 1
        y = jnp.dot(w_ref[...],                                      # bf16 weights
                    slab_ref[0:9 * cin, 0:npad].astype(jnp.bfloat16),
                    preferred_element_type=jnp.float32)
        y = jnp.maximum(y + b_ref[...], 0.0)                         # bias + ReLU (f32)
        if mask_ref is not None:                                     # re-zero halo
            y = y * mask_ref[...]
        return y

    def maxpool2x2(y, wp, s_ref):
        cin, npad = load_padded(y)
        m = jnp.maximum(
            jnp.maximum(y, shifted(cin, npad, 1)),                   # (0,0) tap reused
            jnp.maximum(shifted(cin, npad, wp), shifted(cin, npad, wp + 1)))
        # Subsample pool anchors + scatter into next stage's padded layout (bf16 MXU).
        return jnp.dot(m.astype(jnp.bfloat16), s_ref[...],
                       preferred_element_type=jnp.float32)

    a = x_ref[0]                                  # (8, 1280) f32
    a = conv3x3(a, w1, b1, _WP1, m1)              # (8, 1280)
    a = conv3x3(a, w2, b2, _WP1)                  # (16, 1280)
    a = maxpool2x2(a, _WP1, s1)                   # (16, 384)
    a = conv3x3(a, w3, b3, _WP2, m3)              # (32, 384)
    a = conv3x3(a, w4, b4, _WP2)                  # (32, 384)
    a = maxpool2x2(a, _WP2, s2)                   # (32, 128)
    a = conv3x3(a, w5, b5, _WP3, m5)              # (32, 128)
    a = conv3x3(a, w6, b6, _WP3)                  # (32, 128)
    a = maxpool2x2(a, _WP3, s3)                   # (32, 16)  -> (C, H*W)
    out_ref[0] = a


def _pack_conv_w(w_hwio, cin_pad=None):
    """HWIO (3,3,Cin,Cout) -> bf16 matmul form (Cout, 9*Cin), optional Cin pad."""
    kh, kw, cin, cout = w_hwio.shape
    if cin_pad is not None and cin_pad > cin:
        w_hwio = jnp.pad(w_hwio, ((0, 0), (0, 0), (0, cin_pad - cin), (0, 0)))
        cin = cin_pad
    return jnp.transpose(w_hwio.reshape(kh * kw * cin, cout)).astype(jnp.bfloat16)


def vgg_features(x_nchw, conv_params):
    B = x_nchw.shape[0]
    # Pad channels 3->8, spatial by 1, flatten spatial, pad lanes to 1280.
    xp = jnp.pad(x_nchw, ((0, 0), (0, 8 - 3), (1, 1), (1, 1)))   # (B,8,34,34)
    xp = xp.reshape(B, 8, _WP1 * _WP1)
    xp = jnp.pad(xp, ((0, 0), (0, 0), (0, _NP1 - _WP1 * _WP1)))  # (B,8,1280)

    ws_bs = []
    cin_pads = [8, None, None, None, None, None]
    for (w, b), cp in zip(conv_params, cin_pads):
        ws_bs.append(_pack_conv_w(w, cp))                         # bf16 (Cout, 9*Cin)
        ws_bs.append(b.reshape(-1, 1))                            # f32  (Cout, 1)

    consts = ws_bs + [_M1, _M3, _M5, _S1, _S2, _S3]
    const_specs = [pl.BlockSpec(c.shape, lambda i: (0, 0)) for c in consts]

    feats = pl.pallas_call(
        _vgg_features_kernel,
        out_shape=jax.ShapeDtypeStruct((B, 32, 16), jnp.float32),
        grid=(B,),
        in_specs=[pl.BlockSpec((1, 8, _NP1), lambda i: (i, 0, 0))] + const_specs,
        out_specs=pl.BlockSpec((1, 32, 16), lambda i: (i, 0, 0)),
        scratch_shapes=[pltpu.VMEM((32, _NP1 + 2 * _MARGIN), jnp.float32),
                        pltpu.VMEM((9 * 32, _NP1), jnp.float32)],
        compiler_params=pltpu.CompilerParams(
            dimension_semantics=("parallel",),
            vmem_limit_bytes=32 * 1024 * 1024),
    )(xp, *consts)

    # (B, C=32, H*W=16) -> (B, 512) in (C, H, W) order == PyTorch view(B, -1).
    return feats.reshape(B, 32 * 16)


# ----------------------------------------------------------------------------
# Fused MLP head: Linear(512,256) + ReLU + Linear(256,10) in one kernel.
# fc2 is zero-padded to 128 output lanes for a lane-dense store; bf16 dots.
# ----------------------------------------------------------------------------
def _mlp_kernel(x_ref, w1_ref, b1_ref, w2_ref, b2_ref, o_ref):
    h = jnp.dot(x_ref[...].astype(jnp.bfloat16), w1_ref[...],
                preferred_element_type=jnp.float32) + b1_ref[...]
    h = jnp.maximum(h, 0.0)
    o_ref[...] = jnp.dot(h.astype(jnp.bfloat16), w2_ref[...],
                         preferred_element_type=jnp.float32) + b2_ref[...]


def mlp(x, w1, b1, w2, b2):
    B = x.shape[0]
    n_out = w2.shape[1]
    n_pad = _round_up(n_out, 128)
    w2p = jnp.pad(w2, ((0, 0), (0, n_pad - n_out))).astype(jnp.bfloat16)
    b2p = jnp.pad(b2, (0, n_pad - n_out))
    vmem = pl.BlockSpec(memory_space=pltpu.MemorySpace.VMEM)
    out = pl.pallas_call(
        _mlp_kernel,
        out_shape=jax.ShapeDtypeStruct((B, n_pad), jnp.float32),
        in_specs=[vmem] * 5,
        out_specs=vmem,
    )(x, w1.astype(jnp.bfloat16), b1.reshape(1, -1), w2p, b2p.reshape(1, -1))
    return out[:, :n_out]


# ----------------------------------------------------------------------------
# Parameters (deterministic synthetic weights, PyTorch-equivalent structure).
# ----------------------------------------------------------------------------
def init_params(key):
    conv_io = [(3, 8), (8, 16), (16, 32), (32, 32), (32, 32), (32, 32)]
    keys = jax.random.split(key, len(conv_io) + 2)
    convs = []
    for i, (cin, cout) in enumerate(conv_io):
        wk, bk = jax.random.split(keys[i])
        w = jax.random.normal(wk, (3, 3, cin, cout), jnp.float32) / jnp.sqrt(9.0 * cin)
        b = jax.random.normal(bk, (cout,), jnp.float32) * 0.01
        convs.append((w, b))

    k1a, k1b = jax.random.split(keys[-2])
    k2a, k2b = jax.random.split(keys[-1])
    fc1_w = jax.random.normal(k1a, (32 * 4 * 4, 256), jnp.float32) / jnp.sqrt(512.0)
    fc1_b = jax.random.normal(k1b, (256,), jnp.float32) * 0.01
    fc2_w = jax.random.normal(k2a, (256, 10), jnp.float32) / jnp.sqrt(256.0)
    fc2_b = jax.random.normal(k2b, (10,), jnp.float32) * 0.01
    return {"convs": convs,
            "fc1_w": fc1_w, "fc1_b": fc1_b,
            "fc2_w": fc2_w, "fc2_b": fc2_b}


def small_vgg_forward(params, x_nchw):
    feats = vgg_features(x_nchw.astype(jnp.float32), params["convs"])
    return mlp(feats, params["fc1_w"], params["fc1_b"],
               params["fc2_w"], params["fc2_b"])               # (B, 10)


# ----------------------------------------------------------------------------
# Pure-JAX reference (for a numerical self-check of the Pallas path).
# ----------------------------------------------------------------------------
def reference_forward(params, x_nchw):
    x = x_nchw.astype(jnp.float32)

    def conv(x, w_hwio, b):
        y = jax.lax.conv_general_dilated(
            x, w_hwio, window_strides=(1, 1), padding=((1, 1), (1, 1)),
            dimension_numbers=("NCHW", "HWIO", "NCHW"))
        return jnp.maximum(y + b[None, :, None, None], 0.0)

    def pool(x):
        return jax.lax.reduce_window(x, -jnp.inf, jax.lax.max,
                                     (1, 1, 2, 2), (1, 1, 2, 2), "VALID")

    convs = params["convs"]
    x = conv(x, *convs[0]); x = conv(x, *convs[1]); x = pool(x)
    x = conv(x, *convs[2]); x = conv(x, *convs[3]); x = pool(x)
    x = conv(x, *convs[4]); x = conv(x, *convs[5]); x = pool(x)
    x = x.reshape(x.shape[0], -1)
    h = jnp.maximum(x @ params["fc1_w"] + params["fc1_b"], 0.0)
    return h @ params["fc2_w"] + params["fc2_b"]


if __name__ == "__main__":
    key = jax.random.PRNGKey(0)
    pkey, xkey = jax.random.split(key)
    params = init_params(pkey)
    # Input shape implied by the module: FC expects 32*4*4 => 32x32 RGB input.
    x = jax.random.normal(xkey, (2, 3, 32, 32), jnp.float32)

    out = jax.block_until_ready(jax.jit(small_vgg_forward)(params, x))
    assert out.shape == (2, 10) and out.dtype == jnp.float32

    ref = jax.block_until_ready(jax.jit(reference_forward)(params, x))
    err = float(jnp.max(jnp.abs(out - ref)))
    tol = 1e-2 + 5e-2 * float(jnp.max(jnp.abs(ref)))
    assert err < tol, f"Pallas/XLA mismatch: max abs err={err} (tol={tol})"

    print("KERNEL_OK")
</pallas_src>

<mosaic_0001>
module attributes {stable_mosaic.version = 11 : i64} {
  func.func @_vgg_features_kernel(%arg0: i32, %arg1: memref<1x8x1280xf32, #tpu.memory_space<vmem>>, %arg2: memref<8x72xbf16, #tpu.memory_space<vmem>>, %arg3: memref<8x1xf32, #tpu.memory_space<vmem>>, %arg4: memref<16x72xbf16, #tpu.memory_space<vmem>>, %arg5: memref<16x1xf32, #tpu.memory_space<vmem>>, %arg6: memref<32x144xbf16, #tpu.memory_space<vmem>>, %arg7: memref<32x1xf32, #tpu.memory_space<vmem>>, %arg8: memref<32x288xbf16, #tpu.memory_space<vmem>>, %arg9: memref<32x1xf32, #tpu.memory_space<vmem>>, %arg10: memref<32x288xbf16, #tpu.memory_space<vmem>>, %arg11: memref<32x1xf32, #tpu.memory_space<vmem>>, %arg12: memref<32x288xbf16, #tpu.memory_space<vmem>>, %arg13: memref<32x1xf32, #tpu.memory_space<vmem>>, %arg14: memref<1x1280xf32, #tpu.memory_space<vmem>>, %arg15: memref<1x384xf32, #tpu.memory_space<vmem>>, %arg16: memref<1x128xf32, #tpu.memory_space<vmem>>, %arg17: memref<1280x384xbf16, #tpu.memory_space<vmem>>, %arg18: memref<384x128xbf16, #tpu.memory_space<vmem>>, %arg19: memref<128x16xbf16, #tpu.memory_space<vmem>>, %arg20: memref<1x32x16xf32, #tpu.memory_space<vmem>>, %arg21: memref<32x1536xf32, #tpu.memory_space<vmem>>, %arg22: memref<288x1280xf32, #tpu.memory_space<vmem>>) attributes {dimension_semantics = [#tpu.dimension_semantics<parallel>], iteration_bounds = array<i64: 2>, scalar_prefetch = 0 : i64, scratch_operands = 2 : i64, tpu.core_type = #tpu.core_type<tc>, window_params = [{transform_indices = @transform_0, window_bounds = array<i64: 1, 8, 1280>}, {pipeline_mode = #tpu.pipeline_mode<synchronous>, transform_indices = @transform_1, window_bounds = array<i64: 8, 72>}, {pipeline_mode = #tpu.pipeline_mode<synchronous>, transform_indices = @transform_2, window_bounds = array<i64: 8, 1>}, {pipeline_mode = #tpu.pipeline_mode<synchronous>, transform_indices = @transform_3, window_bounds = array<i64: 16, 72>}, {pipeline_mode = #tpu.pipeline_mode<synchronous>, transform_indices = @transform_4, window_bounds = array<i64: 16, 1>}, {pipeline_mode = #tpu.pipeline_mode<synchronous>, transform_indices = @transform_5, window_bounds = array<i64: 32, 144>}, {pipeline_mode = #tpu.pipeline_mode<synchronous>, transform_indices = @transform_6, window_bounds = array<i64: 32, 1>}, {pipeline_mode = #tpu.pipeline_mode<synchronous>, transform_indices = @transform_7, window_bounds = array<i64: 32, 288>}, {pipeline_mode = #tpu.pipeline_mode<synchronous>, transform_indices = @transform_8, window_bounds = array<i64: 32, 1>}, {pipeline_mode = #tpu.pipeline_mode<synchronous>, transform_indices = @transform_9, window_bounds = array<i64: 32, 288>}, {pipeline_mode = #tpu.pipeline_mode<synchronous>, transform_indices = @transform_10, window_bounds = array<i64: 32, 1>}, {pipeline_mode = #tpu.pipeline_mode<synchronous>, transform_indices = @transform_11, window_bounds = array<i64: 32, 288>}, {pipeline_mode = #tpu.pipeline_mode<synchronous>, transform_indices = @transform_12, window_bounds = array<i64: 32, 1>}, {pipeline_mode = #tpu.pipeline_mode<synchronous>, transform_indices = @transform_13, window_bounds = array<i64: 1, 1280>}, {pipeline_mode = #tpu.pipeline_mode<synchronous>, transform_indices = @transform_14, window_bounds = array<i64: 1, 384>}, {pipeline_mode = #tpu.pipeline_mode<synchronous>, transform_indices = @transform_15, window_bounds = array<i64: 1, 128>}, {pipeline_mode = #tpu.pipeline_mode<synchronous>, transform_indices = @transform_16, window_bounds = array<i64: 1280, 384>}, {pipeline_mode = #tpu.pipeline_mode<synchronous>, transform_indices = @transform_17, window_bounds = array<i64: 384, 128>}, {pipeline_mode = #tpu.pipeline_mode<synchronous>, transform_indices = @transform_18, window_bounds = array<i64: 128, 16>}, {transform_indices = @transform_19, window_bounds = array<i64: 1, 32, 16>}]} {
    %cst = arith.constant 0.000000e+00 : f32
    %0 = vector.broadcast %cst : f32 to vector<32x1536xf32>
    %c0 = arith.constant 0 : index
    %c0_0 = arith.constant 0 : index
    %1 = vector.load %arg21[%c0, %c0_0] : memref<32x1536xf32, #tpu.memory_space<vmem>>, vector<32x1536xf32>
    tpu.vector_store %arg21[%c0, %c0_0], %0 {strides = array<i32>} : memref<32x1536xf32, #tpu.memory_space<vmem>>, vector<32x1536xf32>,
    %c0_1 = arith.constant 0 : index
    %c0_2 = arith.constant 0 : index
    %c0_3 = arith.constant 0 : index
    %2 = vector.load %arg1[%c0_1, %c0_2, %c0_3] : memref<1x8x1280xf32, #tpu.memory_space<vmem>>, vector<1x8x1280xf32>
    %3 = vector.shape_cast %2 : vector<1x8x1280xf32> to vector<8x1280xf32>
    %c0_4 = arith.constant 0 : index
    %c128 = arith.constant 128 : index
    %4 = vector.load %arg21[%c0_4, %c128] : memref<32x1536xf32, #tpu.memory_space<vmem>>, vector<8x1280xf32>
    tpu.vector_store %arg21[%c0_4, %c128], %3 {strides = array<i32>} : memref<32x1536xf32, #tpu.memory_space<vmem>>, vector<8x1280xf32>,
    %c0_5 = arith.constant 0 : index
    %c93 = arith.constant 93 : index
    %5 = vector.load %arg21[%c0_5, %c93] : memref<32x1536xf32, #tpu.memory_space<vmem>>, vector<8x1280xf32>
    %c0_6 = arith.constant 0 : index
    %c0_7 = arith.constant 0 : index
    %6 = vector.load %arg22[%c0_6, %c0_7] : memref<288x1280xf32, #tpu.memory_space<vmem>>, vector<8x1280xf32>
    tpu.vector_store %arg22[%c0_6, %c0_7], %5 {strides = array<i32>} : memref<288x1280xf32, #tpu.memory_space<vmem>>, vector<8x1280xf32>,
    %c0_8 = arith.constant 0 : index
    %c94 = arith.constant 94 : index
    %7 = vector.load %arg21[%c0_8, %c94] : memref<32x1536xf32, #tpu.memory_space<vmem>>, vector<8x1280xf32>
    %c8 = arith.constant 8 : index
    %c0_9 = arith.constant 0 : index
    %8 = vector.load %arg22[%c8, %c0_9] : memref<288x1280xf32, #tpu.memory_space<vmem>>, vector<8x1280xf32>
    tpu.vector_store %arg22[%c8, %c0_9], %7 {strides = array<i32>} : memref<288x1280xf32, #tpu.memory_space<vmem>>, vector<8x1280xf32>,
    %c0_10 = arith.constant 0 : index
    %c95 = arith.constant 95 : index
    %9 = vector.load %arg21[%c0_10, %c95] : memref<32x1536xf32, #tpu.memory_space<vmem>>, vector<8x1280xf32>
    %c16 = arith.constant 16 : index
    %c0_11 = arith.constant 0 : index
    %10 = vector.load %arg22[%c16, %c0_11] : memref<288x1280xf32, #tpu.memory_space<vmem>>, vector<8x1280xf32>
    tpu.vector_store %arg22[%c16, %c0_11], %9 {strides = array<i32>} : memref<288x1280xf32, #tpu.memory_space<vmem>>, vector<8x1280xf32>,
    %c0_12 = arith.constant 0 : index
    %c127 = arith.constant 127 : index
    %11 = vector.load %arg21[%c0_12, %c127] : memref<32x1536xf32, #tpu.memory_space<vmem>>, vector<8x1280xf32>
    %c24 = arith.constant 24 : index
    %c0_13 = arith.constant 0 : index
    %12 = vector.load %arg22[%c24, %c0_13] : memref<288x1280xf32, #tpu.memory_space<vmem>>, vector<8x1280xf32>
    tpu.vector_store %arg22[%c24, %c0_13], %11 {strides = array<i32>} : memref<288x1280xf32, #tpu.memory_space<vmem>>, vector<8x1280xf32>,
    %c32 = arith.constant 32 : index
    %c0_14 = arith.constant 0 : index
    %13 = vector.load %arg22[%c32, %c0_14] : memref<288x1280xf32, #tpu.memory_space<vmem>>, vector<8x1280xf32>
    tpu.vector_store %arg22[%c32, %c0_14], %3 {strides = array<i32>} : memref<288x1280xf32, #tpu.memory_space<vmem>>, vector<8x1280xf32>,
    %c0_15 = arith.constant 0 : index
    %c129 = arith.constant 129 : index
    %14 = vector.load %arg21[%c0_15, %c129] : memref<32x1536xf32, #tpu.memory_space<vmem>>, vector<8x1280xf32>
    %c40 = arith.constant 40 : index
    %c0_16 = arith.constant 0 : index
    %15 = vector.load %arg22[%c40, %c0_16] : memref<288x1280xf32, #tpu.memory_space<vmem>>, vector<8x1280xf32>
    tpu.vector_store %arg22[%c40, %c0_16], %14 {strides = array<i32>} : memref<288x1280xf32, #tpu.memory_space<vmem>>, vector<8x1280xf32>,
    %c0_17 = arith.constant 0 : index
    %c161 = arith.constant 161 : index
    %16 = vector.load %arg21[%c0_17, %c161] : memref<32x1536xf32, #tpu.memory_space<vmem>>, vector<8x1280xf32>
    %c48 = arith.constant 48 : index
    %c0_18 = arith.constant 0 : index
    %17 = vector.load %arg22[%c48, %c0_18] : memref<288x1280xf32, #tpu.memory_space<vmem>>, vector<8x1280xf32>
    tpu.vector_store %arg22[%c48, %c0_18], %16 {strides = array<i32>} : memref<288x1280xf32, #tpu.memory_space<vmem>>, vector<8x1280xf32>,
    %c0_19 = arith.constant 0 : index
    %c162 = arith.constant 162 : index
    %18 = vector.load %arg21[%c0_19, %c162] : memref<32x1536xf32, #tpu.memory_space<vmem>>, vector<8x1280xf32>
    %c56 = arith.constant 56 : index
    %c0_20 = arith.constant 0 : index
    %19 = vector.load %arg22[%c56, %c0_20] : memref<288x1280xf32, #tpu.memory_space<vmem>>, vector<8x1280xf32>
    tpu.vector_store %arg22[%c56, %c0_20], %18 {strides = array<i32>} : memref<288x1280xf32, #tpu.memory_space<vmem>>, vector<8x1280xf32>,
    %c0_21 = arith.constant 0 : index
    %c163 = arith.constant 163 : index
    %20 = vector.load %arg21[%c0_21, %c163] : memref<32x1536xf32, #tpu.memory_space<vmem>>, vector<8x1280xf32>
    %c64 = arith.constant 64 : index
    %c0_22 = arith.constant 0 : index
    %21 = vector.load %arg22[%c64, %c0_22] : memref<288x1280xf32, #tpu.memory_space<vmem>>, vector<8x1280xf32>
    tpu.vector_store %arg22[%c64, %c0_22], %20 {strides = array<i32>} : memref<288x1280xf32, #tpu.memory_space<vmem>>, vector<8x1280xf32>,
    %c0_23 = arith.constant 0 : index
    %c0_24 = arith.constant 0 : index
    %22 = vector.load %arg2[%c0_23, %c0_24] : memref<8x72xbf16, #tpu.memory_space<vmem>>, vector<8x72xbf16>
    %c0_25 = arith.constant 0 : index
    %c0_26 = arith.constant 0 : index
    %23 = vector.load %arg22[%c0_25, %c0_26] : memref<288x1280xf32, #tpu.memory_space<vmem>>, vector<72x1280xf32>
    %24 = arith.truncf %23 : vector<72x1280xf32> to vector<72x1280xbf16>
    %cst_27 = arith.constant dense<0.000000e+00> : vector<8x1280xf32>
    %25 = tpu.matmul %22, %24, %cst_27 {dimension_numbers = #tpu.dot_dimension_numbers<[1], [0], [0], [1], [0, 0, 1, 1], [], []>} : vector<8x72xbf16>, vector<72x1280xbf16>, vector<8x1280xf32> -> vector<8x1280xf32>
    %c0_28 = arith.constant 0 : index
    %c0_29 = arith.constant 0 : index
    %26 = vector.load %arg3[%c0_28, %c0_29] : memref<8x1xf32, #tpu.memory_space<vmem>>, vector<8x1xf32>
    %27 = vector.broadcast %26 : vector<8x1xf32> to vector<8x1280xf32>
    %28 = arith.addf %25, %27 : vector<8x1280xf32>
    %cst_30 = arith.constant 0.000000e+00 : f32
    %29 = vector.broadcast %cst_30 : f32 to vector<8x1280xf32>
    %30 = arith.maximumf %28, %29 : vector<8x1280xf32>
    %c0_31 = arith.constant 0 : index
    %c0_32 = arith.constant 0 : index
    %31 = vector.load %arg14[%c0_31, %c0_32] : memref<1x1280xf32, #tpu.memory_space<vmem>>, vector<1x1280xf32>
    %32 = vector.broadcast %31 : vector<1x1280xf32> to vector<8x1280xf32>
    %33 = arith.mulf %30, %32 : vector<8x1280xf32>
    %c0_33 = arith.constant 0 : index
    %c128_34 = arith.constant 128 : index
    %34 = vector.load %arg21[%c0_33, %c128_34] : memref<32x1536xf32, #tpu.memory_space<vmem>>, vector<8x1280xf32>
    tpu.vector_store %arg21[%c0_33, %c128_34], %33 {strides = array<i32>} : memref<32x1536xf32, #tpu.memory_space<vmem>>, vector<8x1280xf32>,
    %c0_35 = arith.constant 0 : index
    %c93_36 = arith.constant 93 : index
    %35 = vector.load %arg21[%c0_35, %c93_36] : memref<32x1536xf32, #tpu.memory_space<vmem>>, vector<8x1280xf32>
    %c0_37 = arith.constant 0 : index
    %c0_38 = arith.constant 0 : index
    %36 = vector.load %arg22[%c0_37, %c0_38] : memref<288x1280xf32, #tpu.memory_space<vmem>>, vector<8x1280xf32>
    tpu.vector_store %arg22[%c0_37, %c0_38], %35 {strides = array<i32>} : memref<288x1280xf32, #tpu.memory_space<vmem>>, vector<8x1280xf32>,
    %c0_39 = arith.constant 0 : index
    %c94_40 = arith.constant 94 : index
    %37 = vector.load %arg21[%c0_39, %c94_40] : memref<32x1536xf32, #tpu.memory_space<vmem>>, vector<8x1280xf32>
    %c8_41 = arith.constant 8 : index
    %c0_42 = arith.constant 0 : index
    %38 = vector.load %arg22[%c8_41, %c0_42] : memref<288x1280xf32, #tpu.memory_space<vmem>>, vector<8x1280xf32>
    tpu.vector_store %arg22[%c8_41, %c0_42], %37 {strides = array<i32>} : memref<288x1280xf32, #tpu.memory_space<vmem>>, vector<8x1280xf32>,
    %c0_43 = arith.constant 0 : index
    %c95_44 = arith.constant 95 : index
    %39 = vector.load %arg21[%c0_43, %c95_44] : memref<32x1536xf32, #tpu.memory_space<vmem>>, vector<8x1280xf32>
    %c16_45 = arith.constant 16 : index
    %c0_46 = arith.constant 0 : index
    %40 = vector.load %arg22[%c16_45, %c0_46] : memref<288x1280xf32, #tpu.memory_space<vmem>>, vector<8x1280xf32>
    tpu.vector_store %arg22[%c16_45, %c0_46], %39 {strides = array<i32>} : memref<288x1280xf32, #tpu.memory_space<vmem>>, vector<8x1280xf32>,
    %c0_47 = arith.constant 0 : index
    %c127_48 = arith.constant 127 : index
    %41 = vector.load %arg21[%c0_47, %c127_48] : memref<32x1536xf32, #tpu.memory_space<vmem>>, vector<8x1280xf32>
    %c24_49 = arith.constant 24 : index
    %c0_50 = arith.constant 0 : index
    %42 = vector.load %arg22[%c24_49, %c0_50] : memref<288x1280xf32, #tpu.memory_space<vmem>>, vector<8x1280xf32>
    tpu.vector_store %arg22[%c24_49, %c0_50], %41 {strides = array<i32>} : memref<288x1280xf32, #tpu.memory_space<vmem>>, vector<8x1280xf32>,
    %c32_51 = arith.constant 32 : index
    %c0_52 = arith.constant 0 : index
    %43 = vector.load %arg22[%c32_51, %c0_52] : memref<288x1280xf32, #tpu.memory_space<vmem>>, vector<8x1280xf32>
    tpu.vector_store %arg22[%c32_51, %c0_52], %33 {strides = array<i32>} : memref<288x1280xf32, #tpu.memory_space<vmem>>, vector<8x1280xf32>,
    %c0_53 = arith.constant 0 : index
    %c129_54 = arith.constant 129 : index
    %44 = vector.load %arg21[%c0_53, %c129_54] : memref<32x1536xf32, #tpu.memory_space<vmem>>, vector<8x1280xf32>
    %c40_55 = arith.constant 40 : index
    %c0_56 = arith.constant 0 : index
    %45 = vector.load %arg22[%c40_55, %c0_56] : memref<288x1280xf32, #tpu.memory_space<vmem>>, vector<8x1280xf32>
    tpu.vector_store %arg22[%c40_55, %c0_56], %44 {strides = array<i32>} : memref<288x1280xf32, #tpu.memory_space<vmem>>, vector<8x1280xf32>,
    %c0_57 = arith.constant 0 : index
    %c161_58 = arith.constant 161 : index
    %46 = vector.load %arg21[%c0_57, %c161_58] : memref<32x1536xf32, #tpu.memory_space<vmem>>, vector<8x1280xf32>
    %c48_59 = arith.constant 48 : index
    %c0_60 = arith.constant 0 : index
    %47 = vector.load %arg22[%c48_59, %c0_60] : memref<288x1280xf32, #tpu.memory_space<vmem>>, vector<8x1280xf32>
    tpu.vector_store %arg22[%c48_59, %c0_60], %46 {strides = array<i32>} : memref<288x1280xf32, #tpu.memory_space<vmem>>, vector<8x1280xf32>,
    %c0_61 = arith.constant 0 : index
    %c162_62 = arith.constant 162 : index
    %48 = vector.load %arg21[%c0_61, %c162_62] : memref<32x1536xf32, #tpu.memory_space<vmem>>, vector<8x1280xf32>
    %c56_63 = arith.constant 56 : index
    %c0_64 = arith.constant 0 : index
    %49 = vector.load %arg22[%c56_63, %c0_64] : memref<288x1280xf32, #tpu.memory_space<vmem>>, vector<8x1280xf32>
    tpu.vector_store %arg22[%c56_63, %c0_64], %48 {strides = array<i32>} : memref<288x1280xf32, #tpu.memory_space<vmem>>, vector<8x1280xf32>,
    %c0_65 = arith.constant 0 : index
    %c163_66 = arith.constant 163 : index
    %50 = vector.load %arg21[%c0_65, %c163_66] : memref<32x1536xf32, #tpu.memory_space<vmem>>, vector<8x1280xf32>
    %c64_67 = arith.constant 64 : index
    %c0_68 = arith.constant 0 : index
    %51 = vector.load %arg22[%c64_67, %c0_68] : memref<288x1280xf32, #tpu.memory_space<vmem>>, vector<8x1280xf32>
    tpu.vector_store %arg22[%c64_67, %c0_68], %50 {strides = array<i32>} : memref<288x1280xf32, #tpu.memory_space<vmem>>, vector<8x1280xf32>,
    %c0_69 = arith.constant 0 : index
    %c0_70 = arith.constant 0 : index
    %52 = vector.load %arg4[%c0_69, %c0_70] : memref<16x72xbf16, #tpu.memory_space<vmem>>, vector<16x72xbf16>
    %c0_71 = arith.constant 0 : index
    %c0_72 = arith.constant 0 : index
    %53 = vector.load %arg22[%c0_71, %c0_72] : memref<288x1280xf32, #tpu.memory_space<vmem>>, vector<72x1280xf32>
    %54 = arith.truncf %53 : vector<72x1280xf32> to vector<72x1280xbf16>
    %cst_73 = arith.constant dense<0.000000e+00> : vector<16x1280xf32>
    %55 = tpu.matmul %52, %54, %cst_73 {dimension_numbers = #tpu.dot_dimension_numbers<[1], [0], [0], [1], [0, 0, 1, 1], [], []>} : vector<16x72xbf16>, vector<72x1280xbf16>, vector<16x1280xf32> -> vector<16x1280xf32>
    %c0_74 = arith.constant 0 : index
    %c0_75 = arith.constant 0 : index
    %56 = vector.load %arg5[%c0_74, %c0_75] : memref<16x1xf32, #tpu.memory_space<vmem>>, vector<16x1xf32>
    %57 = vector.broadcast %56 : vector<16x1xf32> to vector<16x1280xf32>
    %58 = arith.addf %55, %57 : vector<16x1280xf32>
    %cst_76 = arith.constant 0.000000e+00 : f32
    %59 = vector.broadcast %cst_76 : f32 to vector<16x1280xf32>
    %60 = arith.maximumf %58, %59 : vector<16x1280xf32>
    %c0_77 = arith.constant 0 : index
    %c128_78 = arith.constant 128 : index
    %61 = vector.load %arg21[%c0_77, %c128_78] : memref<32x1536xf32, #tpu.memory_space<vmem>>, vector<16x1280xf32>
    tpu.vector_store %arg21[%c0_77, %c128_78], %60 {strides = array<i32>} : memref<32x1536xf32, #tpu.memory_space<vmem>>, vector<16x1280xf32>,
    %c0_79 = arith.constant 0 : index
    %c129_80 = arith.constant 129 : index
    %62 = vector.load %arg21[%c0_79, %c129_80] : memref<32x1536xf32, #tpu.memory_space<vmem>>, vector<16x1280xf32>
    %63 = arith.maximumf %60, %62 : vector<16x1280xf32>
    %c0_81 = arith.constant 0 : index
    %c162_82 = arith.constant 162 : index
    %64 = vector.load %arg21[%c0_81, %c162_82] : memref<32x1536xf32, #tpu.memory_space<vmem>>, vector<16x1280xf32>
    %c0_83 = arith.constant 0 : index
    %c163_84 = arith.constant 163 : index
    %65 = vector.load %arg21[%c0_83, %c163_84] : memref<32x1536xf32, #tpu.memory_space<vmem>>, vector<16x1280xf32>
    %66 = arith.maximumf %64, %65 : vector<16x1280xf32>
    %67 = arith.maximumf %63, %66 : vector<16x1280xf32>
    %68 = arith.truncf %67 : vector<16x1280xf32> to vector<16x1280xbf16>
    %c0_85 = arith.constant 0 : index
    %c0_86 = arith.constant 0 : index
    %69 = vector.load %arg17[%c0_85, %c0_86] : memref<1280x384xbf16, #tpu.memory_space<vmem>>, vector<1280x384xbf16>
    %cst_87 = arith.constant dense<0.000000e+00> : vector<16x384xf32>
    %70 = tpu.matmul %68, %69, %cst_87 {dimension_numbers = #tpu.dot_dimension_numbers<[1], [0], [0], [1], [0, 0, 1, 1], [], []>} : vector<16x1280xbf16>, vector<1280x384xbf16>, vector<16x384xf32> -> vector<16x384xf32>
    %c0_88 = arith.constant 0 : index
    %c128_89 = arith.constant 128 : index
    %71 = vector.load %arg21[%c0_88, %c128_89] : memref<32x1536xf32, #tpu.memory_space<vmem>>, vector<16x384xf32>
    tpu.vector_store %arg21[%c0_88, %c128_89], %70 {strides = array<i32>} : memref<32x1536xf32, #tpu.memory_space<vmem>>, vector<16x384xf32>,
    %c0_90 = arith.constant 0 : index
    %c109 = arith.constant 109 : index
    %72 = vector.load %arg21[%c0_90, %c109] : memref<32x1536xf32, #tpu.memory_space<vmem>>, vector<16x384xf32>
    %c0_91 = arith.constant 0 : index
    %c0_92 = arith.constant 0 : index
    %73 = vector.load %arg22[%c0_91, %c0_92] : memref<288x1280xf32, #tpu.memory_space<vmem>>, vector<16x384xf32>
    tpu.vector_store %arg22[%c0_91, %c0_92], %72 {strides = array<i32>} : memref<288x1280xf32, #tpu.memory_space<vmem>>, vector<16x384xf32>,
    %c0_93 = arith.constant 0 : index
    %c110 = arith.constant 110 : index
    %74 = vector.load %arg21[%c0_93, %c110] : memref<32x1536xf32, #tpu.memory_space<vmem>>, vector<16x384xf32>
    %c16_94 = arith.constant 16 : index
    %c0_95 = arith.constant 0 : index
    %75 = vector.load %arg22[%c16_94, %c0_95] : memref<288x1280xf32, #tpu.memory_space<vmem>>, vector<16x384xf32>
    tpu.vector_store %arg22[%c16_94, %c0_95], %74 {strides = array<i32>} : memref<288x1280xf32, #tpu.memory_space<vmem>>, vector<16x384xf32>,
    %c0_96 = arith.constant 0 : index
    %c111 = arith.constant 111 : index
    %76 = vector.load %arg21[%c0_96, %c111] : memref<32x1536xf32, #tpu.memory_space<vmem>>, vector<16x384xf32>
    %c32_97 = arith.constant 32 : index
    %c0_98 = arith.constant 0 : index
    %77 = vector.load %arg22[%c32_97, %c0_98] : memref<288x1280xf32, #tpu.memory_space<vmem>>, vector<16x384xf32>
    tpu.vector_store %arg22[%c32_97, %c0_98], %76 {strides = array<i32>} : memref<288x1280xf32, #tpu.memory_space<vmem>>, vector<16x384xf32>,
    %c0_99 = arith.constant 0 : index
    %c127_100 = arith.constant 127 : index
    %78 = vector.load %arg21[%c0_99, %c127_100] : memref<32x1536xf32, #tpu.memory_space<vmem>>, vector<16x384xf32>
    %c48_101 = arith.constant 48 : index
    %c0_102 = arith.constant 0 : index
    %79 = vector.load %arg22[%c48_101, %c0_102] : memref<288x1280xf32, #tpu.memory_space<vmem>>, vector<16x384xf32>
    tpu.vector_store %arg22[%c48_101, %c0_102], %78 {strides = array<i32>} : memref<288x1280xf32, #tpu.memory_space<vmem>>, vector<16x384xf32>,
    %c64_103 = arith.constant 64 : index
    %c0_104 = arith.constant 0 : index
    %80 = vector.load %arg22[%c64_103, %c0_104] : memref<288x1280xf32, #tpu.memory_space<vmem>>, vector<16x384xf32>
    tpu.vector_store %arg22[%c64_103, %c0_104], %70 {strides = array<i32>} : memref<288x1280xf32, #tpu.memory_space<vmem>>, vector<16x384xf32>,
    %c0_105 = arith.constant 0 : index
    %c129_106 = arith.constant 129 : index
    %81 = vector.load %arg21[%c0_105, %c129_106] : memref<32x1536xf32, #tpu.memory_space<vmem>>, vector<16x384xf32>
    %c80 = arith.constant 80 : index
    %c0_107 = arith.constant 0 : index
    %82 = vector.load %arg22[%c80, %c0_107] : memref<288x1280xf32, #tpu.memory_space<vmem>>, vector<16x384xf32>
    tpu.vector_store %arg22[%c80, %c0_107], %81 {strides = array<i32>} : memref<288x1280xf32, #tpu.memory_space<vmem>>, vector<16x384xf32>,
    %c0_108 = arith.constant 0 : index
    %c145 = arith.constant 145 : index
    %83 = vector.load %arg21[%c0_108, %c145] : memref<32x1536xf32, #tpu.memory_space<vmem>>, vector<16x384xf32>
    %c96 = arith.constant 96 : index
    %c0_109 = arith.constant 0 : index
    %84 = vector.load %arg22[%c96, %c0_109] : memref<288x1280xf32, #tpu.memory_space<vmem>>, vector<16x384xf32>
    tpu.vector_store %arg22[%c96, %c0_109], %83 {strides = array<i32>} : memref<288x1280xf32, #tpu.memory_space<vmem>>, vector<16x384xf32>,
    %c0_110 = arith.constant 0 : index
    %c146 = arith.constant 146 : index
    %85 = vector.load %arg21[%c0_110, %c146] : memref<32x1536xf32, #tpu.memory_space<vmem>>, vector<16x384xf32>
    %c112 = arith.constant 112 : index
    %c0_111 = arith.constant 0 : index
    %86 = vector.load %arg22[%c112, %c0_111] : memref<288x1280xf32, #tpu.memory_space<vmem>>, vector<16x384xf32>
    tpu.vector_store %arg22[%c112, %c0_111], %85 {strides = array<i32>} : memref<288x1280xf32, #tpu.memory_space<vmem>>, vector<16x384xf32>,
    %c0_112 = arith.constant 0 : index
    %c147 = arith.constant 147 : index
    %87 = vector.load %arg21[%c0_112, %c147] : memref<32x1536xf32, #tpu.memory_space<vmem>>, vector<16x384xf32>
    %c128_113 = arith.constant 128 : index
    %c0_114 = arith.constant 0 : index
    %88 = vector.load %arg22[%c128_113, %c0_114] : memref<288x1280xf32, #tpu.memory_space<vmem>>, vector<16x384xf32>
    tpu.vector_store %arg22[%c128_113, %c0_114], %87 {strides = array<i32>} : memref<288x1280xf32, #tpu.memory_space<vmem>>, vector<16x384xf32>,
    %c0_115 = arith.constant 0 : index
    %c0_116 = arith.constant 0 : index
    %89 = vector.load %arg6[%c0_115, %c0_116] : memref<32x144xbf16, #tpu.memory_space<vmem>>, vector<32x144xbf16>
    %c0_117 = arith.constant 0 : index
    %c0_118 = arith.constant 0 : index
    %90 = vector.load %arg22[%c0_117, %c0_118] : memref<288x1280xf32, #tpu.memory_space<vmem>>, vector<144x384xf32>
    %91 = arith.truncf %90 : vector<144x384xf32> to vector<144x384xbf16>
    %cst_119 = arith.constant dense<0.000000e+00> : vector<32x384xf32>
    %92 = tpu.matmul %89, %91, %cst_119 {dimension_numbers = #tpu.dot_dimension_numbers<[1], [0], [0], [1], [0, 0, 1, 1], [], []>} : vector<32x144xbf16>, vector<144x384xbf16>, vector<32x384xf32> -> vector<32x384xf32>
    %c0_120 = arith.constant 0 : index
    %c0_121 = arith.constant 0 : index
    %93 = vector.load %arg7[%c0_120, %c0_121] : memref<32x1xf32, #tpu.memory_space<vmem>>, vector<32x1xf32>
    %94 = vector.broadcast %93 : vector<32x1xf32> to vector<32x384xf32>
    %95 = arith.addf %92, %94 : vector<32x384xf32>
    %cst_122 = arith.constant 0.000000e+00 : f32
    %96 = vector.broadcast %cst_122 : f32 to vector<32x384xf32>
    %97 = arith.maximumf %95, %96 : vector<32x384xf32>
    %c0_123 = arith.constant 0 : index
    %c0_124 = arith.constant 0 : index
    %98 = vector.load %arg15[%c0_123, %c0_124] : memref<1x384xf32, #tpu.memory_space<vmem>>, vector<1x384xf32>
    %99 = vector.broadcast %98 : vector<1x384xf32> to vector<32x384xf32>
    %100 = arith.mulf %97, %99 : vector<32x384xf32>
    %c0_125 = arith.constant 0 : index
    %c128_126 = arith.constant 128 : index
    %101 = vector.load %arg21[%c0_125, %c128_126] : memref<32x1536xf32, #tpu.memory_space<vmem>>, vector<32x384xf32>
    tpu.vector_store %arg21[%c0_125, %c128_126], %100 {strides = array<i32>} : memref<32x1536xf32, #tpu.memory_space<vmem>>, vector<32x384xf32>,
    %c0_127 = arith.constant 0 : index
    %c109_128 = arith.constant 109 : index
    %102 = vector.load %arg21[%c0_127, %c109_128] : memref<32x1536xf32, #tpu.memory_space<vmem>>, vector<32x384xf32>
    %c0_129 = arith.constant 0 : index
    %c0_130 = arith.constant 0 : index
    %103 = vector.load %arg22[%c0_129, %c0_130] : memref<288x1280xf32, #tpu.memory_space<vmem>>, vector<32x384xf32>
    tpu.vector_store %arg22[%c0_129, %c0_130], %102 {strides = array<i32>} : memref<288x1280xf32, #tpu.memory_space<vmem>>, vector<32x384xf32>,
    %c0_131 = arith.constant 0 : index
    %c110_132 = arith.constant 110 : index
    %104 = vector.load %arg21[%c0_131, %c110_132] : memref<32x1536xf32, #tpu.memory_space<vmem>>, vector<32x384xf32>
    %c32_133 = arith.constant 32 : index
    %c0_134 = arith.constant 0 : index
    %105 = vector.load %arg22[%c32_133, %c0_134] : memref<288x1280xf32, #tpu.memory_space<vmem>>, vector<32x384xf32>
    tpu.vector_store %arg22[%c32_133, %c0_134], %104 {strides = array<i32>} : memref<288x1280xf32, #tpu.memory_space<vmem>>, vector<32x384xf32>,
    %c0_135 = arith.constant 0 : index
    %c111_136 = arith.constant 111 : index
    %106 = vector.load %arg21[%c0_135, %c111_136] : memref<32x1536xf32, #tpu.memory_space<vmem>>, vector<32x384xf32>
    %c64_137 = arith.constant 64 : index
    %c0_138 = arith.constant 0 : index
    %107 = vector.load %arg22[%c64_137, %c0_138] : memref<288x1280xf32, #tpu.memory_space<vmem>>, vector<32x384xf32>
    tpu.vector_store %arg22[%c64_137, %c0_138], %106 {strides = array<i32>} : memref<288x1280xf32, #tpu.memory_space<vmem>>, vector<32x384xf32>,
    %c0_139 = arith.constant 0 : index
    %c127_140 = arith.constant 127 : index
    %108 = vector.load %arg21[%c0_139, %c127_140] : memref<32x1536xf32, #tpu.memory_space<vmem>>, vector<32x384xf32>
    %c96_141 = arith.constant 96 : index
    %c0_142 = arith.constant 0 : index
    %109 = vector.load %arg22[%c96_141, %c0_142] : memref<288x1280xf32, #tpu.memory_space<vmem>>, vector<32x384xf32>
    tpu.vector_store %arg22[%c96_141, %c0_142], %108 {strides = array<i32>} : memref<288x1280xf32, #tpu.memory_space<vmem>>, vector<32x384xf32>,
    %c128_143 = arith.constant 128 : index
    %c0_144 = arith.constant 0 : index
    %110 = vector.load %arg22[%c128_143, %c0_144] : memref<288x1280xf32, #tpu.memory_space<vmem>>, vector<32x384xf32>
    tpu.vector_store %arg22[%c128_143, %c0_144], %100 {strides = array<i32>} : memref<288x1280xf32, #tpu.memory_space<vmem>>, vector<32x384xf32>,
    %c0_145 = arith.constant 0 : index
    %c129_146 = arith.constant 129 : index
    %111 = vector.load %arg21[%c0_145, %c129_146] : memref<32x1536xf32, #tpu.memory_space<vmem>>, vector<32x384xf32>
    %c160 = arith.constant 160 : index
    %c0_147 = arith.constant 0 : index
    %112 = vector.load %arg22[%c160, %c0_147] : memref<288x1280xf32, #tpu.memory_space<vmem>>, vector<32x384xf32>
    tpu.vector_store %arg22[%c160, %c0_147], %111 {strides = array<i32>} : memref<288x1280xf32, #tpu.memory_space<vmem>>, vector<32x384xf32>,
    %c0_148 = arith.constant 0 : index
    %c145_149 = arith.constant 145 : index
    %113 = vector.load %arg21[%c0_148, %c145_149] : memref<32x1536xf32, #tpu.memory_space<vmem>>, vector<32x384xf32>
    %c192 = arith.constant 192 : index
    %c0_150 = arith.constant 0 : index
    %114 = vector.load %arg22[%c192, %c0_150] : memref<288x1280xf32, #tpu.memory_space<vmem>>, vector<32x384xf32>
    tpu.vector_store %arg22[%c192, %c0_150], %113 {strides = array<i32>} : memref<288x1280xf32, #tpu.memory_space<vmem>>, vector<32x384xf32>,
    %c0_151 = arith.constant 0 : index
    %c146_152 = arith.constant 146 : index
    %115 = vector.load %arg21[%c0_151, %c146_152] : memref<32x1536xf32, #tpu.memory_space<vmem>>, vector<32x384xf32>
    %c224 = arith.constant 224 : index
    %c0_153 = arith.constant 0 : index
    %116 = vector.load %arg22[%c224, %c0_153] : memref<288x1280xf32, #tpu.memory_space<vmem>>, vector<32x384xf32>
    tpu.vector_store %arg22[%c224, %c0_153], %115 {strides = array<i32>} : memref<288x1280xf32, #tpu.memory_space<vmem>>, vector<32x384xf32>,
    %c0_154 = arith.constant 0 : index
    %c147_155 = arith.constant 147 : index
    %117 = vector.load %arg21[%c0_154, %c147_155] : memref<32x1536xf32, #tpu.memory_space<vmem>>, vector<32x384xf32>
    %c256 = arith.constant 256 : index
    %c0_156 = arith.constant 0 : index
    %118 = vector.load %arg22[%c256, %c0_156] : memref<288x1280xf32, #tpu.memory_space<vmem>>, vector<32x384xf32>
    tpu.vector_store %arg22[%c256, %c0_156], %117 {strides = array<i32>} : memref<288x1280xf32, #tpu.memory_space<vmem>>, vector<32x384xf32>,
    %c0_157 = arith.constant 0 : index
    %c0_158 = arith.constant 0 : index
    %119 = vector.load %arg8[%c0_157, %c0_158] : memref<32x288xbf16, #tpu.memory_space<vmem>>, vector<32x288xbf16>
    %c0_159 = arith.constant 0 : index
    %c0_160 = arith.constant 0 : index
    %120 = vector.load %arg22[%c0_159, %c0_160] : memref<288x1280xf32, #tpu.memory_space<vmem>>, vector<288x384xf32>
    %121 = arith.truncf %120 : vector<288x384xf32> to vector<288x384xbf16>
    %cst_161 = arith.constant dense<0.000000e+00> : vector<32x384xf32>
    %122 = tpu.matmul %119, %121, %cst_161 {dimension_numbers = #tpu.dot_dimension_numbers<[1], [0], [0], [1], [0, 0, 1, 1], [], []>} : vector<32x288xbf16>, vector<288x384xbf16>, vector<32x384xf32> -> vector<32x384xf32>
    %c0_162 = arith.constant 0 : index
    %c0_163 = arith.constant 0 : index
    %123 = vector.load %arg9[%c0_162, %c0_163] : memref<32x1xf32, #tpu.memory_space<vmem>>, vector<32x1xf32>
    %124 = vector.broadcast %123 : vector<32x1xf32> to vector<32x384xf32>
    %125 = arith.addf %122, %124 : vector<32x384xf32>
    %cst_164 = arith.constant 0.000000e+00 : f32
    %126 = vector.broadcast %cst_164 : f32 to vector<32x384xf32>
    %127 = arith.maximumf %125, %126 : vector<32x384xf32>
    %c0_165 = arith.constant 0 : index
    %c128_166 = arith.constant 128 : index
    %128 = vector.load %arg21[%c0_165, %c128_166] : memref<32x1536xf32, #tpu.memory_space<vmem>>, vector<32x384xf32>
    tpu.vector_store %arg21[%c0_165, %c128_166], %127 {strides = array<i32>} : memref<32x1536xf32, #tpu.memory_space<vmem>>, vector<32x384xf32>,
    %c0_167 = arith.constant 0 : index
    %c129_168 = arith.constant 129 : index
    %129 = vector.load %arg21[%c0_167, %c129_168] : memref<32x1536xf32, #tpu.memory_space<vmem>>, vector<32x384xf32>
    %130 = arith.maximumf %127, %129 : vector<32x384xf32>
    %c0_169 = arith.constant 0 : index
    %c146_170 = arith.constant 146 : index
    %131 = vector.load %arg21[%c0_169, %c146_170] : memref<32x1536xf32, #tpu.memory_space<vmem>>, vector<32x384xf32>
    %c0_171 = arith.constant 0 : index
    %c147_172 = arith.constant 147 : index
    %132 = vector.load %arg21[%c0_171, %c147_172] : memref<32x1536xf32, #tpu.memory_space<vmem>>, vector<32x384xf32>
    %133 = arith.maximumf %131, %132 : vector<32x384xf32>
    %134 = arith.maximumf %130, %133 : vector<32x384xf32>
    %135 = arith.truncf %134 : vector<32x384xf32> to vector<32x384xbf16>
    %c0_173 = arith.constant 0 : index
    %c0_174 = arith.constant 0 : index
    %136 = vector.load %arg18[%c0_173, %c0_174] : memref<384x128xbf16, #tpu.memory_space<vmem>>, vector<384x128xbf16>
    %cst_175 = arith.constant dense<0.000000e+00> : vector<32x128xf32>
    %137 = tpu.matmul %135, %136, %cst_175 {dimension_numbers = #tpu.dot_dimension_numbers<[1], [0], [0], [1], [0, 0, 1, 1], [], []>} : vector<32x384xbf16>, vector<384x128xbf16>, vector<32x128xf32> -> vector<32x128xf32>
    %c0_176 = arith.constant 0 : index
    %c128_177 = arith.constant 128 : index
    %138 = vector.load %arg21[%c0_176, %c128_177] : memref<32x1536xf32, #tpu.memory_space<vmem>>, vector<32x128xf32>
    tpu.vector_store %arg21[%c0_176, %c128_177], %137 {strides = array<i32>} : memref<32x1536xf32, #tpu.memory_space<vmem>>, vector<32x128xf32>,
    %c0_178 = arith.constant 0 : index
    %c117 = arith.constant 117 : index
    %139 = vector.load %arg21[%c0_178, %c117] : memref<32x1536xf32, #tpu.memory_space<vmem>>, vector<32x128xf32>
    %c0_179 = arith.constant 0 : index
    %c0_180 = arith.constant 0 : index
    %140 = vector.load %arg22[%c0_179, %c0_180] : memref<288x1280xf32, #tpu.memory_space<vmem>>, vector<32x128xf32>
    tpu.vector_store %arg22[%c0_179, %c0_180], %139 {strides = array<i32>} : memref<288x1280xf32, #tpu.memory_space<vmem>>, vector<32x128xf32>,
    %c0_181 = arith.constant 0 : index
    %c118 = arith.constant 118 : index
    %141 = vector.load %arg21[%c0_181, %c118] : memref<32x1536xf32, #tpu.memory_space<vmem>>, vector<32x128xf32>
    %c32_182 = arith.constant 32 : index
    %c0_183 = arith.constant 0 : index
    %142 = vector.load %arg22[%c32_182, %c0_183] : memref<288x1280xf32, #tpu.memory_space<vmem>>, vector<32x128xf32>
    tpu.vector_store %arg22[%c32_182, %c0_183], %141 {strides = array<i32>} : memref<288x1280xf32, #tpu.memory_space<vmem>>, vector<32x128xf32>,
    %c0_184 = arith.constant 0 : index
    %c119 = arith.constant 119 : index
    %143 = vector.load %arg21[%c0_184, %c119] : memref<32x1536xf32, #tpu.memory_space<vmem>>, vector<32x128xf32>
    %c64_185 = arith.constant 64 : index
    %c0_186 = arith.constant 0 : index
    %144 = vector.load %arg22[%c64_185, %c0_186] : memref<288x1280xf32, #tpu.memory_space<vmem>>, vector<32x128xf32>
    tpu.vector_store %arg22[%c64_185, %c0_186], %143 {strides = array<i32>} : memref<288x1280xf32, #tpu.memory_space<vmem>>, vector<32x128xf32>,
    %c0_187 = arith.constant 0 : index
    %c127_188 = arith.constant 127 : index
    %145 = vector.load %arg21[%c0_187, %c127_188] : memref<32x1536xf32, #tpu.memory_space<vmem>>, vector<32x128xf32>
    %c96_189 = arith.constant 96 : index
    %c0_190 = arith.constant 0 : index
    %146 = vector.load %arg22[%c96_189, %c0_190] : memref<288x1280xf32, #tpu.memory_space<vmem>>, vector<32x128xf32>
    tpu.vector_store %arg22[%c96_189, %c0_190], %145 {strides = array<i32>} : memref<288x1280xf32, #tpu.memory_space<vmem>>, vector<32x128xf32>,
    %c128_191 = arith.constant 128 : index
    %c0_192 = arith.constant 0 : index
    %147 = vector.load %arg22[%c128_191, %c0_192] : memref<288x1280xf32, #tpu.memory_space<vmem>>, vector<32x128xf32>
    tpu.vector_store %arg22[%c128_191, %c0_192], %137 {strides = array<i32>} : memref<288x1280xf32, #tpu.memory_space<vmem>>, vector<32x128xf32>,
    %c0_193 = arith.constant 0 : index
    %c129_194 = arith.constant 129 : index
    %148 = vector.load %arg21[%c0_193, %c129_194] : memref<32x1536xf32, #tpu.memory_space<vmem>>, vector<32x128xf32>
    %c160_195 = arith.constant 160 : index
    %c0_196 = arith.constant 0 : index
    %149 = vector.load %arg22[%c160_195, %c0_196] : memref<288x1280xf32, #tpu.memory_space<vmem>>, vector<32x128xf32>
    tpu.vector_store %arg22[%c160_195, %c0_196], %148 {strides = array<i32>} : memref<288x1280xf32, #tpu.memory_space<vmem>>, vector<32x128xf32>,
    %c0_197 = arith.constant 0 : index
    %c137 = arith.constant 137 : index
    %150 = vector.load %arg21[%c0_197, %c137] : memref<32x1536xf32, #tpu.memory_space<vmem>>, vector<32x128xf32>
    %c192_198 = arith.constant 192 : index
    %c0_199 = arith.constant 0 : index
    %151 = vector.load %arg22[%c192_198, %c0_199] : memref<288x1280xf32, #tpu.memory_space<vmem>>, vector<32x128xf32>
    tpu.vector_store %arg22[%c192_198, %c0_199], %150 {strides = array<i32>} : memref<288x1280xf32, #tpu.memory_space<vmem>>, vector<32x128xf32>,
    %c0_200 = arith.constant 0 : index
    %c138 = arith.constant 138 : index
    %152 = vector.load %arg21[%c0_200, %c138] : memref<32x1536xf32, #tpu.memory_space<vmem>>, vector<32x128xf32>
    %c224_201 = arith.constant 224 : index
    %c0_202 = arith.constant 0 : index
    %153 = vector.load %arg22[%c224_201, %c0_202] : memref<288x1280xf32, #tpu.memory_space<vmem>>, vector<32x128xf32>
    tpu.vector_store %arg22[%c224_201, %c0_202], %152 {strides = array<i32>} : memref<288x1280xf32, #tpu.memory_space<vmem>>, vector<32x128xf32>,
    %c0_203 = arith.constant 0 : index
    %c139 = arith.constant 139 : index
    %154 = vector.load %arg21[%c0_203, %c139] : memref<32x1536xf32, #tpu.memory_space<vmem>>, vector<32x128xf32>
    %c256_204 = arith.constant 256 : index
    %c0_205 = arith.constant 0 : index
    %155 = vector.load %arg22[%c256_204, %c0_205] : memref<288x1280xf32, #tpu.memory_space<vmem>>, vector<32x128xf32>
    tpu.vector_store %arg22[%c256_204, %c0_205], %154 {strides = array<i32>} : memref<288x1280xf32, #tpu.memory_space<vmem>>, vector<32x128xf32>,
    %c0_206 = arith.constant 0 : index
    %c0_207 = arith.constant 0 : index
    %156 = vector.load %arg10[%c0_206, %c0_207] : memref<32x288xbf16, #tpu.memory_space<vmem>>, vector<32x288xbf16>
    %c0_208 = arith.constant 0 : index
    %c0_209 = arith.constant 0 : index
    %157 = vector.load %arg22[%c0_208, %c0_209] : memref<288x1280xf32, #tpu.memory_space<vmem>>, vector<288x128xf32>
    %158 = arith.truncf %157 : vector<288x128xf32> to vector<288x128xbf16>
    %cst_210 = arith.constant dense<0.000000e+00> : vector<32x128xf32>
    %159 = tpu.matmul %156, %158, %cst_210 {dimension_numbers = #tpu.dot_dimension_numbers<[1], [0], [0], [1], [0, 0, 1, 1], [], []>} : vector<32x288xbf16>, vector<288x128xbf16>, vector<32x128xf32> -> vector<32x128xf32>
    %c0_211 = arith.constant 0 : index
    %c0_212 = arith.constant 0 : index
    %160 = vector.load %arg11[%c0_211, %c0_212] : memref<32x1xf32, #tpu.memory_space<vmem>>, vector<32x1xf32>
    %161 = vector.broadcast %160 : vector<32x1xf32> to vector<32x128xf32>
    %162 = arith.addf %159, %161 : vector<32x128xf32>
    %cst_213 = arith.constant 0.000000e+00 : f32
    %163 = vector.broadcast %cst_213 : f32 to vector<32x128xf32>
    %164 = arith.maximumf %162, %163 : vector<32x128xf32>
    %c0_214 = arith.constant 0 : index
    %c0_215 = arith.constant 0 : index
    %165 = vector.load %arg16[%c0_214, %c0_215] : memref<1x128xf32, #tpu.memory_space<vmem>>, vector<1x128xf32>
    %166 = vector.broadcast %165 : vector<1x128xf32> to vector<32x128xf32>
    %167 = arith.mulf %164, %166 : vector<32x128xf32>
    %c0_216 = arith.constant 0 : index
    %c128_217 = arith.constant 128 : index
    %168 = vector.load %arg21[%c0_216, %c128_217] : memref<32x1536xf32, #tpu.memory_space<vmem>>, vector<32x128xf32>
    tpu.vector_store %arg21[%c0_216, %c128_217], %167 {strides = array<i32>} : memref<32x1536xf32, #tpu.memory_space<vmem>>, vector<32x128xf32>,
    %c0_218 = arith.constant 0 : index
    %c117_219 = arith.constant 117 : index
    %169 = vector.load %arg21[%c0_218, %c117_219] : memref<32x1536xf32, #tpu.memory_space<vmem>>, vector<32x128xf32>
    %c0_220 = arith.constant 0 : index
    %c0_221 = arith.constant 0 : index
    %170 = vector.load %arg22[%c0_220, %c0_221] : memref<288x1280xf32, #tpu.memory_space<vmem>>, vector<32x128xf32>
    tpu.vector_store %arg22[%c0_220, %c0_221], %169 {strides = array<i32>} : memref<288x1280xf32, #tpu.memory_space<vmem>>, vector<32x128xf32>,
    %c0_222 = arith.constant 0 : index
    %c118_223 = arith.constant 118 : index
    %171 = vector.load %arg21[%c0_222, %c118_223] : memref<32x1536xf32, #tpu.memory_space<vmem>>, vector<32x128xf32>
    %c32_224 = arith.constant 32 : index
    %c0_225 = arith.constant 0 : index
    %172 = vector.load %arg22[%c32_224, %c0_225] : memref<288x1280xf32, #tpu.memory_space<vmem>>, vector<32x128xf32>
    tpu.vector_store %arg22[%c32_224, %c0_225], %171 {strides = array<i32>} : memref<288x1280xf32, #tpu.memory_space<vmem>>, vector<32x128xf32>,
    %c0_226 = arith.constant 0 : index
    %c119_227 = arith.constant 119 : index
    %173 = vector.load %arg21[%c0_226, %c119_227] : memref<32x1536xf32, #tpu.memory_space<vmem>>, vector<32x128xf32>
    %c64_228 = arith.constant 64 : index
    %c0_229 = arith.constant 0 : index
    %174 = vector.load %arg22[%c64_228, %c0_229] : memref<288x1280xf32, #tpu.memory_space<vmem>>, vector<32x128xf32>
    tpu.vector_store %arg22[%c64_228, %c0_229], %173 {strides = array<i32>} : memref<288x1280xf32, #tpu.memory_space<vmem>>, vector<32x128xf32>,
    %c0_230 = arith.constant 0 : index
    %c127_231 = arith.constant 127 : index
    %175 = vector.load %arg21[%c0_230, %c127_231] : memref<32x1536xf32, #tpu.memory_space<vmem>>, vector<32x128xf32>
    %c96_232 = arith.constant 96 : index
    %c0_233 = arith.constant 0 : index
    %176 = vector.load %arg22[%c96_232, %c0_233] : memref<288x1280xf32, #tpu.memory_space<vmem>>, vector<32x128xf32>
    tpu.vector_store %arg22[%c96_232, %c0_233], %175 {strides = array<i32>} : memref<288x1280xf32, #tpu.memory_space<vmem>>, vector<32x128xf32>,
    %c128_234 = arith.constant 128 : index
    %c0_235 = arith.constant 0 : index
    %177 = vector.load %arg22[%c128_234, %c0_235] : memref<288x1280xf32, #tpu.memory_space<vmem>>, vector<32x128xf32>
    tpu.vector_store %arg22[%c128_234, %c0_235], %167 {strides = array<i32>} : memref<288x1280xf32, #tpu.memory_space<vmem>>, vector<32x128xf32>,
    %c0_236 = arith.constant 0 : index
    %c129_237 = arith.constant 129 : index
    %178 = vector.load %arg21[%c0_236, %c129_237] : memref<32x1536xf32, #tpu.memory_space<vmem>>, vector<32x128xf32>
    %c160_238 = arith.constant 160 : index
    %c0_239 = arith.constant 0 : index
    %179 = vector.load %arg22[%c160_238, %c0_239] : memref<288x1280xf32, #tpu.memory_space<vmem>>, vector<32x128xf32>
    tpu.vector_store %arg22[%c160_238, %c0_239], %178 {strides = array<i32>} : memref<288x1280xf32, #tpu.memory_space<vmem>>, vector<32x128xf32>,
    %c0_240 = arith.constant 0 : index
    %c137_241 = arith.constant 137 : index
    %180 = vector.load %arg21[%c0_240, %c137_241] : memref<32x1536xf32, #tpu.memory_space<vmem>>, vector<32x128xf32>
    %c192_242 = arith.constant 192 : index
    %c0_243 = arith.constant 0 : index
    %181 = vector.load %arg22[%c192_242, %c0_243] : memref<288x1280xf32, #tpu.memory_space<vmem>>, vector<32x128xf32>
    tpu.vector_store %arg22[%c192_242, %c0_243], %180 {strides = array<i32>} : memref<288x1280xf32, #tpu.memory_space<vmem>>, vector<32x128xf32>,
    %c0_244 = arith.constant 0 : index
    %c138_245 = arith.constant 138 : index
    %182 = vector.load %arg21[%c0_244, %c138_245] : memref<32x1536xf32, #tpu.memory_space<vmem>>, vector<32x128xf32>
    %c224_246 = arith.constant 224 : index
    %c0_247 = arith.constant 0 : index
    %183 = vector.load %arg22[%c224_246, %c0_247] : memref<288x1280xf32, #tpu.memory_space<vmem>>, vector<32x128xf32>
    tpu.vector_store %arg22[%c224_246, %c0_247], %182 {strides = array<i32>} : memref<288x1280xf32, #tpu.memory_space<vmem>>, vector<32x128xf32>,
    %c0_248 = arith.constant 0 : index
    %c139_249 = arith.constant 139 : index
    %184 = vector.load %arg21[%c0_248, %c139_249] : memref<32x1536xf32, #tpu.memory_space<vmem>>, vector<32x128xf32>
    %c256_250 = arith.constant 256 : index
    %c0_251 = arith.constant 0 : index
    %185 = vector.load %arg22[%c256_250, %c0_251] : memref<288x1280xf32, #tpu.memory_space<vmem>>, vector<32x128xf32>
    tpu.vector_store %arg22[%c256_250, %c0_251], %184 {strides = array<i32>} : memref<288x1280xf32, #tpu.memory_space<vmem>>, vector<32x128xf32>,
    %c0_252 = arith.constant 0 : index
    %c0_253 = arith.constant 0 : index
    %186 = vector.load %arg12[%c0_252, %c0_253] : memref<32x288xbf16, #tpu.memory_space<vmem>>, vector<32x288xbf16>
    %c0_254 = arith.constant 0 : index
    %c0_255 = arith.constant 0 : index
    %187 = vector.load %arg22[%c0_254, %c0_255] : memref<288x1280xf32, #tpu.memory_space<vmem>>, vector<288x128xf32>
    %188 = arith.truncf %187 : vector<288x128xf32> to vector<288x128xbf16>
    %cst_256 = arith.constant dense<0.000000e+00> : vector<32x128xf32>
    %189 = tpu.matmul %186, %188, %cst_256 {dimension_numbers = #tpu.dot_dimension_numbers<[1], [0], [0], [1], [0, 0, 1, 1], [], []>} : vector<32x288xbf16>, vector<288x128xbf16>, vector<32x128xf32> -> vector<32x128xf32>
    %c0_257 = arith.constant 0 : index
    %c0_258 = arith.constant 0 : index
    %190 = vector.load %arg13[%c0_257, %c0_258] : memref<32x1xf32, #tpu.memory_space<vmem>>, vector<32x1xf32>
    %191 = vector.broadcast %190 : vector<32x1xf32> to vector<32x128xf32>
    %192 = arith.addf %189, %191 : vector<32x128xf32>
    %cst_259 = arith.constant 0.000000e+00 : f32
    %193 = vector.broadcast %cst_259 : f32 to vector<32x128xf32>
    %194 = arith.maximumf %192, %193 : vector<32x128xf32>
    %c0_260 = arith.constant 0 : index
    %c128_261 = arith.constant 128 : index
    %195 = vector.load %arg21[%c0_260, %c128_261] : memref<32x1536xf32, #tpu.memory_space<vmem>>, vector<32x128xf32>
    tpu.vector_store %arg21[%c0_260, %c128_261], %194 {strides = array<i32>} : memref<32x1536xf32, #tpu.memory_space<vmem>>, vector<32x128xf32>,
    %c0_262 = arith.constant 0 : index
    %c129_263 = arith.constant 129 : index
    %196 = vector.load %arg21[%c0_262, %c129_263] : memref<32x1536xf32, #tpu.memory_space<vmem>>, vector<32x128xf32>
    %197 = arith.maximumf %194, %196 : vector<32x128xf32>
    %c0_264 = arith.constant 0 : index
    %c138_265 = arith.constant 138 : index
    %198 = vector.load %arg21[%c0_264, %c138_265] : memref<32x1536xf32, #tpu.memory_space<vmem>>, vector<32x128xf32>
    %c0_266 = arith.constant 0 : index
    %c139_267 = arith.constant 139 : index
    %199 = vector.load %arg21[%c0_266, %c139_267] : memref<32x1536xf32, #tpu.memory_space<vmem>>, vector<32x128xf32>
    %200 = arith.maximumf %198, %199 : vector<32x128xf32>
    %201 = arith.maximumf %197, %200 : vector<32x128xf32>
    %202 = arith.truncf %201 : vector<32x128xf32> to vector<32x128xbf16>
    %c0_268 = arith.constant 0 : index
    %c0_269 = arith.constant 0 : index
    %203 = vector.load %arg19[%c0_268, %c0_269] : memref<128x16xbf16, #tpu.memory_space<vmem>>, vector<128x16xbf16>
    %cst_270 = arith.constant dense<0.000000e+00> : vector<32x16xf32>
    %204 = tpu.matmul %202, %203, %cst_270 {dimension_numbers = #tpu.dot_dimension_numbers<[1], [0], [0], [1], [0, 0, 1, 1], [], []>} : vector<32x128xbf16>, vector<128x16xbf16>, vector<32x16xf32> -> vector<32x16xf32>
    %c0_271 = arith.constant 0 : index
    %c0_272 = arith.constant 0 : index
    %c0_273 = arith.constant 0 : index
    %205 = vector.load %arg20[%c0_271, %c0_272, %c0_273] : memref<1x32x16xf32, #tpu.memory_space<vmem>>, vector<1x32x16xf32>
    %206 = vector.shape_cast %205 : vector<1x32x16xf32> to vector<32x16xf32>
    %207 = vector.shape_cast %204 : vector<32x16xf32> to vector<1x32x16xf32>
    tpu.vector_store %arg20[%c0_271, %c0_272, %c0_273], %207 {strides = array<i32>} : memref<1x32x16xf32, #tpu.memory_space<vmem>>, vector<1x32x16xf32>,
    return
  }
  func.func @transform_0(%arg0: i32) -> (i32, i32, i32) {
    %c0_i32 = arith.constant 0 : i32
    %c0_i32_0 = arith.constant 0 : i32
    %c0_i32_1 = arith.constant 0 : i32
    return %arg0, %c0_i32, %c0_i32_0 : i32, i32, i32
  }
  func.func @transform_1(%arg0: i32) -> (i32, i32) {
    %c0_i32 = arith.constant 0 : i32
    %c0_i32_0 = arith.constant 0 : i32
    %c0_i32_1 = arith.constant 0 : i32
    return %c0_i32, %c0_i32_0 : i32, i32
  }
  func.func @transform_2(%arg0: i32) -> (i32, i32) {
    %c0_i32 = arith.constant 0 : i32
    %c0_i32_0 = arith.constant 0 : i32
    %c0_i32_1 = arith.constant 0 : i32
    return %c0_i32, %c0_i32_0 : i32, i32
  }
  func.func @transform_3(%arg0: i32) -> (i32, i32) {
    %c0_i32 = arith.constant 0 : i32
    %c0_i32_0 = arith.constant 0 : i32
    %c0_i32_1 = arith.constant 0 : i32
    return %c0_i32, %c0_i32_0 : i32, i32
  }
  func.func @transform_4(%arg0: i32) -> (i32, i32) {
    %c0_i32 = arith.constant 0 : i32
    %c0_i32_0 = arith.constant 0 : i32
    %c0_i32_1 = arith.constant 0 : i32
    return %c0_i32, %c0_i32_0 : i32, i32
  }
  func.func @transform_5(%arg0: i32) -> (i32, i32) {
    %c0_i32 = arith.constant 0 : i32
    %c0_i32_0 = arith.constant 0 : i32
    %c0_i32_1 = arith.constant 0 : i32
    return %c0_i32, %c0_i32_0 : i32, i32
  }
  func.func @transform_6(%arg0: i32) -> (i32, i32) {
    %c0_i32 = arith.constant 0 : i32
    %c0_i32_0 = arith.constant 0 : i32
    %c0_i32_1 = arith.constant 0 : i32
    return %c0_i32, %c0_i32_0 : i32, i32
  }
  func.func @transform_7(%arg0: i32) -> (i32, i32) {
    %c0_i32 = arith.constant 0 : i32
    %c0_i32_0 = arith.constant 0 : i32
    %c0_i32_1 = arith.constant 0 : i32
    return %c0_i32, %c0_i32_0 : i32, i32
  }
  func.func @transform_8(%arg0: i32) -> (i32, i32) {
    %c0_i32 = arith.constant 0 : i32
    %c0_i32_0 = arith.constant 0 : i32
    %c0_i32_1 = arith.constant 0 : i32
    return %c0_i32, %c0_i32_0 : i32, i32
  }
  func.func @transform_9(%arg0: i32) -> (i32, i32) {
    %c0_i32 = arith.constant 0 : i32
    %c0_i32_0 = arith.constant 0 : i32
    %c0_i32_1 = arith.constant 0 : i32
    return %c0_i32, %c0_i32_0 : i32, i32
  }
  func.func @transform_10(%arg0: i32) -> (i32, i32) {
    %c0_i32 = arith.constant 0 : i32
    %c0_i32_0 = arith.constant 0 : i32
    %c0_i32_1 = arith.constant 0 : i32
    return %c0_i32, %c0_i32_0 : i32, i32
  }
  func.func @transform_11(%arg0: i32) -> (i32, i32) {
    %c0_i32 = arith.constant 0 : i32
    %c0_i32_0 = arith.constant 0 : i32
    %c0_i32_1 = arith.constant 0 : i32
    return %c0_i32, %c0_i32_0 : i32, i32
  }
  func.func @transform_12(%arg0: i32) -> (i32, i32) {
    %c0_i32 = arith.constant 0 : i32
    %c0_i32_0 = arith.constant 0 : i32
    %c0_i32_1 = arith.constant 0 : i32
    return %c0_i32, %c0_i32_0 : i32, i32
  }
  func.func @transform_13(%arg0: i32) -> (i32, i32) {
    %c0_i32 = arith.constant 0 : i32
    %c0_i32_0 = arith.constant 0 : i32
    %c0_i32_1 = arith.constant 0 : i32
    return %c0_i32, %c0_i32_0 : i32, i32
  }
  func.func @transform_14(%arg0: i32) -> (i32, i32) {
    %c0_i32 = arith.constant 0 : i32
    %c0_i32_0 = arith.constant 0 : i32
    %c0_i32_1 = arith.constant 0 : i32
    return %c0_i32, %c0_i32_0 : i32, i32
  }
  func.func @transform_15(%arg0: i32) -> (i32, i32) {
    %c0_i32 = arith.constant 0 : i32
    %c0_i32_0 = arith.constant 0 : i32
    %c0_i32_1 = arith.constant 0 : i32
    return %c0_i32, %c0_i32_0 : i32, i32
  }
  func.func @transform_16(%arg0: i32) -> (i32, i32) {
    %c0_i32 = arith.constant 0 : i32
    %c0_i32_0 = arith.constant 0 : i32
    %c0_i32_1 = arith.constant 0 : i32
    return %c0_i32, %c0_i32_0 : i32, i32
  }
  func.func @transform_17(%arg0: i32) -> (i32, i32) {
    %c0_i32 = arith.constant 0 : i32
    %c0_i32_0 = arith.constant 0 : i32
    %c0_i32_1 = arith.constant 0 : i32
    return %c0_i32, %c0_i32_0 : i32, i32
  }
  func.func @transform_18(%arg0: i32) -> (i32, i32) {
    %c0_i32 = arith.constant 0 : i32
    %c0_i32_0 = arith.constant 0 : i32
    %c0_i32_1 = arith.constant 0 : i32
    return %c0_i32, %c0_i32_0 : i32, i32
  }
  func.func @transform_19(%arg0: i32) -> (i32, i32, i32) {
    %c0_i32 = arith.constant 0 : i32
    %c0_i32_0 = arith.constant 0 : i32
    %c0_i32_1 = arith.constant 0 : i32
    return %arg0, %c0_i32, %c0_i32_0 : i32, i32, i32
  }
}

module attributes {stable_mosaic.version = 11 : i64} {
  func.func @_mlp_kernel(%arg0: memref<2x512xf32, #tpu.memory_space<vmem>>, %arg1: memref<512x256xbf16, #tpu.memory_space<vmem>>, %arg2: memref<1x256xf32, #tpu.memory_space<vmem>>, %arg3: memref<256x128xbf16, #tpu.memory_space<vmem>>, %arg4: memref<1x128xf32, #tpu.memory_space<vmem>>, %arg5: memref<2x128xf32, #tpu.memory_space<vmem>>) attributes {dimension_semantics = [], scalar_prefetch = 0 : i64, scratch_operands = 0 : i64, tpu.core_type = #tpu.core_type<tc>} {
    %c0 = arith.constant 0 : index
    %c0_0 = arith.constant 0 : index
    %0 = vector.load %arg0[%c0, %c0_0] : memref<2x512xf32, #tpu.memory_space<vmem>>, vector<2x512xf32>
    %1 = arith.truncf %0 : vector<2x512xf32> to vector<2x512xbf16>
    %c0_1 = arith.constant 0 : index
    %c0_2 = arith.constant 0 : index
    %2 = vector.load %arg1[%c0_1, %c0_2] : memref<512x256xbf16, #tpu.memory_space<vmem>>, vector<512x256xbf16>
    %cst = arith.constant dense<0.000000e+00> : vector<2x256xf32>
    %3 = tpu.matmul %1, %2, %cst {dimension_numbers = #tpu.dot_dimension_numbers<[1], [0], [0], [1], [0, 0, 1, 1], [], []>} : vector<2x512xbf16>, vector<512x256xbf16>, vector<2x256xf32> -> vector<2x256xf32>
    %c0_3 = arith.constant 0 : index
    %c0_4 = arith.constant 0 : index
    %4 = vector.load %arg2[%c0_3, %c0_4] : memref<1x256xf32, #tpu.memory_space<vmem>>, vector<1x256xf32>
    %5 = vector.broadcast %4 : vector<1x256xf32> to vector<2x256xf32>
    %6 = arith.addf %3, %5 : vector<2x256xf32>
    %cst_5 = arith.constant 0.000000e+00 : f32
    %7 = vector.broadcast %cst_5 : f32 to vector<2x256xf32>
    %8 = arith.maximumf %6, %7 : vector<2x256xf32>
    %9 = arith.truncf %8 : vector<2x256xf32> to vector<2x256xbf16>
    %c0_6 = arith.constant 0 : index
    %c0_7 = arith.constant 0 : index
    %10 = vector.load %arg3[%c0_6, %c0_7] : memref<256x128xbf16, #tpu.memory_space<vmem>>, vector<256x128xbf16>
    %cst_8 = arith.constant dense<0.000000e+00> : vector<2x128xf32>
    %11 = tpu.matmul %9, %10, %cst_8 {dimension_numbers = #tpu.dot_dimension_numbers<[1], [0], [0], [1], [0, 0, 1, 1], [], []>} : vector<2x256xbf16>, vector<256x128xbf16>, vector<2x128xf32> -> vector<2x128xf32>
    %c0_9 = arith.constant 0 : index
    %c0_10 = arith.constant 0 : index
    %12 = vector.load %arg4[%c0_9, %c0_10] : memref<1x128xf32, #tpu.memory_space<vmem>>, vector<1x128xf32>
    %13 = vector.broadcast %12 : vector<1x128xf32> to vector<2x128xf32>
    %14 = arith.addf %11, %13 : vector<2x128xf32>
    %c0_11 = arith.constant 0 : index
    %c0_12 = arith.constant 0 : index
    %15 = vector.load %arg5[%c0_11, %c0_12] : memref<2x128xf32, #tpu.memory_space<vmem>>, vector<2x128xf32>
    tpu.vector_store %arg5[%c0_11, %c0_12], %14 {strides = array<i32>} : memref<2x128xf32, #tpu.memory_space<vmem>>, vector<2x128xf32>,
    return
  }
}

</mosaic_0001>

<llo_original>
// kernel: small_vgg_forward.3
$region0: #{small_vgg_forward.3}
  #allocation0 [shape = 'u32[]', space=smem, size = 0x4, offset = 0x4, fixed_abs, tag = 'smem constant byte address 0x4 - core index']
  #allocation1 [shape = 'u32[144,128]{1,0:T(1,128)}', space=vmem, size = 0x12000, scoped, tag = 'internal scratch']
  %s0 = inlined_call_operand.vmem [shape: f32[2,512], index: 0, kind: input, shape index: {}]
  %s1 = inlined_call_operand.vmem [shape: bf16[512,256], index: 1, kind: input, shape index: {}]
  %s2 = inlined_call_operand.vmem [shape: f32[1,256], index: 2, kind: input, shape index: {}]
  %s3 = inlined_call_operand.vmem [shape: bf16[256,128], index: 3, kind: input, shape index: {}]
  %s4 = inlined_call_operand.vmem [shape: f32[1,128], index: 4, kind: input, shape index: {}]
  %s5 = inlined_call_operand.hbm [shape: f32[2,128], index: 5, kind: output, shape index: {}]
  %s6 = sld [smem:[#allocation0]]
  $region30: #{small_vgg_forward.3} parent=0
    _
  %s8 = ssub.s32 1, %s6
  %s9 = scalar_select 0, %s8, %s6
  $region1: #{small_vgg_forward.3} parent=0
    #allocation2 [shape = 'u8[1024]{0}', space=vmem, size = 0x400, scoped, tag = 'output window, operand 0, single buffered']
    #allocation3 [shape = 's32[1]{0}', space=sflag, size = 0x4, scoped, tag = 'scoped memory for small_vgg_forward.3']
    %10 = vsyncpa [#allocation3], 0
    // Predicated region
    $region2: #{small_vgg_forward.3} parent=1 // pred_check
      _
    $region3: #{small_vgg_forward.3} parent=1 // pred_check_branch
      %12 = sbr.rel (0) target = $region5
    $region4: #{small_vgg_forward.3} parent=1 // pred_region
      _
    $region5: #{small_vgg_forward.3} parent=1 // pred_fallthru
      _
    // Predicated region
    $region6: #{small_vgg_forward.3} parent=1 // pred_check
      _
    $region7: #{small_vgg_forward.3} parent=1 // pred_check_branch
      %14 = sbr.rel (0) target = $region9
    $region8: #{small_vgg_forward.3} parent=1 // pred_region
      _
    $region9: #{small_vgg_forward.3} parent=1 // pred_fallthru
      _
    // Predicated region
    $region10: #{small_vgg_forward.3} parent=1 // pred_check
      _
    $region11: #{small_vgg_forward.3} parent=1 // pred_check_branch
      %16 = sbr.rel (0) target = $region13
    $region12: #{small_vgg_forward.3} parent=1 // pred_region
      _
    $region13: #{small_vgg_forward.3} parent=1 // pred_fallthru
      _
    // Predicated region
    $region14: #{small_vgg_forward.3} parent=1 // pred_check
      _
    $region15: #{small_vgg_forward.3} parent=1 // pred_check_branch
      %18 = sbr.rel (0) target = $region17
    $region16: #{small_vgg_forward.3} parent=1 // pred_region
      _
    $region17: #{small_vgg_forward.3} parent=1 // pred_fallthru
      _
    // Predicated region
    $region18: #{small_vgg_forward.3} parent=1 // pred_check
      _
    $region19: #{small_vgg_forward.3} parent=1 // pred_check_branch
      %20 = sbr.rel (0) target = $region21
    $region20: #{small_vgg_forward.3} parent=1 // pred_region
      _
    $region21: #{small_vgg_forward.3} parent=1 // pred_fallthru
      _
    %v22 = vld [vmem:[%s0] sm:$0xff]
    %v24 = vcombine.high %v22, %v22
    %v26 = vunpack.c.l.s4 1983009808
    %v27 = vunpack.c.0.s8 %v26
    %v28 = vlaneseq
    %v29 = vshrl.u32 %v28, 7
    %v30 = vsub.s32 %v27, %v29
    %v31 = vrot.slane %v22, %v30
    %v33 = vunpack.c.l.s4 1983009808
    %v34 = vunpack.c.0.s8 %v33
    %v35 = vlaneseq
    %v36 = vshrl.u32 %v35, 7
    %v37 = vsub.s32 %v34, %v36
    %v38 = vrot.slane %v24, %v37
    %v39 = vcombine.high %v31, %v31
    %v40 = vcombine.high %v38, %v38
    %v45 = vpack.c.bf16 %v31, %v31
    %v46 = vpack.c.bf16 %v39, %v39
    %v47 = vpack.c.bf16 %v38, %v38
    %v48 = vpack.c.bf16 %v40, %v40
    %v49 = vld [vmem:[%s1] sm:$0xff]
    %v50 = vld [vmem:[%s1 + $0x8] sm:$0xff]
    %v51 = vld [vmem:[%s1 + $0x10] sm:$0xff]
    %v52 = vld [vmem:[%s1 + $0x18] sm:$0xff]
    %v53 = vld [vmem:[%s1 + $0x20] sm:$0xff]
    %v54 = vld [vmem:[%s1 + $0x28] sm:$0xff]
    %v55 = vld [vmem:[%s1 + $0x30] sm:$0xff]
    %v56 = vld [vmem:[%s1 + $0x38] sm:$0xff]
    %v57 = vld [vmem:[%s1 + $0x40] sm:$0xff]
    %v58 = vld [vmem:[%s1 + $0x48] sm:$0xff]
    %v59 = vld [vmem:[%s1 + $0x50] sm:$0xff]
    %v60 = vld [vmem:[%s1 + $0x58] sm:$0xff]
    %v61 = vld [vmem:[%s1 + $0x60] sm:$0xff]
    %v62 = vld [vmem:[%s1 + $0x68] sm:$0xff]
    %v63 = vld [vmem:[%s1 + $0x70] sm:$0xff]
    %v64 = vld [vmem:[%s1 + $0x78] sm:$0xff]
    %v65 = vld [vmem:[%s1 + $0x80] sm:$0xff]
    %v66 = vld [vmem:[%s1 + $0x88] sm:$0xff]
    %v67 = vld [vmem:[%s1 + $0x90] sm:$0xff]
    %v68 = vld [vmem:[%s1 + $0x98] sm:$0xff]
    %v69 = vld [vmem:[%s1 + $0xa0] sm:$0xff]
    %v70 = vld [vmem:[%s1 + $0xa8] sm:$0xff]
    %v71 = vld [vmem:[%s1 + $0xb0] sm:$0xff]
    %v72 = vld [vmem:[%s1 + $0xb8] sm:$0xff]
    %v73 = vld [vmem:[%s1 + $0xc0] sm:$0xff]
    %v74 = vld [vmem:[%s1 + $0xc8] sm:$0xff]
    %v75 = vld [vmem:[%s1 + $0xd0] sm:$0xff]
    %v76 = vld [vmem:[%s1 + $0xd8] sm:$0xff]
    %v77 = vld [vmem:[%s1 + $0xe0] sm:$0xff]
    %v78 = vld [vmem:[%s1 + $0xe8] sm:$0xff]
    %v79 = vld [vmem:[%s1 + $0xf0] sm:$0xff]
    %v80 = vld [vmem:[%s1 + $0xf8] sm:$0xff]
    %v81 = vld [vmem:[%s1 + $0x100] sm:$0xff]
    %v82 = vld [vmem:[%s1 + $0x108] sm:$0xff]
    %v83 = vld [vmem:[%s1 + $0x110] sm:$0xff]
    %v84 = vld [vmem:[%s1 + $0x118] sm:$0xff]
    %v85 = vld [vmem:[%s1 + $0x120] sm:$0xff]
    %v86 = vld [vmem:[%s1 + $0x128] sm:$0xff]
    %v87 = vld [vmem:[%s1 + $0x130] sm:$0xff]
    %v88 = vld [vmem:[%s1 + $0x138] sm:$0xff]
    %v89 = vld [vmem:[%s1 + $0x140] sm:$0xff]
    %v90 = vld [vmem:[%s1 + $0x148] sm:$0xff]
    %v91 = vld [vmem:[%s1 + $0x150] sm:$0xff]
    %v92 = vld [vmem:[%s1 + $0x158] sm:$0xff]
    %v93 = vld [vmem:[%s1 + $0x160] sm:$0xff]
    %v94 = vld [vmem:[%s1 + $0x168] sm:$0xff]
    %v95 = vld [vmem:[%s1 + $0x170] sm:$0xff]
    %v96 = vld [vmem:[%s1 + $0x178] sm:$0xff]
    %v97 = vld [vmem:[%s1 + $0x180] sm:$0xff]
    %v98 = vld [vmem:[%s1 + $0x188] sm:$0xff]
    %v99 = vld [vmem:[%s1 + $0x190] sm:$0xff]
    %v100 = vld [vmem:[%s1 + $0x198] sm:$0xff]
    %v101 = vld [vmem:[%s1 + $0x1a0] sm:$0xff]
    %v102 = vld [vmem:[%s1 + $0x1a8] sm:$0xff]
    %v103 = vld [vmem:[%s1 + $0x1b0] sm:$0xff]
    %v104 = vld [vmem:[%s1 + $0x1b8] sm:$0xff]
    %v105 = vld [vmem:[%s1 + $0x1c0] sm:$0xff]
    %v106 = vld [vmem:[%s1 + $0x1c8] sm:$0xff]
    %v107 = vld [vmem:[%s1 + $0x1d0] sm:$0xff]
    %v108 = vld [vmem:[%s1 + $0x1d8] sm:$0xff]
    %v109 = vld [vmem:[%s1 + $0x1e0] sm:$0xff]
    %v110 = vld [vmem:[%s1 + $0x1e8] sm:$0xff]
    %v111 = vld [vmem:[%s1 + $0x1f0] sm:$0xff]
    %v112 = vld [vmem:[%s1 + $0x1f8] sm:$0xff]
    %v113 = vld [vmem:[%s2] sm:$0x3]
    %v115 = vlaneseq
    %v116 = vshrl.u32 %v115, 7
    %v117 = vsub.s32 0, %v116
    %v118 = vrot.slane %v113, %v117
    %v119 = vlaneseq
    %v120 = vshrl.u32 %v119, 7
    %v121 = vsub.s32 1, %v120
    %v122 = vrot.slane %v113, %v121
    %v189 = vunpack.c.l.b16 %v49
    %v190 = vunpack.c.h.b16 %v49
    %v191 = vunpack.c.l.b16 %v50
    %v192 = vunpack.c.h.b16 %v50
    %v193 = vunpack.c.l.b16 %v51
    %v194 = vunpack.c.h.b16 %v51
    %v195 = vunpack.c.l.b16 %v52
    %v196 = vunpack.c.h.b16 %v52
    %v197 = vunpack.c.l.b16 %v53
    %v198 = vunpack.c.h.b16 %v53
    %v199 = vunpack.c.l.b16 %v54
    %v200 = vunpack.c.h.b16 %v54
    %v201 = vunpack.c.l.b16 %v55
    %v202 = vunpack.c.h.b16 %v55
    %v203 = vunpack.c.l.b16 %v56
    %v204 = vunpack.c.h.b16 %v56
    %v205 = vunpack.c.l.b16 %v57
    %v206 = vunpack.c.h.b16 %v57
    %v207 = vunpack.c.l.b16 %v58
    %v208 = vunpack.c.h.b16 %v58
    %v209 = vunpack.c.l.b16 %v59
    %v210 = vunpack.c.h.b16 %v59
    %v211 = vunpack.c.l.b16 %v60
    %v212 = vunpack.c.h.b16 %v60
    %v213 = vunpack.c.l.b16 %v61
    %v214 = vunpack.c.h.b16 %v61
    %v215 = vunpack.c.l.b16 %v62
    %v216 = vunpack.c.h.b16 %v62
    %v217 = vunpack.c.l.b16 %v63
    %v218 = vunpack.c.h.b16 %v63
    %v219 = vunpack.c.l.b16 %v64
    %v220 = vunpack.c.h.b16 %v64
    %v221 = vunpack.c.l.b16 %v65
    %v222 = vunpack.c.h.b16 %v65
    %v223 = vunpack.c.l.b16 %v66
    %v224 = vunpack.c.h.b16 %v66
    %v225 = vunpack.c.l.b16 %v67
    %v226 = vunpack.c.h.b16 %v67
    %v227 = vunpack.c.l.b16 %v68
    %v228 = vunpack.c.h.b16 %v68
    %v229 = vunpack.c.l.b16 %v69
    %v230 = vunpack.c.h.b16 %v69
    %v231 = vunpack.c.l.b16 %v70
    %v232 = vunpack.c.h.b16 %v70
    %v233 = vunpack.c.l.b16 %v71
    %v234 = vunpack.c.h.b16 %v71
    %v235 = vunpack.c.l.b16 %v72
    %v236 = vunpack.c.h.b16 %v72
    %v237 = vunpack.c.l.b16 %v73
    %v238 = vunpack.c.h.b16 %v73
    %v239 = vunpack.c.l.b16 %v74
    %v240 = vunpack.c.h.b16 %v74
    %v241 = vunpack.c.l.b16 %v75
    %v242 = vunpack.c.h.b16 %v75
    %v243 = vunpack.c.l.b16 %v76
    %v244 = vunpack.c.h.b16 %v76
    %v245 = vunpack.c.l.b16 %v77
    %v246 = vunpack.c.h.b16 %v77
    %v247 = vunpack.c.l.b16 %v78
    %v248 = vunpack.c.h.b16 %v78
    %v249 = vunpack.c.l.b16 %v79
    %v250 = vunpack.c.h.b16 %v79
    %v251 = vunpack.c.l.b16 %v80
    %v252 = vunpack.c.h.b16 %v80
    %v253 = vunpack.c.l.b16 %v81
    %v254 = vunpack.c.h.b16 %v81
    %v255 = vunpack.c.l.b16 %v82
    %v256 = vunpack.c.h.b16 %v82
    %v257 = vunpack.c.l.b16 %v83
    %v258 = vunpack.c.h.b16 %v83
    %v259 = vunpack.c.l.b16 %v84
    %v260 = vunpack.c.h.b16 %v84
    %v261 = vunpack.c.l.b16 %v85
    %v262 = vunpack.c.h.b16 %v85
    %v263 = vunpack.c.l.b16 %v86
    %v264 = vunpack.c.h.b16 %v86
    %v265 = vunpack.c.l.b16 %v87
    %v266 = vunpack.c.h.b16 %v87
    %v267 = vunpack.c.l.b16 %v88
    %v268 = vunpack.c.h.b16 %v88
    %v269 = vunpack.c.l.b16 %v89
    %v270 = vunpack.c.h.b16 %v89
    %v271 = vunpack.c.l.b16 %v90
    %v272 = vunpack.c.h.b16 %v90
    %v273 = vunpack.c.l.b16 %v91
    %v274 = vunpack.c.h.b16 %v91
    %v275 = vunpack.c.l.b16 %v92
    %v276 = vunpack.c.h.b16 %v92
    %v277 = vunpack.c.l.b16 %v93
    %v278 = vunpack.c.h.b16 %v93
    %v279 = vunpack.c.l.b16 %v94
    %v280 = vunpack.c.h.b16 %v94
    %v281 = vunpack.c.l.b16 %v95
    %v282 = vunpack.c.h.b16 %v95
    %v283 = vunpack.c.l.b16 %v96
    %v284 = vunpack.c.h.b16 %v96
    %v285 = vunpack.c.l.b16 %v97
    %v286 = vunpack.c.h.b16 %v97
    %v287 = vunpack.c.l.b16 %v98
    %v288 = vunpack.c.h.b16 %v98
    %v289 = vunpack.c.l.b16 %v99
    %v290 = vunpack.c.h.b16 %v99
    %v291 = vunpack.c.l.b16 %v100
    %v292 = vunpack.c.h.b16 %v100
    %v293 = vunpack.c.l.b16 %v101
    %v294 = vunpack.c.h.b16 %v101
    %v295 = vunpack.c.l.b16 %v102
    %v296 = vunpack.c.h.b16 %v102
    %v297 = vunpack.c.l.b16 %v103
    %v298 = vunpack.c.h.b16 %v103
    %v299 = vunpack.c.l.b16 %v104
    %v300 = vunpack.c.h.b16 %v104
    %v301 = vunpack.c.l.b16 %v105
    %v302 = vunpack.c.h.b16 %v105
    %v303 = vunpack.c.l.b16 %v106
    %v304 = vunpack.c.h.b16 %v106
    %v305 = vunpack.c.l.b16 %v107
    %v306 = vunpack.c.h.b16 %v107
    %v307 = vunpack.c.l.b16 %v108
    %v308 = vunpack.c.h.b16 %v108
    %v309 = vunpack.c.l.b16 %v109
    %v310 = vunpack.c.h.b16 %v109
    %v311 = vunpack.c.l.b16 %v110
    %v312 = vunpack.c.h.b16 %v110
    %v313 = vunpack.c.l.b16 %v111
    %v314 = vunpack.c.h.b16 %v111
    %v315 = vunpack.c.l.b16 %v112
    %v316 = vunpack.c.h.b16 %v112
    %v317 = vpack.c.b16 %v191, %v189
    %v318 = vpack.c.b16 %v192, %v190
    %v319 = vpack.c.b16 %v195, %v193
    %v320 = vpack.c.b16 %v196, %v194
    %v321 = vpack.c.b16 %v199, %v197
    %v322 = vpack.c.b16 %v200, %v198
    %v323 = vpack.c.b16 %v203, %v201
    %v324 = vpack.c.b16 %v204, %v202
    %v325 = vpack.c.b16 %v207, %v205
    %v326 = vpack.c.b16 %v208, %v206
    %v327 = vpack.c.b16 %v211, %v209
    %v328 = vpack.c.b16 %v212, %v210
    %v329 = vpack.c.b16 %v215, %v213
    %v330 = vpack.c.b16 %v216, %v214
    %v331 = vpack.c.b16 %v219, %v217
    %v332 = vpack.c.b16 %v220, %v218
    %v333 = vpack.c.b16 %v223, %v221
    %v334 = vpack.c.b16 %v224, %v222
    %v335 = vpack.c.b16 %v227, %v225
    %v336 = vpack.c.b16 %v228, %v226
    %v337 = vpack.c.b16 %v231, %v229
    %v338 = vpack.c.b16 %v232, %v230
    %v339 = vpack.c.b16 %v235, %v233
    %v340 = vpack.c.b16 %v236, %v234
    %v341 = vpack.c.b16 %v239, %v237
    %v342 = vpack.c.b16 %v240, %v238
    %v343 = vpack.c.b16 %v243, %v241
    %v344 = vpack.c.b16 %v244, %v242
    %v345 = vpack.c.b16 %v247, %v245
    %v346 = vpack.c.b16 %v248, %v246
    %v347 = vpack.c.b16 %v251, %v249
    %v348 = vpack.c.b16 %v252, %v250
    %v349 = vpack.c.b16 %v255, %v253
    %v350 = vpack.c.b16 %v256, %v254
    %v351 = vpack.c.b16 %v259, %v257
    %v352 = vpack.c.b16 %v260, %v258
    %v353 = vpack.c.b16 %v263, %v261
    %v354 = vpack.c.b16 %v264, %v262
    %v355 = vpack.c.b16 %v267, %v265
    %v356 = vpack.c.b16 %v268, %v266
    %v357 = vpack.c.b16 %v271, %v269
    %v358 = vpack.c.b16 %v272, %v270
    %v359 = vpack.c.b16 %v275, %v273
    %v360 = vpack.c.b16 %v276, %v274
    %v361 = vpack.c.b16 %v279, %v277
    %v362 = vpack.c.b16 %v280, %v278
    %v363 = vpack.c.b16 %v283, %v281
    %v364 = vpack.c.b16 %v284, %v282
    %v365 = vpack.c.b16 %v287, %v285
    %v366 = vpack.c.b16 %v288, %v286
    %v367 = vpack.c.b16 %v291, %v289
    %v368 = vpack.c.b16 %v292, %v290
    %v369 = vpack.c.b16 %v295, %v293
    %v370 = vpack.c.b16 %v296, %v294
    %v371 = vpack.c.b16 %v299, %v297
    %v372 = vpack.c.b16 %v300, %v298
    %v373 = vpack.c.b16 %v303, %v301
    %v374 = vpack.c.b16 %v304, %v302
    %v375 = vpack.c.b16 %v307, %v305
    %v376 = vpack.c.b16 %v308, %v306
    %v377 = vpack.c.b16 %v311, %v309
    %v378 = vpack.c.b16 %v312, %v310
    %v379 = vpack.c.b16 %v315, %v313
    %v380 = vpack.c.b16 %v316, %v314
    %445 = vmatprep.subr.bf16.mxu0 %v318
    %446 = vmatpush1.bf16.msra.mxu0 %v317
    %447 = vmatprep.subr.bf16.mxu0 %v320
    %448 = vmatpush1.bf16.msra.mxu0 %v319
    %449 = vmatprep.subr.bf16.mxu0 %v322
    %450 = vmatpush1.bf16.msra.mxu0 %v321
    %451 = vmatprep.subr.bf16.mxu0 %v324
    %452 = vmatpush1.bf16.msra.mxu0 %v323
    %453 = vmatprep.subr.bf16.mxu0 %v326
    %454 = vmatpush1.bf16.msra.mxu0 %v325
    %455 = vmatprep.subr.bf16.mxu0 %v328
    %456 = vmatpush1.bf16.msra.mxu0 %v327
    %457 = vmatprep.subr.bf16.mxu0 %v330
    %458 = vmatpush1.bf16.msra.mxu0 %v329
    %459 = vmatprep.subr.bf16.mxu0 %v332
    %460 = vmatpush1.bf16.msra.mxu0 %v331
    %461 = vmatprep.subr.bf16.mxu0 %v334
    %462 = vmatpush1.bf16.msra.mxu0 %v333
    %463 = vmatprep.subr.bf16.mxu0 %v336
    %464 = vmatpush1.bf16.msra.mxu0 %v335
    %465 = vmatprep.subr.bf16.mxu0 %v338
    %466 = vmatpush1.bf16.msra.mxu0 %v337
    %467 = vmatprep.subr.bf16.mxu0 %v340
    %468 = vmatpush1.bf16.msra.mxu0 %v339
    %469 = vmatprep.subr.bf16.mxu0 %v342
    %470 = vmatpush1.bf16.msra.mxu0 %v341
    %471 = vmatprep.subr.bf16.mxu0 %v344
    %472 = vmatpush1.bf16.msra.mxu0 %v343
    %473 = vmatprep.subr.bf16.mxu0 %v346
    %474 = vmatpush1.bf16.msra.mxu0 %v345
    %475 = vmatprep.subr.bf16.mxu0 %v348
    %476 = vmatpush1.bf16.msra.mxu0 %v347
    %477 = vmatprep.mubr.bf16.mxu0 %v46
    %478 = vmatmul.mubr.bf16.gmra.mrb[0].mxu0 %v45
    %v479 = vpop.f32.mrb[0].mxu0
    %v480 = vadd.f32 %v118, %v479
    %v481 = vpop.f32.mrb[0].mxu0
    %v482 = vadd.f32 %v122, %v481
    %v483 = vpop.f32.mrb[0].mxu0
    %v484 = vpop.f32.mrb[0].mxu0
    %485 = vdwg.mxu0
    %486 = vmatprep.subr.bf16.mxu0 %v350
    %487 = vmatpush1.bf16.msra.mxu0 %v349
    %488 = vmatprep.subr.bf16.mxu0 %v352
    %489 = vmatpush1.bf16.msra.mxu0 %v351
    %490 = vmatprep.subr.bf16.mxu0 %v354
    %491 = vmatpush1.bf16.msra.mxu0 %v353
    %492 = vmatprep.subr.bf16.mxu0 %v356
    %493 = vmatpush1.bf16.msra.mxu0 %v355
    %494 = vmatprep.subr.bf16.mxu0 %v358
    %495 = vmatpush1.bf16.msra.mxu0 %v357
    %496 = vmatprep.subr.bf16.mxu0 %v360
    %497 = vmatpush1.bf16.msra.mxu0 %v359
    %498 = vmatprep.subr.bf16.mxu0 %v362
    %499 = vmatpush1.bf16.msra.mxu0 %v361
    %500 = vmatprep.subr.bf16.mxu0 %v364
    %501 = vmatpush1.bf16.msra.mxu0 %v363
    %502 = vmatprep.subr.bf16.mxu0 %v366
    %503 = vmatpush1.bf16.msra.mxu0 %v365
    %504 = vmatprep.subr.bf16.mxu0 %v368
    %505 = vmatpush1.bf16.msra.mxu0 %v367
    %506 = vmatprep.subr.bf16.mxu0 %v370
    %507 = vmatpush1.bf16.msra.mxu0 %v369
    %508 = vmatprep.subr.bf16.mxu0 %v372
    %509 = vmatpush1.bf16.msra.mxu0 %v371
    %510 = vmatprep.subr.bf16.mxu0 %v374
    %511 = vmatpush1.bf16.msra.mxu0 %v373
    %512 = vmatprep.subr.bf16.mxu0 %v376
    %513 = vmatpush1.bf16.msra.mxu0 %v375
    %514 = vmatprep.subr.bf16.mxu0 %v378
    %515 = vmatpush1.bf16.msra.mxu0 %v377
    %516 = vmatprep.subr.bf16.mxu0 %v380
    %517 = vmatpush1.bf16.msra.mxu0 %v379
    %518 = vmatprep.mubr.bf16.mxu0 %v48
    %519 = vmatmul.mubr.bf16.gmra.mrb[0].mxu0 %v47
    %v520 = vpop.f32.mrb[0].mxu0
    %v521 = vadd.f32 %v480, %v520
    %v522 = vpop.f32.mrb[0].mxu0
    %v523 = vadd.f32 %v482, %v522
    %v524 = vpop.f32.mrb[0].mxu0
    %v525 = vpop.f32.mrb[0].mxu0
    %526 = vdwg.mxu0
    %v527 = vmax.f32 %v521, 0.0
    %v528 = vmax.f32 %v523, 0.0
    %v529 = vpack.c.bf16 %v527, %v527
    %v530 = vpack.c.bf16 %v528, %v528
    %v531 = vld [vmem:[%s3] sm:$0xf]
    %v532 = vld [vmem:[%s3 + $0x4] sm:$0xf]
    %v533 = vld [vmem:[%s3 + $0x8] sm:$0xf]
    %v534 = vld [vmem:[%s3 + $0xc] sm:$0xf]
    %v535 = vld [vmem:[%s3 + $0x10] sm:$0xf]
    %v536 = vld [vmem:[%s3 + $0x14] sm:$0xf]
    %v537 = vld [vmem:[%s3 + $0x18] sm:$0xf]
    %v538 = vld [vmem:[%s3 + $0x1c] sm:$0xf]
    %v539 = vld [vmem:[%s3 + $0x20] sm:$0xf]
    %v540 = vld [vmem:[%s3 + $0x24] sm:$0xf]
    %v541 = vld [vmem:[%s3 + $0x28] sm:$0xf]
    %v542 = vld [vmem:[%s3 + $0x2c] sm:$0xf]
    %v543 = vld [vmem:[%s3 + $0x30] sm:$0xf]
    %v544 = vld [vmem:[%s3 + $0x34] sm:$0xf]
    %v545 = vld [vmem:[%s3 + $0x38] sm:$0xf]
    %v546 = vld [vmem:[%s3 + $0x3c] sm:$0xf]
    %v547 = vld [vmem:[%s3 + $0x40] sm:$0xf]
    %v548 = vld [vmem:[%s3 + $0x44] sm:$0xf]
    %v549 = vld [vmem:[%s3 + $0x48] sm:$0xf]
    %v550 = vld [vmem:[%s3 + $0x4c] sm:$0xf]
    %v551 = vld [vmem:[%s3 + $0x50] sm:$0xf]
    %v552 = vld [vmem:[%s3 + $0x54] sm:$0xf]
    %v553 = vld [vmem:[%s3 + $0x58] sm:$0xf]
    %v554 = vld [vmem:[%s3 + $0x5c] sm:$0xf]
    %v555 = vld [vmem:[%s3 + $0x60] sm:$0xf]
    %v556 = vld [vmem:[%s3 + $0x64] sm:$0xf]
    %v557 = vld [vmem:[%s3 + $0x68] sm:$0xf]
    %v558 = vld [vmem:[%s3 + $0x6c] sm:$0xf]
    %v559 = vld [vmem:[%s3 + $0x70] sm:$0xf]
    %v560 = vld [vmem:[%s3 + $0x74] sm:$0xf]
    %v561 = vld [vmem:[%s3 + $0x78] sm:$0xf]
    %v562 = vld [vmem:[%s3 + $0x7c] sm:$0xf]
    %v563 = vld [vmem:[%s4] sm:$0x1]
    %v565 = vlaneseq
    %v566 = vshrl.u32 %v565, 7
    %v567 = vsub.s32 0, %v566
    %v568 = vrot.slane %v563, %v567
    %v602 = vunpack.c.l.b16 %v531
    %v603 = vunpack.c.l.b16 %v532
    %v604 = vunpack.c.l.b16 %v533
    %v605 = vunpack.c.l.b16 %v534
    %v606 = vunpack.c.l.b16 %v535
    %v607 = vunpack.c.l.b16 %v536
    %v608 = vunpack.c.l.b16 %v537
    %v609 = vunpack.c.l.b16 %v538
    %v610 = vunpack.c.l.b16 %v539
    %v611 = vunpack.c.l.b16 %v540
    %v612 = vunpack.c.l.b16 %v541
    %v613 = vunpack.c.l.b16 %v542
    %v614 = vunpack.c.l.b16 %v543
    %v615 = vunpack.c.l.b16 %v544
    %v616 = vunpack.c.l.b16 %v545
    %v617 = vunpack.c.l.b16 %v546
    %v618 = vunpack.c.l.b16 %v547
    %v619 = vunpack.c.l.b16 %v548
    %v620 = vunpack.c.l.b16 %v549
    %v621 = vunpack.c.l.b16 %v550
    %v622 = vunpack.c.l.b16 %v551
    %v623 = vunpack.c.l.b16 %v552
    %v624 = vunpack.c.l.b16 %v553
    %v625 = vunpack.c.l.b16 %v554
    %v626 = vunpack.c.l.b16 %v555
    %v627 = vunpack.c.l.b16 %v556
    %v628 = vunpack.c.l.b16 %v557
    %v629 = vunpack.c.l.b16 %v558
    %v630 = vunpack.c.l.b16 %v559
    %v631 = vunpack.c.l.b16 %v560
    %v632 = vunpack.c.l.b16 %v561
    %v633 = vunpack.c.l.b16 %v562
    %v634 = vpack.c.b16 %v603, %v602
    %v635 = vpack.c.b16 %v605, %v604
    %v636 = vpack.c.b16 %v607, %v606
    %v637 = vpack.c.b16 %v609, %v608
    %v638 = vpack.c.b16 %v611, %v610
    %v639 = vpack.c.b16 %v613, %v612
    %v640 = vpack.c.b16 %v615, %v614
    %v641 = vpack.c.b16 %v617, %v616
    %v642 = vpack.c.b16 %v619, %v618
    %v643 = vpack.c.b16 %v621, %v620
    %v644 = vpack.c.b16 %v623, %v622
    %v645 = vpack.c.b16 %v625, %v624
    %v646 = vpack.c.b16 %v627, %v626
    %v647 = vpack.c.b16 %v629, %v628
    %v648 = vpack.c.b16 %v631, %v630
    %v649 = vpack.c.b16 %v633, %v632
    %666 = vmatprep.subr.bf16.mxu0 0
    %667 = vmatpush1.bf16.msra.mxu0 %v634
    %668 = vmatprep.subr.bf16.mxu0 0
    %669 = vmatpush1.bf16.msra.mxu0 %v635
    %670 = vmatprep.subr.bf16.mxu0 0
    %671 = vmatpush1.bf16.msra.mxu0 %v636
    %672 = vmatprep.subr.bf16.mxu0 0
    %673 = vmatpush1.bf16.msra.mxu0 %v637
    %674 = vmatprep.subr.bf16.mxu0 0
    %675 = vmatpush1.bf16.msra.mxu0 %v638
    %676 = vmatprep.subr.bf16.mxu0 0
    %677 = vmatpush1.bf16.msra.mxu0 %v639
    %678 = vmatprep.subr.bf16.mxu0 0
    %679 = vmatpush1.bf16.msra.mxu0 %v640
    %680 = vmatprep.subr.bf16.mxu0 0
    %681 = vmatpush1.bf16.msra.mxu0 %v641
    %682 = vmatprep.subr.bf16.mxu0 0
    %683 = vmatpush1.bf16.msra.mxu0 %v642
    %684 = vmatprep.subr.bf16.mxu0 0
    %685 = vmatpush1.bf16.msra.mxu0 %v643
    %686 = vmatprep.subr.bf16.mxu0 0
    %687 = vmatpush1.bf16.msra.mxu0 %v644
    %688 = vmatprep.subr.bf16.mxu0 0
    %689 = vmatpush1.bf16.msra.mxu0 %v645
    %690 = vmatprep.subr.bf16.mxu0 0
    %691 = vmatpush1.bf16.msra.mxu0 %v646
    %692 = vmatprep.subr.bf16.mxu0 0
    %693 = vmatpush1.bf16.msra.mxu0 %v647
    %694 = vmatprep.subr.bf16.mxu0 0
    %695 = vmatpush1.bf16.msra.mxu0 %v648
    %696 = vmatprep.subr.bf16.mxu0 0
    %697 = vmatpush1.bf16.msra.mxu0 %v649
    %698 = vmatprep.mubr.bf16.mxu0 %v530
    %699 = vmatmul.mubr.bf16.gmra.mrb[0].mxu0 %v529
    %v700 = vpop.f32.mrb[0].mxu0
    %v701 = vadd.f32 %v568, %v700
    %v702 = vpop.f32.mrb[0].mxu0
    %v703 = vpop.f32.mrb[0].mxu0
    %v704 = vpop.f32.mrb[0].mxu0
    %705 = vdwg.mxu0
    %706 = vst [vmem:[#allocation2] sm:$0x3] %v701
    // Predicated region
    $region22: #{small_vgg_forward.3} parent=1 // pred_check
      _
    $region23: #{small_vgg_forward.3} parent=1 // pred_check_branch
      %708 = sbr.rel (0) target = $region25
    $region24: #{small_vgg_forward.3} parent=1 // pred_region
      %s710 = ssub.s32 32, 32
      %711 = vsyncadd [#allocation3], %s710
      %s713 = sshll.u32 [#allocation2], 4
      %s714 = int_to_ptr.vmem [resolvable:$true] %s713
      %716 = dma.vmem_to_hbm [thread:$0]  %s714, 32, %s5, [#allocation3]
    $region25: #{small_vgg_forward.3} parent=1 // pred_fallthru
      _
    // Predicated region
    $region26: #{small_vgg_forward.3} parent=1 // pred_check
      _
    $region27: #{small_vgg_forward.3} parent=1 // pred_check_branch
      %718 = sbr.rel (0) target = $region29
    $region28: #{small_vgg_forward.3} parent=1 // pred_region
      %719 = dma.done [#allocation3], 32
    $region29: #{small_vgg_forward.3} parent=1 // pred_fallthru
      _
    %720 = vsyncpa [#allocation3], 1

// kernel: small_vgg_forward.2
$region0: #{small_vgg_forward.2}
  #allocation0 [shape = 'u32[]', space=smem, size = 0x4, offset = 0x4, fixed_abs, tag = 'smem constant byte address 0x4 - core index']
  #allocation1 [shape = 'u32[144,128]{1,0:T(1,128)}', space=vmem, size = 0x12000, scoped, tag = 'internal scratch']
  #allocation2 [shape = 'f32[32,1536]{1,0:T(8,128)}', space=vmem, size = 0x30000, scoped, tag = 'scratch operand']
  #allocation3 [shape = 'f32[288,1280]{1,0:T(8,128)}', space=vmem, size = 0x168000, scoped, tag = 'scratch operand']
  %s0 = inlined_call_operand.vmem [shape: f32[2,8,1280], index: 0, kind: input, shape index: {}]
  %s1 = inlined_call_operand.vmem [shape: bf16[8,72], index: 1, kind: input, shape index: {}]
  %s2 = inlined_call_operand.vmem [shape: f32[8,1], index: 2, kind: input, shape index: {}]
  %s3 = inlined_call_operand.vmem [shape: bf16[16,72], index: 3, kind: input, shape index: {}]
  %s4 = inlined_call_operand.vmem [shape: f32[16,1], index: 4, kind: input, shape index: {}]
  %s5 = inlined_call_operand.vmem [shape: bf16[32,144], index: 5, kind: input, shape index: {}]
  %s6 = inlined_call_operand.vmem [shape: f32[32,1], index: 6, kind: input, shape index: {}]
  %s7 = inlined_call_operand.vmem [shape: bf16[32,288], index: 7, kind: input, shape index: {}]
  %s8 = inlined_call_operand.vmem [shape: f32[32,1], index: 8, kind: input, shape index: {}]
  %s9 = inlined_call_operand.vmem [shape: bf16[32,288], index: 9, kind: input, shape index: {}]
  %s10 = inlined_call_operand.vmem [shape: f32[32,1], index: 10, kind: input, shape index: {}]
  %s11 = inlined_call_operand.vmem [shape: bf16[32,288], index: 11, kind: input, shape index: {}]
  %s12 = inlined_call_operand.vmem [shape: f32[32,1], index: 12, kind: input, shape index: {}]
  %s13 = inlined_call_operand.vmem [shape: f32[1,1280], index: 13, kind: input, shape index: {}]
  %s14 = inlined_call_operand.vmem [shape: f32[1,384], index: 14, kind: input, shape index: {}]
  %s15 = inlined_call_operand.vmem [shape: f32[1,128], index: 15, kind: input, shape index: {}]
  %s16 = inlined_call_operand.vmem [shape: bf16[1280,384], index: 16, kind: input, shape index: {}]
  %s17 = inlined_call_operand.vmem [shape: bf16[384,128], index: 17, kind: input, shape index: {}]
  %s18 = inlined_call_operand.vmem [shape: bf16[128,16], index: 18, kind: input, shape index: {}]
  %s19 = inlined_call_operand.vmem [shape: f32[2,32,16], index: 19, kind: output, shape index: {}]
  %s20 = sld [smem:[#allocation0]]
  $region109: #{small_vgg_forward.2} parent=0
    _
  %s22 = ssub.s32 1, %s20
  %s23 = scalar_select 0, %s22, %s20
  loop: start=0, step=1, limit=4
  $region2: #{small_vgg_forward.2} parent=0 // loop_pre_header
    _
  $region3: #{small_vgg_forward.2} parent=0 // loop_header
    %s25 = sphi 0, %s29
    %p26 = scmp.ge.s32.totalorder %s25, 4
    %s35 = sphi 0, %s37
    %s38 = sphi 0, %s35
    %s39 = sphi 0, %s38
    %s55 = sphi 0, %s39
    %s59 = sphi 0, %s59
    %s61 = sphi 0, %s59
    %s62 = sphi 0, %s61
    %s76 = sphi 0, %s62
    %s80 = sphi 0, %s80
    %s82 = sphi 0, %s80
    %s83 = sphi 0, %s82
    %s97 = sphi 0, %s83
    %s101 = sphi 0, %s101
    %s103 = sphi 0, %s101
    %s104 = sphi 0, %s103
    %s118 = sphi 0, %s104
    %s122 = sphi 0, %s122
    %s124 = sphi 0, %s122
    %s125 = sphi 0, %s124
    %s139 = sphi 0, %s125
    %s143 = sphi 0, %s143
    %s145 = sphi 0, %s143
    %s146 = sphi 0, %s145
    %s160 = sphi 0, %s146
    %s164 = sphi 0, %s164
    %s166 = sphi 0, %s164
    %s167 = sphi 0, %s166
    %s181 = sphi 0, %s167
    %s185 = sphi 0, %s185
    %s187 = sphi 0, %s185
    %s188 = sphi 0, %s187
    %s202 = sphi 0, %s188
    %s206 = sphi 0, %s206
    %s208 = sphi 0, %s206
    %s209 = sphi 0, %s208
    %s223 = sphi 0, %s209
    %s227 = sphi 0, %s227
    %s229 = sphi 0, %s227
    %s230 = sphi 0, %s229
    %s244 = sphi 0, %s230
    %s248 = sphi 0, %s248
    %s250 = sphi 0, %s248
    %s251 = sphi 0, %s250
    %s265 = sphi 0, %s251
    %s269 = sphi 0, %s269
    %s271 = sphi 0, %s269
    %s272 = sphi 0, %s271
    %s286 = sphi 0, %s272
    %s290 = sphi 0, %s290
    %s292 = sphi 0, %s290
    %s293 = sphi 0, %s292
    %s307 = sphi 0, %s293
    %s311 = sphi 0, %s311
    %s313 = sphi 0, %s311
    %s314 = sphi 0, %s313
    %s328 = sphi 0, %s314
    %s332 = sphi 0, %s332
    %s334 = sphi 0, %s332
    %s335 = sphi 0, %s334
    %s349 = sphi 0, %s335
    %s353 = sphi 0, %s353
    %s355 = sphi 0, %s353
    %s356 = sphi 0, %s355
    %s370 = sphi 0, %s356
    %s374 = sphi 0, %s374
    %s376 = sphi 0, %s374
    %s377 = sphi 0, %s376
    %s391 = sphi 0, %s377
    %s395 = sphi 0, %s395
    %s397 = sphi 0, %s395
    %s398 = sphi 0, %s397
    %s412 = sphi 0, %s398
    %s416 = sphi 0, %s416
    %s418 = sphi 0, %s416
    %s419 = sphi 0, %s418
    %s433 = sphi 0, %s419
    %s439 = sphi 0, %s441
    %s442 = sphi 0, %s439
    %s443 = sphi 0, %s442
    %s459 = sphi 0, %s443
  $region4: #{small_vgg_forward.2} parent=0 // loop_header_branch
    %28 = sbr.rel (%p26) target = $region8
  $region5: #{small_vgg_forward.2} parent=0 // loop_body
    %s30 = ssub.s32 %s25, 1
    %s31 = ssub.s32 %s25, 2
    %s32 = sadd.s32 %s25, 1
    %s33 = ssub.s32 %s25, %s32
    %p34 = scmp.eq.s32.totalorder %s33, 0
    %s36 = sadd.s32 %s35, 1
    %s37 = scalar_select %p34, %s35, %s36
    %p40 = pneg %p34
    %p41 = scmp.eq.s32.totalorder %s25, 1
    %p42 = por %p40, %p41
    %p43 = scmp.ne.s32.totalorder %s35, %s38
    %p44 = scmp.eq.s32.totalorder %s25, 0
    %p45 = por %p43, %p44
    %p46 = scmp.ne.s32.totalorder %s35, %s38
    %p47 = scmp.eq.s32.totalorder %s30, 1
    %p48 = por %p46, %p47
    %p49 = scmp.ne.s32.totalorder %s38, %s39
    %p50 = scmp.eq.s32.totalorder %s30, 0
    %p51 = por %p49, %p50
    %p52 = scmp.ne.s32.totalorder %s38, %s39
    %p53 = scmp.eq.s32.totalorder %s31, 1
    %p54 = por %p52, %p53
    %p56 = scmp.ne.s32.totalorder %s39, %s55
    %p57 = scmp.eq.s32.totalorder %s31, 0
    %p58 = por %p56, %p57
    %s60 = sadd.s32 %s59, 1
    %p63 = scmp.eq.s32.totalorder %s25, 1
    %p64 = scmp.ne.s32.totalorder %s59, %s61
    %p65 = scmp.eq.s32.totalorder %s25, 0
    %p66 = por %p64, %p65
    %p67 = scmp.ne.s32.totalorder %s59, %s61
    %p68 = scmp.eq.s32.totalorder %s30, 1
    %p69 = por %p67, %p68
    %p70 = scmp.ne.s32.totalorder %s61, %s62
    %p71 = scmp.eq.s32.totalorder %s30, 0
    %p72 = por %p70, %p71
    %p73 = scmp.ne.s32.totalorder %s61, %s62
    %p74 = scmp.eq.s32.totalorder %s31, 1
    %p75 = por %p73, %p74
    %p77 = scmp.ne.s32.totalorder %s62, %s76
    %p78 = scmp.eq.s32.totalorder %s31, 0
    %p79 = por %p77, %p78
    %s81 = sadd.s32 %s80, 1
    %p84 = scmp.eq.s32.totalorder %s25, 1
    %p85 = scmp.ne.s32.totalorder %s80, %s82
    %p86 = scmp.eq.s32.totalorder %s25, 0
    %p87 = por %p85, %p86
    %p88 = scmp.ne.s32.totalorder %s80, %s82
    %p89 = scmp.eq.s32.totalorder %s30, 1
    %p90 = por %p88, %p89
    %p91 = scmp.ne.s32.totalorder %s82, %s83
    %p92 = scmp.eq.s32.totalorder %s30, 0
    %p93 = por %p91, %p92
    %p94 = scmp.ne.s32.totalorder %s82, %s83
    %p95 = scmp.eq.s32.totalorder %s31, 1
    %p96 = por %p94, %p95
    %p98 = scmp.ne.s32.totalorder %s83, %s97
    %p99 = scmp.eq.s32.totalorder %s31, 0
    %p100 = por %p98, %p99
    %s102 = sadd.s32 %s101, 1
    %p105 = scmp.eq.s32.totalorder %s25, 1
    %p106 = scmp.ne.s32.totalorder %s101, %s103
    %p107 = scmp.eq.s32.totalorder %s25, 0
    %p108 = por %p106, %p107
    %p109 = scmp.ne.s32.totalorder %s101, %s103
    %p110 = scmp.eq.s32.totalorder %s30, 1
    %p111 = por %p109, %p110
    %p112 = scmp.ne.s32.totalorder %s103, %s104
    %p113 = scmp.eq.s32.totalorder %s30, 0
    %p114 = por %p112, %p113
    %p115 = scmp.ne.s32.totalorder %s103, %s104
    %p116 = scmp.eq.s32.totalorder %s31, 1
    %p117 = por %p115, %p116
    %p119 = scmp.ne.s32.totalorder %s104, %s118
    %p120 = scmp.eq.s32.totalorder %s31, 0
    %p121 = por %p119, %p120
    %s123 = sadd.s32 %s122, 1
    %p126 = scmp.eq.s32.totalorder %s25, 1
    %p127 = scmp.ne.s32.totalorder %s122, %s124
    %p128 = scmp.eq.s32.totalorder %s25, 0
    %p129 = por %p127, %p128
    %p130 = scmp.ne.s32.totalorder %s122, %s124
    %p131 = scmp.eq.s32.totalorder %s30, 1
    %p132 = por %p130, %p131
    %p133 = scmp.ne.s32.totalorder %s124, %s125
    %p134 = scmp.eq.s32.totalorder %s30, 0
    %p135 = por %p133, %p134
    %p136 = scmp.ne.s32.totalorder %s124, %s125
    %p137 = scmp.eq.s32.totalorder %s31, 1
    %p138 = por %p136, %p137
    %p140 = scmp.ne.s32.totalorder %s125, %s139
    %p141 = scmp.eq.s32.totalorder %s31, 0
    %p142 = por %p140, %p141
    %s144 = sadd.s32 %s143, 1
    %p147 = scmp.eq.s32.totalorder %s25, 1
    %p148 = scmp.ne.s32.totalorder %s143, %s145
    %p149 = scmp.eq.s32.totalorder %s25, 0
    %p150 = por %p148, %p149
    %p151 = scmp.ne.s32.totalorder %s143, %s145
    %p152 = scmp.eq.s32.totalorder %s30, 1
    %p153 = por %p151, %p152
    %p154 = scmp.ne.s32.totalorder %s145, %s146
    %p155 = scmp.eq.s32.totalorder %s30, 0
    %p156 = por %p154, %p155
    %p157 = scmp.ne.s32.totalorder %s145, %s146
    %p158 = scmp.eq.s32.totalorder %s31, 1
    %p159 = por %p157, %p158
    %p161 = scmp.ne.s32.totalorder %s146, %s160
    %p162 = scmp.eq.s32.totalorder %s31, 0
    %p163 = por %p161, %p162
    %s165 = sadd.s32 %s164, 1
    %p168 = scmp.eq.s32.totalorder %s25, 1
    %p169 = scmp.ne.s32.totalorder %s164, %s166
    %p170 = scmp.eq.s32.totalorder %s25, 0
    %p171 = por %p169, %p170
    %p172 = scmp.ne.s32.totalorder %s164, %s166
    %p173 = scmp.eq.s32.totalorder %s30, 1
    %p174 = por %p172, %p173
    %p175 = scmp.ne.s32.totalorder %s166, %s167
    %p176 = scmp.eq.s32.totalorder %s30, 0
    %p177 = por %p175, %p176
    %p178 = scmp.ne.s32.totalorder %s166, %s167
    %p179 = scmp.eq.s32.totalorder %s31, 1
    %p180 = por %p178, %p179
    %p182 = scmp.ne.s32.totalorder %s167, %s181
    %p183 = scmp.eq.s32.totalorder %s31, 0
    %p184 = por %p182, %p183
    %s186 = sadd.s32 %s185, 1
    %p189 = scmp.eq.s32.totalorder %s25, 1
    %p190 = scmp.ne.s32.totalorder %s185, %s187
    %p191 = scmp.eq.s32.totalorder %s25, 0
    %p192 = por %p190, %p191
    %p193 = scmp.ne.s32.totalorder %s185, %s187
    %p194 = scmp.eq.s32.totalorder %s30, 1
    %p195 = por %p193, %p194
    %p196 = scmp.ne.s32.totalorder %s187, %s188
    %p197 = scmp.eq.s32.totalorder %s30, 0
    %p198 = por %p196, %p197
    %p199 = scmp.ne.s32.totalorder %s187, %s188
    %p200 = scmp.eq.s32.totalorder %s31, 1
    %p201 = por %p199, %p200
    %p203 = scmp.ne.s32.totalorder %s188, %s202
    %p204 = scmp.eq.s32.totalorder %s31, 0
    %p205 = por %p203, %p204
    %s207 = sadd.s32 %s206, 1
    %p210 = scmp.eq.s32.totalorder %s25, 1
    %p211 = scmp.ne.s32.totalorder %s206, %s208
    %p212 = scmp.eq.s32.totalorder %s25, 0
    %p213 = por %p211, %p212
    %p214 = scmp.ne.s32.totalorder %s206, %s208
    %p215 = scmp.eq.s32.totalorder %s30, 1
    %p216 = por %p214, %p215
    %p217 = scmp.ne.s32.totalorder %s208, %s209
    %p218 = scmp.eq.s32.totalorder %s30, 0
    %p219 = por %p217, %p218
    %p220 = scmp.ne.s32.totalorder %s208, %s209
    %p221 = scmp.eq.s32.totalorder %s31, 1
    %p222 = por %p220, %p221
    %p224 = scmp.ne.s32.totalorder %s209, %s223
    %p225 = scmp.eq.s32.totalorder %s31, 0
    %p226 = por %p224, %p225
    %s228 = sadd.s32 %s227, 1
    %p231 = scmp.eq.s32.totalorder %s25, 1
    %p232 = scmp.ne.s32.totalorder %s227, %s229
    %p233 = scmp.eq.s32.totalorder %s25, 0
    %p234 = por %p232, %p233
    %p235 = scmp.ne.s32.totalorder %s227, %s229
    %p236 = scmp.eq.s32.totalorder %s30, 1
    %p237 = por %p235, %p236
    %p238 = scmp.ne.s32.totalorder %s229, %s230
    %p239 = scmp.eq.s32.totalorder %s30, 0
    %p240 = por %p238, %p239
    %p241 = scmp.ne.s32.totalorder %s229, %s230
    %p242 = scmp.eq.s32.totalorder %s31, 1
    %p243 = por %p241, %p242
    %p245 = scmp.ne.s32.totalorder %s230, %s244
    %p246 = scmp.eq.s32.totalorder %s31, 0
    %p247 = por %p245, %p246
    %s249 = sadd.s32 %s248, 1
    %p252 = scmp.eq.s32.totalorder %s25, 1
    %p253 = scmp.ne.s32.totalorder %s248, %s250
    %p254 = scmp.eq.s32.totalorder %s25, 0
    %p255 = por %p253, %p254
    %p256 = scmp.ne.s32.totalorder %s248, %s250
    %p257 = scmp.eq.s32.totalorder %s30, 1
    %p258 = por %p256, %p257
    %p259 = scmp.ne.s32.totalorder %s250, %s251
    %p260 = scmp.eq.s32.totalorder %s30, 0
    %p261 = por %p259, %p260
    %p262 = scmp.ne.s32.totalorder %s250, %s251
    %p263 = scmp.eq.s32.totalorder %s31, 1
    %p264 = por %p262, %p263
    %p266 = scmp.ne.s32.totalorder %s251, %s265
    %p267 = scmp.eq.s32.totalorder %s31, 0
    %p268 = por %p266, %p267
    %s270 = sadd.s32 %s269, 1
    %p273 = scmp.eq.s32.totalorder %s25, 1
    %p274 = scmp.ne.s32.totalorder %s269, %s271
    %p275 = scmp.eq.s32.totalorder %s25, 0
    %p276 = por %p274, %p275
    %p277 = scmp.ne.s32.totalorder %s269, %s271
    %p278 = scmp.eq.s32.totalorder %s30, 1
    %p279 = por %p277, %p278
    %p280 = scmp.ne.s32.totalorder %s271, %s272
    %p281 = scmp.eq.s32.totalorder %s30, 0
    %p282 = por %p280, %p281
    %p283 = scmp.ne.s32.totalorder %s271, %s272
    %p284 = scmp.eq.s32.totalorder %s31, 1
    %p285 = por %p283, %p284
    %p287 = scmp.ne.s32.totalorder %s272, %s286
    %p288 = scmp.eq.s32.totalorder %s31, 0
    %p289 = por %p287, %p288
    %s291 = sadd.s32 %s290, 1
    %p294 = scmp.eq.s32.totalorder %s25, 1
    %p295 = scmp.ne.s32.totalorder %s290, %s292
    %p296 = scmp.eq.s32.totalorder %s25, 0
    %p297 = por %p295, %p296
    %p298 = scmp.ne.s32.totalorder %s290, %s292
    %p299 = scmp.eq.s32.totalorder %s30, 1
    %p300 = por %p298, %p299
    %p301 = scmp.ne.s32.totalorder %s292, %s293
    %p302 = scmp.eq.s32.totalorder %s30, 0
    %p303 = por %p301, %p302
    %p304 = scmp.ne.s32.totalorder %s292, %s293
    %p305 = scmp.eq.s32.totalorder %s31, 1
    %p306 = por %p304, %p305
    %p308 = scmp.ne.s32.totalorder %s293, %s307
    %p309 = scmp.eq.s32.totalorder %s31, 0
    %p310 = por %p308, %p309
    %s312 = sadd.s32 %s311, 1
    %p315 = scmp.eq.s32.totalorder %s25, 1
    %p316 = scmp.ne.s32.totalorder %s311, %s313
    %p317 = scmp.eq.s32.totalorder %s25, 0
    %p318 = por %p316, %p317
    %p319 = scmp.ne.s32.totalorder %s311, %s313
    %p320 = scmp.eq.s32.totalorder %s30, 1
    %p321 = por %p319, %p320
    %p322 = scmp.ne.s32.totalorder %s313, %s314
    %p323 = scmp.eq.s32.totalorder %s30, 0
    %p324 = por %p322, %p323
    %p325 = scmp.ne.s32.totalorder %s313, %s314
    %p326 = scmp.eq.s32.totalorder %s31, 1
    %p327 = por %p325, %p326
    %p329 = scmp.ne.s32.totalorder %s314, %s328
    %p330 = scmp.eq.s32.totalorder %s31, 0
    %p331 = por %p329, %p330
    %s333 = sadd.s32 %s332, 1
    %p336 = scmp.eq.s32.totalorder %s25, 1
    %p337 = scmp.ne.s32.totalorder %s332, %s334
    %p338 = scmp.eq.s32.totalorder %s25, 0
    %p339 = por %p337, %p338
    %p340 = scmp.ne.s32.totalorder %s332, %s334
    %p341 = scmp.eq.s32.totalorder %s30, 1
    %p342 = por %p340, %p341
    %p343 = scmp.ne.s32.totalorder %s334, %s335
    %p344 = scmp.eq.s32.totalorder %s30, 0
    %p345 = por %p343, %p344
    %p346 = scmp.ne.s32.totalorder %s334, %s335
    %p347 = scmp.eq.s32.totalorder %s31, 1
    %p348 = por %p346, %p347
    %p350 = scmp.ne.s32.totalorder %s335, %s349
    %p351 = scmp.eq.s32.totalorder %s31, 0
    %p352 = por %p350, %p351
    %s354 = sadd.s32 %s353, 1
    %p357 = scmp.eq.s32.totalorder %s25, 1
    %p358 = scmp.ne.s32.totalorder %s353, %s355
    %p359 = scmp.eq.s32.totalorder %s25, 0
    %p360 = por %p358, %p359
    %p361 = scmp.ne.s32.totalorder %s353, %s355
    %p362 = scmp.eq.s32.totalorder %s30, 1
    %p363 = por %p361, %p362
    %p364 = scmp.ne.s32.totalorder %s355, %s356
    %p365 = scmp.eq.s32.totalorder %s30, 0
    %p366 = por %p364, %p365
    %p367 = scmp.ne.s32.totalorder %s355, %s356
    %p368 = scmp.eq.s32.totalorder %s31, 1
    %p369 = por %p367, %p368
    %p371 = scmp.ne.s32.totalorder %s356, %s370
    %p372 = scmp.eq.s32.totalorder %s31, 0
    %p373 = por %p371, %p372
    %s375 = sadd.s32 %s374, 1
    %p378 = scmp.eq.s32.totalorder %s25, 1
    %p379 = scmp.ne.s32.totalorder %s374, %s376
    %p380 = scmp.eq.s32.totalorder %s25, 0
    %p381 = por %p379, %p380
    %p382 = scmp.ne.s32.totalorder %s374, %s376
    %p383 = scmp.eq.s32.totalorder %s30, 1
    %p384 = por %p382, %p383
    %p385 = scmp.ne.s32.totalorder %s376, %s377
    %p386 = scmp.eq.s32.totalorder %s30, 0
    %p387 = por %p385, %p386
    %p388 = scmp.ne.s32.totalorder %s376, %s377
    %p389 = scmp.eq.s32.totalorder %s31, 1
    %p390 = por %p388, %p389
    %p392 = scmp.ne.s32.totalorder %s377, %s391
    %p393 = scmp.eq.s32.totalorder %s31, 0
    %p394 = por %p392, %p393
    %s396 = sadd.s32 %s395, 1
    %p399 = scmp.eq.s32.totalorder %s25, 1
    %p400 = scmp.ne.s32.totalorder %s395, %s397
    %p401 = scmp.eq.s32.totalorder %s25, 0
    %p402 = por %p400, %p401
    %p403 = scmp.ne.s32.totalorder %s395, %s397
    %p404 = scmp.eq.s32.totalorder %s30, 1
    %p405 = por %p403, %p404
    %p406 = scmp.ne.s32.totalorder %s397, %s398
    %p407 = scmp.eq.s32.totalorder %s30, 0
    %p408 = por %p406, %p407
    %p409 = scmp.ne.s32.totalorder %s397, %s398
    %p410 = scmp.eq.s32.totalorder %s31, 1
    %p411 = por %p409, %p410
    %p413 = scmp.ne.s32.totalorder %s398, %s412
    %p414 = scmp.eq.s32.totalorder %s31, 0
    %p415 = por %p413, %p414
    %s417 = sadd.s32 %s416, 1
    %p420 = scmp.eq.s32.totalorder %s25, 1
    %p421 = scmp.ne.s32.totalorder %s416, %s418
    %p422 = scmp.eq.s32.totalorder %s25, 0
    %p423 = por %p421, %p422
    %p424 = scmp.ne.s32.totalorder %s416, %s418
    %p425 = scmp.eq.s32.totalorder %s30, 1
    %p426 = por %p424, %p425
    %p427 = scmp.ne.s32.totalorder %s418, %s419
    %p428 = scmp.eq.s32.totalorder %s30, 0
    %p429 = por %p427, %p428
    %p430 = scmp.ne.s32.totalorder %s418, %s419
    %p431 = scmp.eq.s32.totalorder %s31, 1
    %p432 = por %p430, %p431
    %p434 = scmp.ne.s32.totalorder %s419, %s433
    %p435 = scmp.eq.s32.totalorder %s31, 0
    %p436 = por %p434, %p435
    %s437 = ssub.s32 %s25, %s32
    %p438 = scmp.eq.s32.totalorder %s437, 0
    %s440 = sadd.s32 %s439, 1
    %s441 = scalar_select %p438, %s439, %s440
    %p444 = pneg %p438
    %p445 = scmp.eq.s32.totalorder %s25, 1
    %p446 = por %p444, %p445
    %p447 = scmp.ne.s32.totalorder %s439, %s442
    %p448 = scmp.eq.s32.totalorder %s25, 0
    %p449 = por %p447, %p448
    %p450 = scmp.ne.s32.totalorder %s439, %s442
    %p451 = scmp.eq.s32.totalorder %s30, 1
    %p452 = por %p450, %p451
    %p453 = scmp.ne.s32.totalorder %s442, %s443
    %p454 = scmp.eq.s32.totalorder %s30, 0
    %p455 = por %p453, %p454
    %p456 = scmp.ne.s32.totalorder %s442, %s443
    %p457 = scmp.eq.s32.totalorder %s31, 1
    %p458 = por %p456, %p457
    %p460 = scmp.ne.s32.totalorder %s443, %s459
    %p461 = scmp.eq.s32.totalorder %s31, 0
    %p462 = por %p460, %p461
    %p463 = scmp.le.s32.totalorder 1, %s25
    %p464 = scmp.lt.s32.totalorder %s25, 3
    %p465 = pnand %p463, %p464
    %p466 = pneg %p465
    // Predicated region
    $region9: #{small_vgg_forward.2} parent=5 // pred_check
      _
    $region10: #{small_vgg_forward.2} parent=5 // pred_check_branch
      %468 = sbr.rel (%p465) target = $region12
    $region11: #{small_vgg_forward.2} parent=5 // pred_region
      %s469 = ssub.s32 %s25, 1
      // Predicated region
      $region13: #{small_vgg_forward.2} parent=11 // pred_check
        %p470 = pneg %p72
      $region14: #{small_vgg_forward.2} parent=11 // pred_check_branch
        %472 = sbr.rel (%p470) target = $region16
      $region15: #{small_vgg_forward.2} parent=11 // pred_region
        _
      $region16: #{small_vgg_forward.2} parent=11 // pred_fallthru
        _
      // Predicated region
      $region17: #{small_vgg_forward.2} parent=11 // pred_check
        %p473 = pneg %p93
      $region18: #{small_vgg_forward.2} parent=11 // pred_check_branch
        %475 = sbr.rel (%p473) target = $region20
      $region19: #{small_vgg_forward.2} parent=11 // pred_region
        _
      $region20: #{small_vgg_forward.2} parent=11 // pred_fallthru
        _
      // Predicated region
      $region21: #{small_vgg_forward.2} parent=11 // pred_check
        %p476 = pneg %p114
      $region22: #{small_vgg_forward.2} parent=11 // pred_check_branch
        %478 = sbr.rel (%p476) target = $region24
      $region23: #{small_vgg_forward.2} parent=11 // pred_region
        _
      $region24: #{small_vgg_forward.2} parent=11 // pred_fallthru
        _
      // Predicated region
      $region25: #{small_vgg_forward.2} parent=11 // pred_check
        %p479 = pneg %p135
      $region26: #{small_vgg_forward.2} parent=11 // pred_check_branch
        %481 = sbr.rel (%p479) target = $region28
      $region27: #{small_vgg_forward.2} parent=11 // pred_region
        _
      $region28: #{small_vgg_forward.2} parent=11 // pred_fallthru
        _
      // Predicated region
      $region29: #{small_vgg_forward.2} parent=11 // pred_check
        %p482 = pneg %p156
      $region30: #{small_vgg_forward.2} parent=11 // pred_check_branch
        %484 = sbr.rel (%p482) target = $region32
      $region31: #{small_vgg_forward.2} parent=11 // pred_region
        _
      $region32: #{small_vgg_forward.2} parent=11 // pred_fallthru
        _
      // Predicated region
      $region33: #{small_vgg_forward.2} parent=11 // pred_check
        %p485 = pneg %p177
      $region34: #{small_vgg_forward.2} parent=11 // pred_check_branch
        %487 = sbr.rel (%p485) target = $region36
      $region35: #{small_vgg_forward.2} parent=11 // pred_region
        _
      $region36: #{small_vgg_forward.2} parent=11 // pred_fallthru
        _
      // Predicated region
      $region37: #{small_vgg_forward.2} parent=11 // pred_check
        %p488 = pneg %p198
      $region38: #{small_vgg_forward.2} parent=11 // pred_check_branch
        %490 = sbr.rel (%p488) target = $region40
      $region39: #{small_vgg_forward.2} parent=11 // pred_region
        _
      $region40: #{small_vgg_forward.2} parent=11 // pred_fallthru
        _
      // Predicated region
      $region41: #{small_vgg_forward.2} parent=11 // pred_check
        %p491 = pneg %p219
      $region42: #{small_vgg_forward.2} parent=11 // pred_check_branch
        %493 = sbr.rel (%p491) target = $region44
      $region43: #{small_vgg_forward.2} parent=11 // pred_region
        _
      $region44: #{small_vgg_forward.2} parent=11 // pred_fallthru
        _
      // Predicated region
      $region45: #{small_vgg_forward.2} parent=11 // pred_check
        %p494 = pneg %p240
      $region46: #{small_vgg_forward.2} parent=11 // pred_check_branch
        %496 = sbr.rel (%p494) target = $region48
      $region47: #{small_vgg_forward.2} parent=11 // pred_region
        _
      $region48: #{small_vgg_forward.2} parent=11 // pred_fallthru
        _
      // Predicated region
      $region49: #{small_vgg_forward.2} parent=11 // pred_check
        %p497 = pneg %p261
      $region50: #{small_vgg_forward.2} parent=11 // pred_check_branch
        %499 = sbr.rel (%p497) target = $region52
      $region51: #{small_vgg_forward.2} parent=11 // pred_region
        _
      $region52: #{small_vgg_forward.2} parent=11 // pred_fallthru
        _
      // Predicated region
      $region53: #{small_vgg_forward.2} parent=11 // pred_check
        %p500 = pneg %p282
      $region54: #{small_vgg_forward.2} parent=11 // pred_check_branch
        %502 = sbr.rel (%p500) target = $region56
      $region55: #{small_vgg_forward.2} parent=11 // pred_region
        _
      $region56: #{small_vgg_forward.2} parent=11 // pred_fallthru
        _
      // Predicated region
      $region57: #{small_vgg_forward.2} parent=11 // pred_check
        %p503 = pneg %p303
      $region58: #{small_vgg_forward.2} parent=11 // pred_check_branch
        %505 = sbr.rel (%p503) target = $region60
      $region59: #{small_vgg_forward.2} parent=11 // pred_region
        _
      $region60: #{small_vgg_forward.2} parent=11 // pred_fallthru
        _
      // Predicated region
      $region61: #{small_vgg_forward.2} parent=11 // pred_check
        %p506 = pneg %p324
      $region62: #{small_vgg_forward.2} parent=11 // pred_check_branch
        %508 = sbr.rel (%p506) target = $region64
      $region63: #{small_vgg_forward.2} parent=11 // pred_region
        _
      $region64: #{small_vgg_forward.2} parent=11 // pred_fallthru
        _
      // Predicated region
      $region65: #{small_vgg_forward.2} parent=11 // pred_check
        %p509 = pneg %p345
      $region66: #{small_vgg_forward.2} parent=11 // pred_check_branch
        %511 = sbr.rel (%p509) target = $region68
      $region67: #{small_vgg_forward.2} parent=11 // pred_region
        _
      $region68: #{small_vgg_forward.2} parent=11 // pred_fallthru
        _
      // Predicated region
      $region69: #{small_vgg_forward.2} parent=11 // pred_check
        %p512 = pneg %p366
      $region70: #{small_vgg_forward.2} parent=11 // pred_check_branch
        %514 = sbr.rel (%p512) target = $region72
      $region71: #{small_vgg_forward.2} parent=11 // pred_region
        _
      $region72: #{small_vgg_forward.2} parent=11 // pred_fallthru
        _
      // Predicated region
      $region73: #{small_vgg_forward.2} parent=11 // pred_check
        %p515 = pneg %p387
      $region74: #{small_vgg_forward.2} parent=11 // pred_check_branch
        %517 = sbr.rel (%p515) target = $region76
      $region75: #{small_vgg_forward.2} parent=11 // pred_region
        _
      $region76: #{small_vgg_forward.2} parent=11 // pred_fallthru
        _
      // Predicated region
      $region77: #{small_vgg_forward.2} parent=11 // pred_check
        %p518 = pneg %p408
      $region78: #{small_vgg_forward.2} parent=11 // pred_check_branch
        %520 = sbr.rel (%p518) target = $region80
      $region79: #{small_vgg_forward.2} parent=11 // pred_region
        _
      $region80: #{small_vgg_forward.2} parent=11 // pred_fallthru
        _
      // Predicated region
      $region81: #{small_vgg_forward.2} parent=11 // pred_check
        %p521 = pneg %p429
      $region82: #{small_vgg_forward.2} parent=11 // pred_check_branch
        %523 = sbr.rel (%p521) target = $region84
      $region83: #{small_vgg_forward.2} parent=11 // pred_region
        _
      $region84: #{small_vgg_forward.2} parent=11 // pred_fallthru
        _
    $region12: #{small_vgg_forward.2} parent=5 // pred_fallthru
      _
    %p524 = scmp.lt.s32.totalorder %s25, 2
    // Predicated region
    $region85: #{small_vgg_forward.2} parent=5 // pred_check
      %p525 = pneg %p524
    $region86: #{small_vgg_forward.2} parent=5 // pred_check_branch
      %527 = sbr.rel (%p525) target = $region88
    $region87: #{small_vgg_forward.2} parent=5 // pred_region
      // Predicated region
      $region89: #{small_vgg_forward.2} parent=87 // pred_check
        %p528 = pneg %p45
      $region90: #{small_vgg_forward.2} parent=87 // pred_check_branch
        %530 = sbr.rel (%p528) target = $region92
      $region91: #{small_vgg_forward.2} parent=87 // pred_region
        %p531 = scmp.lt.s32.totalorder %s25, 1
        %s532 = scalar_select %p531, %s25, 1
        %s533 = smul.addr %s532, 10
        %s534 = smul.addr %s533, 8
        %s535 = scalar_lea.vmem %s0, %s534
      $region92: #{small_vgg_forward.2} parent=87 // pred_fallthru
        _
    $region88: #{small_vgg_forward.2} parent=5 // pred_fallthru
      _
    %p536 = scmp.le.s32.totalorder 1, %s25
    %p537 = scmp.lt.s32.totalorder %s25, 3
    %p538 = pnand %p536, %p537
    %p539 = pneg %p538
    // Predicated region
    $region93: #{small_vgg_forward.2} parent=5 // pred_check
      _
    $region94: #{small_vgg_forward.2} parent=5 // pred_check_branch
      %541 = sbr.rel (%p538) target = $region96
    $region95: #{small_vgg_forward.2} parent=5 // pred_region
      %s542 = ssub.s32 %s25, 1
      %p543 = scmp.lt.s32.totalorder %s30, 1
      %s544 = scalar_select %p543, %s30, 1
      %s545 = smul.addr %s544, 10
      %s546 = smul.addr %s545, 8
      %s547 = scalar_lea.vmem %s0, %s546
      %p548 = pneg %p51
      %p549 = pneg %p48
      %p550 = pneg %p72
      %p551 = pneg %p69
      %p552 = pneg %p93
      %p553 = pneg %p90
      %p554 = pneg %p114
      %p555 = pneg %p111
      %p556 = pneg %p135
      %p557 = pneg %p132
      %p558 = pneg %p156
      %p559 = pneg %p153
      %p560 = pneg %p177
      %p561 = pneg %p174
      %p562 = pneg %p198
      %p563 = pneg %p195
      %p564 = pneg %p219
      %p565 = pneg %p216
      %p566 = pneg %p240
      %p567 = pneg %p237
      %p568 = pneg %p261
      %p569 = pneg %p258
      %p570 = pneg %p282
      %p571 = pneg %p279
      %p572 = pneg %p303
      %p573 = pneg %p300
      %p574 = pneg %p324
      %p575 = pneg %p321
      %p576 = pneg %p345
      %p577 = pneg %p342
      %p578 = pneg %p366
      %p579 = pneg %p363
      %p580 = pneg %p387
      %p581 = pneg %p384
      %p582 = pneg %p408
      %p583 = pneg %p405
      %p584 = pneg %p429
      %p585 = pneg %p426
      %p586 = pneg %p455
      %p587 = pneg %p452
      %p588 = scmp.lt.s32.totalorder %s30, 1
      %s589 = scalar_select %p588, %s30, 1
      %s590 = smul.addr %s589, 4
      %s591 = smul.addr %s590, 8
      %s592 = scalar_lea.vmem %s19, %s591
      %p593 = scmp.lt.s32.totalorder %s30, 1
      %s594 = scalar_select %p593, %s30, 1
      %s595 = smul.addr %s594, 10
      %s596 = smul.addr %s595, 8
      %s597 = scalar_lea.vmem %s0, %s596
      %p598 = scmp.lt.s32.totalorder %s30, 1
      %s599 = scalar_select %p598, %s30, 1
      %s600 = smul.addr %s599, 4
      %s601 = smul.addr %s600, 8
      %s602 = scalar_lea.vmem %s19, %s601
      %604 = vst [vmem:[#allocation2] sm:$0xff] 0.0
      %605 = vst [vmem:[#allocation2 + $0x8] sm:$0xff] 0.0
      %606 = vst [vmem:[#allocation2 + $0x10] sm:$0xff] 0.0
      %607 = vst [vmem:[#allocation2 + $0x18] sm:$0xff] 0.0
      %608 = vst [vmem:[#allocation2 + $0x20] sm:$0xff] 0.0
      %609 = vst [vmem:[#allocation2 + $0x28] sm:$0xff] 0.0
      %610 = vst [vmem:[#allocation2 + $0x30] sm:$0xff] 0.0
      %611 = vst [vmem:[#allocation2 + $0x38] sm:$0xff] 0.0
      %612 = vst [vmem:[#allocation2 + $0x40] sm:$0xff] 0.0
      %613 = vst [vmem:[#allocation2 + $0x48] sm:$0xff] 0.0
      %614 = vst [vmem:[#allocation2 + $0x50] sm:$0xff] 0.0
      %615 = vst [vmem:[#allocation2 + $0x58] sm:$0xff] 0.0
      %616 = vst [vmem:[#allocation2 + $0x60] sm:$0xff] 0.0
      %617 = vst [vmem:[#allocation2 + $0x68] sm:$0xff] 0.0
      %618 = vst [vmem:[#allocation2 + $0x70] sm:$0xff] 0.0
      %619 = vst [vmem:[#allocation2 + $0x78] sm:$0xff] 0.0
      %620 = vst [vmem:[#allocation2 + $0x80] sm:$0xff] 0.0
      %621 = vst [vmem:[#allocation2 + $0x88] sm:$0xff] 0.0
      %622 = vst [vmem:[#allocation2 + $0x90] sm:$0xff] 0.0
      %623 = vst [vmem:[#allocation2 + $0x98] sm:$0xff] 0.0
      %624 = vst [vmem:[#allocation2 + $0xa0] sm:$0xff] 0.0
      %625 = vst [vmem:[#allocation2 + $0xa8] sm:$0xff] 0.0
      %626 = vst [vmem:[#allocation2 + $0xb0] sm:$0xff] 0.0
      %627 = vst [vmem:[#allocation2 + $0xb8] sm:$0xff] 0.0
      %628 = vst [vmem:[#allocation2 + $0xc0] sm:$0xff] 0.0
      %629 = vst [vmem:[#allocation2 + $0xc8] sm:$0xff] 0.0
      %630 = vst [vmem:[#allocation2 + $0xd0] sm:$0xff] 0.0
      %631 = vst [vmem:[#allocation2 + $0xd8] sm:$0xff] 0.0
      %632 = vst [vmem:[#allocation2 + $0xe0] sm:$0xff] 0.0
      %633 = vst [vmem:[#allocation2 + $0xe8] sm:$0xff] 0.0
      %634 = vst [vmem:[#allocation2 + $0xf0] sm:$0xff] 0.0
      %635 = vst [vmem:[#allocation2 + $0xf8] sm:$0xff] 0.0
      %636 = vst [vmem:[#allocation2 + $0x100] sm:$0xff] 0.0
      %637 = vst [vmem:[#allocation2 + $0x108] sm:$0xff] 0.0
      %638 = vst [vmem:[#allocation2 + $0x110] sm:$0xff] 0.0
      %639 = vst [vmem:[#allocation2 + $0x118] sm:$0xff] 0.0
      %640 = vst [vmem:[#allocation2 + $0x120] sm:$0xff] 0.0
      %641 = vst [vmem:[#allocation2 + $0x128] sm:$0xff] 0.0
      %642 = vst [vmem:[#allocation2 + $0x130] sm:$0xff] 0.0
      %643 = vst [vmem:[#allocation2 + $0x138] sm:$0xff] 0.0
      %644 = vst [vmem:[#allocation2 + $0x140] sm:$0xff] 0.0
      %645 = vst [vmem:[#allocation2 + $0x148] sm:$0xff] 0.0
      %646 = vst [vmem:[#allocation2 + $0x150] sm:$0xff] 0.0
      %647 = vst [vmem:[#allocation2 + $0x158] sm:$0xff] 0.0
      %648 = vst [vmem:[#allocation2 + $0x160] sm:$0xff] 0.0
      %649 = vst [vmem:[#allocation2 + $0x168] sm:$0xff] 0.0
      %650 = vst [vmem:[#allocation2 + $0x170] sm:$0xff] 0.0
      %651 = vst [vmem:[#allocation2 + $0x178] sm:$0xff] 0.0
      %v652 = vld [vmem:[%s597] sm:$0xff]
      %v653 = vld [vmem:[%s597 + $0x8] sm:$0xff]
      %v654 = vld [vmem:[%s597 + $0x10] sm:$0xff]
      %v655 = vld [vmem:[%s597 + $0x18] sm:$0xff]
      %v656 = vld [vmem:[%s597 + $0x20] sm:$0xff]
      %v657 = vld [vmem:[%s597 + $0x28] sm:$0xff]
      %v658 = vld [vmem:[%s597 + $0x30] sm:$0xff]
      %v659 = vld [vmem:[%s597 + $0x38] sm:$0xff]
      %v660 = vld [vmem:[%s597 + $0x40] sm:$0xff]
      %v661 = vld [vmem:[%s597 + $0x48] sm:$0xff]
      %662 = vst [vmem:[#allocation2 + $0x8] sm:$0xff] %v652
      %663 = vst [vmem:[#allocation2 + $0x10] sm:$0xff] %v653
      %664 = vst [vmem:[#allocation2 + $0x18] sm:$0xff] %v654
      %665 = vst [vmem:[#allocation2 + $0x20] sm:$0xff] %v655
      %666 = vst [vmem:[#allocation2 + $0x28] sm:$0xff] %v656
      %667 = vst [vmem:[#allocation2 + $0x30] sm:$0xff] %v657
      %668 = vst [vmem:[#allocation2 + $0x38] sm:$0xff] %v658
      %669 = vst [vmem:[#allocation2 + $0x40] sm:$0xff] %v659
      %670 = vst [vmem:[#allocation2 + $0x48] sm:$0xff] %v660
      %671 = vst [vmem:[#allocation2 + $0x50] sm:$0xff] %v661
      %v672 = vld [vmem:[#allocation2] sm:$0xff]
      %v673 = vld [vmem:[#allocation2 + $0x8] sm:$0xff]
      %v674 = vld [vmem:[#allocation2 + $0x10] sm:$0xff]
      %v675 = vld [vmem:[#allocation2 + $0x18] sm:$0xff]
      %v676 = vld [vmem:[#allocation2 + $0x20] sm:$0xff]
      %v677 = vld [vmem:[#allocation2 + $0x28] sm:$0xff]
      %v678 = vld [vmem:[#allocation2 + $0x30] sm:$0xff]
      %v679 = vld [vmem:[#allocation2 + $0x38] sm:$0xff]
      %v680 = vld [vmem:[#allocation2 + $0x40] sm:$0xff]
      %v681 = vld [vmem:[#allocation2 + $0x48] sm:$0xff]
      %v682 = vld [vmem:[#allocation2 + $0x50] sm:$0xff]
      %694 = vrot.lane.b32.xlu0 %v672, 35
      %v695 = vpop.permute.xlu0 %694
      %696 = vrot.lane.b32.xlu0 %v673, 35
      %v697 = vpop.permute.xlu0 %696
      %698 = vrot.lane.b32.xlu0 %v674, 35
      %v699 = vpop.permute.xlu0 %698
      %700 = vrot.lane.b32.xlu0 %v675, 35
      %v701 = vpop.permute.xlu0 %700
      %702 = vrot.lane.b32.xlu0 %v676, 35
      %v703 = vpop.permute.xlu0 %702
      %704 = vrot.lane.b32.xlu0 %v677, 35
      %v705 = vpop.permute.xlu0 %704
      %706 = vrot.lane.b32.xlu0 %v678, 35
      %v707 = vpop.permute.xlu0 %706
      %708 = vrot.lane.b32.xlu0 %v679, 35
      %v709 = vpop.permute.xlu0 %708
      %710 = vrot.lane.b32.xlu0 %v680, 35
      %v711 = vpop.permute.xlu0 %710
      %712 = vrot.lane.b32.xlu0 %v681, 35
      %v713 = vpop.permute.xlu0 %712
      %714 = vrot.lane.b32.xlu0 %v682, 35
      %v715 = vpop.permute.xlu0 %714
      %vm716 = vcmask 285696
      %v717 = vsel %vm716, %v695, %v697
      %v718 = vsel %vm716, %v697, %v699
      %v719 = vsel %vm716, %v699, %v701
      %v720 = vsel %vm716, %v701, %v703
      %v721 = vsel %vm716, %v703, %v705
      %v722 = vsel %vm716, %v705, %v707
      %v723 = vsel %vm716, %v707, %v709
      %v724 = vsel %vm716, %v709, %v711
      %v725 = vsel %vm716, %v711, %v713
      %v726 = vsel %vm716, %v713, %v715
      %737 = vst [vmem:[#allocation3] sm:$0xff] %v717
      %738 = vst [vmem:[#allocation3 + $0x8] sm:$0xff] %v718
      %739 = vst [vmem:[#allocation3 + $0x10] sm:$0xff] %v719
      %740 = vst [vmem:[#allocation3 + $0x18] sm:$0xff] %v720
      %741 = vst [vmem:[#allocation3 + $0x20] sm:$0xff] %v721
      %742 = vst [vmem:[#allocation3 + $0x28] sm:$0xff] %v722
      %743 = vst [vmem:[#allocation3 + $0x30] sm:$0xff] %v723
      %744 = vst [vmem:[#allocation3 + $0x38] sm:$0xff] %v724
      %745 = vst [vmem:[#allocation3 + $0x40] sm:$0xff] %v725
      %746 = vst [vmem:[#allocation3 + $0x48] sm:$0xff] %v726
      %v747 = vld [vmem:[#allocation2] sm:$0xff]
      %v748 = vld [vmem:[#allocation2 + $0x8] sm:$0xff]
      %v749 = vld [vmem:[#allocation2 + $0x10] sm:$0xff]
      %v750 = vld [vmem:[#allocation2 + $0x18] sm:$0xff]
      %v751 = vld [vmem:[#allocation2 + $0x20] sm:$0xff]
      %v752 = vld [vmem:[#allocation2 + $0x28] sm:$0xff]
      %v753 = vld [vmem:[#allocation2 + $0x30] sm:$0xff]
      %v754 = vld [vmem:[#allocation2 + $0x38] sm:$0xff]
      %v755 = vld [vmem:[#allocation2 + $0x40] sm:$0xff]
      %v756 = vld [vmem:[#allocation2 + $0x48] sm:$0xff]
      %v757 = vld [vmem:[#allocation2 + $0x50] sm:$0xff]
      %769 = vrot.lane.b32.xlu0 %v747, 34
      %v770 = vpop.permute.xlu0 %769
      %771 = vrot.lane.b32.xlu0 %v748, 34
      %v772 = vpop.permute.xlu0 %771
      %773 = vrot.lane.b32.xlu0 %v749, 34
      %v774 = vpop.permute.xlu0 %773
      %775 = vrot.lane.b32.xlu0 %v750, 34
      %v776 = vpop.permute.xlu0 %775
      %777 = vrot.lane.b32.xlu0 %v751, 34
      %v778 = vpop.permute.xlu0 %777
      %779 = vrot.lane.b32.xlu0 %v752, 34
      %v780 = vpop.permute.xlu0 %779
      %781 = vrot.lane.b32.xlu0 %v753, 34
      %v782 = vpop.permute.xlu0 %781
      %783 = vrot.lane.b32.xlu0 %v754, 34
      %v784 = vpop.permute.xlu0 %783
      %785 = vrot.lane.b32.xlu0 %v755, 34
      %v786 = vpop.permute.xlu0 %785
      %787 = vrot.lane.b32.xlu0 %v756, 34
      %v788 = vpop.permute.xlu0 %787
      %789 = vrot.lane.b32.xlu0 %v757, 34
      %v790 = vpop.permute.xlu0 %789
      %vm791 = vcmask 277504
      %v792 = vsel %vm791, %v770, %v772
      %v793 = vsel %vm791, %v772, %v774
      %v794 = vsel %vm791, %v774, %v776
      %v795 = vsel %vm791, %v776, %v778
      %v796 = vsel %vm791, %v778, %v780
      %v797 = vsel %vm791, %v780, %v782
      %v798 = vsel %vm791, %v782, %v784
      %v799 = vsel %vm791, %v784, %v786
      %v800 = vsel %vm791, %v786, %v788
      %v801 = vsel %vm791, %v788, %v790
      %812 = vst [vmem:[#allocation3 + $0x50] sm:$0xff] %v792
      %813 = vst [vmem:[#allocation3 + $0x58] sm:$0xff] %v793
      %814 = vst [vmem:[#allocation3 + $0x60] sm:$0xff] %v794
      %815 = vst [vmem:[#allocation3 + $0x68] sm:$0xff] %v795
      %816 = vst [vmem:[#allocation3 + $0x70] sm:$0xff] %v796
      %817 = vst [vmem:[#allocation3 + $0x78] sm:$0xff] %v797
      %818 = vst [vmem:[#allocation3 + $0x80] sm:$0xff] %v798
      %819 = vst [vmem:[#allocation3 + $0x88] sm:$0xff] %v799
      %820 = vst [vmem:[#allocation3 + $0x90] sm:$0xff] %v800
      %821 = vst [vmem:[#allocation3 + $0x98] sm:$0xff] %v801
      %v822 = vld [vmem:[#allocation2] sm:$0xff]
      %v823 = vld [vmem:[#allocation2 + $0x8] sm:$0xff]
      %v824 = vld [vmem:[#allocation2 + $0x10] sm:$0xff]
      %v825 = vld [vmem:[#allocation2 + $0x18] sm:$0xff]
      %v826 = vld [vmem:[#allocation2 + $0x20] sm:$0xff]
      %v827 = vld [vmem:[#allocation2 + $0x28] sm:$0xff]
      %v828 = vld [vmem:[#allocation2 + $0x30] sm:$0xff]
      %v829 = vld [vmem:[#allocation2 + $0x38] sm:$0xff]
      %v830 = vld [vmem:[#allocation2 + $0x40] sm:$0xff]
      %v831 = vld [vmem:[#allocation2 + $0x48] sm:$0xff]
      %v832 = vld [vmem:[#allocation2 + $0x50] sm:$0xff]
      %844 = vrot.lane.b32.xlu0 %v822, 33
      %v845 = vpop.permute.xlu0 %844
      %846 = vrot.lane.b32.xlu0 %v823, 33
      %v847 = vpop.permute.xlu0 %846
      %848 = vrot.lane.b32.xlu0 %v824, 33
      %v849 = vpop.permute.xlu0 %848
      %850 = vrot.lane.b32.xlu0 %v825, 33
      %v851 = vpop.permute.xlu0 %850
      %852 = vrot.lane.b32.xlu0 %v826, 33
      %v853 = vpop.permute.xlu0 %852
      %854 = vrot.lane.b32.xlu0 %v827, 33
      %v855 = vpop.permute.xlu0 %854
      %856 = vrot.lane.b32.xlu0 %v828, 33
      %v857 = vpop.permute.xlu0 %856
      %858 = vrot.lane.b32.xlu0 %v829, 33
      %v859 = vpop.permute.xlu0 %858
      %860 = vrot.lane.b32.xlu0 %v830, 33
      %v861 = vpop.permute.xlu0 %860
      %862 = vrot.lane.b32.xlu0 %v831, 33
      %v863 = vpop.permute.xlu0 %862
      %864 = vrot.lane.b32.xlu0 %v832, 33
      %v865 = vpop.permute.xlu0 %864
      %vm866 = vcmask 269312
      %v867 = vsel %vm866, %v845, %v847
      %v868 = vsel %vm866, %v847, %v849
      %v869 = vsel %vm866, %v849, %v851
      %v870 = vsel %vm866, %v851, %v853
      %v871 = vsel %vm866, %v853, %v855
      %v872 = vsel %vm866, %v855, %v857
      %v873 = vsel %vm866, %v857, %v859
      %v874 = vsel %vm866, %v859, %v861
      %v875 = vsel %vm866, %v861, %v863
      %v876 = vsel %vm866, %v863, %v865
      %887 = vst [vmem:[#allocation3 + $0xa0] sm:$0xff] %v867
      %888 = vst [vmem:[#allocation3 + $0xa8] sm:$0xff] %v868
      %889 = vst [vmem:[#allocation3 + $0xb0] sm:$0xff] %v869
      %890 = vst [vmem:[#allocation3 + $0xb8] sm:$0xff] %v870
      %891 = vst [vmem:[#allocation3 + $0xc0] sm:$0xff] %v871
      %892 = vst [vmem:[#allocation3 + $0xc8] sm:$0xff] %v872
      %893 = vst [vmem:[#allocation3 + $0xd0] sm:$0xff] %v873
      %894 = vst [vmem:[#allocation3 + $0xd8] sm:$0xff] %v874
      %895 = vst [vmem:[#allocation3 + $0xe0] sm:$0xff] %v875
      %896 = vst [vmem:[#allocation3 + $0xe8] sm:$0xff] %v876
      %v897 = vld [vmem:[#allocation2] sm:$0xff]
      %v898 = vld [vmem:[#allocation2 + $0x8] sm:$0xff]
      %v899 = vld [vmem:[#allocation2 + $0x10] sm:$0xff]
      %v900 = vld [vmem:[#allocation2 + $0x18] sm:$0xff]
      %v901 = vld [vmem:[#allocation2 + $0x20] sm:$0xff]
      %v902 = vld [vmem:[#allocation2 + $0x28] sm:$0xff]
      %v903 = vld [vmem:[#allocation2 + $0x30] sm:$0xff]
      %v904 = vld [vmem:[#allocation2 + $0x38] sm:$0xff]
      %v905 = vld [vmem:[#allocation2 + $0x40] sm:$0xff]
      %v906 = vld [vmem:[#allocation2 + $0x48] sm:$0xff]
      %v907 = vld [vmem:[#allocation2 + $0x50] sm:$0xff]
      %919 = vrot.lane.b32.xlu0 %v897, 1
      %v920 = vpop.permute.xlu0 %919
      %921 = vrot.lane.b32.xlu0 %v898, 1
      %v922 = vpop.permute.xlu0 %921
      %923 = vrot.lane.b32.xlu0 %v899, 1
      %v924 = vpop.permute.xlu0 %923
      %925 = vrot.lane.b32.xlu0 %v900, 1
      %v926 = vpop.permute.xlu0 %925
      %927 = vrot.lane.b32.xlu0 %v901, 1
      %v928 = vpop.permute.xlu0 %927
      %929 = vrot.lane.b32.xlu0 %v902, 1
      %v930 = vpop.permute.xlu0 %929
      %931 = vrot.lane.b32.xlu0 %v903, 1
      %v932 = vpop.permute.xlu0 %931
      %933 = vrot.lane.b32.xlu0 %v904, 1
      %v934 = vpop.permute.xlu0 %933
      %935 = vrot.lane.b32.xlu0 %v905, 1
      %v936 = vpop.permute.xlu0 %935
      %937 = vrot.lane.b32.xlu0 %v906, 1
      %v938 = vpop.permute.xlu0 %937
      %939 = vrot.lane.b32.xlu0 %v907, 1
      %v940 = vpop.permute.xlu0 %939
      %vm941 = vcmask 7168
      %v942 = vsel %vm941, %v920, %v922
      %v943 = vsel %vm941, %v922, %v924
      %v944 = vsel %vm941, %v924, %v926
      %v945 = vsel %vm941, %v926, %v928
      %v946 = vsel %vm941, %v928, %v930
      %v947 = vsel %vm941, %v930, %v932
      %v948 = vsel %vm941, %v932, %v934
      %v949 = vsel %vm941, %v934, %v936
      %v950 = vsel %vm941, %v936, %v938
      %v951 = vsel %vm941, %v938, %v940
      %962 = vst [vmem:[#allocation3 + $0xf0] sm:$0xff] %v942
      %963 = vst [vmem:[#allocation3 + $0xf8] sm:$0xff] %v943
      %964 = vst [vmem:[#allocation3 + $0x100] sm:$0xff] %v944
      %965 = vst [vmem:[#allocation3 + $0x108] sm:$0xff] %v945
      %966 = vst [vmem:[#allocation3 + $0x110] sm:$0xff] %v946
      %967 = vst [vmem:[#allocation3 + $0x118] sm:$0xff] %v947
      %968 = vst [vmem:[#allocation3 + $0x120] sm:$0xff] %v948
      %969 = vst [vmem:[#allocation3 + $0x128] sm:$0xff] %v949
      %970 = vst [vmem:[#allocation3 + $0x130] sm:$0xff] %v950
      %971 = vst [vmem:[#allocation3 + $0x138] sm:$0xff] %v951
      %972 = vst [vmem:[#allocation3 + $0x140] sm:$0xff] %v652
      %973 = vst [vmem:[#allocation3 + $0x148] sm:$0xff] %v653
      %974 = vst [vmem:[#allocation3 + $0x150] sm:$0xff] %v654
      %975 = vst [vmem:[#allocation3 + $0x158] sm:$0xff] %v655
      %976 = vst [vmem:[#allocation3 + $0x160] sm:$0xff] %v656
      %977 = vst [vmem:[#allocation3 + $0x168] sm:$0xff] %v657
      %978 = vst [vmem:[#allocation3 + $0x170] sm:$0xff] %v658
      %979 = vst [vmem:[#allocation3 + $0x178] sm:$0xff] %v659
      %980 = vst [vmem:[#allocation3 + $0x180] sm:$0xff] %v660
      %981 = vst [vmem:[#allocation3 + $0x188] sm:$0xff] %v661
      %v982 = vld [vmem:[#allocation2 + $0x8] sm:$0xff]
      %v983 = vld [vmem:[#allocation2 + $0x10] sm:$0xff]
      %v984 = vld [vmem:[#allocation2 + $0x18] sm:$0xff]
      %v985 = vld [vmem:[#allocation2 + $0x20] sm:$0xff]
      %v986 = vld [vmem:[#allocation2 + $0x28] sm:$0xff]
      %v987 = vld [vmem:[#allocation2 + $0x30] sm:$0xff]
      %v988 = vld [vmem:[#allocation2 + $0x38] sm:$0xff]
      %v989 = vld [vmem:[#allocation2 + $0x40] sm:$0xff]
      %v990 = vld [vmem:[#allocation2 + $0x48] sm:$0xff]
      %v991 = vld [vmem:[#allocation2 + $0x50] sm:$0xff]
      %v992 = vld [vmem:[#allocation2 + $0x58] sm:$0xff]
      %1004 = vrot.lane.b32.xlu0 %v982, 127
      %v1005 = vpop.permute.xlu0 %1004
      %1006 = vrot.lane.b32.xlu0 %v983, 127
      %v1007 = vpop.permute.xlu0 %1006
      %1008 = vrot.lane.b32.xlu0 %v984, 127
      %v1009 = vpop.permute.xlu0 %1008
      %1010 = vrot.lane.b32.xlu0 %v985, 127
      %v1011 = vpop.permute.xlu0 %1010
      %1012 = vrot.lane.b32.xlu0 %v986, 127
      %v1013 = vpop.permute.xlu0 %1012
      %1014 = vrot.lane.b32.xlu0 %v987, 127
      %v1015 = vpop.permute.xlu0 %1014
      %1016 = vrot.lane.b32.xlu0 %v988, 127
      %v1017 = vpop.permute.xlu0 %1016
      %1018 = vrot.lane.b32.xlu0 %v989, 127
      %v1019 = vpop.permute.xlu0 %1018
      %1020 = vrot.lane.b32.xlu0 %v990, 127
      %v1021 = vpop.permute.xlu0 %1020
      %1022 = vrot.lane.b32.xlu0 %v991, 127
      %v1023 = vpop.permute.xlu0 %1022
      %1024 = vrot.lane.b32.xlu0 %v992, 127
      %v1025 = vpop.permute.xlu0 %1024
      %vm1026 = vcmask 1039360
      %v1027 = vsel %vm1026, %v1005, %v1007
      %v1028 = vsel %vm1026, %v1007, %v1009
      %v1029 = vsel %vm1026, %v1009, %v1011
      %v1030 = vsel %vm1026, %v1011, %v1013
      %v1031 = vsel %vm1026, %v1013, %v1015
      %v1032 = vsel %vm1026, %v1015, %v1017
      %v1033 = vsel %vm1026, %v1017, %v1019
      %v1034 = vsel %vm1026, %v1019, %v1021
      %v1035 = vsel %vm1026, %v1021, %v1023
      %v1036 = vsel %vm1026, %v1023, %v1025
      %1047 = vst [vmem:[#allocation3 + $0x190] sm:$0xff] %v1027
      %1048 = vst [vmem:[#allocation3 + $0x198] sm:$0xff] %v1028
      %1049 = vst [vmem:[#allocation3 + $0x1a0] sm:$0xff] %v1029
      %1050 = vst [vmem:[#allocation3 + $0x1a8] sm:$0xff] %v1030
      %1051 = vst [vmem:[#allocation3 + $0x1b0] sm:$0xff] %v1031
      %1052 = vst [vmem:[#allocation3 + $0x1b8] sm:$0xff] %v1032
      %1053 = vst [vmem:[#allocation3 + $0x1c0] sm:$0xff] %v1033
      %1054 = vst [vmem:[#allocation3 + $0x1c8] sm:$0xff] %v1034
      %1055 = vst [vmem:[#allocation3 + $0x1d0] sm:$0xff] %v1035
      %1056 = vst [vmem:[#allocation3 + $0x1d8] sm:$0xff] %v1036
      %v1057 = vld [vmem:[#allocation2 + $0x8] sm:$0xff]
      %v1058 = vld [vmem:[#allocation2 + $0x10] sm:$0xff]
      %v1059 = vld [vmem:[#allocation2 + $0x18] sm:$0xff]
      %v1060 = vld [vmem:[#allocation2 + $0x20] sm:$0xff]
      %v1061 = vld [vmem:[#allocation2 + $0x28] sm:$0xff]
      %v1062 = vld [vmem:[#allocation2 + $0x30] sm:$0xff]
      %v1063 = vld [vmem:[#allocation2 + $0x38] sm:$0xff]
      %v1064 = vld [vmem:[#allocation2 + $0x40] sm:$0xff]
      %v1065 = vld [vmem:[#allocation2 + $0x48] sm:$0xff]
      %v1066 = vld [vmem:[#allocation2 + $0x50] sm:$0xff]
      %v1067 = vld [vmem:[#allocation2 + $0x58] sm:$0xff]
      %1079 = vrot.lane.b32.xlu0 %v1057, 95
      %v1080 = vpop.permute.xlu0 %1079
      %1081 = vrot.lane.b32.xlu0 %v1058, 95
      %v1082 = vpop.permute.xlu0 %1081
      %1083 = vrot.lane.b32.xlu0 %v1059, 95
      %v1084 = vpop.permute.xlu0 %1083
      %1085 = vrot.lane.b32.xlu0 %v1060, 95
      %v1086 = vpop.permute.xlu0 %1085
      %1087 = vrot.lane.b32.xlu0 %v1061, 95
      %v1088 = vpop.permute.xlu0 %1087
      %1089 = vrot.lane.b32.xlu0 %v1062, 95
      %v1090 = vpop.permute.xlu0 %1089
      %1091 = vrot.lane.b32.xlu0 %v1063, 95
      %v1092 = vpop.permute.xlu0 %1091
      %1093 = vrot.lane.b32.xlu0 %v1064, 95
      %v1094 = vpop.permute.xlu0 %1093
      %1095 = vrot.lane.b32.xlu0 %v1065, 95
      %v1096 = vpop.permute.xlu0 %1095
      %1097 = vrot.lane.b32.xlu0 %v1066, 95
      %v1098 = vpop.permute.xlu0 %1097
      %1099 = vrot.lane.b32.xlu0 %v1067, 95
      %v1100 = vpop.permute.xlu0 %1099
      %vm1101 = vcmask 777216
      %v1102 = vsel %vm1101, %v1080, %v1082
      %v1103 = vsel %vm1101, %v1082, %v1084
      %v1104 = vsel %vm1101, %v1084, %v1086
      %v1105 = vsel %vm1101, %v1086, %v1088
      %v1106 = vsel %vm1101, %v1088, %v1090
      %v1107 = vsel %vm1101, %v1090, %v1092
      %v1108 = vsel %vm1101, %v1092, %v1094
      %v1109 = vsel %vm1101, %v1094, %v1096
      %v1110 = vsel %vm1101, %v1096, %v1098
      %v1111 = vsel %vm1101, %v1098, %v1100
      %1122 = vst [vmem:[#allocation3 + $0x1e0] sm:$0xff] %v1102
      %1123 = vst [vmem:[#allocation3 + $0x1e8] sm:$0xff] %v1103
      %1124 = vst [vmem:[#allocation3 + $0x1f0] sm:$0xff] %v1104
      %1125 = vst [vmem:[#allocation3 + $0x1f8] sm:$0xff] %v1105
      %1126 = vst [vmem:[#allocation3 + $0x200] sm:$0xff] %v1106
      %1127 = vst [vmem:[#allocation3 + $0x208] sm:$0xff] %v1107
      %1128 = vst [vmem:[#allocation3 + $0x210] sm:$0xff] %v1108
      %1129 = vst [vmem:[#allocation3 + $0x218] sm:$0xff] %v1109
      %1130 = vst [vmem:[#allocation3 + $0x220] sm:$0xff] %v1110
      %1131 = vst [vmem:[#allocation3 + $0x228] sm:$0xff] %v1111
      %v1132 = vld [vmem:[#allocation2 + $0x8] sm:$0xff]
      %v1133 = vld [vmem:[#allocation2 + $0x10] sm:$0xff]
      %v1134 = vld [vmem:[#allocation2 + $0x18] sm:$0xff]
      %v1135 = vld [vmem:[#allocation2 + $0x20] sm:$0xff]
      %v1136 = vld [vmem:[#allocation2 + $0x28] sm:$0xff]
      %v1137 = vld [vmem:[#allocation2 + $0x30] sm:$0xff]
      %v1138 = vld [vmem:[#allocation2 + $0x38] sm:$0xff]
      %v1139 = vld [vmem:[#allocation2 + $0x40] sm:$0xff]
      %v1140 = vld [vmem:[#allocation2 + $0x48] sm:$0xff]
      %v1141 = vld [vmem:[#allocation2 + $0x50] sm:$0xff]
      %v1142 = vld [vmem:[#allocation2 + $0x58] sm:$0xff]
      %1154 = vrot.lane.b32.xlu0 %v1132, 94
      %v1155 = vpop.permute.xlu0 %1154
      %1156 = vrot.lane.b32.xlu0 %v1133, 94
      %v1157 = vpop.permute.xlu0 %1156
      %1158 = vrot.lane.b32.xlu0 %v1134, 94
      %v1159 = vpop.permute.xlu0 %1158
      %1160 = vrot.lane.b32.xlu0 %v1135, 94
      %v1161 = vpop.permute.xlu0 %1160
      %1162 = vrot.lane.b32.xlu0 %v1136, 94
      %v1163 = vpop.permute.xlu0 %1162
      %1164 = vrot.lane.b32.xlu0 %v1137, 94
      %v1165 = vpop.permute.xlu0 %1164
      %1166 = vrot.lane.b32.xlu0 %v1138, 94
      %v1167 = vpop.permute.xlu0 %1166
      %1168 = vrot.lane.b32.xlu0 %v1139, 94
      %v1169 = vpop.permute.xlu0 %1168
      %1170 = vrot.lane.b32.xlu0 %v1140, 94
      %v1171 = vpop.permute.xlu0 %1170
      %1172 = vrot.lane.b32.xlu0 %v1141, 94
      %v1173 = vpop.permute.xlu0 %1172
      %1174 = vrot.lane.b32.xlu0 %v1142, 94
      %v1175 = vpop.permute.xlu0 %1174
      %vm1176 = vcmask 769024
      %v1177 = vsel %vm1176, %v1155, %v1157
      %v1178 = vsel %vm1176, %v1157, %v1159
      %v1179 = vsel %vm1176, %v1159, %v1161
      %v1180 = vsel %vm1176, %v1161, %v1163
      %v1181 = vsel %vm1176, %v1163, %v1165
      %v1182 = vsel %vm1176, %v1165, %v1167
      %v1183 = vsel %vm1176, %v1167, %v1169
      %v1184 = vsel %vm1176, %v1169, %v1171
      %v1185 = vsel %vm1176, %v1171, %v1173
      %v1186 = vsel %vm1176, %v1173, %v1175
      %1197 = vst [vmem:[#allocation3 + $0x230] sm:$0xff] %v1177
      %1198 = vst [vmem:[#allocation3 + $0x238] sm:$0xff] %v1178
      %1199 = vst [vmem:[#allocation3 + $0x240] sm:$0xff] %v1179
      %1200 = vst [vmem:[#allocation3 + $0x248] sm:$0xff] %v1180
      %1201 = vst [vmem:[#allocation3 + $0x250] sm:$0xff] %v1181
      %1202 = vst [vmem:[#allocation3 + $0x258] sm:$0xff] %v1182
      %1203 = vst [vmem:[#allocation3 + $0x260] sm:$0xff] %v1183
      %1204 = vst [vmem:[#allocation3 + $0x268] sm:$0xff] %v1184
      %1205 = vst [vmem:[#allocation3 + $0x270] sm:$0xff] %v1185
      %1206 = vst [vmem:[#allocation3 + $0x278] sm:$0xff] %v1186
      %v1207 = vld [vmem:[#allocation2 + $0x8] sm:$0xff]
      %v1208 = vld [vmem:[#allocation2 + $0x10] sm:$0xff]
      %v1209 = vld [vmem:[#allocation2 + $0x18] sm:$0xff]
      %v1210 = vld [vmem:[#allocation2 + $0x20] sm:$0xff]
      %v1211 = vld [vmem:[#allocation2 + $0x28] sm:$0xff]
      %v1212 = vld [vmem:[#allocation2 + $0x30] sm:$0xff]
      %v1213 = vld [vmem:[#allocation2 + $0x38] sm:$0xff]
      %v1214 = vld [vmem:[#allocation2 + $0x40] sm:$0xff]
      %v1215 = vld [vmem:[#allocation2 + $0x48] sm:$0xff]
      %v1216 = vld [vmem:[#allocation2 + $0x50] sm:$0xff]
      %v1217 = vld [vmem:[#allocation2 + $0x58] sm:$0xff]
      %1229 = vrot.lane.b32.xlu0 %v1207, 93
      %v1230 = vpop.permute.xlu0 %1229
      %1231 = vrot.lane.b32.xlu0 %v1208, 93
      %v1232 = vpop.permute.xlu0 %1231
      %1233 = vrot.lane.b32.xlu0 %v1209, 93
      %v1234 = vpop.permute.xlu0 %1233
      %1235 = vrot.lane.b32.xlu0 %v1210, 93
      %v1236 = vpop.permute.xlu0 %1235
      %1237 = vrot.lane.b32.xlu0 %v1211, 93
      %v1238 = vpop.permute.xlu0 %1237
      %1239 = vrot.lane.b32.xlu0 %v1212, 93
      %v1240 = vpop.permute.xlu0 %1239
      %1241 = vrot.lane.b32.xlu0 %v1213, 93
      %v1242 = vpop.permute.xlu0 %1241
      %1243 = vrot.lane.b32.xlu0 %v1214, 93
      %v1244 = vpop.permute.xlu0 %1243
      %1245 = vrot.lane.b32.xlu0 %v1215, 93
      %v1246 = vpop.permute.xlu0 %1245
      %1247 = vrot.lane.b32.xlu0 %v1216, 93
      %v1248 = vpop.permute.xlu0 %1247
      %1249 = vrot.lane.b32.xlu0 %v1217, 93
      %v1250 = vpop.permute.xlu0 %1249
      %vm1251 = vcmask 760832
      %v1252 = vsel %vm1251, %v1230, %v1232
      %v1253 = vsel %vm1251, %v1232, %v1234
      %v1254 = vsel %vm1251, %v1234, %v1236
      %v1255 = vsel %vm1251, %v1236, %v1238
      %v1256 = vsel %vm1251, %v1238, %v1240
      %v1257 = vsel %vm1251, %v1240, %v1242
      %v1258 = vsel %vm1251, %v1242, %v1244
      %v1259 = vsel %vm1251, %v1244, %v1246
      %v1260 = vsel %vm1251, %v1246, %v1248
      %v1261 = vsel %vm1251, %v1248, %v1250
      %1272 = vst [vmem:[#allocation3 + $0x280] sm:$0xff] %v1252
      %1273 = vst [vmem:[#allocation3 + $0x288] sm:$0xff] %v1253
      %1274 = vst [vmem:[#allocation3 + $0x290] sm:$0xff] %v1254
      %1275 = vst [vmem:[#allocation3 + $0x298] sm:$0xff] %v1255
      %1276 = vst [vmem:[#allocation3 + $0x2a0] sm:$0xff] %v1256
      %1277 = vst [vmem:[#allocation3 + $0x2a8] sm:$0xff] %v1257
      %1278 = vst [vmem:[#allocation3 + $0x2b0] sm:$0xff] %v1258
      %1279 = vst [vmem:[#allocation3 + $0x2b8] sm:$0xff] %v1259
      %1280 = vst [vmem:[#allocation3 + $0x2c0] sm:$0xff] %v1260
      %1281 = vst [vmem:[#allocation3 + $0x2c8] sm:$0xff] %v1261
      %v1282 = vld [vmem:[%s1] sm:$0xf]
      %v1283 = vld [vmem:[#allocation3] sm:$0xff]
      %v1284 = vld [vmem:[#allocation3 + $0x8] sm:$0xff]
      %v1285 = vld [vmem:[#allocation3 + $0x10] sm:$0xff]
      %v1286 = vld [vmem:[#allocation3 + $0x18] sm:$0xff]
      %v1287 = vld [vmem:[#allocation3 + $0x20] sm:$0xff]
      %v1288 = vld [vmem:[#allocation3 + $0x28] sm:$0xff]
      %v1289 = vld [vmem:[#allocation3 + $0x30] sm:$0xff]
      %v1290 = vld [vmem:[#allocation3 + $0x38] sm:$0xff]
      %v1291 = vld [vmem:[#allocation3 + $0x40] sm:$0xff]
      %v1292 = vld [vmem:[#allocation3 + $0x48] sm:$0xff]
      %v1293 = vld [vmem:[#allocation3 + $0x50] sm:$0xff]
      %v1294 = vld [vmem:[#allocation3 + $0x58] sm:$0xff]
      %v1295 = vld [vmem:[#allocation3 + $0x60] sm:$0xff]
      %v1296 = vld [vmem:[#allocation3 + $0x68] sm:$0xff]
      %v1297 = vld [vmem:[#allocation3 + $0x70] sm:$0xff]
      %v1298 = vld [vmem:[#allocation3 + $0x78] sm:$0xff]
      %v1299 = vld [vmem:[#allocation3 + $0x80] sm:$0xff]
      %v1300 = vld [vmem:[#allocation3 + $0x88] sm:$0xff]
      %v1301 = vld [vmem:[#allocation3 + $0x90] sm:$0xff]
      %v1302 = vld [vmem:[#allocation3 + $0x98] sm:$0xff]
      %v1303 = vld [vmem:[#allocation3 + $0xa0] sm:$0xff]
      %v1304 = vld [vmem:[#allocation3 + $0xa8] sm:$0xff]
      %v1305 = vld [vmem:[#allocation3 + $0xb0] sm:$0xff]
      %v1306 = vld [vmem:[#allocation3 + $0xb8] sm:$0xff]
      %v1307 = vld [vmem:[#allocation3 + $0xc0] sm:$0xff]
      %v1308 = vld [vmem:[#allocation3 + $0xc8] sm:$0xff]
      %v1309 = vld [vmem:[#allocation3 + $0xd0] sm:$0xff]
      %v1310 = vld [vmem:[#allocation3 + $0xd8] sm:$0xff]
      %v1311 = vld [vmem:[#allocation3 + $0xe0] sm:$0xff]
      %v1312 = vld [vmem:[#allocation3 + $0xe8] sm:$0xff]
      %v1313 = vld [vmem:[#allocation3 + $0xf0] sm:$0xff]
      %v1314 = vld [vmem:[#allocation3 + $0xf8] sm:$0xff]
      %v1315 = vld [vmem:[#allocation3 + $0x100] sm:$0xff]
      %v1316 = vld [vmem:[#allocation3 + $0x108] sm:$0xff]
      %v1317 = vld [vmem:[#allocation3 + $0x110] sm:$0xff]
      %v1318 = vld [vmem:[#allocation3 + $0x118] sm:$0xff]
      %v1319 = vld [vmem:[#allocation3 + $0x120] sm:$0xff]
      %v1320 = vld [vmem:[#allocation3 + $0x128] sm:$0xff]
      %v1321 = vld [vmem:[#allocation3 + $0x130] sm:$0xff]
      %v1322 = vld [vmem:[#allocation3 + $0x138] sm:$0xff]
      %v1323 = vld [vmem:[#allocation3 + $0x140] sm:$0xff]
      %v1324 = vld [vmem:[#allocation3 + $0x148] sm:$0xff]
      %v1325 = vld [vmem:[#allocation3 + $0x150] sm:$0xff]
      %v1326 = vld [vmem:[#allocation3 + $0x158] sm:$0xff]
      %v1327 = vld [vmem:[#allocation3 + $0x160] sm:$0xff]
      %v1328 = vld [vmem:[#allocation3 + $0x168] sm:$0xff]
      %v1329 = vld [vmem:[#allocation3 + $0x170] sm:$0xff]
      %v1330 = vld [vmem:[#allocation3 + $0x178] sm:$0xff]
      %v1331 = vld [vmem:[#allocation3 + $0x180] sm:$0xff]
      %v1332 = vld [vmem:[#allocation3 + $0x188] sm:$0xff]
      %v1333 = vld [vmem:[#allocation3 + $0x190] sm:$0xff]
      %v1334 = vld [vmem:[#allocation3 + $0x198] sm:$0xff]
      %v1335 = vld [vmem:[#allocation3 + $0x1a0] sm:$0xff]
      %v1336 = vld [vmem:[#allocation3 + $0x1a8] sm:$0xff]
      %v1337 = vld [vmem:[#allocation3 + $0x1b0] sm:$0xff]
      %v1338 = vld [vmem:[#allocation3 + $0x1b8] sm:$0xff]
      %v1339 = vld [vmem:[#allocation3 + $0x1c0] sm:$0xff]
      %v1340 = vld [vmem:[#allocation3 + $0x1c8] sm:$0xff]
      %v1341 = vld [vmem:[#allocation3 + $0x1d0] sm:$0xff]
      %v1342 = vld [vmem:[#allocation3 + $0x1d8] sm:$0xff]
      %v1343 = vld [vmem:[#allocation3 + $0x1e0] sm:$0xff]
      %v1344 = vld [vmem:[#allocation3 + $0x1e8] sm:$0xff]
      %v1345 = vld [vmem:[#allocation3 + $0x1f0] sm:$0xff]
      %v1346 = vld [vmem:[#allocation3 + $0x1f8] sm:$0xff]
      %v1347 = vld [vmem:[#allocation3 + $0x200] sm:$0xff]
      %v1348 = vld [vmem:[#allocation3 + $0x208] sm:$0xff]
      %v1349 = vld [vmem:[#allocation3 + $0x210] sm:$0xff]
      %v1350 = vld [vmem:[#allocation3 + $0x218] sm:$0xff]
      %v1351 = vld [vmem:[#allocation3 + $0x220] sm:$0xff]
      %v1352 = vld [vmem:[#allocation3 + $0x228] sm:$0xff]
      %v1353 = vld [vmem:[#allocation3 + $0x230] sm:$0xff]
      %v1354 = vld [vmem:[#allocation3 + $0x238] sm:$0xff]
      %v1355 = vld [vmem:[#allocation3 + $0x240] sm:$0xff]
      %v1356 = vld [vmem:[#allocation3 + $0x248] sm:$0xff]
      %v1357 = vld [vmem:[#allocation3 + $0x250] sm:$0xff]
      %v1358 = vld [vmem:[#allocation3 + $0x258] sm:$0xff]
      %v1359 = vld [vmem:[#allocation3 + $0x260] sm:$0xff]
      %v1360 = vld [vmem:[#allocation3 + $0x268] sm:$0xff]
      %v1361 = vld [vmem:[#allocation3 + $0x270] sm:$0xff]
      %v1362 = vld [vmem:[#allocation3 + $0x278] sm:$0xff]
      %v1363 = vld [vmem:[#allocation3 + $0x280] sm:$0xff]
      %v1364 = vld [vmem:[#allocation3 + $0x288] sm:$0xff]
      %v1365 = vld [vmem:[#allocation3 + $0x290] sm:$0xff]
      %v1366 = vld [vmem:[#allocation3 + $0x298] sm:$0xff]
      %v1367 = vld [vmem:[#allocation3 + $0x2a0] sm:$0xff]
      %v1368 = vld [vmem:[#allocation3 + $0x2a8] sm:$0xff]
      %v1369 = vld [vmem:[#allocation3 + $0x2b0] sm:$0xff]
      %v1370 = vld [vmem:[#allocation3 + $0x2b8] sm:$0xff]
      %v1371 = vld [vmem:[#allocation3 + $0x2c0] sm:$0xff]
      %v1372 = vld [vmem:[#allocation3 + $0x2c8] sm:$0xff]
      %v1373 = vpack.c.bf16 %v1293, %v1283
      %v1374 = vpack.c.bf16 %v1294, %v1284
      %v1375 = vpack.c.bf16 %v1295, %v1285
      %v1376 = vpack.c.bf16 %v1296, %v1286
      %v1377 = vpack.c.bf16 %v1297, %v1287
      %v1378 = vpack.c.bf16 %v1298, %v1288
      %v1379 = vpack.c.bf16 %v1299, %v1289
      %v1380 = vpack.c.bf16 %v1300, %v1290
      %v1381 = vpack.c.bf16 %v1301, %v1291
      %v1382 = vpack.c.bf16 %v1302, %v1292
      %v1383 = vpack.c.bf16 %v1313, %v1303
      %v1384 = vpack.c.bf16 %v1314, %v1304
      %v1385 = vpack.c.bf16 %v1315, %v1305
      %v1386 = vpack.c.bf16 %v1316, %v1306
      %v1387 = vpack.c.bf16 %v1317, %v1307
      %v1388 = vpack.c.bf16 %v1318, %v1308
      %v1389 = vpack.c.bf16 %v1319, %v1309
      %v1390 = vpack.c.bf16 %v1320, %v1310
      %v1391 = vpack.c.bf16 %v1321, %v1311
      %v1392 = vpack.c.bf16 %v1322, %v1312
      %v1393 = vpack.c.bf16 %v1333, %v1323
      %v1394 = vpack.c.bf16 %v1334, %v1324
      %v1395 = vpack.c.bf16 %v1335, %v1325
      %v1396 = vpack.c.bf16 %v1336, %v1326
      %v1397 = vpack.c.bf16 %v1337, %v1327
      %v1398 = vpack.c.bf16 %v1338, %v1328
      %v1399 = vpack.c.bf16 %v1339, %v1329
      %v1400 = vpack.c.bf16 %v1340, %v1330
      %v1401 = vpack.c.bf16 %v1341, %v1331
      %v1402 = vpack.c.bf16 %v1342, %v1332
      %v1403 = vpack.c.bf16 %v1353, %v1343
      %v1404 = vpack.c.bf16 %v1354, %v1344
      %v1405 = vpack.c.bf16 %v1355, %v1345
      %v1406 = vpack.c.bf16 %v1356, %v1346
      %v1407 = vpack.c.bf16 %v1357, %v1347
      %v1408 = vpack.c.bf16 %v1358, %v1348
      %v1409 = vpack.c.bf16 %v1359, %v1349
      %v1410 = vpack.c.bf16 %v1360, %v1350
      %v1411 = vpack.c.bf16 %v1361, %v1351
      %v1412 = vpack.c.bf16 %v1362, %v1352
      %v1413 = vpack.c.bf16 %v1363, %v1363
      %v1414 = vpack.c.bf16 %v1364, %v1364
      %v1415 = vpack.c.bf16 %v1365, %v1365
      %v1416 = vpack.c.bf16 %v1366, %v1366
      %v1417 = vpack.c.bf16 %v1367, %v1367
      %v1418 = vpack.c.bf16 %v1368, %v1368
      %v1419 = vpack.c.bf16 %v1369, %v1369
      %v1420 = vpack.c.bf16 %v1370, %v1370
      %v1421 = vpack.c.bf16 %v1371, %v1371
      %v1422 = vpack.c.bf16 %v1372, %v1372
      %v1423 = vld [vmem:[%s2] sm:$0xff]
      %1425 = vset.pattern.permute.xlu0 0
      %1426 = vperm.xlu0 %1425, %v1423
      %v1427 = vpop.permute.xlu0 %1426
      %vm1429 = vcmask 588800
      %v1431 = vsel %vm1429, %v1282, 0
      %vm1433 = vcmask 1043456
      %v1435 = vsel %vm1433, %v1413, 0
      %v1438 = vsel %vm1433, %v1414, 0
      %v1441 = vsel %vm1433, %v1415, 0
      %v1444 = vsel %vm1433, %v1416, 0
      %v1447 = vsel %vm1433, %v1417, 0
      %v1450 = vsel %vm1433, %v1418, 0
      %v1453 = vsel %vm1433, %v1419, 0
      %v1456 = vsel %vm1433, %v1420, 0
      %v1459 = vsel %vm1433, %v1421, 0
      %v1462 = vsel %vm1433, %v1422, 0
      %1464 = vmatprep.subr.bf16.mxu0 %v1374
      %1465 = vmatpush1.bf16.msra.mxu0 %v1373
      %1466 = vmatprep.subr.bf16.mxu0 %v1384
      %1467 = vmatpush1.bf16.msra.mxu0 %v1383
      %1468 = vmatprep.subr.bf16.mxu0 %v1394
      %1469 = vmatpush1.bf16.msra.mxu0 %v1393
      %1470 = vmatprep.subr.bf16.mxu0 %v1404
      %1471 = vmatpush1.bf16.msra.mxu0 %v1403
      %1472 = vmatprep.subr.bf16.mxu0 %v1438
      %1473 = vmatpush1.bf16.msra.mxu0 %v1435
      %1474 = vmatprep.subr.bf16.mxu0 0
      %1475 = vmatpush1.bf16.msra.mxu0 0
      %1476 = vmatprep.subr.bf16.mxu0 0
      %1477 = vmatpush1.bf16.msra.mxu0 0
      %1478 = vmatprep.subr.bf16.mxu0 0
      %1479 = vmatpush1.bf16.msra.mxu0 0
      %1480 = vmatprep.subr.bf16.mxu0 0
      %1481 = vmatpush1.bf16.msra.mxu0 0
      %1482 = vmatprep.subr.bf16.mxu0 0
      %1483 = vmatpush1.bf16.msra.mxu0 0
      %1484 = vmatprep.subr.bf16.mxu0 0
      %1485 = vmatpush1.bf16.msra.mxu0 0
      %1486 = vmatprep.subr.bf16.mxu0 0
      %1487 = vmatpush1.bf16.msra.mxu0 0
      %1488 = vmatprep.subr.bf16.mxu0 0
      %1489 = vmatpush1.bf16.msra.mxu0 0
      %1490 = vmatprep.subr.bf16.mxu0 0
      %1491 = vmatpush1.bf16.msra.mxu0 0
      %1492 = vmatprep.subr.bf16.mxu0 0
      %1493 = vmatpush1.bf16.msra.mxu0 0
      %1494 = vmatprep.subr.bf16.mxu0 0
      %1495 = vmatpush1.bf16.msra.mxu0 0
      %1496 = vmatprep.mubr.bf16.mxu0 0
      %1497 = vmatmul.mubr.bf16.gmra.mrb[0].mxu0 %v1431
      %v1498 = vpop.f32.mrb[0].mxu0
      %v1499 = vadd.f32 %v1427, %v1498
      %v1500 = vpop.f32.mrb[0].mxu0
      %v1501 = vadd.f32 %v1427, %v1500
      %v1502 = vpop.f32.mrb[0].mxu0
      %v1503 = vpop.f32.mrb[0].mxu0
      %1504 = vdwg.mxu0
      %1505 = vmatprep.subr.bf16.mxu0 %v1376
      %1506 = vmatpush1.bf16.msra.mxu0 %v1375
      %1507 = vmatprep.subr.bf16.mxu0 %v1386
      %1508 = vmatpush1.bf16.msra.mxu0 %v1385
      %1509 = vmatprep.subr.bf16.mxu0 %v1396
      %1510 = vmatpush1.bf16.msra.mxu0 %v1395
      %1511 = vmatprep.subr.bf16.mxu0 %v1406
      %1512 = vmatpush1.bf16.msra.mxu0 %v1405
      %1513 = vmatprep.subr.bf16.mxu0 %v1444
      %1514 = vmatpush1.bf16.msra.mxu0 %v1441
      %1515 = vmatprep.subr.bf16.mxu0 0
      %1516 = vmatpush1.bf16.msra.mxu0 0
      %1517 = vmatprep.subr.bf16.mxu0 0
      %1518 = vmatpush1.bf16.msra.mxu0 0
      %1519 = vmatprep.subr.bf16.mxu0 0
      %1520 = vmatpush1.bf16.msra.mxu0 0
      %1521 = vmatprep.subr.bf16.mxu0 0
      %1522 = vmatpush1.bf16.msra.mxu0 0
      %1523 = vmatprep.subr.bf16.mxu0 0
      %1524 = vmatpush1.bf16.msra.mxu0 0
      %1525 = vmatprep.subr.bf16.mxu0 0
      %1526 = vmatpush1.bf16.msra.mxu0 0
      %1527 = vmatprep.subr.bf16.mxu0 0
      %1528 = vmatpush1.bf16.msra.mxu0 0
      %1529 = vmatprep.subr.bf16.mxu0 0
      %1530 = vmatpush1.bf16.msra.mxu0 0
      %1531 = vmatprep.subr.bf16.mxu0 0
      %1532 = vmatpush1.bf16.msra.mxu0 0
      %1533 = vmatprep.subr.bf16.mxu0 0
      %1534 = vmatpush1.bf16.msra.mxu0 0
      %1535 = vmatprep.subr.bf16.mxu0 0
      %1536 = vmatpush1.bf16.msra.mxu0 0
      %1537 = vmatprep.mubr.bf16.mxu0 0
      %1538 = vmatmul.mubr.bf16.gmra.mrb[0].mxu0 %v1431
      %v1539 = vpop.f32.mrb[0].mxu0
      %v1540 = vadd.f32 %v1427, %v1539
      %v1541 = vpop.f32.mrb[0].mxu0
      %v1542 = vadd.f32 %v1427, %v1541
      %v1543 = vpop.f32.mrb[0].mxu0
      %v1544 = vpop.f32.mrb[0].mxu0
      %1545 = vdwg.mxu0
      %1546 = vmatprep.subr.bf16.mxu0 %v1378
      %1547 = vmatpush1.bf16.msra.mxu0 %v1377
      %1548 = vmatprep.subr.bf16.mxu0 %v1388
      %1549 = vmatpush1.bf16.msra.mxu0 %v1387
      %1550 = vmatprep.subr.bf16.mxu0 %v1398
      %1551 = vmatpush1.bf16.msra.mxu0 %v1397
      %1552 = vmatprep.subr.bf16.mxu0 %v1408
      %1553 = vmatpush1.bf16.msra.mxu0 %v1407
      %1554 = vmatprep.subr.bf16.mxu0 %v1450
      %1555 = vmatpush1.bf16.msra.mxu0 %v1447
      %1556 = vmatprep.subr.bf16.mxu0 0
      %1557 = vmatpush1.bf16.msra.mxu0 0
      %1558 = vmatprep.subr.bf16.mxu0 0
      %1559 = vmatpush1.bf16.msra.mxu0 0
      %1560 = vmatprep.subr.bf16.mxu0 0
      %1561 = vmatpush1.bf16.msra.mxu0 0
      %1562 = vmatprep.subr.bf16.mxu0 0
      %1563 = vmatpush1.bf16.msra.mxu0 0
      %1564 = vmatprep.subr.bf16.mxu0 0
      %1565 = vmatpush1.bf16.msra.mxu0 0
      %1566 = vmatprep.subr.bf16.mxu0 0
      %1567 = vmatpush1.bf16.msra.mxu0 0
      %1568 = vmatprep.subr.bf16.mxu0 0
      %1569 = vmatpush1.bf16.msra.mxu0 0
      %1570 = vmatprep.subr.bf16.mxu0 0
      %1571 = vmatpush1.bf16.msra.mxu0 0
      %1572 = vmatprep.subr.bf16.mxu0 0
      %1573 = vmatpush1.bf16.msra.mxu0 0
      %1574 = vmatprep.subr.bf16.mxu0 0
      %1575 = vmatpush1.bf16.msra.mxu0 0
      %1576 = vmatprep.subr.bf16.mxu0 0
      %1577 = vmatpush1.bf16.msra.mxu0 0
      %1578 = vmatprep.mubr.bf16.mxu0 0
      %1579 = vmatmul.mubr.bf16.gmra.mrb[0].mxu0 %v1431
      %v1580 = vpop.f32.mrb[0].mxu0
      %v1581 = vadd.f32 %v1427, %v1580
      %v1582 = vpop.f32.mrb[0].mxu0
      %v1583 = vadd.f32 %v1427, %v1582
      %v1584 = vpop.f32.mrb[0].mxu0
      %v1585 = vpop.f32.mrb[0].mxu0
      %1586 = vdwg.mxu0
      %1587 = vmatprep.subr.bf16.mxu0 %v1380
      %1588 = vmatpush1.bf16.msra.mxu0 %v1379
      %1589 = vmatprep.subr.bf16.mxu0 %v1390
      %1590 = vmatpush1.bf16.msra.mxu0 %v1389
      %1591 = vmatprep.subr.bf16.mxu0 %v1400
      %1592 = vmatpush1.bf16.msra.mxu0 %v1399
      %1593 = vmatprep.subr.bf16.mxu0 %v1410
      %1594 = vmatpush1.bf16.msra.mxu0 %v1409
      %1595 = vmatprep.subr.bf16.mxu0 %v1456
      %1596 = vmatpush1.bf16.msra.mxu0 %v1453
      %1597 = vmatprep.subr.bf16.mxu0 0
      %1598 = vmatpush1.bf16.msra.mxu0 0
      %1599 = vmatprep.subr.bf16.mxu0 0
      %1600 = vmatpush1.bf16.msra.mxu0 0
      %1601 = vmatprep.subr.bf16.mxu0 0
      %1602 = vmatpush1.bf16.msra.mxu0 0
      %1603 = vmatprep.subr.bf16.mxu0 0
      %1604 = vmatpush1.bf16.msra.mxu0 0
      %1605 = vmatprep.subr.bf16.mxu0 0
      %1606 = vmatpush1.bf16.msra.mxu0 0
      %1607 = vmatprep.subr.bf16.mxu0 0
      %1608 = vmatpush1.bf16.msra.mxu0 0
      %1609 = vmatprep.subr.bf16.mxu0 0
      %1610 = vmatpush1.bf16.msra.mxu0 0
      %1611 = vmatprep.subr.bf16.mxu0 0
      %1612 = vmatpush1.bf16.msra.mxu0 0
      %1613 = vmatprep.subr.bf16.mxu0 0
      %1614 = vmatpush1.bf16.msra.mxu0 0
      %1615 = vmatprep.subr.bf16.mxu0 0
      %1616 = vmatpush1.bf16.msra.mxu0 0
      %1617 = vmatprep.subr.bf16.mxu0 0
      %1618 = vmatpush1.bf16.msra.mxu0 0
      %1619 = vmatprep.mubr.bf16.mxu0 0
      %1620 = vmatmul.mubr.bf16.gmra.mrb[0].mxu0 %v1431
      %v1621 = vpop.f32.mrb[0].mxu0
      %v1622 = vadd.f32 %v1427, %v1621
      %v1623 = vpop.f32.mrb[0].mxu0
      %v1624 = vadd.f32 %v1427, %v1623
      %v1625 = vpop.f32.mrb[0].mxu0
      %v1626 = vpop.f32.mrb[0].mxu0
      %1627 = vdwg.mxu0
      %1628 = vmatprep.subr.bf16.mxu0 %v1382
      %1629 = vmatpush1.bf16.msra.mxu0 %v1381
      %1630 = vmatprep.subr.bf16.mxu0 %v1392
      %1631 = vmatpush1.bf16.msra.mxu0 %v1391
      %1632 = vmatprep.subr.bf16.mxu0 %v1402
      %1633 = vmatpush1.bf16.msra.mxu0 %v1401
      %1634 = vmatprep.subr.bf16.mxu0 %v1412
      %1635 = vmatpush1.bf16.msra.mxu0 %v1411
      %1636 = vmatprep.subr.bf16.mxu0 %v1462
      %1637 = vmatpush1.bf16.msra.mxu0 %v1459
      %1638 = vmatprep.subr.bf16.mxu0 0
      %1639 = vmatpush1.bf16.msra.mxu0 0
      %1640 = vmatprep.subr.bf16.mxu0 0
      %1641 = vmatpush1.bf16.msra.mxu0 0
      %1642 = vmatprep.subr.bf16.mxu0 0
      %1643 = vmatpush1.bf16.msra.mxu0 0
      %1644 = vmatprep.subr.bf16.mxu0 0
      %1645 = vmatpush1.bf16.msra.mxu0 0
      %1646 = vmatprep.subr.bf16.mxu0 0
      %1647 = vmatpush1.bf16.msra.mxu0 0
      %1648 = vmatprep.subr.bf16.mxu0 0
      %1649 = vmatpush1.bf16.msra.mxu0 0
      %1650 = vmatprep.subr.bf16.mxu0 0
      %1651 = vmatpush1.bf16.msra.mxu0 0
      %1652 = vmatprep.subr.bf16.mxu0 0
      %1653 = vmatpush1.bf16.msra.mxu0 0
      %1654 = vmatprep.subr.bf16.mxu0 0
      %1655 = vmatpush1.bf16.msra.mxu0 0
      %1656 = vmatprep.subr.bf16.mxu0 0
      %1657 = vmatpush1.bf16.msra.mxu0 0
      %1658 = vmatprep.subr.bf16.mxu0 0
      %1659 = vmatpush1.bf16.msra.mxu0 0
      %1660 = vmatprep.mubr.bf16.mxu0 0
      %1661 = vmatmul.mubr.bf16.gmra.mrb[0].mxu0 %v1431
      %v1662 = vpop.f32.mrb[0].mxu0
      %v1663 = vadd.f32 %v1427, %v1662
      %v1664 = vpop.f32.mrb[0].mxu0
      %v1665 = vadd.f32 %v1427, %v1664
      %v1666 = vpop.f32.mrb[0].mxu0
      %v1667 = vpop.f32.mrb[0].mxu0
      %1668 = vdwg.mxu0
      %v1669 = vmax.f32 %v1499, 0.0
      %v1670 = vmax.f32 %v1501, 0.0
      %v1671 = vmax.f32 %v1540, 0.0
      %v1672 = vmax.f32 %v1542, 0.0
      %v1673 = vmax.f32 %v1581, 0.0
      %v1674 = vmax.f32 %v1583, 0.0
      %v1675 = vmax.f32 %v1622, 0.0
      %v1676 = vmax.f32 %v1624, 0.0
      %v1677 = vmax.f32 %v1663, 0.0
      %v1678 = vmax.f32 %v1665, 0.0
      %v1679 = vld [vmem:[%s13] sm:$0xff]
      %v1680 = vld [vmem:[%s13 + $0x8] sm:$0x3]
      %v1683 = vlaneseq
      %v1684 = vshrl.u32 %v1683, 7
      %v1685 = vsub.s32 0, %v1684
      %v1686 = vrot.slane %v1679, %v1685
      %v1687 = vlaneseq
      %v1688 = vshrl.u32 %v1687, 7
      %v1689 = vsub.s32 1, %v1688
      %v1690 = vrot.slane %v1679, %v1689
      %v1691 = vlaneseq
      %v1692 = vshrl.u32 %v1691, 7
      %v1693 = vsub.s32 2, %v1692
      %v1694 = vrot.slane %v1679, %v1693
      %v1695 = vlaneseq
      %v1696 = vshrl.u32 %v1695, 7
      %v1697 = vsub.s32 3, %v1696
      %v1698 = vrot.slane %v1679, %v1697
      %v1699 = vlaneseq
      %v1700 = vshrl.u32 %v1699, 7
      %v1701 = vsub.s32 4, %v1700
      %v1702 = vrot.slane %v1679, %v1701
      %v1703 = vlaneseq
      %v1704 = vshrl.u32 %v1703, 7
      %v1705 = vsub.s32 5, %v1704
      %v1706 = vrot.slane %v1679, %v1705
      %v1707 = vlaneseq
      %v1708 = vshrl.u32 %v1707, 7
      %v1709 = vsub.s32 6, %v1708
      %v1710 = vrot.slane %v1679, %v1709
      %v1711 = vlaneseq
      %v1712 = vshrl.u32 %v1711, 7
      %v1713 = vsub.s32 7, %v1712
      %v1714 = vrot.slane %v1679, %v1713
      %v1715 = vlaneseq
      %v1716 = vshrl.u32 %v1715, 7
      %v1717 = vsub.s32 0, %v1716
      %v1718 = vrot.slane %v1680, %v1717
      %v1719 = vlaneseq
      %v1720 = vshrl.u32 %v1719, 7
      %v1721 = vsub.s32 1, %v1720
      %v1722 = vrot.slane %v1680, %v1721
      %v1733 = vmul.f32 %v1669, %v1686
      %v1734 = vmul.f32 %v1670, %v1690
      %v1735 = vmul.f32 %v1671, %v1694
      %v1736 = vmul.f32 %v1672, %v1698
      %v1737 = vmul.f32 %v1673, %v1702
      %v1738 = vmul.f32 %v1674, %v1706
      %v1739 = vmul.f32 %v1675, %v1710
      %v1740 = vmul.f32 %v1676, %v1714
      %v1741 = vmul.f32 %v1677, %v1718
      %v1742 = vmul.f32 %v1678, %v1722
      %1743 = vst [vmem:[#allocation2 + $0x8] sm:$0xff] %v1733
      %1744 = vst [vmem:[#allocation2 + $0x10] sm:$0xff] %v1734
      %1745 = vst [vmem:[#allocation2 + $0x18] sm:$0xff] %v1735
      %1746 = vst [vmem:[#allocation2 + $0x20] sm:$0xff] %v1736
      %1747 = vst [vmem:[#allocation2 + $0x28] sm:$0xff] %v1737
      %1748 = vst [vmem:[#allocation2 + $0x30] sm:$0xff] %v1738
      %1749 = vst [vmem:[#allocation2 + $0x38] sm:$0xff] %v1739
      %1750 = vst [vmem:[#allocation2 + $0x40] sm:$0xff] %v1740
      %1751 = vst [vmem:[#allocation2 + $0x48] sm:$0xff] %v1741
      %1752 = vst [vmem:[#allocation2 + $0x50] sm:$0xff] %v1742
      %v1753 = vld [vmem:[#allocation2] sm:$0xff]
      %v1754 = vld [vmem:[#allocation2 + $0x8] sm:$0xff]
      %v1755 = vld [vmem:[#allocation2 + $0x10] sm:$0xff]
      %v1756 = vld [vmem:[#allocation2 + $0x18] sm:$0xff]
      %v1757 = vld [vmem:[#allocation2 + $0x20] sm:$0xff]
      %v1758 = vld [vmem:[#allocation2 + $0x28] sm:$0xff]
      %v1759 = vld [vmem:[#allocation2 + $0x30] sm:$0xff]
      %v1760 = vld [vmem:[#allocation2 + $0x38] sm:$0xff]
      %v1761 = vld [vmem:[#allocation2 + $0x40] sm:$0xff]
      %v1762 = vld [vmem:[#allocation2 + $0x48] sm:$0xff]
      %v1763 = vld [vmem:[#allocation2 + $0x50] sm:$0xff]
      %1775 = vrot.lane.b32.xlu0 %v1753, 35
      %v1776 = vpop.permute.xlu0 %1775
      %1777 = vrot.lane.b32.xlu0 %v1754, 35
      %v1778 = vpop.permute.xlu0 %1777
      %1779 = vrot.lane.b32.xlu0 %v1755, 35
      %v1780 = vpop.permute.xlu0 %1779
      %1781 = vrot.lane.b32.xlu0 %v1756, 35
      %v1782 = vpop.permute.xlu0 %1781
      %1783 = vrot.lane.b32.xlu0 %v1757, 35
      %v1784 = vpop.permute.xlu0 %1783
      %1785 = vrot.lane.b32.xlu0 %v1758, 35
      %v1786 = vpop.permute.xlu0 %1785
      %1787 = vrot.lane.b32.xlu0 %v1759, 35
      %v1788 = vpop.permute.xlu0 %1787
      %1789 = vrot.lane.b32.xlu0 %v1760, 35
      %v1790 = vpop.permute.xlu0 %1789
      %1791 = vrot.lane.b32.xlu0 %v1761, 35
      %v1792 = vpop.permute.xlu0 %1791
      %1793 = vrot.lane.b32.xlu0 %v1762, 35
      %v1794 = vpop.permute.xlu0 %1793
      %1795 = vrot.lane.b32.xlu0 %v1763, 35
      %v1796 = vpop.permute.xlu0 %1795
      %v1797 = vsel %vm716, %v1776, %v1778
      %v1798 = vsel %vm716, %v1778, %v1780
      %v1799 = vsel %vm716, %v1780, %v1782
      %v1800 = vsel %vm716, %v1782, %v1784
      %v1801 = vsel %vm716, %v1784, %v1786
      %v1802 = vsel %vm716, %v1786, %v1788
      %v1803 = vsel %vm716, %v1788, %v1790
      %v1804 = vsel %vm716, %v1790, %v1792
      %v1805 = vsel %vm716, %v1792, %v1794
      %v1806 = vsel %vm716, %v1794, %v1796
      %1817 = vst [vmem:[#allocation3] sm:$0xff] %v1797
      %1818 = vst [vmem:[#allocation3 + $0x8] sm:$0xff] %v1798
      %1819 = vst [vmem:[#allocation3 + $0x10] sm:$0xff] %v1799
      %1820 = vst [vmem:[#allocation3 + $0x18] sm:$0xff] %v1800
      %1821 = vst [vmem:[#allocation3 + $0x20] sm:$0xff] %v1801
      %1822 = vst [vmem:[#allocation3 + $0x28] sm:$0xff] %v1802
      %1823 = vst [vmem:[#allocation3 + $0x30] sm:$0xff] %v1803
      %1824 = vst [vmem:[#allocation3 + $0x38] sm:$0xff] %v1804
      %1825 = vst [vmem:[#allocation3 + $0x40] sm:$0xff] %v1805
      %1826 = vst [vmem:[#allocation3 + $0x48] sm:$0xff] %v1806
      %v1827 = vld [vmem:[#allocation2] sm:$0xff]
      %v1828 = vld [vmem:[#allocation2 + $0x8] sm:$0xff]
      %v1829 = vld [vmem:[#allocation2 + $0x10] sm:$0xff]
      %v1830 = vld [vmem:[#allocation2 + $0x18] sm:$0xff]
      %v1831 = vld [vmem:[#allocation2 + $0x20] sm:$0xff]
      %v1832 = vld [vmem:[#allocation2 + $0x28] sm:$0xff]
      %v1833 = vld [vmem:[#allocation2 + $0x30] sm:$0xff]
      %v1834 = vld [vmem:[#allocation2 + $0x38] sm:$0xff]
      %v1835 = vld [vmem:[#allocation2 + $0x40] sm:$0xff]
      %v1836 = vld [vmem:[#allocation2 + $0x48] sm:$0xff]
      %v1837 = vld [vmem:[#allocation2 + $0x50] sm:$0xff]
      %1849 = vrot.lane.b32.xlu0 %v1827, 34
      %v1850 = vpop.permute.xlu0 %1849
      %1851 = vrot.lane.b32.xlu0 %v1828, 34
      %v1852 = vpop.permute.xlu0 %1851
      %1853 = vrot.lane.b32.xlu0 %v1829, 34
      %v1854 = vpop.permute.xlu0 %1853
      %1855 = vrot.lane.b32.xlu0 %v1830, 34
      %v1856 = vpop.permute.xlu0 %1855
      %1857 = vrot.lane.b32.xlu0 %v1831, 34
      %v1858 = vpop.permute.xlu0 %1857
      %1859 = vrot.lane.b32.xlu0 %v1832, 34
      %v1860 = vpop.permute.xlu0 %1859
      %1861 = vrot.lane.b32.xlu0 %v1833, 34
      %v1862 = vpop.permute.xlu0 %1861
      %1863 = vrot.lane.b32.xlu0 %v1834, 34
      %v1864 = vpop.permute.xlu0 %1863
      %1865 = vrot.lane.b32.xlu0 %v1835, 34
      %v1866 = vpop.permute.xlu0 %1865
      %1867 = vrot.lane.b32.xlu0 %v1836, 34
      %v1868 = vpop.permute.xlu0 %1867
      %1869 = vrot.lane.b32.xlu0 %v1837, 34
      %v1870 = vpop.permute.xlu0 %1869
      %v1871 = vsel %vm791, %v1850, %v1852
      %v1872 = vsel %vm791, %v1852, %v1854
      %v1873 = vsel %vm791, %v1854, %v1856
      %v1874 = vsel %vm791, %v1856, %v1858
      %v1875 = vsel %vm791, %v1858, %v1860
      %v1876 = vsel %vm791, %v1860, %v1862
      %v1877 = vsel %vm791, %v1862, %v1864
      %v1878 = vsel %vm791, %v1864, %v1866
      %v1879 = vsel %vm791, %v1866, %v1868
      %v1880 = vsel %vm791, %v1868, %v1870
      %1891 = vst [vmem:[#allocation3 + $0x50] sm:$0xff] %v1871
      %1892 = vst [vmem:[#allocation3 + $0x58] sm:$0xff] %v1872
      %1893 = vst [vmem:[#allocation3 + $0x60] sm:$0xff] %v1873
      %1894 = vst [vmem:[#allocation3 + $0x68] sm:$0xff] %v1874
      %1895 = vst [vmem:[#allocation3 + $0x70] sm:$0xff] %v1875
      %1896 = vst [vmem:[#allocation3 + $0x78] sm:$0xff] %v1876
      %1897 = vst [vmem:[#allocation3 + $0x80] sm:$0xff] %v1877
      %1898 = vst [vmem:[#allocation3 + $0x88] sm:$0xff] %v1878
      %1899 = vst [vmem:[#allocation3 + $0x90] sm:$0xff] %v1879
      %1900 = vst [vmem:[#allocation3 + $0x98] sm:$0xff] %v1880
      %v1901 = vld [vmem:[#allocation2] sm:$0xff]
      %v1902 = vld [vmem:[#allocation2 + $0x8] sm:$0xff]
      %v1903 = vld [vmem:[#allocation2 + $0x10] sm:$0xff]
      %v1904 = vld [vmem:[#allocation2 + $0x18] sm:$0xff]
      %v1905 = vld [vmem:[#allocation2 + $0x20] sm:$0xff]
      %v1906 = vld [vmem:[#allocation2 + $0x28] sm:$0xff]
      %v1907 = vld [vmem:[#allocation2 + $0x30] sm:$0xff]
      %v1908 = vld [vmem:[#allocation2 + $0x38] sm:$0xff]
      %v1909 = vld [vmem:[#allocation2 + $0x40] sm:$0xff]
      %v1910 = vld [vmem:[#allocation2 + $0x48] sm:$0xff]
      %v1911 = vld [vmem:[#allocation2 + $0x50] sm:$0xff]
      %1923 = vrot.lane.b32.xlu0 %v1901, 33
      %v1924 = vpop.permute.xlu0 %1923
      %1925 = vrot.lane.b32.xlu0 %v1902, 33
      %v1926 = vpop.permute.xlu0 %1925
      %1927 = vrot.lane.b32.xlu0 %v1903, 33
      %v1928 = vpop.permute.xlu0 %1927
      %1929 = vrot.lane.b32.xlu0 %v1904, 33
      %v1930 = vpop.permute.xlu0 %1929
      %1931 = vrot.lane.b32.xlu0 %v1905, 33
      %v1932 = vpop.permute.xlu0 %1931
      %1933 = vrot.lane.b32.xlu0 %v1906, 33
      %v1934 = vpop.permute.xlu0 %1933
      %1935 = vrot.lane.b32.xlu0 %v1907, 33
      %v1936 = vpop.permute.xlu0 %1935
      %1937 = vrot.lane.b32.xlu0 %v1908, 33
      %v1938 = vpop.permute.xlu0 %1937
      %1939 = vrot.lane.b32.xlu0 %v1909, 33
      %v1940 = vpop.permute.xlu0 %1939
      %1941 = vrot.lane.b32.xlu0 %v1910, 33
      %v1942 = vpop.permute.xlu0 %1941
      %1943 = vrot.lane.b32.xlu0 %v1911, 33
      %v1944 = vpop.permute.xlu0 %1943
      %v1945 = vsel %vm866, %v1924, %v1926
      %v1946 = vsel %vm866, %v1926, %v1928
      %v1947 = vsel %vm866, %v1928, %v1930
      %v1948 = vsel %vm866, %v1930, %v1932
      %v1949 = vsel %vm866, %v1932, %v1934
      %v1950 = vsel %vm866, %v1934, %v1936
      %v1951 = vsel %vm866, %v1936, %v1938
      %v1952 = vsel %vm866, %v1938, %v1940
      %v1953 = vsel %vm866, %v1940, %v1942
      %v1954 = vsel %vm866, %v1942, %v1944
      %1965 = vst [vmem:[#allocation3 + $0xa0] sm:$0xff] %v1945
      %1966 = vst [vmem:[#allocation3 + $0xa8] sm:$0xff] %v1946
      %1967 = vst [vmem:[#allocation3 + $0xb0] sm:$0xff] %v1947
      %1968 = vst [vmem:[#allocation3 + $0xb8] sm:$0xff] %v1948
      %1969 = vst [vmem:[#allocation3 + $0xc0] sm:$0xff] %v1949
      %1970 = vst [vmem:[#allocation3 + $0xc8] sm:$0xff] %v1950
      %1971 = vst [vmem:[#allocation3 + $0xd0] sm:$0xff] %v1951
      %1972 = vst [vmem:[#allocation3 + $0xd8] sm:$0xff] %v1952
      %1973 = vst [vmem:[#allocation3 + $0xe0] sm:$0xff] %v1953
      %1974 = vst [vmem:[#allocation3 + $0xe8] sm:$0xff] %v1954
      %v1975 = vld [vmem:[#allocation2] sm:$0xff]
      %v1976 = vld [vmem:[#allocation2 + $0x8] sm:$0xff]
      %v1977 = vld [vmem:[#allocation2 + $0x10] sm:$0xff]
      %v1978 = vld [vmem:[#allocation2 + $0x18] sm:$0xff]
      %v1979 = vld [vmem:[#allocation2 + $0x20] sm:$0xff]
      %v1980 = vld [vmem:[#allocation2 + $0x28] sm:$0xff]
      %v1981 = vld [vmem:[#allocation2 + $0x30] sm:$0xff]
      %v1982 = vld [vmem:[#allocation2 + $0x38] sm:$0xff]
      %v1983 = vld [vmem:[#allocation2 + $0x40] sm:$0xff]
      %v1984 = vld [vmem:[#allocation2 + $0x48] sm:$0xff]
      %v1985 = vld [vmem:[#allocation2 + $0x50] sm:$0xff]
      %1997 = vrot.lane.b32.xlu0 %v1975, 1
      %v1998 = vpop.permute.xlu0 %1997
      %1999 = vrot.lane.b32.xlu0 %v1976, 1
      %v2000 = vpop.permute.xlu0 %1999
      %2001 = vrot.lane.b32.xlu0 %v1977, 1
      %v2002 = vpop.permute.xlu0 %2001
      %2003 = vrot.lane.b32.xlu0 %v1978, 1
      %v2004 = vpop.permute.xlu0 %2003
      %2005 = vrot.lane.b32.xlu0 %v1979, 1
      %v2006 = vpop.permute.xlu0 %2005
      %2007 = vrot.lane.b32.xlu0 %v1980, 1
      %v2008 = vpop.permute.xlu0 %2007
      %2009 = vrot.lane.b32.xlu0 %v1981, 1
      %v2010 = vpop.permute.xlu0 %2009
      %2011 = vrot.lane.b32.xlu0 %v1982, 1
      %v2012 = vpop.permute.xlu0 %2011
      %2013 = vrot.lane.b32.xlu0 %v1983, 1
      %v2014 = vpop.permute.xlu0 %2013
      %2015 = vrot.lane.b32.xlu0 %v1984, 1
      %v2016 = vpop.permute.xlu0 %2015
      %2017 = vrot.lane.b32.xlu0 %v1985, 1
      %v2018 = vpop.permute.xlu0 %2017
      %v2019 = vsel %vm941, %v1998, %v2000
      %v2020 = vsel %vm941, %v2000, %v2002
      %v2021 = vsel %vm941, %v2002, %v2004
      %v2022 = vsel %vm941, %v2004, %v2006
      %v2023 = vsel %vm941, %v2006, %v2008
      %v2024 = vsel %vm941, %v2008, %v2010
      %v2025 = vsel %vm941, %v2010, %v2012
      %v2026 = vsel %vm941, %v2012, %v2014
      %v2027 = vsel %vm941, %v2014, %v2016
      %v2028 = vsel %vm941, %v2016, %v2018
      %2039 = vst [vmem:[#allocation3 + $0xf0] sm:$0xff] %v2019
      %2040 = vst [vmem:[#allocation3 + $0xf8] sm:$0xff] %v2020
      %2041 = vst [vmem:[#allocation3 + $0x100] sm:$0xff] %v2021
      %2042 = vst [vmem:[#allocation3 + $0x108] sm:$0xff] %v2022
      %2043 = vst [vmem:[#allocation3 + $0x110] sm:$0xff] %v2023
      %2044 = vst [vmem:[#allocation3 + $0x118] sm:$0xff] %v2024
      %2045 = vst [vmem:[#allocation3 + $0x120] sm:$0xff] %v2025
      %2046 = vst [vmem:[#allocation3 + $0x128] sm:$0xff] %v2026
      %2047 = vst [vmem:[#allocation3 + $0x130] sm:$0xff] %v2027
      %2048 = vst [vmem:[#allocation3 + $0x138] sm:$0xff] %v2028
      %2049 = vst [vmem:[#allocation3 + $0x140] sm:$0xff] %v1733
      %2050 = vst [vmem:[#allocation3 + $0x148] sm:$0xff] %v1734
      %2051 = vst [vmem:[#allocation3 + $0x150] sm:$0xff] %v1735
      %2052 = vst [vmem:[#allocation3 + $0x158] sm:$0xff] %v1736
      %2053 = vst [vmem:[#allocation3 + $0x160] sm:$0xff] %v1737
      %2054 = vst [vmem:[#allocation3 + $0x168] sm:$0xff] %v1738
      %2055 = vst [vmem:[#allocation3 + $0x170] sm:$0xff] %v1739
      %2056 = vst [vmem:[#allocation3 + $0x178] sm:$0xff] %v1740
      %2057 = vst [vmem:[#allocation3 + $0x180] sm:$0xff] %v1741
      %2058 = vst [vmem:[#allocation3 + $0x188] sm:$0xff] %v1742
      %v2059 = vld [vmem:[#allocation2 + $0x8] sm:$0xff]
      %v2060 = vld [vmem:[#allocation2 + $0x10] sm:$0xff]
      %v2061 = vld [vmem:[#allocation2 + $0x18] sm:$0xff]
      %v2062 = vld [vmem:[#allocation2 + $0x20] sm:$0xff]
      %v2063 = vld [vmem:[#allocation2 + $0x28] sm:$0xff]
      %v2064 = vld [vmem:[#allocation2 + $0x30] sm:$0xff]
      %v2065 = vld [vmem:[#allocation2 + $0x38] sm:$0xff]
      %v2066 = vld [vmem:[#allocation2 + $0x40] sm:$0xff]
      %v2067 = vld [vmem:[#allocation2 + $0x48] sm:$0xff]
      %v2068 = vld [vmem:[#allocation2 + $0x50] sm:$0xff]
      %v2069 = vld [vmem:[#allocation2 + $0x58] sm:$0xff]
      %2081 = vrot.lane.b32.xlu0 %v2059, 127
      %v2082 = vpop.permute.xlu0 %2081
      %2083 = vrot.lane.b32.xlu0 %v2060, 127
      %v2084 = vpop.permute.xlu0 %2083
      %2085 = vrot.lane.b32.xlu0 %v2061, 127
      %v2086 = vpop.permute.xlu0 %2085
      %2087 = vrot.lane.b32.xlu0 %v2062, 127
      %v2088 = vpop.permute.xlu0 %2087
      %2089 = vrot.lane.b32.xlu0 %v2063, 127
      %v2090 = vpop.permute.xlu0 %2089
      %2091 = vrot.lane.b32.xlu0 %v2064, 127
      %v2092 = vpop.permute.xlu0 %2091
      %2093 = vrot.lane.b32.xlu0 %v2065, 127
      %v2094 = vpop.permute.xlu0 %2093
      %2095 = vrot.lane.b32.xlu0 %v2066, 127
      %v2096 = vpop.permute.xlu0 %2095
      %2097 = vrot.lane.b32.xlu0 %v2067, 127
      %v2098 = vpop.permute.xlu0 %2097
      %2099 = vrot.lane.b32.xlu0 %v2068, 127
      %v2100 = vpop.permute.xlu0 %2099
      %2101 = vrot.lane.b32.xlu0 %v2069, 127
      %v2102 = vpop.permute.xlu0 %2101
      %v2103 = vsel %vm1026, %v2082, %v2084
      %v2104 = vsel %vm1026, %v2084, %v2086
      %v2105 = vsel %vm1026, %v2086, %v2088
      %v2106 = vsel %vm1026, %v2088, %v2090
      %v2107 = vsel %vm1026, %v2090, %v2092
      %v2108 = vsel %vm1026, %v2092, %v2094
      %v2109 = vsel %vm1026, %v2094, %v2096
      %v2110 = vsel %vm1026, %v2096, %v2098
      %v2111 = vsel %vm1026, %v2098, %v2100
      %v2112 = vsel %vm1026, %v2100, %v2102
      %2123 = vst [vmem:[#allocation3 + $0x190] sm:$0xff] %v2103
      %2124 = vst [vmem:[#allocation3 + $0x198] sm:$0xff] %v2104
      %2125 = vst [vmem:[#allocation3 + $0x1a0] sm:$0xff] %v2105
      %2126 = vst [vmem:[#allocation3 + $0x1a8] sm:$0xff] %v2106
      %2127 = vst [vmem:[#allocation3 + $0x1b0] sm:$0xff] %v2107
      %2128 = vst [vmem:[#allocation3 + $0x1b8] sm:$0xff] %v2108
      %2129 = vst [vmem:[#allocation3 + $0x1c0] sm:$0xff] %v2109
      %2130 = vst [vmem:[#allocation3 + $0x1c8] sm:$0xff] %v2110
      %2131 = vst [vmem:[#allocation3 + $0x1d0] sm:$0xff] %v2111
      %2132 = vst [vmem:[#allocation3 + $0x1d8] sm:$0xff] %v2112
      %v2133 = vld [vmem:[#allocation2 + $0x8] sm:$0xff]
      %v2134 = vld [vmem:[#allocation2 + $0x10] sm:$0xff]
      %v2135 = vld [vmem:[#allocation2 + $0x18] sm:$0xff]
      %v2136 = vld [vmem:[#allocation2 + $0x20] sm:$0xff]
      %v2137 = vld [vmem:[#allocation2 + $0x28] sm:$0xff]
      %v2138 = vld [vmem:[#allocation2 + $0x30] sm:$0xff]
      %v2139 = vld [vmem:[#allocation2 + $0x38] sm:$0xff]
      %v2140 = vld [vmem:[#allocation2 + $0x40] sm:$0xff]
      %v2141 = vld [vmem:[#allocation2 + $0x48] sm:$0xff]
      %v2142 = vld [vmem:[#allocation2 + $0x50] sm:$0xff]
      %v2143 = vld [vmem:[#allocation2 + $0x58] sm:$0xff]
      %2155 = vrot.lane.b32.xlu0 %v2133, 95
      %v2156 = vpop.permute.xlu0 %2155
      %2157 = vrot.lane.b32.xlu0 %v2134, 95
      %v2158 = vpop.permute.xlu0 %2157
      %2159 = vrot.lane.b32.xlu0 %v2135, 95
      %v2160 = vpop.permute.xlu0 %2159
      %2161 = vrot.lane.b32.xlu0 %v2136, 95
      %v2162 = vpop.permute.xlu0 %2161
      %2163 = vrot.lane.b32.xlu0 %v2137, 95
      %v2164 = vpop.permute.xlu0 %2163
      %2165 = vrot.lane.b32.xlu0 %v2138, 95
      %v2166 = vpop.permute.xlu0 %2165
      %2167 = vrot.lane.b32.xlu0 %v2139, 95
      %v2168 = vpop.permute.xlu0 %2167
      %2169 = vrot.lane.b32.xlu0 %v2140, 95
      %v2170 = vpop.permute.xlu0 %2169
      %2171 = vrot.lane.b32.xlu0 %v2141, 95
      %v2172 = vpop.permute.xlu0 %2171
      %2173 = vrot.lane.b32.xlu0 %v2142, 95
      %v2174 = vpop.permute.xlu0 %2173
      %2175 = vrot.lane.b32.xlu0 %v2143, 95
      %v2176 = vpop.permute.xlu0 %2175
      %v2177 = vsel %vm1101, %v2156, %v2158
      %v2178 = vsel %vm1101, %v2158, %v2160
      %v2179 = vsel %vm1101, %v2160, %v2162
      %v2180 = vsel %vm1101, %v2162, %v2164
      %v2181 = vsel %vm1101, %v2164, %v2166
      %v2182 = vsel %vm1101, %v2166, %v2168
      %v2183 = vsel %vm1101, %v2168, %v2170
      %v2184 = vsel %vm1101, %v2170, %v2172
      %v2185 = vsel %vm1101, %v2172, %v2174
      %v2186 = vsel %vm1101, %v2174, %v2176
      %2197 = vst [vmem:[#allocation3 + $0x1e0] sm:$0xff] %v2177
      %2198 = vst [vmem:[#allocation3 + $0x1e8] sm:$0xff] %v2178
      %2199 = vst [vmem:[#allocation3 + $0x1f0] sm:$0xff] %v2179
      %2200 = vst [vmem:[#allocation3 + $0x1f8] sm:$0xff] %v2180
      %2201 = vst [vmem:[#allocation3 + $0x200] sm:$0xff] %v2181
      %2202 = vst [vmem:[#allocation3 + $0x208] sm:$0xff] %v2182
      %2203 = vst [vmem:[#allocation3 + $0x210] sm:$0xff] %v2183
      %2204 = vst [vmem:[#allocation3 + $0x218] sm:$0xff] %v2184
      %2205 = vst [vmem:[#allocation3 + $0x220] sm:$0xff] %v2185
      %2206 = vst [vmem:[#allocation3 + $0x228] sm:$0xff] %v2186
      %v2207 = vld [vmem:[#allocation2 + $0x8] sm:$0xff]
      %v2208 = vld [vmem:[#allocation2 + $0x10] sm:$0xff]
      %v2209 = vld [vmem:[#allocation2 + $0x18] sm:$0xff]
      %v2210 = vld [vmem:[#allocation2 + $0x20] sm:$0xff]
      %v2211 = vld [vmem:[#allocation2 + $0x28] sm:$0xff]
      %v2212 = vld [vmem:[#allocation2 + $0x30] sm:$0xff]
      %v2213 = vld [vmem:[#allocation2 + $0x38] sm:$0xff]
      %v2214 = vld [vmem:[#allocation2 + $0x40] sm:$0xff]
      %v2215 = vld [vmem:[#allocation2 + $0x48] sm:$0xff]
      %v2216 = vld [vmem:[#allocation2 + $0x50] sm:$0xff]
      %v2217 = vld [vmem:[#allocation2 + $0x58] sm:$0xff]
      %2229 = vrot.lane.b32.xlu0 %v2207, 94
      %v2230 = vpop.permute.xlu0 %2229
      %2231 = vrot.lane.b32.xlu0 %v2208, 94
      %v2232 = vpop.permute.xlu0 %2231
      %2233 = vrot.lane.b32.xlu0 %v2209, 94
      %v2234 = vpop.permute.xlu0 %2233
      %2235 = vrot.lane.b32.xlu0 %v2210, 94
      %v2236 = vpop.permute.xlu0 %2235
      %2237 = vrot.lane.b32.xlu0 %v2211, 94
      %v2238 = vpop.permute.xlu0 %2237
      %2239 = vrot.lane.b32.xlu0 %v2212, 94
      %v2240 = vpop.permute.xlu0 %2239
      %2241 = vrot.lane.b32.xlu0 %v2213, 94
      %v2242 = vpop.permute.xlu0 %2241
      %2243 = vrot.lane.b32.xlu0 %v2214, 94
      %v2244 = vpop.permute.xlu0 %2243
      %2245 = vrot.lane.b32.xlu0 %v2215, 94
      %v2246 = vpop.permute.xlu0 %2245
      %2247 = vrot.lane.b32.xlu0 %v2216, 94
      %v2248 = vpop.permute.xlu0 %2247
      %2249 = vrot.lane.b32.xlu0 %v2217, 94
      %v2250 = vpop.permute.xlu0 %2249
      %v2251 = vsel %vm1176, %v2230, %v2232
      %v2252 = vsel %vm1176, %v2232, %v2234
      %v2253 = vsel %vm1176, %v2234, %v2236
      %v2254 = vsel %vm1176, %v2236, %v2238
      %v2255 = vsel %vm1176, %v2238, %v2240
      %v2256 = vsel %vm1176, %v2240, %v2242
      %v2257 = vsel %vm1176, %v2242, %v2244
      %v2258 = vsel %vm1176, %v2244, %v2246
      %v2259 = vsel %vm1176, %v2246, %v2248
      %v2260 = vsel %vm1176, %v2248, %v2250
      %2271 = vst [vmem:[#allocation3 + $0x230] sm:$0xff] %v2251
      %2272 = vst [vmem:[#allocation3 + $0x238] sm:$0xff] %v2252
      %2273 = vst [vmem:[#allocation3 + $0x240] sm:$0xff] %v2253
      %2274 = vst [vmem:[#allocation3 + $0x248] sm:$0xff] %v2254
      %2275 = vst [vmem:[#allocation3 + $0x250] sm:$0xff] %v2255
      %2276 = vst [vmem:[#allocation3 + $0x258] sm:$0xff] %v2256
      %2277 = vst [vmem:[#allocation3 + $0x260] sm:$0xff] %v2257
      %2278 = vst [vmem:[#allocation3 + $0x268] sm:$0xff] %v2258
      %2279 = vst [vmem:[#allocation3 + $0x270] sm:$0xff] %v2259
      %2280 = vst [vmem:[#allocation3 + $0x278] sm:$0xff] %v2260
      %v2281 = vld [vmem:[#allocation2 + $0x8] sm:$0xff]
      %v2282 = vld [vmem:[#allocation2 + $0x10] sm:$0xff]
      %v2283 = vld [vmem:[#allocation2 + $0x18] sm:$0xff]
      %v2284 = vld [vmem:[#allocation2 + $0x20] sm:$0xff]
      %v2285 = vld [vmem:[#allocation2 + $0x28] sm:$0xff]
      %v2286 = vld [vmem:[#allocation2 + $0x30] sm:$0xff]
      %v2287 = vld [vmem:[#allocation2 + $0x38] sm:$0xff]
      %v2288 = vld [vmem:[#allocation2 + $0x40] sm:$0xff]
      %v2289 = vld [vmem:[#allocation2 + $0x48] sm:$0xff]
      %v2290 = vld [vmem:[#allocation2 + $0x50] sm:$0xff]
      %v2291 = vld [vmem:[#allocation2 + $0x58] sm:$0xff]
      %2303 = vrot.lane.b32.xlu0 %v2281, 93
      %v2304 = vpop.permute.xlu0 %2303
      %2305 = vrot.lane.b32.xlu0 %v2282, 93
      %v2306 = vpop.permute.xlu0 %2305
      %2307 = vrot.lane.b32.xlu0 %v2283, 93
      %v2308 = vpop.permute.xlu0 %2307
      %2309 = vrot.lane.b32.xlu0 %v2284, 93
      %v2310 = vpop.permute.xlu0 %2309
      %2311 = vrot.lane.b32.xlu0 %v2285, 93
      %v2312 = vpop.permute.xlu0 %2311
      %2313 = vrot.lane.b32.xlu0 %v2286, 93
      %v2314 = vpop.permute.xlu0 %2313
      %2315 = vrot.lane.b32.xlu0 %v2287, 93
      %v2316 = vpop.permute.xlu0 %2315
      %2317 = vrot.lane.b32.xlu0 %v2288, 93
      %v2318 = vpop.permute.xlu0 %2317
      %2319 = vrot.lane.b32.xlu0 %v2289, 93
      %v2320 = vpop.permute.xlu0 %2319
      %2321 = vrot.lane.b32.xlu0 %v2290, 93
      %v2322 = vpop.permute.xlu0 %2321
      %2323 = vrot.lane.b32.xlu0 %v2291, 93
      %v2324 = vpop.permute.xlu0 %2323
      %v2325 = vsel %vm1251, %v2304, %v2306
      %v2326 = vsel %vm1251, %v2306, %v2308
      %v2327 = vsel %vm1251, %v2308, %v2310
      %v2328 = vsel %vm1251, %v2310, %v2312
      %v2329 = vsel %vm1251, %v2312, %v2314
      %v2330 = vsel %vm1251, %v2314, %v2316
      %v2331 = vsel %vm1251, %v2316, %v2318
      %v2332 = vsel %vm1251, %v2318, %v2320
      %v2333 = vsel %vm1251, %v2320, %v2322
      %v2334 = vsel %vm1251, %v2322, %v2324
      %2345 = vst [vmem:[#allocation3 + $0x280] sm:$0xff] %v2325
      %2346 = vst [vmem:[#allocation3 + $0x288] sm:$0xff] %v2326
      %2347 = vst [vmem:[#allocation3 + $0x290] sm:$0xff] %v2327
      %2348 = vst [vmem:[#allocation3 + $0x298] sm:$0xff] %v2328
      %2349 = vst [vmem:[#allocation3 + $0x2a0] sm:$0xff] %v2329
      %2350 = vst [vmem:[#allocation3 + $0x2a8] sm:$0xff] %v2330
      %2351 = vst [vmem:[#allocation3 + $0x2b0] sm:$0xff] %v2331
      %2352 = vst [vmem:[#allocation3 + $0x2b8] sm:$0xff] %v2332
      %2353 = vst [vmem:[#allocation3 + $0x2c0] sm:$0xff] %v2333
      %2354 = vst [vmem:[#allocation3 + $0x2c8] sm:$0xff] %v2334
      %v2355 = vld [vmem:[%s3] sm:$0xf]
      %v2356 = vld [vmem:[%s3 + $0x4] sm:$0xf]
      %v2357 = vld [vmem:[#allocation3] sm:$0xff]
      %v2358 = vld [vmem:[#allocation3 + $0x8] sm:$0xff]
      %v2359 = vld [vmem:[#allocation3 + $0x10] sm:$0xff]
      %v2360 = vld [vmem:[#allocation3 + $0x18] sm:$0xff]
      %v2361 = vld [vmem:[#allocation3 + $0x20] sm:$0xff]
      %v2362 = vld [vmem:[#allocation3 + $0x28] sm:$0xff]
      %v2363 = vld [vmem:[#allocation3 + $0x30] sm:$0xff]
      %v2364 = vld [vmem:[#allocation3 + $0x38] sm:$0xff]
      %v2365 = vld [vmem:[#allocation3 + $0x40] sm:$0xff]
      %v2366 = vld [vmem:[#allocation3 + $0x48] sm:$0xff]
      %v2367 = vld [vmem:[#allocation3 + $0x50] sm:$0xff]
      %v2368 = vld [vmem:[#allocation3 + $0x58] sm:$0xff]
      %v2369 = vld [vmem:[#allocation3 + $0x60] sm:$0xff]
      %v2370 = vld [vmem:[#allocation3 + $0x68] sm:$0xff]
      %v2371 = vld [vmem:[#allocation3 + $0x70] sm:$0xff]
      %v2372 = vld [vmem:[#allocation3 + $0x78] sm:$0xff]
      %v2373 = vld [vmem:[#allocation3 + $0x80] sm:$0xff]
      %v2374 = vld [vmem:[#allocation3 + $0x88] sm:$0xff]
      %v2375 = vld [vmem:[#allocation3 + $0x90] sm:$0xff]
      %v2376 = vld [vmem:[#allocation3 + $0x98] sm:$0xff]
      %v2377 = vld [vmem:[#allocation3 + $0xa0] sm:$0xff]
      %v2378 = vld [vmem:[#allocation3 + $0xa8] sm:$0xff]
      %v2379 = vld [vmem:[#allocation3 + $0xb0] sm:$0xff]
      %v2380 = vld [vmem:[#allocation3 + $0xb8] sm:$0xff]
      %v2381 = vld [vmem:[#allocation3 + $0xc0] sm:$0xff]
      %v2382 = vld [vmem:[#allocation3 + $0xc8] sm:$0xff]
      %v2383 = vld [vmem:[#allocation3 + $0xd0] sm:$0xff]
      %v2384 = vld [vmem:[#allocation3 + $0xd8] sm:$0xff]
      %v2385 = vld [vmem:[#allocation3 + $0xe0] sm:$0xff]
      %v2386 = vld [vmem:[#allocation3 + $0xe8] sm:$0xff]
      %v2387 = vld [vmem:[#allocation3 + $0xf0] sm:$0xff]
      %v2388 = vld [vmem:[#allocation3 + $0xf8] sm:$0xff]
      %v2389 = vld [vmem:[#allocation3 + $0x100] sm:$0xff]
      %v2390 = vld [vmem:[#allocation3 + $0x108] sm:$0xff]
      %v2391 = vld [vmem:[#allocation3 + $0x110] sm:$0xff]
      %v2392 = vld [vmem:[#allocation3 + $0x118] sm:$0xff]
      %v2393 = vld [vmem:[#allocation3 + $0x120] sm:$0xff]
      %v2394 = vld [vmem:[#allocation3 + $0x128] sm:$0xff]
      %v2395 = vld [vmem:[#allocation3 + $0x130] sm:$0xff]
      %v2396 = vld [vmem:[#allocation3 + $0x138] sm:$0xff]
      %v2397 = vld [vmem:[#allocation3 + $0x140] sm:$0xff]
      %v2398 = vld [vmem:[#allocation3 + $0x148] sm:$0xff]
      %v2399 = vld [vmem:[#allocation3 + $0x150] sm:$0xff]
      %v2400 = vld [vmem:[#allocation3 + $0x158] sm:$0xff]
      %v2401 = vld [vmem:[#allocation3 + $0x160] sm:$0xff]
      %v2402 = vld [vmem:[#allocation3 + $0x168] sm:$0xff]
      %v2403 = vld [vmem:[#allocation3 + $0x170] sm:$0xff]
      %v2404 = vld [vmem:[#allocation3 + $0x178] sm:$0xff]
      %v2405 = vld [vmem:[#allocation3 + $0x180] sm:$0xff]
      %v2406 = vld [vmem:[#allocation3 + $0x188] sm:$0xff]
      %v2407 = vld [vmem:[#allocation3 + $0x190] sm:$0xff]
      %v2408 = vld [vmem:[#allocation3 + $0x198] sm:$0xff]
      %v2409 = vld [vmem:[#allocation3 + $0x1a0] sm:$0xff]
      %v2410 = vld [vmem:[#allocation3 + $0x1a8] sm:$0xff]
      %v2411 = vld [vmem:[#allocation3 + $0x1b0] sm:$0xff]
      %v2412 = vld [vmem:[#allocation3 + $0x1b8] sm:$0xff]
      %v2413 = vld [vmem:[#allocation3 + $0x1c0] sm:$0xff]
      %v2414 = vld [vmem:[#allocation3 + $0x1c8] sm:$0xff]
      %v2415 = vld [vmem:[#allocation3 + $0x1d0] sm:$0xff]
      %v2416 = vld [vmem:[#allocation3 + $0x1d8] sm:$0xff]
      %v2417 = vld [vmem:[#allocation3 + $0x1e0] sm:$0xff]
      %v2418 = vld [vmem:[#allocation3 + $0x1e8] sm:$0xff]
      %v2419 = vld [vmem:[#allocation3 + $0x1f0] sm:$0xff]
      %v2420 = vld [vmem:[#allocation3 + $0x1f8] sm:$0xff]
      %v2421 = vld [vmem:[#allocation3 + $0x200] sm:$0xff]
      %v2422 = vld [vmem:[#allocation3 + $0x208] sm:$0xff]
      %v2423 = vld [vmem:[#allocation3 + $0x210] sm:$0xff]
      %v2424 = vld [vmem:[#allocation3 + $0x218] sm:$0xff]
      %v2425 = vld [vmem:[#allocation3 + $0x220] sm:$0xff]
      %v2426 = vld [vmem:[#allocation3 + $0x228] sm:$0xff]
      %v2427 = vld [vmem:[#allocation3 + $0x230] sm:$0xff]
      %v2428 = vld [vmem:[#allocation3 + $0x238] sm:$0xff]
      %v2429 = vld [vmem:[#allocation3 + $0x240] sm:$0xff]
      %v2430 = vld [vmem:[#allocation3 + $0x248] sm:$0xff]
      %v2431 = vld [vmem:[#allocation3 + $0x250] sm:$0xff]
      %v2432 = vld [vmem:[#allocation3 + $0x258] sm:$0xff]
      %v2433 = vld [vmem:[#allocation3 + $0x260] sm:$0xff]
      %v2434 = vld [vmem:[#allocation3 + $0x268] sm:$0xff]
      %v2435 = vld [vmem:[#allocation3 + $0x270] sm:$0xff]
      %v2436 = vld [vmem:[#allocation3 + $0x278] sm:$0xff]
      %v2437 = vld [vmem:[#allocation3 + $0x280] sm:$0xff]
      %v2438 = vld [vmem:[#allocation3 + $0x288] sm:$0xff]
      %v2439 = vld [vmem:[#allocation3 + $0x290] sm:$0xff]
      %v2440 = vld [vmem:[#allocation3 + $0x298] sm:$0xff]
      %v2441 = vld [vmem:[#allocation3 + $0x2a0] sm:$0xff]
      %v2442 = vld [vmem:[#allocation3 + $0x2a8] sm:$0xff]
      %v2443 = vld [vmem:[#allocation3 + $0x2b0] sm:$0xff]
      %v2444 = vld [vmem:[#allocation3 + $0x2b8] sm:$0xff]
      %v2445 = vld [vmem:[#allocation3 + $0x2c0] sm:$0xff]
      %v2446 = vld [vmem:[#allocation3 + $0x2c8] sm:$0xff]
      %v2447 = vpack.c.bf16 %v2367, %v2357
      %v2448 = vpack.c.bf16 %v2368, %v2358
      %v2449 = vpack.c.bf16 %v2369, %v2359
      %v2450 = vpack.c.bf16 %v2370, %v2360
      %v2451 = vpack.c.bf16 %v2371, %v2361
      %v2452 = vpack.c.bf16 %v2372, %v2362
      %v2453 = vpack.c.bf16 %v2373, %v2363
      %v2454 = vpack.c.bf16 %v2374, %v2364
      %v2455 = vpack.c.bf16 %v2375, %v2365
      %v2456 = vpack.c.bf16 %v2376, %v2366
      %v2457 = vpack.c.bf16 %v2387, %v2377
      %v2458 = vpack.c.bf16 %v2388, %v2378
      %v2459 = vpack.c.bf16 %v2389, %v2379
      %v2460 = vpack.c.bf16 %v2390, %v2380
      %v2461 = vpack.c.bf16 %v2391, %v2381
      %v2462 = vpack.c.bf16 %v2392, %v2382
      %v2463 = vpack.c.bf16 %v2393, %v2383
      %v2464 = vpack.c.bf16 %v2394, %v2384
      %v2465 = vpack.c.bf16 %v2395, %v2385
      %v2466 = vpack.c.bf16 %v2396, %v2386
      %v2467 = vpack.c.bf16 %v2407, %v2397
      %v2468 = vpack.c.bf16 %v2408, %v2398
      %v2469 = vpack.c.bf16 %v2409, %v2399
      %v2470 = vpack.c.bf16 %v2410, %v2400
      %v2471 = vpack.c.bf16 %v2411, %v2401
      %v2472 = vpack.c.bf16 %v2412, %v2402
      %v2473 = vpack.c.bf16 %v2413, %v2403
      %v2474 = vpack.c.bf16 %v2414, %v2404
      %v2475 = vpack.c.bf16 %v2415, %v2405
      %v2476 = vpack.c.bf16 %v2416, %v2406
      %v2477 = vpack.c.bf16 %v2427, %v2417
      %v2478 = vpack.c.bf16 %v2428, %v2418
      %v2479 = vpack.c.bf16 %v2429, %v2419
      %v2480 = vpack.c.bf16 %v2430, %v2420
      %v2481 = vpack.c.bf16 %v2431, %v2421
      %v2482 = vpack.c.bf16 %v2432, %v2422
      %v2483 = vpack.c.bf16 %v2433, %v2423
      %v2484 = vpack.c.bf16 %v2434, %v2424
      %v2485 = vpack.c.bf16 %v2435, %v2425
      %v2486 = vpack.c.bf16 %v2436, %v2426
      %v2487 = vpack.c.bf16 %v2437, %v2437
      %v2488 = vpack.c.bf16 %v2438, %v2438
      %v2489 = vpack.c.bf16 %v2439, %v2439
      %v2490 = vpack.c.bf16 %v2440, %v2440
      %v2491 = vpack.c.bf16 %v2441, %v2441
      %v2492 = vpack.c.bf16 %v2442, %v2442
      %v2493 = vpack.c.bf16 %v2443, %v2443
      %v2494 = vpack.c.bf16 %v2444, %v2444
      %v2495 = vpack.c.bf16 %v2445, %v2445
      %v2496 = vpack.c.bf16 %v2446, %v2446
      %v2497 = vld [vmem:[%s4] sm:$0xff]
      %v2498 = vld [vmem:[%s4 + $0x8] sm:$0xff]
      %2500 = vset.pattern.permute.xlu0 0
      %2501 = vperm.xlu0 %2500, %v2497
      %v2502 = vpop.permute.xlu0 %2501
      %2505 = vset.pattern.permute.xlu0 0
      %2506 = vperm.xlu0 %2505, %v2498
      %v2507 = vpop.permute.xlu0 %2506
      %v2511 = vunpack.c.l.b16 %v2355
      %v2512 = vunpack.c.l.b16 %v2356
      %v2513 = vpack.c.b16 %v2512, %v2511
      %v2515 = vsel %vm1429, %v2513, 0
      %v2518 = vsel %vm1433, %v2487, 0
      %v2521 = vsel %vm1433, %v2488, 0
      %v2524 = vsel %vm1433, %v2489, 0
      %v2527 = vsel %vm1433, %v2490, 0
      %v2530 = vsel %vm1433, %v2491, 0
      %v2533 = vsel %vm1433, %v2492, 0
      %v2536 = vsel %vm1433, %v2493, 0
      %v2539 = vsel %vm1433, %v2494, 0
      %v2542 = vsel %vm1433, %v2495, 0
      %v2545 = vsel %vm1433, %v2496, 0
      %2547 = vmatprep.subr.bf16.mxu0 %v2448
      %2548 = vmatpush1.bf16.msra.mxu0 %v2447
      %2549 = vmatprep.subr.bf16.mxu0 %v2458
      %2550 = vmatpush1.bf16.msra.mxu0 %v2457
      %2551 = vmatprep.subr.bf16.mxu0 %v2468
      %2552 = vmatpush1.bf16.msra.mxu0 %v2467
      %2553 = vmatprep.subr.bf16.mxu0 %v2478
      %2554 = vmatpush1.bf16.msra.mxu0 %v2477
      %2555 = vmatprep.subr.bf16.mxu0 %v2521
      %2556 = vmatpush1.bf16.msra.mxu0 %v2518
      %2557 = vmatprep.subr.bf16.mxu0 0
      %2558 = vmatpush1.bf16.msra.mxu0 0
      %2559 = vmatprep.subr.bf16.mxu0 0
      %2560 = vmatpush1.bf16.msra.mxu0 0
      %2561 = vmatprep.subr.bf16.mxu0 0
      %2562 = vmatpush1.bf16.msra.mxu0 0
      %2563 = vmatprep.subr.bf16.mxu0 0
      %2564 = vmatpush1.bf16.msra.mxu0 0
      %2565 = vmatprep.subr.bf16.mxu0 0
      %2566 = vmatpush1.bf16.msra.mxu0 0
      %2567 = vmatprep.subr.bf16.mxu0 0
      %2568 = vmatpush1.bf16.msra.mxu0 0
      %2569 = vmatprep.subr.bf16.mxu0 0
      %2570 = vmatpush1.bf16.msra.mxu0 0
      %2571 = vmatprep.subr.bf16.mxu0 0
      %2572 = vmatpush1.bf16.msra.mxu0 0
      %2573 = vmatprep.subr.bf16.mxu0 0
      %2574 = vmatpush1.bf16.msra.mxu0 0
      %2575 = vmatprep.subr.bf16.mxu0 0
      %2576 = vmatpush1.bf16.msra.mxu0 0
      %2577 = vmatprep.subr.bf16.mxu0 0
      %2578 = vmatpush1.bf16.msra.mxu0 0
      %2579 = vmatprep.mubr.bf16.mxu0 0
      %2580 = vmatmul.mubr.bf16.gmra.mrb[0].mxu0 %v2515
      %v2581 = vpop.f32.mrb[0].mxu0
      %v2582 = vadd.f32 %v2502, %v2581
      %v2583 = vpop.f32.mrb[0].mxu0
      %v2584 = vadd.f32 %v2502, %v2583
      %v2585 = vpop.f32.mrb[0].mxu0
      %v2586 = vadd.f32 %v2507, %v2585
      %v2587 = vpop.f32.mrb[0].mxu0
      %v2588 = vadd.f32 %v2507, %v2587
      %2589 = vdwg.mxu0
      %2590 = vmatprep.subr.bf16.mxu0 %v2450
      %2591 = vmatpush1.bf16.msra.mxu0 %v2449
      %2592 = vmatprep.subr.bf16.mxu0 %v2460
      %2593 = vmatpush1.bf16.msra.mxu0 %v2459
      %2594 = vmatprep.subr.bf16.mxu0 %v2470
      %2595 = vmatpush1.bf16.msra.mxu0 %v2469
      %2596 = vmatprep.subr.bf16.mxu0 %v2480
      %2597 = vmatpush1.bf16.msra.mxu0 %v2479
      %2598 = vmatprep.subr.bf16.mxu0 %v2527
      %2599 = vmatpush1.bf16.msra.mxu0 %v2524
      %2600 = vmatprep.subr.bf16.mxu0 0
      %2601 = vmatpush1.bf16.msra.mxu0 0
      %2602 = vmatprep.subr.bf16.mxu0 0
      %2603 = vmatpush1.bf16.msra.mxu0 0
      %2604 = vmatprep.subr.bf16.mxu0 0
      %2605 = vmatpush1.bf16.msra.mxu0 0
      %2606 = vmatprep.subr.bf16.mxu0 0
      %2607 = vmatpush1.bf16.msra.mxu0 0
      %2608 = vmatprep.subr.bf16.mxu0 0
      %2609 = vmatpush1.bf16.msra.mxu0 0
      %2610 = vmatprep.subr.bf16.mxu0 0
      %2611 = vmatpush1.bf16.msra.mxu0 0
      %2612 = vmatprep.subr.bf16.mxu0 0
      %2613 = vmatpush1.bf16.msra.mxu0 0
      %2614 = vmatprep.subr.bf16.mxu0 0
      %2615 = vmatpush1.bf16.msra.mxu0 0
      %2616 = vmatprep.subr.bf16.mxu0 0
      %2617 = vmatpush1.bf16.msra.mxu0 0
      %2618 = vmatprep.subr.bf16.mxu0 0
      %2619 = vmatpush1.bf16.msra.mxu0 0
      %2620 = vmatprep.subr.bf16.mxu0 0
      %2621 = vmatpush1.bf16.msra.mxu0 0
      %2622 = vmatprep.mubr.bf16.mxu0 0
      %2623 = vmatmul.mubr.bf16.gmra.mrb[0].mxu0 %v2515
      %v2624 = vpop.f32.mrb[0].mxu0
      %v2625 = vadd.f32 %v2502, %v2624
      %v2626 = vpop.f32.mrb[0].mxu0
      %v2627 = vadd.f32 %v2502, %v2626
      %v2628 = vpop.f32.mrb[0].mxu0
      %v2629 = vadd.f32 %v2507, %v2628
      %v2630 = vpop.f32.mrb[0].mxu0
      %v2631 = vadd.f32 %v2507, %v2630
      %2632 = vdwg.mxu0
      %2633 = vmatprep.subr.bf16.mxu0 %v2452
      %2634 = vmatpush1.bf16.msra.mxu0 %v2451
      %2635 = vmatprep.subr.bf16.mxu0 %v2462
      %2636 = vmatpush1.bf16.msra.mxu0 %v2461
      %2637 = vmatprep.subr.bf16.mxu0 %v2472
      %2638 = vmatpush1.bf16.msra.mxu0 %v2471
      %2639 = vmatprep.subr.bf16.mxu0 %v2482
      %2640 = vmatpush1.bf16.msra.mxu0 %v2481
      %2641 = vmatprep.subr.bf16.mxu0 %v2533
      %2642 = vmatpush1.bf16.msra.mxu0 %v2530
      %2643 = vmatprep.subr.bf16.mxu0 0
      %2644 = vmatpush1.bf16.msra.mxu0 0
      %2645 = vmatprep.subr.bf16.mxu0 0
      %2646 = vmatpush1.bf16.msra.mxu0 0
      %2647 = vmatprep.subr.bf16.mxu0 0
      %2648 = vmatpush1.bf16.msra.mxu0 0
      %2649 = vmatprep.subr.bf16.mxu0 0
      %2650 = vmatpush1.bf16.msra.mxu0 0
      %2651 = vmatprep.subr.bf16.mxu0 0
      %2652 = vmatpush1.bf16.msra.mxu0 0
      %2653 = vmatprep.subr.bf16.mxu0 0
      %2654 = vmatpush1.bf16.msra.mxu0 0
      %2655 = vmatprep.subr.bf16.mxu0 0
      %2656 = vmatpush1.bf16.msra.mxu0 0
      %2657 = vmatprep.subr.bf16.mxu0 0
      %2658 = vmatpush1.bf16.msra.mxu0 0
      %2659 = vmatprep.subr.bf16.mxu0 0
      %2660 = vmatpush1.bf16.msra.mxu0 0
      %2661 = vmatprep.subr.bf16.mxu0 0
      %2662 = vmatpush1.bf16.msra.mxu0 0
      %2663 = vmatprep.subr.bf16.mxu0 0
      %2664 = vmatpush1.bf16.msra.mxu0 0
      %2665 = vmatprep.mubr.bf16.mxu0 0
      %2666 = vmatmul.mubr.bf16.gmra.mrb[0].mxu0 %v2515
      %v2667 = vpop.f32.mrb[0].mxu0
      %v2668 = vadd.f32 %v2502, %v2667
      %v2669 = vpop.f32.mrb[0].mxu0
      %v2670 = vadd.f32 %v2502, %v2669
      %v2671 = vpop.f32.mrb[0].mxu0
      %v2672 = vadd.f32 %v2507, %v2671
      %v2673 = vpop.f32.mrb[0].mxu0
      %v2674 = vadd.f32 %v2507, %v2673
      %2675 = vdwg.mxu0
      %2676 = vmatprep.subr.bf16.mxu0 %v2454
      %2677 = vmatpush1.bf16.msra.mxu0 %v2453
      %2678 = vmatprep.subr.bf16.mxu0 %v2464
      %2679 = vmatpush1.bf16.msra.mxu0 %v2463
      %2680 = vmatprep.subr.bf16.mxu0 %v2474
      %2681 = vmatpush1.bf16.msra.mxu0 %v2473
      %2682 = vmatprep.subr.bf16.mxu0 %v2484
      %2683 = vmatpush1.bf16.msra.mxu0 %v2483
      %2684 = vmatprep.subr.bf16.mxu0 %v2539
      %2685 = vmatpush1.bf16.msra.mxu0 %v2536
      %2686 = vmatprep.subr.bf16.mxu0 0
      %2687 = vmatpush1.bf16.msra.mxu0 0
      %2688 = vmatprep.subr.bf16.mxu0 0
      %2689 = vmatpush1.bf16.msra.mxu0 0
      %2690 = vmatprep.subr.bf16.mxu0 0
      %2691 = vmatpush1.bf16.msra.mxu0 0
      %2692 = vmatprep.subr.bf16.mxu0 0
      %2693 = vmatpush1.bf16.msra.mxu0 0
      %2694 = vmatprep.subr.bf16.mxu0 0
      %2695 = vmatpush1.bf16.msra.mxu0 0
      %2696 = vmatprep.subr.bf16.mxu0 0
      %2697 = vmatpush1.bf16.msra.mxu0 0
      %2698 = vmatprep.subr.bf16.mxu0 0
      %2699 = vmatpush1.bf16.msra.mxu0 0
      %2700 = vmatprep.subr.bf16.mxu0 0
      %2701 = vmatpush1.bf16.msra.mxu0 0
      %2702 = vmatprep.subr.bf16.mxu0 0
      %2703 = vmatpush1.bf16.msra.mxu0 0
      %2704 = vmatprep.subr.bf16.mxu0 0
      %2705 = vmatpush1.bf16.msra.mxu0 0
      %2706 = vmatprep.subr.bf16.mxu0 0
      %2707 = vmatpush1.bf16.msra.mxu0 0
      %2708 = vmatprep.mubr.bf16.mxu0 0
      %2709 = vmatmul.mubr.bf16.gmra.mrb[0].mxu0 %v2515
      %v2710 = vpop.f32.mrb[0].mxu0
      %v2711 = vadd.f32 %v2502, %v2710
      %v2712 = vpop.f32.mrb[0].mxu0
      %v2713 = vadd.f32 %v2502, %v2712
      %v2714 = vpop.f32.mrb[0].mxu0
      %v2715 = vadd.f32 %v2507, %v2714
      %v2716 = vpop.f32.mrb[0].mxu0
      %v2717 = vadd.f32 %v2507, %v2716
      %2718 = vdwg.mxu0
      %2719 = vmatprep.subr.bf16.mxu0 %v2456
      %2720 = vmatpush1.bf16.msra.mxu0 %v2455
      %2721 = vmatprep.subr.bf16.mxu0 %v2466
      %2722 = vmatpush1.bf16.msra.mxu0 %v2465
      %2723 = vmatprep.subr.bf16.mxu0 %v2476
      %2724 = vmatpush1.bf16.msra.mxu0 %v2475
      %2725 = vmatprep.subr.bf16.mxu0 %v2486
      %2726 = vmatpush1.bf16.msra.mxu0 %v2485
      %2727 = vmatprep.subr.bf16.mxu0 %v2545
      %2728 = vmatpush1.bf16.msra.mxu0 %v2542
      %2729 = vmatprep.subr.bf16.mxu0 0
      %2730 = vmatpush1.bf16.msra.mxu0 0
      %2731 = vmatprep.subr.bf16.mxu0 0
      %2732 = vmatpush1.bf16.msra.mxu0 0
      %2733 = vmatprep.subr.bf16.mxu0 0
      %2734 = vmatpush1.bf16.msra.mxu0 0
      %2735 = vmatprep.subr.bf16.mxu0 0
      %2736 = vmatpush1.bf16.msra.mxu0 0
      %2737 = vmatprep.subr.bf16.mxu0 0
      %2738 = vmatpush1.bf16.msra.mxu0 0
      %2739 = vmatprep.subr.bf16.mxu0 0
      %2740 = vmatpush1.bf16.msra.mxu0 0
      %2741 = vmatprep.subr.bf16.mxu0 0
      %2742 = vmatpush1.bf16.msra.mxu0 0
      %2743 = vmatprep.subr.bf16.mxu0 0
      %2744 = vmatpush1.bf16.msra.mxu0 0
      %2745 = vmatprep.subr.bf16.mxu0 0
      %2746 = vmatpush1.bf16.msra.mxu0 0
      %2747 = vmatprep.subr.bf16.mxu0 0
      %2748 = vmatpush1.bf16.msra.mxu0 0
      %2749 = vmatprep.subr.bf16.mxu0 0
      %2750 = vmatpush1.bf16.msra.mxu0 0
      %2751 = vmatprep.mubr.bf16.mxu0 0
      %2752 = vmatmul.mubr.bf16.gmra.mrb[0].mxu0 %v2515
      %v2753 = vpop.f32.mrb[0].mxu0
      %v2754 = vadd.f32 %v2502, %v2753
      %v2755 = vpop.f32.mrb[0].mxu0
      %v2756 = vadd.f32 %v2502, %v2755
      %v2757 = vpop.f32.mrb[0].mxu0
      %v2758 = vadd.f32 %v2507, %v2757
      %v2759 = vpop.f32.mrb[0].mxu0
      %v2760 = vadd.f32 %v2507, %v2759
      %2761 = vdwg.mxu0
      %v2762 = vmax.f32 %v2582, 0.0
      %v2763 = vmax.f32 %v2584, 0.0
      %v2764 = vmax.f32 %v2625, 0.0
      %v2765 = vmax.f32 %v2627, 0.0
      %v2766 = vmax.f32 %v2668, 0.0
      %v2767 = vmax.f32 %v2670, 0.0
      %v2768 = vmax.f32 %v2711, 0.0
      %v2769 = vmax.f32 %v2713, 0.0
      %v2770 = vmax.f32 %v2754, 0.0
      %v2771 = vmax.f32 %v2756, 0.0
      %v2772 = vmax.f32 %v2586, 0.0
      %v2773 = vmax.f32 %v2588, 0.0
      %v2774 = vmax.f32 %v2629, 0.0
      %v2775 = vmax.f32 %v2631, 0.0
      %v2776 = vmax.f32 %v2672, 0.0
      %v2777 = vmax.f32 %v2674, 0.0
      %v2778 = vmax.f32 %v2715, 0.0
      %v2779 = vmax.f32 %v2717, 0.0
      %v2780 = vmax.f32 %v2758, 0.0
      %v2781 = vmax.f32 %v2760, 0.0
      %2782 = vst [vmem:[#allocation2 + $0x8] sm:$0xff] %v2762
      %2783 = vst [vmem:[#allocation2 + $0x10] sm:$0xff] %v2763
      %2784 = vst [vmem:[#allocation2 + $0x18] sm:$0xff] %v2764
      %2785 = vst [vmem:[#allocation2 + $0x20] sm:$0xff] %v2765
      %2786 = vst [vmem:[#allocation2 + $0x28] sm:$0xff] %v2766
      %2787 = vst [vmem:[#allocation2 + $0x30] sm:$0xff] %v2767
      %2788 = vst [vmem:[#allocation2 + $0x38] sm:$0xff] %v2768
      %2789 = vst [vmem:[#allocation2 + $0x40] sm:$0xff] %v2769
      %2790 = vst [vmem:[#allocation2 + $0x48] sm:$0xff] %v2770
      %2791 = vst [vmem:[#allocation2 + $0x50] sm:$0xff] %v2771
      %2792 = vst [vmem:[#allocation2 + $0x68] sm:$0xff] %v2772
      %2793 = vst [vmem:[#allocation2 + $0x70] sm:$0xff] %v2773
      %2794 = vst [vmem:[#allocation2 + $0x78] sm:$0xff] %v2774
      %2795 = vst [vmem:[#allocation2 + $0x80] sm:$0xff] %v2775
      %2796 = vst [vmem:[#allocation2 + $0x88] sm:$0xff] %v2776
      %2797 = vst [vmem:[#allocation2 + $0x90] sm:$0xff] %v2777
      %2798 = vst [vmem:[#allocation2 + $0x98] sm:$0xff] %v2778
      %2799 = vst [vmem:[#allocation2 + $0xa0] sm:$0xff] %v2779
      %2800 = vst [vmem:[#allocation2 + $0xa8] sm:$0xff] %v2780
      %2801 = vst [vmem:[#allocation2 + $0xb0] sm:$0xff] %v2781
      %v2802 = vld [vmem:[#allocation2 + $0x8] sm:$0xff]
      %v2803 = vld [vmem:[#allocation2 + $0x10] sm:$0xff]
      %v2804 = vld [vmem:[#allocation2 + $0x18] sm:$0xff]
      %v2805 = vld [vmem:[#allocation2 + $0x20] sm:$0xff]
      %v2806 = vld [vmem:[#allocation2 + $0x28] sm:$0xff]
      %v2807 = vld [vmem:[#allocation2 + $0x30] sm:$0xff]
      %v2808 = vld [vmem:[#allocation2 + $0x38] sm:$0xff]
      %v2809 = vld [vmem:[#allocation2 + $0x40] sm:$0xff]
      %v2810 = vld [vmem:[#allocation2 + $0x48] sm:$0xff]
      %v2811 = vld [vmem:[#allocation2 + $0x50] sm:$0xff]
      %v2812 = vld [vmem:[#allocation2 + $0x58] sm:$0xff]
      %v2813 = vld [vmem:[#allocation2 + $0x68] sm:$0xff]
      %v2814 = vld [vmem:[#allocation2 + $0x70] sm:$0xff]
      %v2815 = vld [vmem:[#allocation2 + $0x78] sm:$0xff]
      %v2816 = vld [vmem:[#allocation2 + $0x80] sm:$0xff]
      %v2817 = vld [vmem:[#allocation2 + $0x88] sm:$0xff]
      %v2818 = vld [vmem:[#allocation2 + $0x90] sm:$0xff]
      %v2819 = vld [vmem:[#allocation2 + $0x98] sm:$0xff]
      %v2820 = vld [vmem:[#allocation2 + $0xa0] sm:$0xff]
      %v2821 = vld [vmem:[#allocation2 + $0xa8] sm:$0xff]
      %v2822 = vld [vmem:[#allocation2 + $0xb0] sm:$0xff]
      %v2823 = vld [vmem:[#allocation2 + $0xb8] sm:$0xff]
      %2846 = vrot.lane.b32.xlu0 %v2802, 127
      %v2847 = vpop.permute.xlu0 %2846
      %2848 = vrot.lane.b32.xlu0 %v2803, 127
      %v2849 = vpop.permute.xlu0 %2848
      %2850 = vrot.lane.b32.xlu0 %v2804, 127
      %v2851 = vpop.permute.xlu0 %2850
      %2852 = vrot.lane.b32.xlu0 %v2805, 127
      %v2853 = vpop.permute.xlu0 %2852
      %2854 = vrot.lane.b32.xlu0 %v2806, 127
      %v2855 = vpop.permute.xlu0 %2854
      %2856 = vrot.lane.b32.xlu0 %v2807, 127
      %v2857 = vpop.permute.xlu0 %2856
      %2858 = vrot.lane.b32.xlu0 %v2808, 127
      %v2859 = vpop.permute.xlu0 %2858
      %2860 = vrot.lane.b32.xlu0 %v2809, 127
      %v2861 = vpop.permute.xlu0 %2860
      %2862 = vrot.lane.b32.xlu0 %v2810, 127
      %v2863 = vpop.permute.xlu0 %2862
      %2864 = vrot.lane.b32.xlu0 %v2811, 127
      %v2865 = vpop.permute.xlu0 %2864
      %2866 = vrot.lane.b32.xlu0 %v2812, 127
      %v2867 = vpop.permute.xlu0 %2866
      %2868 = vrot.lane.b32.xlu0 %v2813, 127
      %v2869 = vpop.permute.xlu0 %2868
      %2870 = vrot.lane.b32.xlu0 %v2814, 127
      %v2871 = vpop.permute.xlu0 %2870
      %2872 = vrot.lane.b32.xlu0 %v2815, 127
      %v2873 = vpop.permute.xlu0 %2872
      %2874 = vrot.lane.b32.xlu0 %v2816, 127
      %v2875 = vpop.permute.xlu0 %2874
      %2876 = vrot.lane.b32.xlu0 %v2817, 127
      %v2877 = vpop.permute.xlu0 %2876
      %2878 = vrot.lane.b32.xlu0 %v2818, 127
      %v2879 = vpop.permute.xlu0 %2878
      %2880 = vrot.lane.b32.xlu0 %v2819, 127
      %v2881 = vpop.permute.xlu0 %2880
      %2882 = vrot.lane.b32.xlu0 %v2820, 127
      %v2883 = vpop.permute.xlu0 %2882
      %2884 = vrot.lane.b32.xlu0 %v2821, 127
      %v2885 = vpop.permute.xlu0 %2884
      %2886 = vrot.lane.b32.xlu0 %v2822, 127
      %v2887 = vpop.permute.xlu0 %2886
      %2888 = vrot.lane.b32.xlu0 %v2823, 127
      %v2889 = vpop.permute.xlu0 %2888
      %v2890 = vsel %vm1026, %v2847, %v2849
      %v2891 = vsel %vm1026, %v2849, %v2851
      %v2892 = vsel %vm1026, %v2851, %v2853
      %v2893 = vsel %vm1026, %v2853, %v2855
      %v2894 = vsel %vm1026, %v2855, %v2857
      %v2895 = vsel %vm1026, %v2857, %v2859
      %v2896 = vsel %vm1026, %v2859, %v2861
      %v2897 = vsel %vm1026, %v2861, %v2863
      %v2898 = vsel %vm1026, %v2863, %v2865
      %v2899 = vsel %vm1026, %v2865, %v2867
      %v2900 = vsel %vm1026, %v2869, %v2871
      %v2901 = vsel %vm1026, %v2871, %v2873
      %v2902 = vsel %vm1026, %v2873, %v2875
      %v2903 = vsel %vm1026, %v2875, %v2877
      %v2904 = vsel %vm1026, %v2877, %v2879
      %v2905 = vsel %vm1026, %v2879, %v2881
      %v2906 = vsel %vm1026, %v2881, %v2883
      %v2907 = vsel %vm1026, %v2883, %v2885
      %v2908 = vsel %vm1026, %v2885, %v2887
      %v2909 = vsel %vm1026, %v2887, %v2889
      %v2930 = vmax.f32 %v2762, %v2890
      %v2931 = vmax.f32 %v2763, %v2891
      %v2932 = vmax.f32 %v2764, %v2892
      %v2933 = vmax.f32 %v2765, %v2893
      %v2934 = vmax.f32 %v2766, %v2894
      %v2935 = vmax.f32 %v2767, %v2895
      %v2936 = vmax.f32 %v2768, %v2896
      %v2937 = vmax.f32 %v2769, %v2897
      %v2938 = vmax.f32 %v2770, %v2898
      %v2939 = vmax.f32 %v2771, %v2899
      %v2940 = vmax.f32 %v2772, %v2900
      %v2941 = vmax.f32 %v2773, %v2901
      %v2942 = vmax.f32 %v2774, %v2902
      %v2943 = vmax.f32 %v2775, %v2903
      %v2944 = vmax.f32 %v2776, %v2904
      %v2945 = vmax.f32 %v2777, %v2905
      %v2946 = vmax.f32 %v2778, %v2906
      %v2947 = vmax.f32 %v2779, %v2907
      %v2948 = vmax.f32 %v2780, %v2908
      %v2949 = vmax.f32 %v2781, %v2909
      %v2952 = vmax.f32 %v2802, %v2890
      %v2953 = vmax.f32 %v2803, %v2891
      %v2954 = vmax.f32 %v2804, %v2892
      %v2955 = vmax.f32 %v2805, %v2893
      %v2956 = vmax.f32 %v2806, %v2894
      %v2957 = vmax.f32 %v2807, %v2895
      %v2958 = vmax.f32 %v2808, %v2896
      %v2959 = vmax.f32 %v2809, %v2897
      %v2960 = vmax.f32 %v2810, %v2898
      %v2961 = vmax.f32 %v2811, %v2899
      %v2962 = vmax.f32 %v2812, %v2867
      %v2963 = vmax.f32 %v2813, %v2900
      %v2964 = vmax.f32 %v2814, %v2901
      %v2965 = vmax.f32 %v2815, %v2902
      %v2966 = vmax.f32 %v2816, %v2903
      %v2967 = vmax.f32 %v2817, %v2904
      %v2968 = vmax.f32 %v2818, %v2905
      %v2969 = vmax.f32 %v2819, %v2906
      %v2970 = vmax.f32 %v2820, %v2907
      %v2971 = vmax.f32 %v2821, %v2908
      %v2972 = vmax.f32 %v2822, %v2909
      %v2973 = vmax.f32 %v2823, %v2889
      %2996 = vrot.lane.b32.xlu0 %v2952, 94
      %v2997 = vpop.permute.xlu0 %2996
      %2998 = vrot.lane.b32.xlu0 %v2953, 94
      %v2999 = vpop.permute.xlu0 %2998
      %3000 = vrot.lane.b32.xlu0 %v2954, 94
      %v3001 = vpop.permute.xlu0 %3000
      %3002 = vrot.lane.b32.xlu0 %v2955, 94
      %v3003 = vpop.permute.xlu0 %3002
      %3004 = vrot.lane.b32.xlu0 %v2956, 94
      %v3005 = vpop.permute.xlu0 %3004
      %3006 = vrot.lane.b32.xlu0 %v2957, 94
      %v3007 = vpop.permute.xlu0 %3006
      %3008 = vrot.lane.b32.xlu0 %v2958, 94
      %v3009 = vpop.permute.xlu0 %3008
      %3010 = vrot.lane.b32.xlu0 %v2959, 94
      %v3011 = vpop.permute.xlu0 %3010
      %3012 = vrot.lane.b32.xlu0 %v2960, 94
      %v3013 = vpop.permute.xlu0 %3012
      %3014 = vrot.lane.b32.xlu0 %v2961, 94
      %v3015 = vpop.permute.xlu0 %3014
      %3016 = vrot.lane.b32.xlu0 %v2962, 94
      %v3017 = vpop.permute.xlu0 %3016
      %3018 = vrot.lane.b32.xlu0 %v2963, 94
      %v3019 = vpop.permute.xlu0 %3018
      %3020 = vrot.lane.b32.xlu0 %v2964, 94
      %v3021 = vpop.permute.xlu0 %3020
      %3022 = vrot.lane.b32.xlu0 %v2965, 94
      %v3023 = vpop.permute.xlu0 %3022
      %3024 = vrot.lane.b32.xlu0 %v2966, 94
      %v3025 = vpop.permute.xlu0 %3024
      %3026 = vrot.lane.b32.xlu0 %v2967, 94
      %v3027 = vpop.permute.xlu0 %3026
      %3028 = vrot.lane.b32.xlu0 %v2968, 94
      %v3029 = vpop.permute.xlu0 %3028
      %3030 = vrot.lane.b32.xlu0 %v2969, 94
      %v3031 = vpop.permute.xlu0 %3030
      %3032 = vrot.lane.b32.xlu0 %v2970, 94
      %v3033 = vpop.permute.xlu0 %3032
      %3034 = vrot.lane.b32.xlu0 %v2971, 94
      %v3035 = vpop.permute.xlu0 %3034
      %3036 = vrot.lane.b32.xlu0 %v2972, 94
      %v3037 = vpop.permute.xlu0 %3036
      %3038 = vrot.lane.b32.xlu0 %v2973, 94
      %v3039 = vpop.permute.xlu0 %3038
      %v3040 = vsel %vm1176, %v2997, %v2999
      %v3041 = vsel %vm1176, %v2999, %v3001
      %v3042 = vsel %vm1176, %v3001, %v3003
      %v3043 = vsel %vm1176, %v3003, %v3005
      %v3044 = vsel %vm1176, %v3005, %v3007
      %v3045 = vsel %vm1176, %v3007, %v3009
      %v3046 = vsel %vm1176, %v3009, %v3011
      %v3047 = vsel %vm1176, %v3011, %v3013
      %v3048 = vsel %vm1176, %v3013, %v3015
      %v3049 = vsel %vm1176, %v3015, %v3017
      %v3050 = vsel %vm1176, %v3019, %v3021
      %v3051 = vsel %vm1176, %v3021, %v3023
      %v3052 = vsel %vm1176, %v3023, %v3025
      %v3053 = vsel %vm1176, %v3025, %v3027
      %v3054 = vsel %vm1176, %v3027, %v3029
      %v3055 = vsel %vm1176, %v3029, %v3031
      %v3056 = vsel %vm1176, %v3031, %v3033
      %v3057 = vsel %vm1176, %v3033, %v3035
      %v3058 = vsel %vm1176, %v3035, %v3037
      %v3059 = vsel %vm1176, %v3037, %v3039
      %v3080 = vmax.f32 %v2930, %v3040
      %v3081 = vmax.f32 %v2931, %v3041
      %v3082 = vmax.f32 %v2932, %v3042
      %v3083 = vmax.f32 %v2933, %v3043
      %v3084 = vmax.f32 %v2934, %v3044
      %v3085 = vmax.f32 %v2935, %v3045
      %v3086 = vmax.f32 %v2936, %v3046
      %v3087 = vmax.f32 %v2937, %v3047
      %v3088 = vmax.f32 %v2938, %v3048
      %v3089 = vmax.f32 %v2939, %v3049
      %v3090 = vmax.f32 %v2940, %v3050
      %v3091 = vmax.f32 %v2941, %v3051
      %v3092 = vmax.f32 %v2942, %v3052
      %v3093 = vmax.f32 %v2943, %v3053
      %v3094 = vmax.f32 %v2944, %v3054
      %v3095 = vmax.f32 %v2945, %v3055
      %v3096 = vmax.f32 %v2946, %v3056
      %v3097 = vmax.f32 %v2947, %v3057
      %v3098 = vmax.f32 %v2948, %v3058
      %v3099 = vmax.f32 %v2949, %v3059
      %v3100 = vpack.c.bf16 %v3090, %v3080
      %v3101 = vpack.c.bf16 %v3091, %v3081
      %v3102 = vpack.c.bf16 %v3092, %v3082
      %v3103 = vpack.c.bf16 %v3093, %v3083
      %v3104 = vpack.c.bf16 %v3094, %v3084
      %v3105 = vpack.c.bf16 %v3095, %v3085
      %v3106 = vpack.c.bf16 %v3096, %v3086
      %v3107 = vpack.c.bf16 %v3097, %v3087
      %v3108 = vpack.c.bf16 %v3098, %v3088
      %v3109 = vpack.c.bf16 %v3099, %v3089
      %v3110 = vld [vmem:[%s16] sm:$0xff]
      %v3111 = vld [vmem:[%s16 + $0x8] sm:$0xf]
      %v3112 = vld [vmem:[%s16 + $0xc] sm:$0xff]
      %v3113 = vld [vmem:[%s16 + $0x14] sm:$0xf]
      %v3114 = vld [vmem:[%s16 + $0x18] sm:$0xff]
      %v3115 = vld [vmem:[%s16 + $0x20] sm:$0xf]
      %v3116 = vld [vmem:[%s16 + $0x24] sm:$0xff]
      %v3117 = vld [vmem:[%s16 + $0x2c] sm:$0xf]
      %v3118 = vld [vmem:[%s16 + $0x30] sm:$0xff]
      %v3119 = vld [vmem:[%s16 + $0x38] sm:$0xf]
      %v3120 = vld [vmem:[%s16 + $0x3c] sm:$0xff]
      %v3121 = vld [vmem:[%s16 + $0x44] sm:$0xf]
      %v3122 = vld [vmem:[%s16 + $0x48] sm:$0xff]
      %v3123 = vld [vmem:[%s16 + $0x50] sm:$0xf]
      %v3124 = vld [vmem:[%s16 + $0x54] sm:$0xff]
      %v3125 = vld [vmem:[%s16 + $0x5c] sm:$0xf]
      %v3126 = vld [vmem:[%s16 + $0x60] sm:$0xff]
      %v3127 = vld [vmem:[%s16 + $0x68] sm:$0xf]
      %v3128 = vld [vmem:[%s16 + $0x6c] sm:$0xff]
      %v3129 = vld [vmem:[%s16 + $0x74] sm:$0xf]
      %v3130 = vld [vmem:[%s16 + $0x78] sm:$0xff]
      %v3131 = vld [vmem:[%s16 + $0x80] sm:$0xf]
      %v3132 = vld [vmem:[%s16 + $0x84] sm:$0xff]
      %v3133 = vld [vmem:[%s16 + $0x8c] sm:$0xf]
      %v3134 = vld [vmem:[%s16 + $0x90] sm:$0xff]
      %v3135 = vld [vmem:[%s16 + $0x98] sm:$0xf]
      %v3136 = vld [vmem:[%s16 + $0x9c] sm:$0xff]
      %v3137 = vld [vmem:[%s16 + $0xa4] sm:$0xf]
      %v3138 = vld [vmem:[%s16 + $0xa8] sm:$0xff]
      %v3139 = vld [vmem:[%s16 + $0xb0] sm:$0xf]
      %v3140 = vld [vmem:[%s16 + $0xb4] sm:$0xff]
      %v3141 = vld [vmem:[%s16 + $0xbc] sm:$0xf]
      %v3142 = vld [vmem:[%s16 + $0xc0] sm:$0xff]
      %v3143 = vld [vmem:[%s16 + $0xc8] sm:$0xf]
      %v3144 = vld [vmem:[%s16 + $0xcc] sm:$0xff]
      %v3145 = vld [vmem:[%s16 + $0xd4] sm:$0xf]
      %v3146 = vld [vmem:[%s16 + $0xd8] sm:$0xff]
      %v3147 = vld [vmem:[%s16 + $0xe0] sm:$0xf]
      %v3148 = vld [vmem:[%s16 + $0xe4] sm:$0xff]
      %v3149 = vld [vmem:[%s16 + $0xec] sm:$0xf]
      %v3150 = vld [vmem:[%s16 + $0xf0] sm:$0xff]
      %v3151 = vld [vmem:[%s16 + $0xf8] sm:$0xf]
      %v3152 = vld [vmem:[%s16 + $0xfc] sm:$0xff]
      %v3153 = vld [vmem:[%s16 + $0x104] sm:$0xf]
      %v3154 = vld [vmem:[%s16 + $0x108] sm:$0xff]
      %v3155 = vld [vmem:[%s16 + $0x110] sm:$0xf]
      %v3156 = vld [vmem:[%s16 + $0x114] sm:$0xff]
      %v3157 = vld [vmem:[%s16 + $0x11c] sm:$0xf]
      %v3158 = vld [vmem:[%s16 + $0x120] sm:$0xff]
      %v3159 = vld [vmem:[%s16 + $0x128] sm:$0xf]
      %v3160 = vld [vmem:[%s16 + $0x12c] sm:$0xff]
      %v3161 = vld [vmem:[%s16 + $0x134] sm:$0xf]
      %v3162 = vld [vmem:[%s16 + $0x138] sm:$0xff]
      %v3163 = vld [vmem:[%s16 + $0x140] sm:$0xf]
      %v3164 = vld [vmem:[%s16 + $0x144] sm:$0xff]
      %v3165 = vld [vmem:[%s16 + $0x14c] sm:$0xf]
      %v3166 = vld [vmem:[%s16 + $0x150] sm:$0xff]
      %v3167 = vld [vmem:[%s16 + $0x158] sm:$0xf]
      %v3168 = vld [vmem:[%s16 + $0x15c] sm:$0xff]
      %v3169 = vld [vmem:[%s16 + $0x164] sm:$0xf]
      %v3170 = vld [vmem:[%s16 + $0x168] sm:$0xff]
      %v3171 = vld [vmem:[%s16 + $0x170] sm:$0xf]
      %v3172 = vld [vmem:[%s16 + $0x174] sm:$0xff]
      %v3173 = vld [vmem:[%s16 + $0x17c] sm:$0xf]
      %v3174 = vld [vmem:[%s16 + $0x180] sm:$0xff]
      %v3175 = vld [vmem:[%s16 + $0x188] sm:$0xf]
      %v3176 = vld [vmem:[%s16 + $0x18c] sm:$0xff]
      %v3177 = vld [vmem:[%s16 + $0x194] sm:$0xf]
      %v3178 = vld [vmem:[%s16 + $0x198] sm:$0xff]
      %v3179 = vld [vmem:[%s16 + $0x1a0] sm:$0xf]
      %v3180 = vld [vmem:[%s16 + $0x1a4] sm:$0xff]
      %v3181 = vld [vmem:[%s16 + $0x1ac] sm:$0xf]
      %v3182 = vld [vmem:[%s16 + $0x1b0] sm:$0xff]
      %v3183 = vld [vmem:[%s16 + $0x1b8] sm:$0xf]
      %v3184 = vld [vmem:[%s16 + $0x1bc] sm:$0xff]
      %v3185 = vld [vmem:[%s16 + $0x1c4] sm:$0xf]
      %v3186 = vld [vmem:[%s16 + $0x1c8] sm:$0xff]
      %v3187 = vld [vmem:[%s16 + $0x1d0] sm:$0xf]
      %v3188 = vld [vmem:[%s16 + $0x1d4] sm:$0xff]
      %v3189 = vld [vmem:[%s16 + $0x1dc] sm:$0xf]
      %v3190 = vld [vmem:[%s16 + $0x1e0] sm:$0xff]
      %v3191 = vld [vmem:[%s16 + $0x1e8] sm:$0xf]
      %v3192 = vld [vmem:[%s16 + $0x1ec] sm:$0xff]
      %v3193 = vld [vmem:[%s16 + $0x1f4] sm:$0xf]
      %v3194 = vld [vmem:[%s16 + $0x1f8] sm:$0xff]
      %v3195 = vld [vmem:[%s16 + $0x200] sm:$0xf]
      %v3196 = vld [vmem:[%s16 + $0x204] sm:$0xff]
      %v3197 = vld [vmem:[%s16 + $0x20c] sm:$0xf]
      %v3198 = vld [vmem:[%s16 + $0x210] sm:$0xff]
      %v3199 = vld [vmem:[%s16 + $0x218] sm:$0xf]
      %v3200 = vld [vmem:[%s16 + $0x21c] sm:$0xff]
      %v3201 = vld [vmem:[%s16 + $0x224] sm:$0xf]
      %v3202 = vld [vmem:[%s16 + $0x228] sm:$0xff]
      %v3203 = vld [vmem:[%s16 + $0x230] sm:$0xf]
      %v3204 = vld [vmem:[%s16 + $0x234] sm:$0xff]
      %v3205 = vld [vmem:[%s16 + $0x23c] sm:$0xf]
      %v3206 = vld [vmem:[%s16 + $0x240] sm:$0xff]
      %v3207 = vld [vmem:[%s16 + $0x248] sm:$0xf]
      %v3208 = vld [vmem:[%s16 + $0x24c] sm:$0xff]
      %v3209 = vld [vmem:[%s16 + $0x254] sm:$0xf]
      %v3210 = vld [vmem:[%s16 + $0x258] sm:$0xff]
      %v3211 = vld [vmem:[%s16 + $0x260] sm:$0xf]
      %v3212 = vld [vmem:[%s16 + $0x264] sm:$0xff]
      %v3213 = vld [vmem:[%s16 + $0x26c] sm:$0xf]
      %v3214 = vld [vmem:[%s16 + $0x270] sm:$0xff]
      %v3215 = vld [vmem:[%s16 + $0x278] sm:$0xf]
      %v3216 = vld [vmem:[%s16 + $0x27c] sm:$0xff]
      %v3217 = vld [vmem:[%s16 + $0x284] sm:$0xf]
      %v3218 = vld [vmem:[%s16 + $0x288] sm:$0xff]
      %v3219 = vld [vmem:[%s16 + $0x290] sm:$0xf]
      %v3220 = vld [vmem:[%s16 + $0x294] sm:$0xff]
      %v3221 = vld [vmem:[%s16 + $0x29c] sm:$0xf]
      %v3222 = vld [vmem:[%s16 + $0x2a0] sm:$0xff]
      %v3223 = vld [vmem:[%s16 + $0x2a8] sm:$0xf]
      %v3224 = vld [vmem:[%s16 + $0x2ac] sm:$0xff]
      %v3225 = vld [vmem:[%s16 + $0x2b4] sm:$0xf]
      %v3226 = vld [vmem:[%s16 + $0x2b8] sm:$0xff]
      %v3227 = vld [vmem:[%s16 + $0x2c0] sm:$0xf]
      %v3228 = vld [vmem:[%s16 + $0x2c4] sm:$0xff]
      %v3229 = vld [vmem:[%s16 + $0x2cc] sm:$0xf]
      %v3230 = vld [vmem:[%s16 + $0x2d0] sm:$0xff]
      %v3231 = vld [vmem:[%s16 + $0x2d8] sm:$0xf]
      %v3232 = vld [vmem:[%s16 + $0x2dc] sm:$0xff]
      %v3233 = vld [vmem:[%s16 + $0x2e4] sm:$0xf]
      %v3234 = vld [vmem:[%s16 + $0x2e8] sm:$0xff]
      %v3235 = vld [vmem:[%s16 + $0x2f0] sm:$0xf]
      %v3236 = vld [vmem:[%s16 + $0x2f4] sm:$0xff]
      %v3237 = vld [vmem:[%s16 + $0x2fc] sm:$0xf]
      %v3238 = vld [vmem:[%s16 + $0x300] sm:$0xff]
      %v3239 = vld [vmem:[%s16 + $0x308] sm:$0xf]
      %v3240 = vld [vmem:[%s16 + $0x30c] sm:$0xff]
      %v3241 = vld [vmem:[%s16 + $0x314] sm:$0xf]
      %v3242 = vld [vmem:[%s16 + $0x318] sm:$0xff]
      %v3243 = vld [vmem:[%s16 + $0x320] sm:$0xf]
      %v3244 = vld [vmem:[%s16 + $0x324] sm:$0xff]
      %v3245 = vld [vmem:[%s16 + $0x32c] sm:$0xf]
      %v3246 = vld [vmem:[%s16 + $0x330] sm:$0xff]
      %v3247 = vld [vmem:[%s16 + $0x338] sm:$0xf]
      %v3248 = vld [vmem:[%s16 + $0x33c] sm:$0xff]
      %v3249 = vld [vmem:[%s16 + $0x344] sm:$0xf]
      %v3250 = vld [vmem:[%s16 + $0x348] sm:$0xff]
      %v3251 = vld [vmem:[%s16 + $0x350] sm:$0xf]
      %v3252 = vld [vmem:[%s16 + $0x354] sm:$0xff]
      %v3253 = vld [vmem:[%s16 + $0x35c] sm:$0xf]
      %v3254 = vld [vmem:[%s16 + $0x360] sm:$0xff]
      %v3255 = vld [vmem:[%s16 + $0x368] sm:$0xf]
      %v3256 = vld [vmem:[%s16 + $0x36c] sm:$0xff]
      %v3257 = vld [vmem:[%s16 + $0x374] sm:$0xf]
      %v3258 = vld [vmem:[%s16 + $0x378] sm:$0xff]
      %v3259 = vld [vmem:[%s16 + $0x380] sm:$0xf]
      %v3260 = vld [vmem:[%s16 + $0x384] sm:$0xff]
      %v3261 = vld [vmem:[%s16 + $0x38c] sm:$0xf]
      %v3262 = vld [vmem:[%s16 + $0x390] sm:$0xff]
      %v3263 = vld [vmem:[%s16 + $0x398] sm:$0xf]
      %v3264 = vld [vmem:[%s16 + $0x39c] sm:$0xff]
      %v3265 = vld [vmem:[%s16 + $0x3a4] sm:$0xf]
      %v3266 = vld [vmem:[%s16 + $0x3a8] sm:$0xff]
      %v3267 = vld [vmem:[%s16 + $0x3b0] sm:$0xf]
      %v3268 = vld [vmem:[%s16 + $0x3b4] sm:$0xff]
      %v3269 = vld [vmem:[%s16 + $0x3bc] sm:$0xf]
      %v3270 = vld [vmem:[%s16 + $0x3c0] sm:$0xff]
      %v3271 = vld [vmem:[%s16 + $0x3c8] sm:$0xf]
      %v3272 = vld [vmem:[%s16 + $0x3cc] sm:$0xff]
      %v3273 = vld [vmem:[%s16 + $0x3d4] sm:$0xf]
      %v3274 = vld [vmem:[%s16 + $0x3d8] sm:$0xff]
      %v3275 = vld [vmem:[%s16 + $0x3e0] sm:$0xf]
      %v3276 = vld [vmem:[%s16 + $0x3e4] sm:$0xff]
      %v3277 = vld [vmem:[%s16 + $0x3ec] sm:$0xf]
      %v3278 = vld [vmem:[%s16 + $0x3f0] sm:$0xff]
      %v3279 = vld [vmem:[%s16 + $0x3f8] sm:$0xf]
      %v3280 = vld [vmem:[%s16 + $0x3fc] sm:$0xff]
      %v3281 = vld [vmem:[%s16 + $0x404] sm:$0xf]
      %v3282 = vld [vmem:[%s16 + $0x408] sm:$0xff]
      %v3283 = vld [vmem:[%s16 + $0x410] sm:$0xf]
      %v3284 = vld [vmem:[%s16 + $0x414] sm:$0xff]
      %v3285 = vld [vmem:[%s16 + $0x41c] sm:$0xf]
      %v3286 = vld [vmem:[%s16 + $0x420] sm:$0xff]
      %v3287 = vld [vmem:[%s16 + $0x428] sm:$0xf]
      %v3288 = vld [vmem:[%s16 + $0x42c] sm:$0xff]
      %v3289 = vld [vmem:[%s16 + $0x434] sm:$0xf]
      %v3290 = vld [vmem:[%s16 + $0x438] sm:$0xff]
      %v3291 = vld [vmem:[%s16 + $0x440] sm:$0xf]
      %v3292 = vld [vmem:[%s16 + $0x444] sm:$0xff]
      %v3293 = vld [vmem:[%s16 + $0x44c] sm:$0xf]
      %v3294 = vld [vmem:[%s16 + $0x450] sm:$0xff]
      %v3295 = vld [vmem:[%s16 + $0x458] sm:$0xf]
      %v3296 = vld [vmem:[%s16 + $0x45c] sm:$0xff]
      %v3297 = vld [vmem:[%s16 + $0x464] sm:$0xf]
      %v3298 = vld [vmem:[%s16 + $0x468] sm:$0xff]
      %v3299 = vld [vmem:[%s16 + $0x470] sm:$0xf]
      %v3300 = vld [vmem:[%s16 + $0x474] sm:$0xff]
      %v3301 = vld [vmem:[%s16 + $0x47c] sm:$0xf]
      %v3302 = vld [vmem:[%s16 + $0x480] sm:$0xff]
      %v3303 = vld [vmem:[%s16 + $0x488] sm:$0xf]
      %v3304 = vld [vmem:[%s16 + $0x48c] sm:$0xff]
      %v3305 = vld [vmem:[%s16 + $0x494] sm:$0xf]
      %v3306 = vld [vmem:[%s16 + $0x498] sm:$0xff]
      %v3307 = vld [vmem:[%s16 + $0x4a0] sm:$0xf]
      %v3308 = vld [vmem:[%s16 + $0x4a4] sm:$0xff]
      %v3309 = vld [vmem:[%s16 + $0x4ac] sm:$0xf]
      %v3310 = vld [vmem:[%s16 + $0x4b0] sm:$0xff]
      %v3311 = vld [vmem:[%s16 + $0x4b8] sm:$0xf]
      %v3312 = vld [vmem:[%s16 + $0x4bc] sm:$0xff]
      %v3313 = vld [vmem:[%s16 + $0x4c4] sm:$0xf]
      %v3314 = vld [vmem:[%s16 + $0x4c8] sm:$0xff]
      %v3315 = vld [vmem:[%s16 + $0x4d0] sm:$0xf]
      %v3316 = vld [vmem:[%s16 + $0x4d4] sm:$0xff]
      %v3317 = vld [vmem:[%s16 + $0x4dc] sm:$0xf]
      %v3318 = vld [vmem:[%s16 + $0x4e0] sm:$0xff]
      %v3319 = vld [vmem:[%s16 + $0x4e8] sm:$0xf]
      %v3320 = vld [vmem:[%s16 + $0x4ec] sm:$0xff]
      %v3321 = vld [vmem:[%s16 + $0x4f4] sm:$0xf]
      %v3322 = vld [vmem:[%s16 + $0x4f8] sm:$0xff]
      %v3323 = vld [vmem:[%s16 + $0x500] sm:$0xf]
      %v3324 = vld [vmem:[%s16 + $0x504] sm:$0xff]
      %v3325 = vld [vmem:[%s16 + $0x50c] sm:$0xf]
      %v3326 = vld [vmem:[%s16 + $0x510] sm:$0xff]
      %v3327 = vld [vmem:[%s16 + $0x518] sm:$0xf]
      %v3328 = vld [vmem:[%s16 + $0x51c] sm:$0xff]
      %v3329 = vld [vmem:[%s16 + $0x524] sm:$0xf]
      %v3330 = vld [vmem:[%s16 + $0x528] sm:$0xff]
      %v3331 = vld [vmem:[%s16 + $0x530] sm:$0xf]
      %v3332 = vld [vmem:[%s16 + $0x534] sm:$0xff]
      %v3333 = vld [vmem:[%s16 + $0x53c] sm:$0xf]
      %v3334 = vld [vmem:[%s16 + $0x540] sm:$0xff]
      %v3335 = vld [vmem:[%s16 + $0x548] sm:$0xf]
      %v3336 = vld [vmem:[%s16 + $0x54c] sm:$0xff]
      %v3337 = vld [vmem:[%s16 + $0x554] sm:$0xf]
      %v3338 = vld [vmem:[%s16 + $0x558] sm:$0xff]
      %v3339 = vld [vmem:[%s16 + $0x560] sm:$0xf]
      %v3340 = vld [vmem:[%s16 + $0x564] sm:$0xff]
      %v3341 = vld [vmem:[%s16 + $0x56c] sm:$0xf]
      %v3342 = vld [vmem:[%s16 + $0x570] sm:$0xff]
      %v3343 = vld [vmem:[%s16 + $0x578] sm:$0xf]
      %v3344 = vld [vmem:[%s16 + $0x57c] sm:$0xff]
      %v3345 = vld [vmem:[%s16 + $0x584] sm:$0xf]
      %v3346 = vld [vmem:[%s16 + $0x588] sm:$0xff]
      %v3347 = vld [vmem:[%s16 + $0x590] sm:$0xf]
      %v3348 = vld [vmem:[%s16 + $0x594] sm:$0xff]
      %v3349 = vld [vmem:[%s16 + $0x59c] sm:$0xf]
      %v3350 = vld [vmem:[%s16 + $0x5a0] sm:$0xff]
      %v3351 = vld [vmem:[%s16 + $0x5a8] sm:$0xf]
      %v3352 = vld [vmem:[%s16 + $0x5ac] sm:$0xff]
      %v3353 = vld [vmem:[%s16 + $0x5b4] sm:$0xf]
      %v3354 = vld [vmem:[%s16 + $0x5b8] sm:$0xff]
      %v3355 = vld [vmem:[%s16 + $0x5c0] sm:$0xf]
      %v3356 = vld [vmem:[%s16 + $0x5c4] sm:$0xff]
      %v3357 = vld [vmem:[%s16 + $0x5cc] sm:$0xf]
      %v3358 = vld [vmem:[%s16 + $0x5d0] sm:$0xff]
      %v3359 = vld [vmem:[%s16 + $0x5d8] sm:$0xf]
      %v3360 = vld [vmem:[%s16 + $0x5dc] sm:$0xff]
      %v3361 = vld [vmem:[%s16 + $0x5e4] sm:$0xf]
      %v3362 = vld [vmem:[%s16 + $0x5e8] sm:$0xff]
      %v3363 = vld [vmem:[%s16 + $0x5f0] sm:$0xf]
      %v3364 = vld [vmem:[%s16 + $0x5f4] sm:$0xff]
      %v3365 = vld [vmem:[%s16 + $0x5fc] sm:$0xf]
      %v3366 = vld [vmem:[%s16 + $0x600] sm:$0xff]
      %v3367 = vld [vmem:[%s16 + $0x608] sm:$0xf]
      %v3368 = vld [vmem:[%s16 + $0x60c] sm:$0xff]
      %v3369 = vld [vmem:[%s16 + $0x614] sm:$0xf]
      %v3370 = vld [vmem:[%s16 + $0x618] sm:$0xff]
      %v3371 = vld [vmem:[%s16 + $0x620] sm:$0xf]
      %v3372 = vld [vmem:[%s16 + $0x624] sm:$0xff]
      %v3373 = vld [vmem:[%s16 + $0x62c] sm:$0xf]
      %v3374 = vld [vmem:[%s16 + $0x630] sm:$0xff]
      %v3375 = vld [vmem:[%s16 + $0x638] sm:$0xf]
      %v3376 = vld [vmem:[%s16 + $0x63c] sm:$0xff]
      %v3377 = vld [vmem:[%s16 + $0x644] sm:$0xf]
      %v3378 = vld [vmem:[%s16 + $0x648] sm:$0xff]
      %v3379 = vld [vmem:[%s16 + $0x650] sm:$0xf]
      %v3380 = vld [vmem:[%s16 + $0x654] sm:$0xff]
      %v3381 = vld [vmem:[%s16 + $0x65c] sm:$0xf]
      %v3382 = vld [vmem:[%s16 + $0x660] sm:$0xff]
      %v3383 = vld [vmem:[%s16 + $0x668] sm:$0xf]
      %v3384 = vld [vmem:[%s16 + $0x66c] sm:$0xff]
      %v3385 = vld [vmem:[%s16 + $0x674] sm:$0xf]
      %v3386 = vld [vmem:[%s16 + $0x678] sm:$0xff]
      %v3387 = vld [vmem:[%s16 + $0x680] sm:$0xf]
      %v3388 = vld [vmem:[%s16 + $0x684] sm:$0xff]
      %v3389 = vld [vmem:[%s16 + $0x68c] sm:$0xf]
      %v3390 = vld [vmem:[%s16 + $0x690] sm:$0xff]
      %v3391 = vld [vmem:[%s16 + $0x698] sm:$0xf]
      %v3392 = vld [vmem:[%s16 + $0x69c] sm:$0xff]
      %v3393 = vld [vmem:[%s16 + $0x6a4] sm:$0xf]
      %v3394 = vld [vmem:[%s16 + $0x6a8] sm:$0xff]
      %v3395 = vld [vmem:[%s16 + $0x6b0] sm:$0xf]
      %v3396 = vld [vmem:[%s16 + $0x6b4] sm:$0xff]
      %v3397 = vld [vmem:[%s16 + $0x6bc] sm:$0xf]
      %v3398 = vld [vmem:[%s16 + $0x6c0] sm:$0xff]
      %v3399 = vld [vmem:[%s16 + $0x6c8] sm:$0xf]
      %v3400 = vld [vmem:[%s16 + $0x6cc] sm:$0xff]
      %v3401 = vld [vmem:[%s16 + $0x6d4] sm:$0xf]
      %v3402 = vld [vmem:[%s16 + $0x6d8] sm:$0xff]
      %v3403 = vld [vmem:[%s16 + $0x6e0] sm:$0xf]
      %v3404 = vld [vmem:[%s16 + $0x6e4] sm:$0xff]
      %v3405 = vld [vmem:[%s16 + $0x6ec] sm:$0xf]
      %v3406 = vld [vmem:[%s16 + $0x6f0] sm:$0xff]
      %v3407 = vld [vmem:[%s16 + $0x6f8] sm:$0xf]
      %v3408 = vld [vmem:[%s16 + $0x6fc] sm:$0xff]
      %v3409 = vld [vmem:[%s16 + $0x704] sm:$0xf]
      %v3410 = vld [vmem:[%s16 + $0x708] sm:$0xff]
      %v3411 = vld [vmem:[%s16 + $0x710] sm:$0xf]
      %v3412 = vld [vmem:[%s16 + $0x714] sm:$0xff]
      %v3413 = vld [vmem:[%s16 + $0x71c] sm:$0xf]
      %v3414 = vld [vmem:[%s16 + $0x720] sm:$0xff]
      %v3415 = vld [vmem:[%s16 + $0x728] sm:$0xf]
      %v3416 = vld [vmem:[%s16 + $0x72c] sm:$0xff]
      %v3417 = vld [vmem:[%s16 + $0x734] sm:$0xf]
      %v3418 = vld [vmem:[%s16 + $0x738] sm:$0xff]
      %v3419 = vld [vmem:[%s16 + $0x740] sm:$0xf]
      %v3420 = vld [vmem:[%s16 + $0x744] sm:$0xff]
      %v3421 = vld [vmem:[%s16 + $0x74c] sm:$0xf]
      %v3422 = vld [vmem:[%s16 + $0x750] sm:$0xff]
      %v3423 = vld [vmem:[%s16 + $0x758] sm:$0xf]
      %v3424 = vld [vmem:[%s16 + $0x75c] sm:$0xff]
      %v3425 = vld [vmem:[%s16 + $0x764] sm:$0xf]
      %v3426 = vld [vmem:[%s16 + $0x768] sm:$0xff]
      %v3427 = vld [vmem:[%s16 + $0x770] sm:$0xf]
      %v3428 = vld [vmem:[%s16 + $0x774] sm:$0xff]
      %v3429 = vld [vmem:[%s16 + $0x77c] sm:$0xf]
      %v3750 = vunpack.c.l.b16 %v3110
      %v3751 = vunpack.c.h.b16 %v3110
      %v3752 = vunpack.c.l.b16 %v3111
      %v3753 = vunpack.c.l.b16 %v3112
      %v3754 = vunpack.c.h.b16 %v3112
      %v3755 = vunpack.c.l.b16 %v3113
      %v3756 = vunpack.c.l.b16 %v3114
      %v3757 = vunpack.c.h.b16 %v3114
      %v3758 = vunpack.c.l.b16 %v3115
      %v3759 = vunpack.c.l.b16 %v3116
      %v3760 = vunpack.c.h.b16 %v3116
      %v3761 = vunpack.c.l.b16 %v3117
      %v3762 = vunpack.c.l.b16 %v3118
      %v3763 = vunpack.c.h.b16 %v3118
      %v3764 = vunpack.c.l.b16 %v3119
      %v3765 = vunpack.c.l.b16 %v3120
      %v3766 = vunpack.c.h.b16 %v3120
      %v3767 = vunpack.c.l.b16 %v3121
      %v3768 = vunpack.c.l.b16 %v3122
      %v3769 = vunpack.c.h.b16 %v3122
      %v3770 = vunpack.c.l.b16 %v3123
      %v3771 = vunpack.c.l.b16 %v3124
      %v3772 = vunpack.c.h.b16 %v3124
      %v3773 = vunpack.c.l.b16 %v3125
      %v3774 = vunpack.c.l.b16 %v3126
      %v3775 = vunpack.c.h.b16 %v3126
      %v3776 = vunpack.c.l.b16 %v3127
      %v3777 = vunpack.c.l.b16 %v3128
      %v3778 = vunpack.c.h.b16 %v3128
      %v3779 = vunpack.c.l.b16 %v3129
      %v3780 = vunpack.c.l.b16 %v3130
      %v3781 = vunpack.c.h.b16 %v3130
      %v3782 = vunpack.c.l.b16 %v3131
      %v3783 = vunpack.c.l.b16 %v3132
      %v3784 = vunpack.c.h.b16 %v3132
      %v3785 = vunpack.c.l.b16 %v3133
      %v3786 = vunpack.c.l.b16 %v3134
      %v3787 = vunpack.c.h.b16 %v3134
      %v3788 = vunpack.c.l.b16 %v3135
      %v3789 = vunpack.c.l.b16 %v3136
      %v3790 = vunpack.c.h.b16 %v3136
      %v3791 = vunpack.c.l.b16 %v3137
      %v3792 = vunpack.c.l.b16 %v3138
      %v3793 = vunpack.c.h.b16 %v3138
      %v3794 = vunpack.c.l.b16 %v3139
      %v3795 = vunpack.c.l.b16 %v3140
      %v3796 = vunpack.c.h.b16 %v3140
      %v3797 = vunpack.c.l.b16 %v3141
      %v3798 = vunpack.c.l.b16 %v3142
      %v3799 = vunpack.c.h.b16 %v3142
      %v3800 = vunpack.c.l.b16 %v3143
      %v3801 = vunpack.c.l.b16 %v3144
      %v3802 = vunpack.c.h.b16 %v3144
      %v3803 = vunpack.c.l.b16 %v3145
      %v3804 = vunpack.c.l.b16 %v3146
      %v3805 = vunpack.c.h.b16 %v3146
      %v3806 = vunpack.c.l.b16 %v3147
      %v3807 = vunpack.c.l.b16 %v3148
      %v3808 = vunpack.c.h.b16 %v3148
      %v3809 = vunpack.c.l.b16 %v3149
      %v3810 = vunpack.c.l.b16 %v3150
      %v3811 = vunpack.c.h.b16 %v3150
      %v3812 = vunpack.c.l.b16 %v3151
      %v3813 = vunpack.c.l.b16 %v3152
      %v3814 = vunpack.c.h.b16 %v3152
      %v3815 = vunpack.c.l.b16 %v3153
      %v3816 = vunpack.c.l.b16 %v3154
      %v3817 = vunpack.c.h.b16 %v3154
      %v3818 = vunpack.c.l.b16 %v3155
      %v3819 = vunpack.c.l.b16 %v3156
      %v3820 = vunpack.c.h.b16 %v3156
      %v3821 = vunpack.c.l.b16 %v3157
      %v3822 = vunpack.c.l.b16 %v3158
      %v3823 = vunpack.c.h.b16 %v3158
      %v3824 = vunpack.c.l.b16 %v3159
      %v3825 = vunpack.c.l.b16 %v3160
      %v3826 = vunpack.c.h.b16 %v3160
      %v3827 = vunpack.c.l.b16 %v3161
      %v3828 = vunpack.c.l.b16 %v3162
      %v3829 = vunpack.c.h.b16 %v3162
      %v3830 = vunpack.c.l.b16 %v3163
      %v3831 = vunpack.c.l.b16 %v3164
      %v3832 = vunpack.c.h.b16 %v3164
      %v3833 = vunpack.c.l.b16 %v3165
      %v3834 = vunpack.c.l.b16 %v3166
      %v3835 = vunpack.c.h.b16 %v3166
      %v3836 = vunpack.c.l.b16 %v3167
      %v3837 = vunpack.c.l.b16 %v3168
      %v3838 = vunpack.c.h.b16 %v3168
      %v3839 = vunpack.c.l.b16 %v3169
      %v3840 = vunpack.c.l.b16 %v3170
      %v3841 = vunpack.c.h.b16 %v3170
      %v3842 = vunpack.c.l.b16 %v3171
      %v3843 = vunpack.c.l.b16 %v3172
      %v3844 = vunpack.c.h.b16 %v3172
      %v3845 = vunpack.c.l.b16 %v3173
      %v3846 = vunpack.c.l.b16 %v3174
      %v3847 = vunpack.c.h.b16 %v3174
      %v3848 = vunpack.c.l.b16 %v3175
      %v3849 = vunpack.c.l.b16 %v3176
      %v3850 = vunpack.c.h.b16 %v3176
      %v3851 = vunpack.c.l.b16 %v3177
      %v3852 = vunpack.c.l.b16 %v3178
      %v3853 = vunpack.c.h.b16 %v3178
      %v3854 = vunpack.c.l.b16 %v3179
      %v3855 = vunpack.c.l.b16 %v3180
      %v3856 = vunpack.c.h.b16 %v3180
      %v3857 = vunpack.c.l.b16 %v3181
      %v3858 = vunpack.c.l.b16 %v3182
      %v3859 = vunpack.c.h.b16 %v3182
      %v3860 = vunpack.c.l.b16 %v3183
      %v3861 = vunpack.c.l.b16 %v3184
      %v3862 = vunpack.c.h.b16 %v3184
      %v3863 = vunpack.c.l.b16 %v3185
      %v3864 = vunpack.c.l.b16 %v3186
      %v3865 = vunpack.c.h.b16 %v3186
      %v3866 = vunpack.c.l.b16 %v3187
      %v3867 = vunpack.c.l.b16 %v3188
      %v3868 = vunpack.c.h.b16 %v3188
      %v3869 = vunpack.c.l.b16 %v3189
      %v3870 = vunpack.c.l.b16 %v3190
      %v3871 = vunpack.c.h.b16 %v3190
      %v3872 = vunpack.c.l.b16 %v3191
      %v3873 = vunpack.c.l.b16 %v3192
      %v3874 = vunpack.c.h.b16 %v3192
      %v3875 = vunpack.c.l.b16 %v3193
      %v3876 = vunpack.c.l.b16 %v3194
      %v3877 = vunpack.c.h.b16 %v3194
      %v3878 = vunpack.c.l.b16 %v3195
      %v3879 = vunpack.c.l.b16 %v3196
      %v3880 = vunpack.c.h.b16 %v3196
      %v3881 = vunpack.c.l.b16 %v3197
      %v3882 = vunpack.c.l.b16 %v3198
      %v3883 = vunpack.c.h.b16 %v3198
      %v3884 = vunpack.c.l.b16 %v3199
      %v3885 = vunpack.c.l.b16 %v3200
      %v3886 = vunpack.c.h.b16 %v3200
      %v3887 = vunpack.c.l.b16 %v3201
      %v3888 = vunpack.c.l.b16 %v3202
      %v3889 = vunpack.c.h.b16 %v3202
      %v3890 = vunpack.c.l.b16 %v3203
      %v3891 = vunpack.c.l.b16 %v3204
      %v3892 = vunpack.c.h.b16 %v3204
      %v3893 = vunpack.c.l.b16 %v3205
      %v3894 = vunpack.c.l.b16 %v3206
      %v3895 = vunpack.c.h.b16 %v3206
      %v3896 = vunpack.c.l.b16 %v3207
      %v3897 = vunpack.c.l.b16 %v3208
      %v3898 = vunpack.c.h.b16 %v3208
      %v3899 = vunpack.c.l.b16 %v3209
      %v3900 = vunpack.c.l.b16 %v3210
      %v3901 = vunpack.c.h.b16 %v3210
      %v3902 = vunpack.c.l.b16 %v3211
      %v3903 = vunpack.c.l.b16 %v3212
      %v3904 = vunpack.c.h.b16 %v3212
      %v3905 = vunpack.c.l.b16 %v3213
      %v3906 = vunpack.c.l.b16 %v3214
      %v3907 = vunpack.c.h.b16 %v3214
      %v3908 = vunpack.c.l.b16 %v3215
      %v3909 = vunpack.c.l.b16 %v3216
      %v3910 = vunpack.c.h.b16 %v3216
      %v3911 = vunpack.c.l.b16 %v3217
      %v3912 = vunpack.c.l.b16 %v3218
      %v3913 = vunpack.c.h.b16 %v3218
      %v3914 = vunpack.c.l.b16 %v3219
      %v3915 = vunpack.c.l.b16 %v3220
      %v3916 = vunpack.c.h.b16 %v3220
      %v3917 = vunpack.c.l.b16 %v3221
      %v3918 = vunpack.c.l.b16 %v3222
      %v3919 = vunpack.c.h.b16 %v3222
      %v3920 = vunpack.c.l.b16 %v3223
      %v3921 = vunpack.c.l.b16 %v3224
      %v3922 = vunpack.c.h.b16 %v3224
      %v3923 = vunpack.c.l.b16 %v3225
      %v3924 = vunpack.c.l.b16 %v3226
      %v3925 = vunpack.c.h.b16 %v3226
      %v3926 = vunpack.c.l.b16 %v3227
      %v3927 = vunpack.c.l.b16 %v3228
      %v3928 = vunpack.c.h.b16 %v3228
      %v3929 = vunpack.c.l.b16 %v3229
      %v3930 = vunpack.c.l.b16 %v3230
      %v3931 = vunpack.c.h.b16 %v3230
      %v3932 = vunpack.c.l.b16 %v3231
      %v3933 = vunpack.c.l.b16 %v3232
      %v3934 = vunpack.c.h.b16 %v3232
      %v3935 = vunpack.c.l.b16 %v3233
      %v3936 = vunpack.c.l.b16 %v3234
      %v3937 = vunpack.c.h.b16 %v3234
      %v3938 = vunpack.c.l.b16 %v3235
      %v3939 = vunpack.c.l.b16 %v3236
      %v3940 = vunpack.c.h.b16 %v3236
      %v3941 = vunpack.c.l.b16 %v3237
      %v3942 = vunpack.c.l.b16 %v3238
      %v3943 = vunpack.c.h.b16 %v3238
      %v3944 = vunpack.c.l.b16 %v3239
      %v3945 = vunpack.c.l.b16 %v3240
      %v3946 = vunpack.c.h.b16 %v3240
      %v3947 = vunpack.c.l.b16 %v3241
      %v3948 = vunpack.c.l.b16 %v3242
      %v3949 = vunpack.c.h.b16 %v3242
      %v3950 = vunpack.c.l.b16 %v3243
      %v3951 = vunpack.c.l.b16 %v3244
      %v3952 = vunpack.c.h.b16 %v3244
      %v3953 = vunpack.c.l.b16 %v3245
      %v3954 = vunpack.c.l.b16 %v3246
      %v3955 = vunpack.c.h.b16 %v3246
      %v3956 = vunpack.c.l.b16 %v3247
      %v3957 = vunpack.c.l.b16 %v3248
      %v3958 = vunpack.c.h.b16 %v3248
      %v3959 = vunpack.c.l.b16 %v3249
      %v3960 = vunpack.c.l.b16 %v3250
      %v3961 = vunpack.c.h.b16 %v3250
      %v3962 = vunpack.c.l.b16 %v3251
      %v3963 = vunpack.c.l.b16 %v3252
      %v3964 = vunpack.c.h.b16 %v3252
      %v3965 = vunpack.c.l.b16 %v3253
      %v3966 = vunpack.c.l.b16 %v3254
      %v3967 = vunpack.c.h.b16 %v3254
      %v3968 = vunpack.c.l.b16 %v3255
      %v3969 = vunpack.c.l.b16 %v3256
      %v3970 = vunpack.c.h.b16 %v3256
      %v3971 = vunpack.c.l.b16 %v3257
      %v3972 = vunpack.c.l.b16 %v3258
      %v3973 = vunpack.c.h.b16 %v3258
      %v3974 = vunpack.c.l.b16 %v3259
      %v3975 = vunpack.c.l.b16 %v3260
      %v3976 = vunpack.c.h.b16 %v3260
      %v3977 = vunpack.c.l.b16 %v3261
      %v3978 = vunpack.c.l.b16 %v3262
      %v3979 = vunpack.c.h.b16 %v3262
      %v3980 = vunpack.c.l.b16 %v3263
      %v3981 = vunpack.c.l.b16 %v3264
      %v3982 = vunpack.c.h.b16 %v3264
      %v3983 = vunpack.c.l.b16 %v3265
      %v3984 = vunpack.c.l.b16 %v3266
      %v3985 = vunpack.c.h.b16 %v3266
      %v3986 = vunpack.c.l.b16 %v3267
      %v3987 = vunpack.c.l.b16 %v3268
      %v3988 = vunpack.c.h.b16 %v3268
      %v3989 = vunpack.c.l.b16 %v3269
      %v3990 = vunpack.c.l.b16 %v3270
      %v3991 = vunpack.c.h.b16 %v3270
      %v3992 = vunpack.c.l.b16 %v3271
      %v3993 = vunpack.c.l.b16 %v3272
      %v3994 = vunpack.c.h.b16 %v3272
      %v3995 = vunpack.c.l.b16 %v3273
      %v3996 = vunpack.c.l.b16 %v3274
      %v3997 = vunpack.c.h.b16 %v3274
      %v3998 = vunpack.c.l.b16 %v3275
      %v3999 = vunpack.c.l.b16 %v3276
      %v4000 = vunpack.c.h.b16 %v3276
      %v4001 = vunpack.c.l.b16 %v3277
      %v4002 = vunpack.c.l.b16 %v3278
      %v4003 = vunpack.c.h.b16 %v3278
      %v4004 = vunpack.c.l.b16 %v3279
      %v4005 = vunpack.c.l.b16 %v3280
      %v4006 = vunpack.c.h.b16 %v3280
      %v4007 = vunpack.c.l.b16 %v3281
      %v4008 = vunpack.c.l.b16 %v3282
      %v4009 = vunpack.c.h.b16 %v3282
      %v4010 = vunpack.c.l.b16 %v3283
      %v4011 = vunpack.c.l.b16 %v3284
      %v4012 = vunpack.c.h.b16 %v3284
      %v4013 = vunpack.c.l.b16 %v3285
      %v4014 = vunpack.c.l.b16 %v3286
      %v4015 = vunpack.c.h.b16 %v3286
      %v4016 = vunpack.c.l.b16 %v3287
      %v4017 = vunpack.c.l.b16 %v3288
      %v4018 = vunpack.c.h.b16 %v3288
      %v4019 = vunpack.c.l.b16 %v3289
      %v4020 = vunpack.c.l.b16 %v3290
      %v4021 = vunpack.c.h.b16 %v3290
      %v4022 = vunpack.c.l.b16 %v3291
      %v4023 = vunpack.c.l.b16 %v3292
      %v4024 = vunpack.c.h.b16 %v3292
      %v4025 = vunpack.c.l.b16 %v3293
      %v4026 = vunpack.c.l.b16 %v3294
      %v4027 = vunpack.c.h.b16 %v3294
      %v4028 = vunpack.c.l.b16 %v3295
      %v4029 = vunpack.c.l.b16 %v3296
      %v4030 = vunpack.c.h.b16 %v3296
      %v4031 = vunpack.c.l.b16 %v3297
      %v4032 = vunpack.c.l.b16 %v3298
      %v4033 = vunpack.c.h.b16 %v3298
      %v4034 = vunpack.c.l.b16 %v3299
      %v4035 = vunpack.c.l.b16 %v3300
      %v4036 = vunpack.c.h.b16 %v3300
      %v4037 = vunpack.c.l.b16 %v3301
      %v4038 = vunpack.c.l.b16 %v3302
      %v4039 = vunpack.c.h.b16 %v3302
      %v4040 = vunpack.c.l.b16 %v3303
      %v4041 = vunpack.c.l.b16 %v3304
      %v4042 = vunpack.c.h.b16 %v3304
      %v4043 = vunpack.c.l.b16 %v3305
      %v4044 = vunpack.c.l.b16 %v3306
      %v4045 = vunpack.c.h.b16 %v3306
      %v4046 = vunpack.c.l.b16 %v3307
      %v4047 = vunpack.c.l.b16 %v3308
      %v4048 = vunpack.c.h.b16 %v3308
      %v4049 = vunpack.c.l.b16 %v3309
      %v4050 = vunpack.c.l.b16 %v3310
      %v4051 = vunpack.c.h.b16 %v3310
      %v4052 = vunpack.c.l.b16 %v3311
      %v4053 = vunpack.c.l.b16 %v3312
      %v4054 = vunpack.c.h.b16 %v3312
      %v4055 = vunpack.c.l.b16 %v3313
      %v4056 = vunpack.c.l.b16 %v3314
      %v4057 = vunpack.c.h.b16 %v3314
      %v4058 = vunpack.c.l.b16 %v3315
      %v4059 = vunpack.c.l.b16 %v3316
      %v4060 = vunpack.c.h.b16 %v3316
      %v4061 = vunpack.c.l.b16 %v3317
      %v4062 = vunpack.c.l.b16 %v3318
      %v4063 = vunpack.c.h.b16 %v3318
      %v4064 = vunpack.c.l.b16 %v3319
      %v4065 = vunpack.c.l.b16 %v3320
      %v4066 = vunpack.c.h.b16 %v3320
      %v4067 = vunpack.c.l.b16 %v3321
      %v4068 = vunpack.c.l.b16 %v3322
      %v4069 = vunpack.c.h.b16 %v3322
      %v4070 = vunpack.c.l.b16 %v3323
      %v4071 = vunpack.c.l.b16 %v3324
      %v4072 = vunpack.c.h.b16 %v3324
      %v4073 = vunpack.c.l.b16 %v3325
      %v4074 = vunpack.c.l.b16 %v3326
      %v4075 = vunpack.c.h.b16 %v3326
      %v4076 = vunpack.c.l.b16 %v3327
      %v4077 = vunpack.c.l.b16 %v3328
      %v4078 = vunpack.c.h.b16 %v3328
      %v4079 = vunpack.c.l.b16 %v3329
      %v4080 = vunpack.c.l.b16 %v3330
      %v4081 = vunpack.c.h.b16 %v3330
      %v4082 = vunpack.c.l.b16 %v3331
      %v4083 = vunpack.c.l.b16 %v3332
      %v4084 = vunpack.c.h.b16 %v3332
      %v4085 = vunpack.c.l.b16 %v3333
      %v4086 = vunpack.c.l.b16 %v3334
      %v4087 = vunpack.c.h.b16 %v3334
      %v4088 = vunpack.c.l.b16 %v3335
      %v4089 = vunpack.c.l.b16 %v3336
      %v4090 = vunpack.c.h.b16 %v3336
      %v4091 = vunpack.c.l.b16 %v3337
      %v4092 = vunpack.c.l.b16 %v3338
      %v4093 = vunpack.c.h.b16 %v3338
      %v4094 = vunpack.c.l.b16 %v3339
      %v4095 = vunpack.c.l.b16 %v3340
      %v4096 = vunpack.c.h.b16 %v3340
      %v4097 = vunpack.c.l.b16 %v3341
      %v4098 = vunpack.c.l.b16 %v3342
      %v4099 = vunpack.c.h.b16 %v3342
      %v4100 = vunpack.c.l.b16 %v3343
      %v4101 = vunpack.c.l.b16 %v3344
      %v4102 = vunpack.c.h.b16 %v3344
      %v4103 = vunpack.c.l.b16 %v3345
      %v4104 = vunpack.c.l.b16 %v3346
      %v4105 = vunpack.c.h.b16 %v3346
      %v4106 = vunpack.c.l.b16 %v3347
      %v4107 = vunpack.c.l.b16 %v3348
      %v4108 = vunpack.c.h.b16 %v3348
      %v4109 = vunpack.c.l.b16 %v3349
      %v4110 = vunpack.c.l.b16 %v3350
      %v4111 = vunpack.c.h.b16 %v3350
      %v4112 = vunpack.c.l.b16 %v3351
      %v4113 = vunpack.c.l.b16 %v3352
      %v4114 = vunpack.c.h.b16 %v3352
      %v4115 = vunpack.c.l.b16 %v3353
      %v4116 = vunpack.c.l.b16 %v3354
      %v4117 = vunpack.c.h.b16 %v3354
      %v4118 = vunpack.c.l.b16 %v3355
      %v4119 = vunpack.c.l.b16 %v3356
      %v4120 = vunpack.c.h.b16 %v3356
      %v4121 = vunpack.c.l.b16 %v3357
      %v4122 = vunpack.c.l.b16 %v3358
      %v4123 = vunpack.c.h.b16 %v3358
      %v4124 = vunpack.c.l.b16 %v3359
      %v4125 = vunpack.c.l.b16 %v3360
      %v4126 = vunpack.c.h.b16 %v3360
      %v4127 = vunpack.c.l.b16 %v3361
      %v4128 = vunpack.c.l.b16 %v3362
      %v4129 = vunpack.c.h.b16 %v3362
      %v4130 = vunpack.c.l.b16 %v3363
      %v4131 = vunpack.c.l.b16 %v3364
      %v4132 = vunpack.c.h.b16 %v3364
      %v4133 = vunpack.c.l.b16 %v3365
      %v4134 = vunpack.c.l.b16 %v3366
      %v4135 = vunpack.c.h.b16 %v3366
      %v4136 = vunpack.c.l.b16 %v3367
      %v4137 = vunpack.c.l.b16 %v3368
      %v4138 = vunpack.c.h.b16 %v3368
      %v4139 = vunpack.c.l.b16 %v3369
      %v4140 = vunpack.c.l.b16 %v3370
      %v4141 = vunpack.c.h.b16 %v3370
      %v4142 = vunpack.c.l.b16 %v3371
      %v4143 = vunpack.c.l.b16 %v3372
      %v4144 = vunpack.c.h.b16 %v3372
      %v4145 = vunpack.c.l.b16 %v3373
      %v4146 = vunpack.c.l.b16 %v3374
      %v4147 = vunpack.c.h.b16 %v3374
      %v4148 = vunpack.c.l.b16 %v3375
      %v4149 = vunpack.c.l.b16 %v3376
      %v4150 = vunpack.c.h.b16 %v3376
      %v4151 = vunpack.c.l.b16 %v3377
      %v4152 = vunpack.c.l.b16 %v3378
      %v4153 = vunpack.c.h.b16 %v3378
      %v4154 = vunpack.c.l.b16 %v3379
      %v4155 = vunpack.c.l.b16 %v3380
      %v4156 = vunpack.c.h.b16 %v3380
      %v4157 = vunpack.c.l.b16 %v3381
      %v4158 = vunpack.c.l.b16 %v3382
      %v4159 = vunpack.c.h.b16 %v3382
      %v4160 = vunpack.c.l.b16 %v3383
      %v4161 = vunpack.c.l.b16 %v3384
      %v4162 = vunpack.c.h.b16 %v3384
      %v4163 = vunpack.c.l.b16 %v3385
      %v4164 = vunpack.c.l.b16 %v3386
      %v4165 = vunpack.c.h.b16 %v3386
      %v4166 = vunpack.c.l.b16 %v3387
      %v4167 = vunpack.c.l.b16 %v3388
      %v4168 = vunpack.c.h.b16 %v3388
      %v4169 = vunpack.c.l.b16 %v3389
      %v4170 = vunpack.c.l.b16 %v3390
      %v4171 = vunpack.c.h.b16 %v3390
      %v4172 = vunpack.c.l.b16 %v3391
      %v4173 = vunpack.c.l.b16 %v3392
      %v4174 = vunpack.c.h.b16 %v3392
      %v4175 = vunpack.c.l.b16 %v3393
      %v4176 = vunpack.c.l.b16 %v3394
      %v4177 = vunpack.c.h.b16 %v3394
      %v4178 = vunpack.c.l.b16 %v3395
      %v4179 = vunpack.c.l.b16 %v3396
      %v4180 = vunpack.c.h.b16 %v3396
      %v4181 = vunpack.c.l.b16 %v3397
      %v4182 = vunpack.c.l.b16 %v3398
      %v4183 = vunpack.c.h.b16 %v3398
      %v4184 = vunpack.c.l.b16 %v3399
      %v4185 = vunpack.c.l.b16 %v3400
      %v4186 = vunpack.c.h.b16 %v3400
      %v4187 = vunpack.c.l.b16 %v3401
      %v4188 = vunpack.c.l.b16 %v3402
      %v4189 = vunpack.c.h.b16 %v3402
      %v4190 = vunpack.c.l.b16 %v3403
      %v4191 = vunpack.c.l.b16 %v3404
      %v4192 = vunpack.c.h.b16 %v3404
      %v4193 = vunpack.c.l.b16 %v3405
      %v4194 = vunpack.c.l.b16 %v3406
      %v4195 = vunpack.c.h.b16 %v3406
      %v4196 = vunpack.c.l.b16 %v3407
      %v4197 = vunpack.c.l.b16 %v3408
      %v4198 = vunpack.c.h.b16 %v3408
      %v4199 = vunpack.c.l.b16 %v3409
      %v4200 = vunpack.c.l.b16 %v3410
      %v4201 = vunpack.c.h.b16 %v3410
      %v4202 = vunpack.c.l.b16 %v3411
      %v4203 = vunpack.c.l.b16 %v3412
      %v4204 = vunpack.c.h.b16 %v3412
      %v4205 = vunpack.c.l.b16 %v3413
      %v4206 = vunpack.c.l.b16 %v3414
      %v4207 = vunpack.c.h.b16 %v3414
      %v4208 = vunpack.c.l.b16 %v3415
      %v4209 = vunpack.c.l.b16 %v3416
      %v4210 = vunpack.c.h.b16 %v3416
      %v4211 = vunpack.c.l.b16 %v3417
      %v4212 = vunpack.c.l.b16 %v3418
      %v4213 = vunpack.c.h.b16 %v3418
      %v4214 = vunpack.c.l.b16 %v3419
      %v4215 = vunpack.c.l.b16 %v3420
      %v4216 = vunpack.c.h.b16 %v3420
      %v4217 = vunpack.c.l.b16 %v3421
      %v4218 = vunpack.c.l.b16 %v3422
      %v4219 = vunpack.c.h.b16 %v3422
      %v4220 = vunpack.c.l.b16 %v3423
      %v4221 = vunpack.c.l.b16 %v3424
      %v4222 = vunpack.c.h.b16 %v3424
      %v4223 = vunpack.c.l.b16 %v3425
      %v4224 = vunpack.c.l.b16 %v3426
      %v4225 = vunpack.c.h.b16 %v3426
      %v4226 = vunpack.c.l.b16 %v3427
      %v4227 = vunpack.c.l.b16 %v3428
      %v4228 = vunpack.c.h.b16 %v3428
      %v4229 = vunpack.c.l.b16 %v3429
      %v4230 = vpack.c.b16 %v3753, %v3750
      %v4231 = vpack.c.b16 %v3754, %v3751
      %v4232 = vpack.c.b16 %v3755, %v3752
      %v4233 = vpack.c.b16 %v3759, %v3756
      %v4234 = vpack.c.b16 %v3760, %v3757
      %v4235 = vpack.c.b16 %v3761, %v3758
      %v4236 = vpack.c.b16 %v3765, %v3762
      %v4237 = vpack.c.b16 %v3766, %v3763
      %v4238 = vpack.c.b16 %v3767, %v3764
      %v4239 = vpack.c.b16 %v3771, %v3768
      %v4240 = vpack.c.b16 %v3772, %v3769
      %v4241 = vpack.c.b16 %v3773, %v3770
      %v4242 = vpack.c.b16 %v3777, %v3774
      %v4243 = vpack.c.b16 %v3778, %v3775
      %v4244 = vpack.c.b16 %v3779, %v3776
      %v4245 = vpack.c.b16 %v3783, %v3780
      %v4246 = vpack.c.b16 %v3784, %v3781
      %v4247 = vpack.c.b16 %v3785, %v3782
      %v4248 = vpack.c.b16 %v3789, %v3786
      %v4249 = vpack.c.b16 %v3790, %v3787
      %v4250 = vpack.c.b16 %v3791, %v3788
      %v4251 = vpack.c.b16 %v3795, %v3792
      %v4252 = vpack.c.b16 %v3796, %v3793
      %v4253 = vpack.c.b16 %v3797, %v3794
      %v4254 = vpack.c.b16 %v3801, %v3798
      %v4255 = vpack.c.b16 %v3802, %v3799
      %v4256 = vpack.c.b16 %v3803, %v3800
      %v4257 = vpack.c.b16 %v3807, %v3804
      %v4258 = vpack.c.b16 %v3808, %v3805
      %v4259 = vpack.c.b16 %v3809, %v3806
      %v4260 = vpack.c.b16 %v3813, %v3810
      %v4261 = vpack.c.b16 %v3814, %v3811
      %v4262 = vpack.c.b16 %v3815, %v3812
      %v4263 = vpack.c.b16 %v3819, %v3816
      %v4264 = vpack.c.b16 %v3820, %v3817
      %v4265 = vpack.c.b16 %v3821, %v3818
      %v4266 = vpack.c.b16 %v3825, %v3822
      %v4267 = vpack.c.b16 %v3826, %v3823
      %v4268 = vpack.c.b16 %v3827, %v3824
      %v4269 = vpack.c.b16 %v3831, %v3828
      %v4270 = vpack.c.b16 %v3832, %v3829
      %v4271 = vpack.c.b16 %v3833, %v3830
      %v4272 = vpack.c.b16 %v3837, %v3834
      %v4273 = vpack.c.b16 %v3838, %v3835
      %v4274 = vpack.c.b16 %v3839, %v3836
      %v4275 = vpack.c.b16 %v3843, %v3840
      %v4276 = vpack.c.b16 %v3844, %v3841
      %v4277 = vpack.c.b16 %v3845, %v3842
      %v4278 = vpack.c.b16 %v3849, %v3846
      %v4279 = vpack.c.b16 %v3850, %v3847
      %v4280 = vpack.c.b16 %v3851, %v3848
      %v4281 = vpack.c.b16 %v3855, %v3852
      %v4282 = vpack.c.b16 %v3856, %v3853
      %v4283 = vpack.c.b16 %v3857, %v3854
      %v4284 = vpack.c.b16 %v3861, %v3858
      %v4285 = vpack.c.b16 %v3862, %v3859
      %v4286 = vpack.c.b16 %v3863, %v3860
      %v4287 = vpack.c.b16 %v3867, %v3864
      %v4288 = vpack.c.b16 %v3868, %v3865
      %v4289 = vpack.c.b16 %v3869, %v3866
      %v4290 = vpack.c.b16 %v3873, %v3870
      %v4291 = vpack.c.b16 %v3874, %v3871
      %v4292 = vpack.c.b16 %v3875, %v3872
      %v4293 = vpack.c.b16 %v3879, %v3876
      %v4294 = vpack.c.b16 %v3880, %v3877
      %v4295 = vpack.c.b16 %v3881, %v3878
      %v4296 = vpack.c.b16 %v3885, %v3882
      %v4297 = vpack.c.b16 %v3886, %v3883
      %v4298 = vpack.c.b16 %v3887, %v3884
      %v4299 = vpack.c.b16 %v3891, %v3888
      %v4300 = vpack.c.b16 %v3892, %v3889
      %v4301 = vpack.c.b16 %v3893, %v3890
      %v4302 = vpack.c.b16 %v3897, %v3894
      %v4303 = vpack.c.b16 %v3898, %v3895
      %v4304 = vpack.c.b16 %v3899, %v3896
      %v4305 = vpack.c.b16 %v3903, %v3900
      %v4306 = vpack.c.b16 %v3904, %v3901
      %v4307 = vpack.c.b16 %v3905, %v3902
      %v4308 = vpack.c.b16 %v3909, %v3906
      %v4309 = vpack.c.b16 %v3910, %v3907
      %v4310 = vpack.c.b16 %v3911, %v3908
      %v4311 = vpack.c.b16 %v3915, %v3912
      %v4312 = vpack.c.b16 %v3916, %v3913
      %v4313 = vpack.c.b16 %v3917, %v3914
      %v4314 = vpack.c.b16 %v3921, %v3918
      %v4315 = vpack.c.b16 %v3922, %v3919
      %v4316 = vpack.c.b16 %v3923, %v3920
      %v4317 = vpack.c.b16 %v3927, %v3924
      %v4318 = vpack.c.b16 %v3928, %v3925
      %v4319 = vpack.c.b16 %v3929, %v3926
      %v4320 = vpack.c.b16 %v3933, %v3930
      %v4321 = vpack.c.b16 %v3934, %v3931
      %v4322 = vpack.c.b16 %v3935, %v3932
      %v4323 = vpack.c.b16 %v3939, %v3936
      %v4324 = vpack.c.b16 %v3940, %v3937
      %v4325 = vpack.c.b16 %v3941, %v3938
      %v4326 = vpack.c.b16 %v3945, %v3942
      %v4327 = vpack.c.b16 %v3946, %v3943
      %v4328 = vpack.c.b16 %v3947, %v3944
      %v4329 = vpack.c.b16 %v3951, %v3948
      %v4330 = vpack.c.b16 %v3952, %v3949
      %v4331 = vpack.c.b16 %v3953, %v3950
      %v4332 = vpack.c.b16 %v3957, %v3954
      %v4333 = vpack.c.b16 %v3958, %v3955
      %v4334 = vpack.c.b16 %v3959, %v3956
      %v4335 = vpack.c.b16 %v3963, %v3960
      %v4336 = vpack.c.b16 %v3964, %v3961
      %v4337 = vpack.c.b16 %v3965, %v3962
      %v4338 = vpack.c.b16 %v3969, %v3966
      %v4339 = vpack.c.b16 %v3970, %v3967
      %v4340 = vpack.c.b16 %v3971, %v3968
      %v4341 = vpack.c.b16 %v3975, %v3972
      %v4342 = vpack.c.b16 %v3976, %v3973
      %v4343 = vpack.c.b16 %v3977, %v3974
      %v4344 = vpack.c.b16 %v3981, %v3978
      %v4345 = vpack.c.b16 %v3982, %v3979
      %v4346 = vpack.c.b16 %v3983, %v3980
      %v4347 = vpack.c.b16 %v3987, %v3984
      %v4348 = vpack.c.b16 %v3988, %v3985
      %v4349 = vpack.c.b16 %v3989, %v3986
      %v4350 = vpack.c.b16 %v3993, %v3990
      %v4351 = vpack.c.b16 %v3994, %v3991
      %v4352 = vpack.c.b16 %v3995, %v3992
      %v4353 = vpack.c.b16 %v3999, %v3996
      %v4354 = vpack.c.b16 %v4000, %v3997
      %v4355 = vpack.c.b16 %v4001, %v3998
      %v4356 = vpack.c.b16 %v4005, %v4002
      %v4357 = vpack.c.b16 %v4006, %v4003
      %v4358 = vpack.c.b16 %v4007, %v4004
      %v4359 = vpack.c.b16 %v4011, %v4008
      %v4360 = vpack.c.b16 %v4012, %v4009
      %v4361 = vpack.c.b16 %v4013, %v4010
      %v4362 = vpack.c.b16 %v4017, %v4014
      %v4363 = vpack.c.b16 %v4018, %v4015
      %v4364 = vpack.c.b16 %v4019, %v4016
      %v4365 = vpack.c.b16 %v4023, %v4020
      %v4366 = vpack.c.b16 %v4024, %v4021
      %v4367 = vpack.c.b16 %v4025, %v4022
      %v4368 = vpack.c.b16 %v4029, %v4026
      %v4369 = vpack.c.b16 %v4030, %v4027
      %v4370 = vpack.c.b16 %v4031, %v4028
      %v4371 = vpack.c.b16 %v4035, %v4032
      %v4372 = vpack.c.b16 %v4036, %v4033
      %v4373 = vpack.c.b16 %v4037, %v4034
      %v4374 = vpack.c.b16 %v4041, %v4038
      %v4375 = vpack.c.b16 %v4042, %v4039
      %v4376 = vpack.c.b16 %v4043, %v4040
      %v4377 = vpack.c.b16 %v4047, %v4044
      %v4378 = vpack.c.b16 %v4048, %v4045
      %v4379 = vpack.c.b16 %v4049, %v4046
      %v4380 = vpack.c.b16 %v4053, %v4050
      %v4381 = vpack.c.b16 %v4054, %v4051
      %v4382 = vpack.c.b16 %v4055, %v4052
      %v4383 = vpack.c.b16 %v4059, %v4056
      %v4384 = vpack.c.b16 %v4060, %v4057
      %v4385 = vpack.c.b16 %v4061, %v4058
      %v4386 = vpack.c.b16 %v4065, %v4062
      %v4387 = vpack.c.b16 %v4066, %v4063
      %v4388 = vpack.c.b16 %v4067, %v4064
      %v4389 = vpack.c.b16 %v4071, %v4068
      %v4390 = vpack.c.b16 %v4072, %v4069
      %v4391 = vpack.c.b16 %v4073, %v4070
      %v4392 = vpack.c.b16 %v4077, %v4074
      %v4393 = vpack.c.b16 %v4078, %v4075
      %v4394 = vpack.c.b16 %v4079, %v4076
      %v4395 = vpack.c.b16 %v4083, %v4080
      %v4396 = vpack.c.b16 %v4084, %v4081
      %v4397 = vpack.c.b16 %v4085, %v4082
      %v4398 = vpack.c.b16 %v4089, %v4086
      %v4399 = vpack.c.b16 %v4090, %v4087
      %v4400 = vpack.c.b16 %v4091, %v4088
      %v4401 = vpack.c.b16 %v4095, %v4092
      %v4402 = vpack.c.b16 %v4096, %v4093
      %v4403 = vpack.c.b16 %v4097, %v4094
      %v4404 = vpack.c.b16 %v4101, %v4098
      %v4405 = vpack.c.b16 %v4102, %v4099
      %v4406 = vpack.c.b16 %v4103, %v4100
      %v4407 = vpack.c.b16 %v4107, %v4104
      %v4408 = vpack.c.b16 %v4108, %v4105
      %v4409 = vpack.c.b16 %v4109, %v4106
      %v4410 = vpack.c.b16 %v4113, %v4110
      %v4411 = vpack.c.b16 %v4114, %v4111
      %v4412 = vpack.c.b16 %v4115, %v4112
      %v4413 = vpack.c.b16 %v4119, %v4116
      %v4414 = vpack.c.b16 %v4120, %v4117
      %v4415 = vpack.c.b16 %v4121, %v4118
      %v4416 = vpack.c.b16 %v4125, %v4122
      %v4417 = vpack.c.b16 %v4126, %v4123
      %v4418 = vpack.c.b16 %v4127, %v4124
      %v4419 = vpack.c.b16 %v4131, %v4128
      %v4420 = vpack.c.b16 %v4132, %v4129
      %v4421 = vpack.c.b16 %v4133, %v4130
      %v4422 = vpack.c.b16 %v4137, %v4134
      %v4423 = vpack.c.b16 %v4138, %v4135
      %v4424 = vpack.c.b16 %v4139, %v4136
      %v4425 = vpack.c.b16 %v4143, %v4140
      %v4426 = vpack.c.b16 %v4144, %v4141
      %v4427 = vpack.c.b16 %v4145, %v4142
      %v4428 = vpack.c.b16 %v4149, %v4146
      %v4429 = vpack.c.b16 %v4150, %v4147
      %v4430 = vpack.c.b16 %v4151, %v4148
      %v4431 = vpack.c.b16 %v4155, %v4152
      %v4432 = vpack.c.b16 %v4156, %v4153
      %v4433 = vpack.c.b16 %v4157, %v4154
      %v4434 = vpack.c.b16 %v4161, %v4158
      %v4435 = vpack.c.b16 %v4162, %v4159
      %v4436 = vpack.c.b16 %v4163, %v4160
      %v4437 = vpack.c.b16 %v4167, %v4164
      %v4438 = vpack.c.b16 %v4168, %v4165
      %v4439 = vpack.c.b16 %v4169, %v4166
      %v4440 = vpack.c.b16 %v4173, %v4170
      %v4441 = vpack.c.b16 %v4174, %v4171
      %v4442 = vpack.c.b16 %v4175, %v4172
      %v4443 = vpack.c.b16 %v4179, %v4176
      %v4444 = vpack.c.b16 %v4180, %v4177
      %v4445 = vpack.c.b16 %v4181, %v4178
      %v4446 = vpack.c.b16 %v4185, %v4182
      %v4447 = vpack.c.b16 %v4186, %v4183
      %v4448 = vpack.c.b16 %v4187, %v4184
      %v4449 = vpack.c.b16 %v4191, %v4188
      %v4450 = vpack.c.b16 %v4192, %v4189
      %v4451 = vpack.c.b16 %v4193, %v4190
      %v4452 = vpack.c.b16 %v4197, %v4194
      %v4453 = vpack.c.b16 %v4198, %v4195
      %v4454 = vpack.c.b16 %v4199, %v4196
      %v4455 = vpack.c.b16 %v4203, %v4200
      %v4456 = vpack.c.b16 %v4204, %v4201
      %v4457 = vpack.c.b16 %v4205, %v4202
      %v4458 = vpack.c.b16 %v4209, %v4206
      %v4459 = vpack.c.b16 %v4210, %v4207
      %v4460 = vpack.c.b16 %v4211, %v4208
      %v4461 = vpack.c.b16 %v4215, %v4212
      %v4462 = vpack.c.b16 %v4216, %v4213
      %v4463 = vpack.c.b16 %v4217, %v4214
      %v4464 = vpack.c.b16 %v4221, %v4218
      %v4465 = vpack.c.b16 %v4222, %v4219
      %v4466 = vpack.c.b16 %v4223, %v4220
      %v4467 = vpack.c.b16 %v4227, %v4224
      %v4468 = vpack.c.b16 %v4228, %v4225
      %v4469 = vpack.c.b16 %v4229, %v4226
      %4710 = vmatprep.subr.bf16.mxu0 %v4231
      %4711 = vmatpush1.bf16.msra.mxu0 %v4230
      %4712 = vmatprep.subr.bf16.mxu0 %v4234
      %4713 = vmatpush1.bf16.msra.mxu0 %v4233
      %4714 = vmatprep.subr.bf16.mxu0 %v4237
      %4715 = vmatpush1.bf16.msra.mxu0 %v4236
      %4716 = vmatprep.subr.bf16.mxu0 %v4240
      %4717 = vmatpush1.bf16.msra.mxu0 %v4239
      %4718 = vmatprep.subr.bf16.mxu0 %v4243
      %4719 = vmatpush1.bf16.msra.mxu0 %v4242
      %4720 = vmatprep.subr.bf16.mxu0 %v4246
      %4721 = vmatpush1.bf16.msra.mxu0 %v4245
      %4722 = vmatprep.subr.bf16.mxu0 %v4249
      %4723 = vmatpush1.bf16.msra.mxu0 %v4248
      %4724 = vmatprep.subr.bf16.mxu0 %v4252
      %4725 = vmatpush1.bf16.msra.mxu0 %v4251
      %4726 = vmatprep.subr.bf16.mxu0 %v4255
      %4727 = vmatpush1.bf16.msra.mxu0 %v4254
      %4728 = vmatprep.subr.bf16.mxu0 %v4258
      %4729 = vmatpush1.bf16.msra.mxu0 %v4257
      %4730 = vmatprep.subr.bf16.mxu0 %v4261
      %4731 = vmatpush1.bf16.msra.mxu0 %v4260
      %4732 = vmatprep.subr.bf16.mxu0 %v4264
      %4733 = vmatpush1.bf16.msra.mxu0 %v4263
      %4734 = vmatprep.subr.bf16.mxu0 %v4267
      %4735 = vmatpush1.bf16.msra.mxu0 %v4266
      %4736 = vmatprep.subr.bf16.mxu0 %v4270
      %4737 = vmatpush1.bf16.msra.mxu0 %v4269
      %4738 = vmatprep.subr.bf16.mxu0 %v4273
      %4739 = vmatpush1.bf16.msra.mxu0 %v4272
      %4740 = vmatprep.subr.bf16.mxu0 %v4276
      %4741 = vmatpush1.bf16.msra.mxu0 %v4275
      %4742 = vmatprep.mubr.bf16.mxu0 %v3101
      %4743 = vmatmul.mubr.bf16.gmra.mrb[0].mxu0 %v3100
      %v4744 = vpop.f32.mrb[0].mxu0
      %v4745 = vadd.f32 0.0, %v4744
      %v4746 = vpop.f32.mrb[0].mxu0
      %v4747 = vadd.f32 0.0, %v4746
      %v4748 = vpop.f32.mrb[0].mxu0
      %v4749 = vadd.f32 0.0, %v4748
      %v4750 = vpop.f32.mrb[0].mxu0
      %v4751 = vadd.f32 0.0, %v4750
      %4752 = vdwg.mxu0
      %4753 = vmatprep.subr.bf16.mxu0 %v4279
      %4754 = vmatpush1.bf16.msra.mxu0 %v4278
      %4755 = vmatprep.subr.bf16.mxu0 %v4282
      %4756 = vmatpush1.bf16.msra.mxu0 %v4281
      %4757 = vmatprep.subr.bf16.mxu0 %v4285
      %4758 = vmatpush1.bf16.msra.mxu0 %v4284
      %4759 = vmatprep.subr.bf16.mxu0 %v4288
      %4760 = vmatpush1.bf16.msra.mxu0 %v4287
      %4761 = vmatprep.subr.bf16.mxu0 %v4291
      %4762 = vmatpush1.bf16.msra.mxu0 %v4290
      %4763 = vmatprep.subr.bf16.mxu0 %v4294
      %4764 = vmatpush1.bf16.msra.mxu0 %v4293
      %4765 = vmatprep.subr.bf16.mxu0 %v4297
      %4766 = vmatpush1.bf16.msra.mxu0 %v4296
      %4767 = vmatprep.subr.bf16.mxu0 %v4300
      %4768 = vmatpush1.bf16.msra.mxu0 %v4299
      %4769 = vmatprep.subr.bf16.mxu0 %v4303
      %4770 = vmatpush1.bf16.msra.mxu0 %v4302
      %4771 = vmatprep.subr.bf16.mxu0 %v4306
      %4772 = vmatpush1.bf16.msra.mxu0 %v4305
      %4773 = vmatprep.subr.bf16.mxu0 %v4309
      %4774 = vmatpush1.bf16.msra.mxu0 %v4308
      %4775 = vmatprep.subr.bf16.mxu0 %v4312
      %4776 = vmatpush1.bf16.msra.mxu0 %v4311
      %4777 = vmatprep.subr.bf16.mxu0 %v4315
      %4778 = vmatpush1.bf16.msra.mxu0 %v4314
      %4779 = vmatprep.subr.bf16.mxu0 %v4318
      %4780 = vmatpush1.bf16.msra.mxu0 %v4317
      %4781 = vmatprep.subr.bf16.mxu0 %v4321
      %4782 = vmatpush1.bf16.msra.mxu0 %v4320
      %4783 = vmatprep.subr.bf16.mxu0 %v4324
      %4784 = vmatpush1.bf16.msra.mxu0 %v4323
      %4785 = vmatprep.mubr.bf16.mxu0 %v3103
      %4786 = vmatmul.mubr.bf16.gmra.mrb[0].mxu0 %v3102
      %v4787 = vpop.f32.mrb[0].mxu0
      %v4788 = vadd.f32 %v4745, %v4787
      %v4789 = vpop.f32.mrb[0].mxu0
      %v4790 = vadd.f32 %v4747, %v4789
      %v4791 = vpop.f32.mrb[0].mxu0
      %v4792 = vadd.f32 %v4749, %v4791
      %v4793 = vpop.f32.mrb[0].mxu0
      %v4794 = vadd.f32 %v4751, %v4793
      %4795 = vdwg.mxu0
      %4796 = vmatprep.subr.bf16.mxu0 %v4327
      %4797 = vmatpush1.bf16.msra.mxu0 %v4326
      %4798 = vmatprep.subr.bf16.mxu0 %v4330
      %4799 = vmatpush1.bf16.msra.mxu0 %v4329
      %4800 = vmatprep.subr.bf16.mxu0 %v4333
      %4801 = vmatpush1.bf16.msra.mxu0 %v4332
      %4802 = vmatprep.subr.bf16.mxu0 %v4336
      %4803 = vmatpush1.bf16.msra.mxu0 %v4335
      %4804 = vmatprep.subr.bf16.mxu0 %v4339
      %4805 = vmatpush1.bf16.msra.mxu0 %v4338
      %4806 = vmatprep.subr.bf16.mxu0 %v4342
      %4807 = vmatpush1.bf16.msra.mxu0 %v4341
      %4808 = vmatprep.subr.bf16.mxu0 %v4345
      %4809 = vmatpush1.bf16.msra.mxu0 %v4344
      %4810 = vmatprep.subr.bf16.mxu0 %v4348
      %4811 = vmatpush1.bf16.msra.mxu0 %v4347
      %4812 = vmatprep.subr.bf16.mxu0 %v4351
      %4813 = vmatpush1.bf16.msra.mxu0 %v4350
      %4814 = vmatprep.subr.bf16.mxu0 %v4354
      %4815 = vmatpush1.bf16.msra.mxu0 %v4353
      %4816 = vmatprep.subr.bf16.mxu0 %v4357
      %4817 = vmatpush1.bf16.msra.mxu0 %v4356
      %4818 = vmatprep.subr.bf16.mxu0 %v4360
      %4819 = vmatpush1.bf16.msra.mxu0 %v4359
      %4820 = vmatprep.subr.bf16.mxu0 %v4363
      %4821 = vmatpush1.bf16.msra.mxu0 %v4362
      %4822 = vmatprep.subr.bf16.mxu0 %v4366
      %4823 = vmatpush1.bf16.msra.mxu0 %v4365
      %4824 = vmatprep.subr.bf16.mxu0 %v4369
      %4825 = vmatpush1.bf16.msra.mxu0 %v4368
      %4826 = vmatprep.subr.bf16.mxu0 %v4372
      %4827 = vmatpush1.bf16.msra.mxu0 %v4371
      %4828 = vmatprep.mubr.bf16.mxu0 %v3105
      %4829 = vmatmul.mubr.bf16.gmra.mrb[0].mxu0 %v3104
      %v4830 = vpop.f32.mrb[0].mxu0
      %v4831 = vadd.f32 %v4788, %v4830
      %v4832 = vpop.f32.mrb[0].mxu0
      %v4833 = vadd.f32 %v4790, %v4832
      %v4834 = vpop.f32.mrb[0].mxu0
      %v4835 = vadd.f32 %v4792, %v4834
      %v4836 = vpop.f32.mrb[0].mxu0
      %v4837 = vadd.f32 %v4794, %v4836
      %4838 = vdwg.mxu0
      %4839 = vmatprep.subr.bf16.mxu0 %v4375
      %4840 = vmatpush1.bf16.msra.mxu0 %v4374
      %4841 = vmatprep.subr.bf16.mxu0 %v4378
      %4842 = vmatpush1.bf16.msra.mxu0 %v4377
      %4843 = vmatprep.subr.bf16.mxu0 %v4381
      %4844 = vmatpush1.bf16.msra.mxu0 %v4380
      %4845 = vmatprep.subr.bf16.mxu0 %v4384
      %4846 = vmatpush1.bf16.msra.mxu0 %v4383
      %4847 = vmatprep.subr.bf16.mxu0 %v4387
      %4848 = vmatpush1.bf16.msra.mxu0 %v4386
      %4849 = vmatprep.subr.bf16.mxu0 %v4390
      %4850 = vmatpush1.bf16.msra.mxu0 %v4389
      %4851 = vmatprep.subr.bf16.mxu0 %v4393
      %4852 = vmatpush1.bf16.msra.mxu0 %v4392
      %4853 = vmatprep.subr.bf16.mxu0 %v4396
      %4854 = vmatpush1.bf16.msra.mxu0 %v4395
      %4855 = vmatprep.subr.bf16.mxu0 %v4399
      %4856 = vmatpush1.bf16.msra.mxu0 %v4398
      %4857 = vmatprep.subr.bf16.mxu0 %v4402
      %4858 = vmatpush1.bf16.msra.mxu0 %v4401
      %4859 = vmatprep.subr.bf16.mxu0 %v4405
      %4860 = vmatpush1.bf16.msra.mxu0 %v4404
      %4861 = vmatprep.subr.bf16.mxu0 %v4408
      %4862 = vmatpush1.bf16.msra.mxu0 %v4407
      %4863 = vmatprep.subr.bf16.mxu0 %v4411
      %4864 = vmatpush1.bf16.msra.mxu0 %v4410
      %4865 = vmatprep.subr.bf16.mxu0 %v4414
      %4866 = vmatpush1.bf16.msra.mxu0 %v4413
      %4867 = vmatprep.subr.bf16.mxu0 %v4417
      %4868 = vmatpush1.bf16.msra.mxu0 %v4416
      %4869 = vmatprep.subr.bf16.mxu0 %v4420
      %4870 = vmatpush1.bf16.msra.mxu0 %v4419
      %4871 = vmatprep.mubr.bf16.mxu0 %v3107
      %4872 = vmatmul.mubr.bf16.gmra.mrb[0].mxu0 %v3106
      %v4873 = vpop.f32.mrb[0].mxu0
      %v4874 = vadd.f32 %v4831, %v4873
      %v4875 = vpop.f32.mrb[0].mxu0
      %v4876 = vadd.f32 %v4833, %v4875
      %v4877 = vpop.f32.mrb[0].mxu0
      %v4878 = vadd.f32 %v4835, %v4877
      %v4879 = vpop.f32.mrb[0].mxu0
      %v4880 = vadd.f32 %v4837, %v4879
      %4881 = vdwg.mxu0
      %4882 = vmatprep.subr.bf16.mxu0 %v4423
      %4883 = vmatpush1.bf16.msra.mxu0 %v4422
      %4884 = vmatprep.subr.bf16.mxu0 %v4426
      %4885 = vmatpush1.bf16.msra.mxu0 %v4425
      %4886 = vmatprep.subr.bf16.mxu0 %v4429
      %4887 = vmatpush1.bf16.msra.mxu0 %v4428
      %4888 = vmatprep.subr.bf16.mxu0 %v4432
      %4889 = vmatpush1.bf16.msra.mxu0 %v4431
      %4890 = vmatprep.subr.bf16.mxu0 %v4435
      %4891 = vmatpush1.bf16.msra.mxu0 %v4434
      %4892 = vmatprep.subr.bf16.mxu0 %v4438
      %4893 = vmatpush1.bf16.msra.mxu0 %v4437
      %4894 = vmatprep.subr.bf16.mxu0 %v4441
      %4895 = vmatpush1.bf16.msra.mxu0 %v4440
      %4896 = vmatprep.subr.bf16.mxu0 %v4444
      %4897 = vmatpush1.bf16.msra.mxu0 %v4443
      %4898 = vmatprep.subr.bf16.mxu0 %v4447
      %4899 = vmatpush1.bf16.msra.mxu0 %v4446
      %4900 = vmatprep.subr.bf16.mxu0 %v4450
      %4901 = vmatpush1.bf16.msra.mxu0 %v4449
      %4902 = vmatprep.subr.bf16.mxu0 %v4453
      %4903 = vmatpush1.bf16.msra.mxu0 %v4452
      %4904 = vmatprep.subr.bf16.mxu0 %v4456
      %4905 = vmatpush1.bf16.msra.mxu0 %v4455
      %4906 = vmatprep.subr.bf16.mxu0 %v4459
      %4907 = vmatpush1.bf16.msra.mxu0 %v4458
      %4908 = vmatprep.subr.bf16.mxu0 %v4462
      %4909 = vmatpush1.bf16.msra.mxu0 %v4461
      %4910 = vmatprep.subr.bf16.mxu0 %v4465
      %4911 = vmatpush1.bf16.msra.mxu0 %v4464
      %4912 = vmatprep.subr.bf16.mxu0 %v4468
      %4913 = vmatpush1.bf16.msra.mxu0 %v4467
      %4914 = vmatprep.mubr.bf16.mxu0 %v3109
      %4915 = vmatmul.mubr.bf16.gmra.mrb[0].mxu0 %v3108
      %v4916 = vpop.f32.mrb[0].mxu0
      %v4917 = vadd.f32 %v4874, %v4916
      %v4918 = vpop.f32.mrb[0].mxu0
      %v4919 = vadd.f32 %v4876, %v4918
      %v4920 = vpop.f32.mrb[0].mxu0
      %v4921 = vadd.f32 %v4878, %v4920
      %v4922 = vpop.f32.mrb[0].mxu0
      %v4923 = vadd.f32 %v4880, %v4922
      %4924 = vdwg.mxu0
      %4925 = vmatprep.subr.bf16.mxu0 0
      %4926 = vmatpush1.bf16.msra.mxu0 %v4232
      %4927 = vmatprep.subr.bf16.mxu0 0
      %4928 = vmatpush1.bf16.msra.mxu0 %v4235
      %4929 = vmatprep.subr.bf16.mxu0 0
      %4930 = vmatpush1.bf16.msra.mxu0 %v4238
      %4931 = vmatprep.subr.bf16.mxu0 0
      %4932 = vmatpush1.bf16.msra.mxu0 %v4241
      %4933 = vmatprep.subr.bf16.mxu0 0
      %4934 = vmatpush1.bf16.msra.mxu0 %v4244
      %4935 = vmatprep.subr.bf16.mxu0 0
      %4936 = vmatpush1.bf16.msra.mxu0 %v4247
      %4937 = vmatprep.subr.bf16.mxu0 0
      %4938 = vmatpush1.bf16.msra.mxu0 %v4250
      %4939 = vmatprep.subr.bf16.mxu0 0
      %4940 = vmatpush1.bf16.msra.mxu0 %v4253
      %4941 = vmatprep.subr.bf16.mxu0 0
      %4942 = vmatpush1.bf16.msra.mxu0 %v4256
      %4943 = vmatprep.subr.bf16.mxu0 0
      %4944 = vmatpush1.bf16.msra.mxu0 %v4259
      %4945 = vmatprep.subr.bf16.mxu0 0
      %4946 = vmatpush1.bf16.msra.mxu0 %v4262
      %4947 = vmatprep.subr.bf16.mxu0 0
      %4948 = vmatpush1.bf16.msra.mxu0 %v4265
      %4949 = vmatprep.subr.bf16.mxu0 0
      %4950 = vmatpush1.bf16.msra.mxu0 %v4268
      %4951 = vmatprep.subr.bf16.mxu0 0
      %4952 = vmatpush1.bf16.msra.mxu0 %v4271
      %4953 = vmatprep.subr.bf16.mxu0 0
      %4954 = vmatpush1.bf16.msra.mxu0 %v4274
      %4955 = vmatprep.subr.bf16.mxu0 0
      %4956 = vmatpush1.bf16.msra.mxu0 %v4277
      %4957 = vmatprep.mubr.bf16.mxu0 %v3101
      %4958 = vmatmul.mubr.bf16.gmra.mrb[0].mxu0 %v3100
      %v4959 = vpop.f32.mrb[0].mxu0
      %v4960 = vadd.f32 0.0, %v4959
      %v4961 = vpop.f32.mrb[0].mxu0
      %v4962 = vpop.f32.mrb[0].mxu0
      %v4963 = vadd.f32 0.0, %v4962
      %v4964 = vpop.f32.mrb[0].mxu0
      %4965 = vdwg.mxu0
      %4966 = vmatprep.subr.bf16.mxu0 0
      %4967 = vmatpush1.bf16.msra.mxu0 %v4280
      %4968 = vmatprep.subr.bf16.mxu0 0
      %4969 = vmatpush1.bf16.msra.mxu0 %v4283
      %4970 = vmatprep.subr.bf16.mxu0 0
      %4971 = vmatpush1.bf16.msra.mxu0 %v4286
      %4972 = vmatprep.subr.bf16.mxu0 0
      %4973 = vmatpush1.bf16.msra.mxu0 %v4289
      %4974 = vmatprep.subr.bf16.mxu0 0
      %4975 = vmatpush1.bf16.msra.mxu0 %v4292
      %4976 = vmatprep.subr.bf16.mxu0 0
      %4977 = vmatpush1.bf16.msra.mxu0 %v4295
      %4978 = vmatprep.subr.bf16.mxu0 0
      %4979 = vmatpush1.bf16.msra.mxu0 %v4298
      %4980 = vmatprep.subr.bf16.mxu0 0
      %4981 = vmatpush1.bf16.msra.mxu0 %v4301
      %4982 = vmatprep.subr.bf16.mxu0 0
      %4983 = vmatpush1.bf16.msra.mxu0 %v4304
      %4984 = vmatprep.subr.bf16.mxu0 0
      %4985 = vmatpush1.bf16.msra.mxu0 %v4307
      %4986 = vmatprep.subr.bf16.mxu0 0
      %4987 = vmatpush1.bf16.msra.mxu0 %v4310
      %4988 = vmatprep.subr.bf16.mxu0 0
      %4989 = vmatpush1.bf16.msra.mxu0 %v4313
      %4990 = vmatprep.subr.bf16.mxu0 0
      %4991 = vmatpush1.bf16.msra.mxu0 %v4316
      %4992 = vmatprep.subr.bf16.mxu0 0
      %4993 = vmatpush1.bf16.msra.mxu0 %v4319
      %4994 = vmatprep.subr.bf16.mxu0 0
      %4995 = vmatpush1.bf16.msra.mxu0 %v4322
      %4996 = vmatprep.subr.bf16.mxu0 0
      %4997 = vmatpush1.bf16.msra.mxu0 %v4325
      %4998 = vmatprep.mubr.bf16.mxu0 %v3103
      %4999 = vmatmul.mubr.bf16.gmra.mrb[0].mxu0 %v3102
      %v5000 = vpop.f32.mrb[0].mxu0
      %v5001 = vadd.f32 %v4960, %v5000
      %v5002 = vpop.f32.mrb[0].mxu0
      %v5003 = vpop.f32.mrb[0].mxu0
      %v5004 = vadd.f32 %v4963, %v5003
      %v5005 = vpop.f32.mrb[0].mxu0
      %5006 = vdwg.mxu0
      %5007 = vmatprep.subr.bf16.mxu0 0
      %5008 = vmatpush1.bf16.msra.mxu0 %v4328
      %5009 = vmatprep.subr.bf16.mxu0 0
      %5010 = vmatpush1.bf16.msra.mxu0 %v4331
      %5011 = vmatprep.subr.bf16.mxu0 0
      %5012 = vmatpush1.bf16.msra.mxu0 %v4334
      %5013 = vmatprep.subr.bf16.mxu0 0
      %5014 = vmatpush1.bf16.msra.mxu0 %v4337
      %5015 = vmatprep.subr.bf16.mxu0 0
      %5016 = vmatpush1.bf16.msra.mxu0 %v4340
      %5017 = vmatprep.subr.bf16.mxu0 0
      %5018 = vmatpush1.bf16.msra.mxu0 %v4343
      %5019 = vmatprep.subr.bf16.mxu0 0
      %5020 = vmatpush1.bf16.msra.mxu0 %v4346
      %5021 = vmatprep.subr.bf16.mxu0 0
      %5022 = vmatpush1.bf16.msra.mxu0 %v4349
      %5023 = vmatprep.subr.bf16.mxu0 0
      %5024 = vmatpush1.bf16.msra.mxu0 %v4352
      %5025 = vmatprep.subr.bf16.mxu0 0
      %5026 = vmatpush1.bf16.msra.mxu0 %v4355
      %5027 = vmatprep.subr.bf16.mxu0 0
      %5028 = vmatpush1.bf16.msra.mxu0 %v4358
      %5029 = vmatprep.subr.bf16.mxu0 0
      %5030 = vmatpush1.bf16.msra.mxu0 %v4361
      %5031 = vmatprep.subr.bf16.mxu0 0
      %5032 = vmatpush1.bf16.msra.mxu0 %v4364
      %5033 = vmatprep.subr.bf16.mxu0 0
      %5034 = vmatpush1.bf16.msra.mxu0 %v4367
      %5035 = vmatprep.subr.bf16.mxu0 0
      %5036 = vmatpush1.bf16.msra.mxu0 %v4370
      %5037 = vmatprep.subr.bf16.mxu0 0
      %5038 = vmatpush1.bf16.msra.mxu0 %v4373
      %5039 = vmatprep.mubr.bf16.mxu0 %v3105
      %5040 = vmatmul.mubr.bf16.gmra.mrb[0].mxu0 %v3104
      %v5041 = vpop.f32.mrb[0].mxu0
      %v5042 = vadd.f32 %v5001, %v5041
      %v5043 = vpop.f32.mrb[0].mxu0
      %v5044 = vpop.f32.mrb[0].mxu0
      %v5045 = vadd.f32 %v5004, %v5044
      %v5046 = vpop.f32.mrb[0].mxu0
      %5047 = vdwg.mxu0
      %5048 = vmatprep.subr.bf16.mxu0 0
      %5049 = vmatpush1.bf16.msra.mxu0 %v4376
      %5050 = vmatprep.subr.bf16.mxu0 0
      %5051 = vmatpush1.bf16.msra.mxu0 %v4379
      %5052 = vmatprep.subr.bf16.mxu0 0
      %5053 = vmatpush1.bf16.msra.mxu0 %v4382
      %5054 = vmatprep.subr.bf16.mxu0 0
      %5055 = vmatpush1.bf16.msra.mxu0 %v4385
      %5056 = vmatprep.subr.bf16.mxu0 0
      %5057 = vmatpush1.bf16.msra.mxu0 %v4388
      %5058 = vmatprep.subr.bf16.mxu0 0
      %5059 = vmatpush1.bf16.msra.mxu0 %v4391
      %5060 = vmatprep.subr.bf16.mxu0 0
      %5061 = vmatpush1.bf16.msra.mxu0 %v4394
      %5062 = vmatprep.subr.bf16.mxu0 0
      %5063 = vmatpush1.bf16.msra.mxu0 %v4397
      %5064 = vmatprep.subr.bf16.mxu0 0
      %5065 = vmatpush1.bf16.msra.mxu0 %v4400
      %5066 = vmatprep.subr.bf16.mxu0 0
      %5067 = vmatpush1.bf16.msra.mxu0 %v4403
      %5068 = vmatprep.subr.bf16.mxu0 0
      %5069 = vmatpush1.bf16.msra.mxu0 %v4406
      %5070 = vmatprep.subr.bf16.mxu0 0
      %5071 = vmatpush1.bf16.msra.mxu0 %v4409
      %5072 = vmatprep.subr.bf16.mxu0 0
      %5073 = vmatpush1.bf16.msra.mxu0 %v4412
      %5074 = vmatprep.subr.bf16.mxu0 0
      %5075 = vmatpush1.bf16.msra.mxu0 %v4415
      %5076 = vmatprep.subr.bf16.mxu0 0
      %5077 = vmatpush1.bf16.msra.mxu0 %v4418
      %5078 = vmatprep.subr.bf16.mxu0 0
      %5079 = vmatpush1.bf16.msra.mxu0 %v4421
      %5080 = vmatprep.mubr.bf16.mxu0 %v3107
      %5081 = vmatmul.mubr.bf16.gmra.mrb[0].mxu0 %v3106
      %v5082 = vpop.f32.mrb[0].mxu0
      %v5083 = vadd.f32 %v5042, %v5082
      %v5084 = vpop.f32.mrb[0].mxu0
      %v5085 = vpop.f32.mrb[0].mxu0
      %v5086 = vadd.f32 %v5045, %v5085
      %v5087 = vpop.f32.mrb[0].mxu0
      %5088 = vdwg.mxu0
      %5089 = vmatprep.subr.bf16.mxu0 0
      %5090 = vmatpush1.bf16.msra.mxu0 %v4424
      %5091 = vmatprep.subr.bf16.mxu0 0
      %5092 = vmatpush1.bf16.msra.mxu0 %v4427
      %5093 = vmatprep.subr.bf16.mxu0 0
      %5094 = vmatpush1.bf16.msra.mxu0 %v4430
      %5095 = vmatprep.subr.bf16.mxu0 0
      %5096 = vmatpush1.bf16.msra.mxu0 %v4433
      %5097 = vmatprep.subr.bf16.mxu0 0
      %5098 = vmatpush1.bf16.msra.mxu0 %v4436
      %5099 = vmatprep.subr.bf16.mxu0 0
      %5100 = vmatpush1.bf16.msra.mxu0 %v4439
      %5101 = vmatprep.subr.bf16.mxu0 0
      %5102 = vmatpush1.bf16.msra.mxu0 %v4442
      %5103 = vmatprep.subr.bf16.mxu0 0
      %5104 = vmatpush1.bf16.msra.mxu0 %v4445
      %5105 = vmatprep.subr.bf16.mxu0 0
      %5106 = vmatpush1.bf16.msra.mxu0 %v4448
      %5107 = vmatprep.subr.bf16.mxu0 0
      %5108 = vmatpush1.bf16.msra.mxu0 %v4451
      %5109 = vmatprep.subr.bf16.mxu0 0
      %5110 = vmatpush1.bf16.msra.mxu0 %v4454
      %5111 = vmatprep.subr.bf16.mxu0 0
      %5112 = vmatpush1.bf16.msra.mxu0 %v4457
      %5113 = vmatprep.subr.bf16.mxu0 0
      %5114 = vmatpush1.bf16.msra.mxu0 %v4460
      %5115 = vmatprep.subr.bf16.mxu0 0
      %5116 = vmatpush1.bf16.msra.mxu0 %v4463
      %5117 = vmatprep.subr.bf16.mxu0 0
      %5118 = vmatpush1.bf16.msra.mxu0 %v4466
      %5119 = vmatprep.subr.bf16.mxu0 0
      %5120 = vmatpush1.bf16.msra.mxu0 %v4469
      %5121 = vmatprep.mubr.bf16.mxu0 %v3109
      %5122 = vmatmul.mubr.bf16.gmra.mrb[0].mxu0 %v3108
      %v5123 = vpop.f32.mrb[0].mxu0
      %v5124 = vadd.f32 %v5083, %v5123
      %v5125 = vpop.f32.mrb[0].mxu0
      %v5126 = vpop.f32.mrb[0].mxu0
      %v5127 = vadd.f32 %v5086, %v5126
      %v5128 = vpop.f32.mrb[0].mxu0
      %5129 = vdwg.mxu0
      %5130 = vst [vmem:[#allocation2 + $0x8] sm:$0xff] %v4917
      %5131 = vst [vmem:[#allocation2 + $0x10] sm:$0xff] %v4919
      %5132 = vst [vmem:[#allocation2 + $0x18] sm:$0xff] %v5124
      %5133 = vst [vmem:[#allocation2 + $0x68] sm:$0xff] %v4921
      %5134 = vst [vmem:[#allocation2 + $0x70] sm:$0xff] %v4923
      %5135 = vst [vmem:[#allocation2 + $0x78] sm:$0xff] %v5127
      %v5136 = vld [vmem:[#allocation2] sm:$0xff]
      %v5137 = vld [vmem:[#allocation2 + $0x8] sm:$0xff]
      %v5138 = vld [vmem:[#allocation2 + $0x10] sm:$0xff]
      %v5139 = vld [vmem:[#allocation2 + $0x18] sm:$0xff]
      %v5140 = vld [vmem:[#allocation2 + $0x60] sm:$0xff]
      %v5141 = vld [vmem:[#allocation2 + $0x68] sm:$0xff]
      %v5142 = vld [vmem:[#allocation2 + $0x70] sm:$0xff]
      %v5143 = vld [vmem:[#allocation2 + $0x78] sm:$0xff]
      %5152 = vrot.lane.b32.xlu0 %v5136, 19
      %v5153 = vpop.permute.xlu0 %5152
      %5154 = vrot.lane.b32.xlu0 %v5137, 19
      %v5155 = vpop.permute.xlu0 %5154
      %5156 = vrot.lane.b32.xlu0 %v5138, 19
      %v5157 = vpop.permute.xlu0 %5156
      %5158 = vrot.lane.b32.xlu0 %v5139, 19
      %v5159 = vpop.permute.xlu0 %5158
      %5160 = vrot.lane.b32.xlu0 %v5140, 19
      %v5161 = vpop.permute.xlu0 %5160
      %5162 = vrot.lane.b32.xlu0 %v5141, 19
      %v5163 = vpop.permute.xlu0 %5162
      %5164 = vrot.lane.b32.xlu0 %v5142, 19
      %v5165 = vpop.permute.xlu0 %5164
      %5166 = vrot.lane.b32.xlu0 %v5143, 19
      %v5167 = vpop.permute.xlu0 %5166
      %vm5168 = vcmask 154624
      %v5169 = vsel %vm5168, %v5153, %v5155
      %v5170 = vsel %vm5168, %v5155, %v5157
      %v5171 = vsel %vm5168, %v5157, %v5159
      %v5172 = vsel %vm5168, %v5161, %v5163
      %v5173 = vsel %vm5168, %v5163, %v5165
      %v5174 = vsel %vm5168, %v5165, %v5167
      %5181 = vst [vmem:[#allocation3] sm:$0xff] %v5169
      %5182 = vst [vmem:[#allocation3 + $0x8] sm:$0xff] %v5170
      %5183 = vst [vmem:[#allocation3 + $0x10] sm:$0xff] %v5171
      %5184 = vst [vmem:[#allocation3 + $0x50] sm:$0xff] %v5172
      %5185 = vst [vmem:[#allocation3 + $0x58] sm:$0xff] %v5173
      %5186 = vst [vmem:[#allocation3 + $0x60] sm:$0xff] %v5174
      %v5187 = vld [vmem:[#allocation2] sm:$0xff]
      %v5188 = vld [vmem:[#allocation2 + $0x8] sm:$0xff]
      %v5189 = vld [vmem:[#allocation2 + $0x10] sm:$0xff]
      %v5190 = vld [vmem:[#allocation2 + $0x18] sm:$0xff]
      %v5191 = vld [vmem:[#allocation2 + $0x60] sm:$0xff]
      %v5192 = vld [vmem:[#allocation2 + $0x68] sm:$0xff]
      %v5193 = vld [vmem:[#allocation2 + $0x70] sm:$0xff]
      %v5194 = vld [vmem:[#allocation2 + $0x78] sm:$0xff]
      %5203 = vrot.lane.b32.xlu0 %v5187, 18
      %v5204 = vpop.permute.xlu0 %5203
      %5205 = vrot.lane.b32.xlu0 %v5188, 18
      %v5206 = vpop.permute.xlu0 %5205
      %5207 = vrot.lane.b32.xlu0 %v5189, 18
      %v5208 = vpop.permute.xlu0 %5207
      %5209 = vrot.lane.b32.xlu0 %v5190, 18
      %v5210 = vpop.permute.xlu0 %5209
      %5211 = vrot.lane.b32.xlu0 %v5191, 18
      %v5212 = vpop.permute.xlu0 %5211
      %5213 = vrot.lane.b32.xlu0 %v5192, 18
      %v5214 = vpop.permute.xlu0 %5213
      %5215 = vrot.lane.b32.xlu0 %v5193, 18
      %v5216 = vpop.permute.xlu0 %5215
      %5217 = vrot.lane.b32.xlu0 %v5194, 18
      %v5218 = vpop.permute.xlu0 %5217
      %vm5219 = vcmask 146432
      %v5220 = vsel %vm5219, %v5204, %v5206
      %v5221 = vsel %vm5219, %v5206, %v5208
      %v5222 = vsel %vm5219, %v5208, %v5210
      %v5223 = vsel %vm5219, %v5212, %v5214
      %v5224 = vsel %vm5219, %v5214, %v5216
      %v5225 = vsel %vm5219, %v5216, %v5218
      %5232 = vst [vmem:[#allocation3 + $0xa0] sm:$0xff] %v5220
      %5233 = vst [vmem:[#allocation3 + $0xa8] sm:$0xff] %v5221
      %5234 = vst [vmem:[#allocation3 + $0xb0] sm:$0xff] %v5222
      %5235 = vst [vmem:[#allocation3 + $0xf0] sm:$0xff] %v5223
      %5236 = vst [vmem:[#allocation3 + $0xf8] sm:$0xff] %v5224
      %5237 = vst [vmem:[#allocation3 + $0x100] sm:$0xff] %v5225
      %v5238 = vld [vmem:[#allocation2] sm:$0xff]
      %v5239 = vld [vmem:[#allocation2 + $0x8] sm:$0xff]
      %v5240 = vld [vmem:[#allocation2 + $0x10] sm:$0xff]
      %v5241 = vld [vmem:[#allocation2 + $0x18] sm:$0xff]
      %v5242 = vld [vmem:[#allocation2 + $0x60] sm:$0xff]
      %v5243 = vld [vmem:[#allocation2 + $0x68] sm:$0xff]
      %v5244 = vld [vmem:[#allocation2 + $0x70] sm:$0xff]
      %v5245 = vld [vmem:[#allocation2 + $0x78] sm:$0xff]
      %5254 = vrot.lane.b32.xlu0 %v5238, 17
      %v5255 = vpop.permute.xlu0 %5254
      %5256 = vrot.lane.b32.xlu0 %v5239, 17
      %v5257 = vpop.permute.xlu0 %5256
      %5258 = vrot.lane.b32.xlu0 %v5240, 17
      %v5259 = vpop.permute.xlu0 %5258
      %5260 = vrot.lane.b32.xlu0 %v5241, 17
      %v5261 = vpop.permute.xlu0 %5260
      %5262 = vrot.lane.b32.xlu0 %v5242, 17
      %v5263 = vpop.permute.xlu0 %5262
      %5264 = vrot.lane.b32.xlu0 %v5243, 17
      %v5265 = vpop.permute.xlu0 %5264
      %5266 = vrot.lane.b32.xlu0 %v5244, 17
      %v5267 = vpop.permute.xlu0 %5266
      %5268 = vrot.lane.b32.xlu0 %v5245, 17
      %v5269 = vpop.permute.xlu0 %5268
      %vm5270 = vcmask 138240
      %v5271 = vsel %vm5270, %v5255, %v5257
      %v5272 = vsel %vm5270, %v5257, %v5259
      %v5273 = vsel %vm5270, %v5259, %v5261
      %v5274 = vsel %vm5270, %v5263, %v5265
      %v5275 = vsel %vm5270, %v5265, %v5267
      %v5276 = vsel %vm5270, %v5267, %v5269
      %5283 = vst [vmem:[#allocation3 + $0x140] sm:$0xff] %v5271
      %5284 = vst [vmem:[#allocation3 + $0x148] sm:$0xff] %v5272
      %5285 = vst [vmem:[#allocation3 + $0x150] sm:$0xff] %v5273
      %5286 = vst [vmem:[#allocation3 + $0x190] sm:$0xff] %v5274
      %5287 = vst [vmem:[#allocation3 + $0x198] sm:$0xff] %v5275
      %5288 = vst [vmem:[#allocation3 + $0x1a0] sm:$0xff] %v5276
      %v5289 = vld [vmem:[#allocation2] sm:$0xff]
      %v5290 = vld [vmem:[#allocation2 + $0x8] sm:$0xff]
      %v5291 = vld [vmem:[#allocation2 + $0x10] sm:$0xff]
      %v5292 = vld [vmem:[#allocation2 + $0x18] sm:$0xff]
      %v5293 = vld [vmem:[#allocation2 + $0x60] sm:$0xff]
      %v5294 = vld [vmem:[#allocation2 + $0x68] sm:$0xff]
      %v5295 = vld [vmem:[#allocation2 + $0x70] sm:$0xff]
      %v5296 = vld [vmem:[#allocation2 + $0x78] sm:$0xff]
      %5305 = vrot.lane.b32.xlu0 %v5289, 1
      %v5306 = vpop.permute.xlu0 %5305
      %5307 = vrot.lane.b32.xlu0 %v5290, 1
      %v5308 = vpop.permute.xlu0 %5307
      %5309 = vrot.lane.b32.xlu0 %v5291, 1
      %v5310 = vpop.permute.xlu0 %5309
      %5311 = vrot.lane.b32.xlu0 %v5292, 1
      %v5312 = vpop.permute.xlu0 %5311
      %5313 = vrot.lane.b32.xlu0 %v5293, 1
      %v5314 = vpop.permute.xlu0 %5313
      %5315 = vrot.lane.b32.xlu0 %v5294, 1
      %v5316 = vpop.permute.xlu0 %5315
      %5317 = vrot.lane.b32.xlu0 %v5295, 1
      %v5318 = vpop.permute.xlu0 %5317
      %5319 = vrot.lane.b32.xlu0 %v5296, 1
      %v5320 = vpop.permute.xlu0 %5319
      %v5321 = vsel %vm941, %v5306, %v5308
      %v5322 = vsel %vm941, %v5308, %v5310
      %v5323 = vsel %vm941, %v5310, %v5312
      %v5324 = vsel %vm941, %v5314, %v5316
      %v5325 = vsel %vm941, %v5316, %v5318
      %v5326 = vsel %vm941, %v5318, %v5320
      %5333 = vst [vmem:[#allocation3 + $0x1e0] sm:$0xff] %v5321
      %5334 = vst [vmem:[#allocation3 + $0x1e8] sm:$0xff] %v5322
      %5335 = vst [vmem:[#allocation3 + $0x1f0] sm:$0xff] %v5323
      %5336 = vst [vmem:[#allocation3 + $0x230] sm:$0xff] %v5324
      %5337 = vst [vmem:[#allocation3 + $0x238] sm:$0xff] %v5325
      %5338 = vst [vmem:[#allocation3 + $0x240] sm:$0xff] %v5326
      %5339 = vst [vmem:[#allocation3 + $0x280] sm:$0xff] %v4917
      %5340 = vst [vmem:[#allocation3 + $0x288] sm:$0xff] %v4919
      %5341 = vst [vmem:[#allocation3 + $0x290] sm:$0xff] %v5124
      %5342 = vst [vmem:[#allocation3 + $0x2d0] sm:$0xff] %v4921
      %5343 = vst [vmem:[#allocation3 + $0x2d8] sm:$0xff] %v4923
      %5344 = vst [vmem:[#allocation3 + $0x2e0] sm:$0xff] %v5127
      %v5345 = vld [vmem:[#allocation2 + $0x8] sm:$0xff]
      %v5346 = vld [vmem:[#allocation2 + $0x10] sm:$0xff]
      %v5347 = vld [vmem:[#allocation2 + $0x18] sm:$0xff]
      %v5348 = vld [vmem:[#allocation2 + $0x20] sm:$0xff]
      %v5349 = vld [vmem:[#allocation2 + $0x68] sm:$0xff]
      %v5350 = vld [vmem:[#allocation2 + $0x70] sm:$0xff]
      %v5351 = vld [vmem:[#allocation2 + $0x78] sm:$0xff]
      %v5352 = vld [vmem:[#allocation2 + $0x80] sm:$0xff]
      %5361 = vrot.lane.b32.xlu0 %v5345, 127
      %v5362 = vpop.permute.xlu0 %5361
      %5363 = vrot.lane.b32.xlu0 %v5346, 127
      %v5364 = vpop.permute.xlu0 %5363
      %5365 = vrot.lane.b32.xlu0 %v5347, 127
      %v5366 = vpop.permute.xlu0 %5365
      %5367 = vrot.lane.b32.xlu0 %v5348, 127
      %v5368 = vpop.permute.xlu0 %5367
      %5369 = vrot.lane.b32.xlu0 %v5349, 127
      %v5370 = vpop.permute.xlu0 %5369
      %5371 = vrot.lane.b32.xlu0 %v5350, 127
      %v5372 = vpop.permute.xlu0 %5371
      %5373 = vrot.lane.b32.xlu0 %v5351, 127
      %v5374 = vpop.permute.xlu0 %5373
      %5375 = vrot.lane.b32.xlu0 %v5352, 127
      %v5376 = vpop.permute.xlu0 %5375
      %v5377 = vsel %vm1026, %v5362, %v5364
      %v5378 = vsel %vm1026, %v5364, %v5366
      %v5379 = vsel %vm1026, %v5366, %v5368
      %v5380 = vsel %vm1026, %v5370, %v5372
      %v5381 = vsel %vm1026, %v5372, %v5374
      %v5382 = vsel %vm1026, %v5374, %v5376
      %5389 = vst [vmem:[#allocation3 + $0x320] sm:$0xff] %v5377
      %5390 = vst [vmem:[#allocation3 + $0x328] sm:$0xff] %v5378
      %5391 = vst [vmem:[#allocation3 + $0x330] sm:$0xff] %v5379
      %5392 = vst [vmem:[#allocation3 + $0x370] sm:$0xff] %v5380
      %5393 = vst [vmem:[#allocation3 + $0x378] sm:$0xff] %v5381
      %5394 = vst [vmem:[#allocation3 + $0x380] sm:$0xff] %v5382
      %v5395 = vld [vmem:[#allocation2 + $0x8] sm:$0xff]
      %v5396 = vld [vmem:[#allocation2 + $0x10] sm:$0xff]
      %v5397 = vld [vmem:[#allocation2 + $0x18] sm:$0xff]
      %v5398 = vld [vmem:[#allocation2 + $0x20] sm:$0xff]
      %v5399 = vld [vmem:[#allocation2 + $0x68] sm:$0xff]
      %v5400 = vld [vmem:[#allocation2 + $0x70] sm:$0xff]
      %v5401 = vld [vmem:[#allocation2 + $0x78] sm:$0xff]
      %v5402 = vld [vmem:[#allocation2 + $0x80] sm:$0xff]
      %5411 = vrot.lane.b32.xlu0 %v5395, 111
      %v5412 = vpop.permute.xlu0 %5411
      %5413 = vrot.lane.b32.xlu0 %v5396, 111
      %v5414 = vpop.permute.xlu0 %5413
      %5415 = vrot.lane.b32.xlu0 %v5397, 111
      %v5416 = vpop.permute.xlu0 %5415
      %5417 = vrot.lane.b32.xlu0 %v5398, 111
      %v5418 = vpop.permute.xlu0 %5417
      %5419 = vrot.lane.b32.xlu0 %v5399, 111
      %v5420 = vpop.permute.xlu0 %5419
      %5421 = vrot.lane.b32.xlu0 %v5400, 111
      %v5422 = vpop.permute.xlu0 %5421
      %5423 = vrot.lane.b32.xlu0 %v5401, 111
      %v5424 = vpop.permute.xlu0 %5423
      %5425 = vrot.lane.b32.xlu0 %v5402, 111
      %v5426 = vpop.permute.xlu0 %5425
      %vm5427 = vcmask 908288
      %v5428 = vsel %vm5427, %v5412, %v5414
      %v5429 = vsel %vm5427, %v5414, %v5416
      %v5430 = vsel %vm5427, %v5416, %v5418
      %v5431 = vsel %vm5427, %v5420, %v5422
      %v5432 = vsel %vm5427, %v5422, %v5424
      %v5433 = vsel %vm5427, %v5424, %v5426
      %5440 = vst [vmem:[#allocation3 + $0x3c0] sm:$0xff] %v5428
      %5441 = vst [vmem:[#allocation3 + $0x3c8] sm:$0xff] %v5429
      %5442 = vst [vmem:[#allocation3 + $0x3d0] sm:$0xff] %v5430
      %5443 = vst [vmem:[#allocation3 + $0x410] sm:$0xff] %v5431
      %5444 = vst [vmem:[#allocation3 + $0x418] sm:$0xff] %v5432
      %5445 = vst [vmem:[#allocation3 + $0x420] sm:$0xff] %v5433
      %v5446 = vld [vmem:[#allocation2 + $0x8] sm:$0xff]
      %v5447 = vld [vmem:[#allocation2 + $0x10] sm:$0xff]
      %v5448 = vld [vmem:[#allocation2 + $0x18] sm:$0xff]
      %v5449 = vld [vmem:[#allocation2 + $0x20] sm:$0xff]
      %v5450 = vld [vmem:[#allocation2 + $0x68] sm:$0xff]
      %v5451 = vld [vmem:[#allocation2 + $0x70] sm:$0xff]
      %v5452 = vld [vmem:[#allocation2 + $0x78] sm:$0xff]
      %v5453 = vld [vmem:[#allocation2 + $0x80] sm:$0xff]
      %5462 = vrot.lane.b32.xlu0 %v5446, 110
      %v5463 = vpop.permute.xlu0 %5462
      %5464 = vrot.lane.b32.xlu0 %v5447, 110
      %v5465 = vpop.permute.xlu0 %5464
      %5466 = vrot.lane.b32.xlu0 %v5448, 110
      %v5467 = vpop.permute.xlu0 %5466
      %5468 = vrot.lane.b32.xlu0 %v5449, 110
      %v5469 = vpop.permute.xlu0 %5468
      %5470 = vrot.lane.b32.xlu0 %v5450, 110
      %v5471 = vpop.permute.xlu0 %5470
      %5472 = vrot.lane.b32.xlu0 %v5451, 110
      %v5473 = vpop.permute.xlu0 %5472
      %5474 = vrot.lane.b32.xlu0 %v5452, 110
      %v5475 = vpop.permute.xlu0 %5474
      %5476 = vrot.lane.b32.xlu0 %v5453, 110
      %v5477 = vpop.permute.xlu0 %5476
      %vm5478 = vcmask 900096
      %v5479 = vsel %vm5478, %v5463, %v5465
      %v5480 = vsel %vm5478, %v5465, %v5467
      %v5481 = vsel %vm5478, %v5467, %v5469
      %v5482 = vsel %vm5478, %v5471, %v5473
      %v5483 = vsel %vm5478, %v5473, %v5475
      %v5484 = vsel %vm5478, %v5475, %v5477
      %5491 = vst [vmem:[#allocation3 + $0x460] sm:$0xff] %v5479
      %5492 = vst [vmem:[#allocation3 + $0x468] sm:$0xff] %v5480
      %5493 = vst [vmem:[#allocation3 + $0x470] sm:$0xff] %v5481
      %5494 = vst [vmem:[#allocation3 + $0x4b0] sm:$0xff] %v5482
      %5495 = vst [vmem:[#allocation3 + $0x4b8] sm:$0xff] %v5483
      %5496 = vst [vmem:[#allocation3 + $0x4c0] sm:$0xff] %v5484
      %v5497 = vld [vmem:[#allocation2 + $0x8] sm:$0xff]
      %v5498 = vld [vmem:[#allocation2 + $0x10] sm:$0xff]
      %v5499 = vld [vmem:[#allocation2 + $0x18] sm:$0xff]
      %v5500 = vld [vmem:[#allocation2 + $0x20] sm:$0xff]
      %v5501 = vld [vmem:[#allocation2 + $0x68] sm:$0xff]
      %v5502 = vld [vmem:[#allocation2 + $0x70] sm:$0xff]
      %v5503 = vld [vmem:[#allocation2 + $0x78] sm:$0xff]
      %v5504 = vld [vmem:[#allocation2 + $0x80] sm:$0xff]
      %5513 = vrot.lane.b32.xlu0 %v5497, 109
      %v5514 = vpop.permute.xlu0 %5513
      %5515 = vrot.lane.b32.xlu0 %v5498, 109
      %v5516 = vpop.permute.xlu0 %5515
      %5517 = vrot.lane.b32.xlu0 %v5499, 109
      %v5518 = vpop.permute.xlu0 %5517
      %5519 = vrot.lane.b32.xlu0 %v5500, 109
      %v5520 = vpop.permute.xlu0 %5519
      %5521 = vrot.lane.b32.xlu0 %v5501, 109
      %v5522 = vpop.permute.xlu0 %5521
      %5523 = vrot.lane.b32.xlu0 %v5502, 109
      %v5524 = vpop.permute.xlu0 %5523
      %5525 = vrot.lane.b32.xlu0 %v5503, 109
      %v5526 = vpop.permute.xlu0 %5525
      %5527 = vrot.lane.b32.xlu0 %v5504, 109
      %v5528 = vpop.permute.xlu0 %5527
      %vm5529 = vcmask 891904
      %v5530 = vsel %vm5529, %v5514, %v5516
      %v5531 = vsel %vm5529, %v5516, %v5518
      %v5532 = vsel %vm5529, %v5518, %v5520
      %v5533 = vsel %vm5529, %v5522, %v5524
      %v5534 = vsel %vm5529, %v5524, %v5526
      %v5535 = vsel %vm5529, %v5526, %v5528
      %5542 = vst [vmem:[#allocation3 + $0x500] sm:$0xff] %v5530
      %5543 = vst [vmem:[#allocation3 + $0x508] sm:$0xff] %v5531
      %5544 = vst [vmem:[#allocation3 + $0x510] sm:$0xff] %v5532
      %5545 = vst [vmem:[#allocation3 + $0x550] sm:$0xff] %v5533
      %5546 = vst [vmem:[#allocation3 + $0x558] sm:$0xff] %v5534
      %5547 = vst [vmem:[#allocation3 + $0x560] sm:$0xff] %v5535
      %v5548 = vld [vmem:[%s5] sm:$0xff]
      %v5549 = vld [vmem:[%s5 + $0x8] sm:$0xff]
      %v5550 = vld [vmem:[%s5 + $0x10] sm:$0xff]
      %v5551 = vld [vmem:[%s5 + $0x18] sm:$0xff]
      %v5552 = vld [vmem:[#allocation3] sm:$0xff]
      %v5553 = vld [vmem:[#allocation3 + $0x8] sm:$0xff]
      %v5554 = vld [vmem:[#allocation3 + $0x10] sm:$0xff]
      %v5555 = vld [vmem:[#allocation3 + $0x50] sm:$0xff]
      %v5556 = vld [vmem:[#allocation3 + $0x58] sm:$0xff]
      %v5557 = vld [vmem:[#allocation3 + $0x60] sm:$0xff]
      %v5558 = vld [vmem:[#allocation3 + $0xa0] sm:$0xff]
      %v5559 = vld [vmem:[#allocation3 + $0xa8] sm:$0xff]
      %v5560 = vld [vmem:[#allocation3 + $0xb0] sm:$0xff]
      %v5561 = vld [vmem:[#allocation3 + $0xf0] sm:$0xff]
      %v5562 = vld [vmem:[#allocation3 + $0xf8] sm:$0xff]
      %v5563 = vld [vmem:[#allocation3 + $0x100] sm:$0xff]
      %v5564 = vld [vmem:[#allocation3 + $0x140] sm:$0xff]
      %v5565 = vld [vmem:[#allocation3 + $0x148] sm:$0xff]
      %v5566 = vld [vmem:[#allocation3 + $0x150] sm:$0xff]
      %v5567 = vld [vmem:[#allocation3 + $0x190] sm:$0xff]
      %v5568 = vld [vmem:[#allocation3 + $0x198] sm:$0xff]
      %v5569 = vld [vmem:[#allocation3 + $0x1a0] sm:$0xff]
      %v5570 = vld [vmem:[#allocation3 + $0x1e0] sm:$0xff]
      %v5571 = vld [vmem:[#allocation3 + $0x1e8] sm:$0xff]
      %v5572 = vld [vmem:[#allocation3 + $0x1f0] sm:$0xff]
      %v5573 = vld [vmem:[#allocation3 + $0x230] sm:$0xff]
      %v5574 = vld [vmem:[#allocation3 + $0x238] sm:$0xff]
      %v5575 = vld [vmem:[#allocation3 + $0x240] sm:$0xff]
      %v5576 = vld [vmem:[#allocation3 + $0x280] sm:$0xff]
      %v5577 = vld [vmem:[#allocation3 + $0x288] sm:$0xff]
      %v5578 = vld [vmem:[#allocation3 + $0x290] sm:$0xff]
      %v5579 = vld [vmem:[#allocation3 + $0x2d0] sm:$0xff]
      %v5580 = vld [vmem:[#allocation3 + $0x2d8] sm:$0xff]
      %v5581 = vld [vmem:[#allocation3 + $0x2e0] sm:$0xff]
      %v5582 = vld [vmem:[#allocation3 + $0x320] sm:$0xff]
      %v5583 = vld [vmem:[#allocation3 + $0x328] sm:$0xff]
      %v5584 = vld [vmem:[#allocation3 + $0x330] sm:$0xff]
      %v5585 = vld [vmem:[#allocation3 + $0x370] sm:$0xff]
      %v5586 = vld [vmem:[#allocation3 + $0x378] sm:$0xff]
      %v5587 = vld [vmem:[#allocation3 + $0x380] sm:$0xff]
      %v5588 = vld [vmem:[#allocation3 + $0x3c0] sm:$0xff]
      %v5589 = vld [vmem:[#allocation3 + $0x3c8] sm:$0xff]
      %v5590 = vld [vmem:[#allocation3 + $0x3d0] sm:$0xff]
      %v5591 = vld [vmem:[#allocation3 + $0x410] sm:$0xff]
      %v5592 = vld [vmem:[#allocation3 + $0x418] sm:$0xff]
      %v5593 = vld [vmem:[#allocation3 + $0x420] sm:$0xff]
      %v5594 = vld [vmem:[#allocation3 + $0x460] sm:$0xff]
      %v5595 = vld [vmem:[#allocation3 + $0x468] sm:$0xff]
      %v5596 = vld [vmem:[#allocation3 + $0x470] sm:$0xff]
      %v5597 = vld [vmem:[#allocation3 + $0x4b0] sm:$0xff]
      %v5598 = vld [vmem:[#allocation3 + $0x4b8] sm:$0xff]
      %v5599 = vld [vmem:[#allocation3 + $0x4c0] sm:$0xff]
      %v5600 = vld [vmem:[#allocation3 + $0x500] sm:$0xff]
      %v5601 = vld [vmem:[#allocation3 + $0x508] sm:$0xff]
      %v5602 = vld [vmem:[#allocation3 + $0x510] sm:$0xff]
      %v5603 = vld [vmem:[#allocation3 + $0x550] sm:$0xff]
      %v5604 = vld [vmem:[#allocation3 + $0x558] sm:$0xff]
      %v5605 = vld [vmem:[#allocation3 + $0x560] sm:$0xff]
      %v5606 = vpack.c.bf16 %v5555, %v5552
      %v5607 = vpack.c.bf16 %v5556, %v5553
      %v5608 = vpack.c.bf16 %v5557, %v5554
      %v5609 = vpack.c.bf16 %v5561, %v5558
      %v5610 = vpack.c.bf16 %v5562, %v5559
      %v5611 = vpack.c.bf16 %v5563, %v5560
      %v5612 = vpack.c.bf16 %v5567, %v5564
      %v5613 = vpack.c.bf16 %v5568, %v5565
      %v5614 = vpack.c.bf16 %v5569, %v5566
      %v5615 = vpack.c.bf16 %v5573, %v5570
      %v5616 = vpack.c.bf16 %v5574, %v5571
      %v5617 = vpack.c.bf16 %v5575, %v5572
      %v5618 = vpack.c.bf16 %v5579, %v5576
      %v5619 = vpack.c.bf16 %v5580, %v5577
      %v5620 = vpack.c.bf16 %v5581, %v5578
      %v5621 = vpack.c.bf16 %v5585, %v5582
      %v5622 = vpack.c.bf16 %v5586, %v5583
      %v5623 = vpack.c.bf16 %v5587, %v5584
      %v5624 = vpack.c.bf16 %v5591, %v5588
      %v5625 = vpack.c.bf16 %v5592, %v5589
      %v5626 = vpack.c.bf16 %v5593, %v5590
      %v5627 = vpack.c.bf16 %v5597, %v5594
      %v5628 = vpack.c.bf16 %v5598, %v5595
      %v5629 = vpack.c.bf16 %v5599, %v5596
      %v5630 = vpack.c.bf16 %v5603, %v5600
      %v5631 = vpack.c.bf16 %v5604, %v5601
      %v5632 = vpack.c.bf16 %v5605, %v5602
      %v5633 = vld [vmem:[%s6] sm:$0xff]
      %v5634 = vld [vmem:[%s6 + $0x8] sm:$0xff]
      %v5635 = vld [vmem:[%s6 + $0x10] sm:$0xff]
      %v5636 = vld [vmem:[%s6 + $0x18] sm:$0xff]
      %5638 = vset.pattern.permute.xlu0 0
      %5639 = vperm.xlu0 %5638, %v5633
      %v5640 = vpop.permute.xlu0 %5639
      %5643 = vset.pattern.permute.xlu0 0
      %5644 = vperm.xlu0 %5643, %v5634
      %v5645 = vpop.permute.xlu0 %5644
      %5648 = vset.pattern.permute.xlu0 0
      %5649 = vperm.xlu0 %5648, %v5635
      %v5650 = vpop.permute.xlu0 %5649
      %5653 = vset.pattern.permute.xlu0 0
      %5654 = vperm.xlu0 %5653, %v5636
      %v5655 = vpop.permute.xlu0 %5654
      %v5661 = vunpack.c.l.b16 %v5548
      %v5662 = vunpack.c.h.b16 %v5548
      %v5663 = vunpack.c.l.b16 %v5549
      %v5664 = vunpack.c.h.b16 %v5549
      %v5665 = vunpack.c.l.b16 %v5550
      %v5666 = vunpack.c.h.b16 %v5550
      %v5667 = vunpack.c.l.b16 %v5551
      %v5668 = vunpack.c.h.b16 %v5551
      %v5669 = vpack.c.b16 %v5663, %v5661
      %v5670 = vpack.c.b16 %v5664, %v5662
      %v5671 = vpack.c.b16 %v5667, %v5665
      %v5672 = vpack.c.b16 %v5668, %v5666
      %vm5675 = vcmask 130048
      %v5677 = vsel %vm5675, %v5670, 0
      %v5680 = vsel %vm5675, %v5672, 0
      %5682 = vmatprep.subr.bf16.mxu0 %v5607
      %5683 = vmatpush1.bf16.msra.mxu0 %v5606
      %5684 = vmatprep.subr.bf16.mxu0 %v5610
      %5685 = vmatpush1.bf16.msra.mxu0 %v5609
      %5686 = vmatprep.subr.bf16.mxu0 %v5613
      %5687 = vmatpush1.bf16.msra.mxu0 %v5612
      %5688 = vmatprep.subr.bf16.mxu0 %v5616
      %5689 = vmatpush1.bf16.msra.mxu0 %v5615
      %5690 = vmatprep.subr.bf16.mxu0 %v5619
      %5691 = vmatpush1.bf16.msra.mxu0 %v5618
      %5692 = vmatprep.subr.bf16.mxu0 %v5622
      %5693 = vmatpush1.bf16.msra.mxu0 %v5621
      %5694 = vmatprep.subr.bf16.mxu0 %v5625
      %5695 = vmatpush1.bf16.msra.mxu0 %v5624
      %5696 = vmatprep.subr.bf16.mxu0 %v5628
      %5697 = vmatpush1.bf16.msra.mxu0 %v5627
      %5698 = vmatprep.subr.bf16.mxu0 %v5631
      %5699 = vmatpush1.bf16.msra.mxu0 %v5630
      %5700 = vmatprep.subr.bf16.mxu0 0
      %5701 = vmatpush1.bf16.msra.mxu0 0
      %5702 = vmatprep.subr.bf16.mxu0 0
      %5703 = vmatpush1.bf16.msra.mxu0 0
      %5704 = vmatprep.subr.bf16.mxu0 0
      %5705 = vmatpush1.bf16.msra.mxu0 0
      %5706 = vmatprep.subr.bf16.mxu0 0
      %5707 = vmatpush1.bf16.msra.mxu0 0
      %5708 = vmatprep.subr.bf16.mxu0 0
      %5709 = vmatpush1.bf16.msra.mxu0 0
      %5710 = vmatprep.subr.bf16.mxu0 0
      %5711 = vmatpush1.bf16.msra.mxu0 0
      %5712 = vmatprep.subr.bf16.mxu0 0
      %5713 = vmatpush1.bf16.msra.mxu0 0
      %5714 = vmatprep.mubr.bf16.mxu0 %v5677
      %5715 = vmatmul.mubr.bf16.gmra.mrb[0].mxu0 %v5669
      %v5716 = vpop.f32.mrb[0].mxu0
      %v5717 = vadd.f32 %v5640, %v5716
      %v5718 = vpop.f32.mrb[0].mxu0
      %v5719 = vadd.f32 %v5640, %v5718
      %v5720 = vpop.f32.mrb[0].mxu0
      %v5721 = vadd.f32 %v5645, %v5720
      %v5722 = vpop.f32.mrb[0].mxu0
      %v5723 = vadd.f32 %v5645, %v5722
      %5724 = vmatprep.mubr.bf16.mxu0 %v5680
      %5725 = vmatmul.mubr.bf16.gmra.mrb[0].mxu0 %v5671
      %v5726 = vpop.f32.mrb[0].mxu0
      %v5727 = vadd.f32 %v5650, %v5726
      %v5728 = vpop.f32.mrb[0].mxu0
      %v5729 = vadd.f32 %v5650, %v5728
      %v5730 = vpop.f32.mrb[0].mxu0
      %v5731 = vadd.f32 %v5655, %v5730
      %v5732 = vpop.f32.mrb[0].mxu0
      %v5733 = vadd.f32 %v5655, %v5732
      %5734 = vdwg.mxu0
      %5735 = vmatprep.subr.bf16.mxu0 0
      %5736 = vmatpush1.bf16.msra.mxu0 %v5608
      %5737 = vmatprep.subr.bf16.mxu0 0
      %5738 = vmatpush1.bf16.msra.mxu0 %v5611
      %5739 = vmatprep.subr.bf16.mxu0 0
      %5740 = vmatpush1.bf16.msra.mxu0 %v5614
      %5741 = vmatprep.subr.bf16.mxu0 0
      %5742 = vmatpush1.bf16.msra.mxu0 %v5617
      %5743 = vmatprep.subr.bf16.mxu0 0
      %5744 = vmatpush1.bf16.msra.mxu0 %v5620
      %5745 = vmatprep.subr.bf16.mxu0 0
      %5746 = vmatpush1.bf16.msra.mxu0 %v5623
      %5747 = vmatprep.subr.bf16.mxu0 0
      %5748 = vmatpush1.bf16.msra.mxu0 %v5626
      %5749 = vmatprep.subr.bf16.mxu0 0
      %5750 = vmatpush1.bf16.msra.mxu0 %v5629
      %5751 = vmatprep.subr.bf16.mxu0 0
      %5752 = vmatpush1.bf16.msra.mxu0 %v5632
      %5753 = vmatprep.subr.bf16.mxu0 0
      %5754 = vmatpush1.bf16.msra.mxu0 0
      %5755 = vmatprep.subr.bf16.mxu0 0
      %5756 = vmatpush1.bf16.msra.mxu0 0
      %5757 = vmatprep.subr.bf16.mxu0 0
      %5758 = vmatpush1.bf16.msra.mxu0 0
      %5759 = vmatprep.subr.bf16.mxu0 0
      %5760 = vmatpush1.bf16.msra.mxu0 0
      %5761 = vmatprep.subr.bf16.mxu0 0
      %5762 = vmatpush1.bf16.msra.mxu0 0
      %5763 = vmatprep.subr.bf16.mxu0 0
      %5764 = vmatpush1.bf16.msra.mxu0 0
      %5765 = vmatprep.subr.bf16.mxu0 0
      %5766 = vmatpush1.bf16.msra.mxu0 0
      %5767 = vmatprep.mubr.bf16.mxu0 %v5677
      %5768 = vmatmul.mubr.bf16.gmra.mrb[0].mxu0 %v5669
      %v5769 = vpop.f32.mrb[0].mxu0
      %v5770 = vadd.f32 %v5640, %v5769
      %v5771 = vpop.f32.mrb[0].mxu0
      %v5772 = vpop.f32.mrb[0].mxu0
      %v5773 = vadd.f32 %v5645, %v5772
      %v5774 = vpop.f32.mrb[0].mxu0
      %5775 = vmatprep.mubr.bf16.mxu0 %v5680
      %5776 = vmatmul.mubr.bf16.gmra.mrb[0].mxu0 %v5671
      %v5777 = vpop.f32.mrb[0].mxu0
      %v5778 = vadd.f32 %v5650, %v5777
      %v5779 = vpop.f32.mrb[0].mxu0
      %v5780 = vpop.f32.mrb[0].mxu0
      %v5781 = vadd.f32 %v5655, %v5780
      %v5782 = vpop.f32.mrb[0].mxu0
      %5783 = vdwg.mxu0
      %v5784 = vmax.f32 %v5717, 0.0
      %v5785 = vmax.f32 %v5719, 0.0
      %v5786 = vmax.f32 %v5770, 0.0
      %v5787 = vmax.f32 %v5721, 0.0
      %v5788 = vmax.f32 %v5723, 0.0
      %v5789 = vmax.f32 %v5773, 0.0
      %v5790 = vmax.f32 %v5727, 0.0
      %v5791 = vmax.f32 %v5729, 0.0
      %v5792 = vmax.f32 %v5778, 0.0
      %v5793 = vmax.f32 %v5731, 0.0
      %v5794 = vmax.f32 %v5733, 0.0
      %v5795 = vmax.f32 %v5781, 0.0
      %v5796 = vld [vmem:[%s14] sm:$0x7]
      %v5798 = vlaneseq
      %v5799 = vshrl.u32 %v5798, 7
      %v5800 = vsub.s32 0, %v5799
      %v5801 = vrot.slane %v5796, %v5800
      %v5802 = vlaneseq
      %v5803 = vshrl.u32 %v5802, 7
      %v5804 = vsub.s32 1, %v5803
      %v5805 = vrot.slane %v5796, %v5804
      %v5806 = vlaneseq
      %v5807 = vshrl.u32 %v5806, 7
      %v5808 = vsub.s32 2, %v5807
      %v5809 = vrot.slane %v5796, %v5808
      %v5813 = vmul.f32 %v5784, %v5801
      %v5814 = vmul.f32 %v5785, %v5805
      %v5815 = vmul.f32 %v5786, %v5809
      %v5816 = vmul.f32 %v5787, %v5801
      %v5817 = vmul.f32 %v5788, %v5805
      %v5818 = vmul.f32 %v5789, %v5809
      %v5819 = vmul.f32 %v5790, %v5801
      %v5820 = vmul.f32 %v5791, %v5805
      %v5821 = vmul.f32 %v5792, %v5809
      %v5822 = vmul.f32 %v5793, %v5801
      %v5823 = vmul.f32 %v5794, %v5805
      %v5824 = vmul.f32 %v5795, %v5809
      %5825 = vst [vmem:[#allocation2 + $0x8] sm:$0xff] %v5813
      %5826 = vst [vmem:[#allocation2 + $0x10] sm:$0xff] %v5814
      %5827 = vst [vmem:[#allocation2 + $0x18] sm:$0xff] %v5815
      %5828 = vst [vmem:[#allocation2 + $0x68] sm:$0xff] %v5816
      %5829 = vst [vmem:[#allocation2 + $0x70] sm:$0xff] %v5817
      %5830 = vst [vmem:[#allocation2 + $0x78] sm:$0xff] %v5818
      %5831 = vst [vmem:[#allocation2 + $0xc8] sm:$0xff] %v5819
      %5832 = vst [vmem:[#allocation2 + $0xd0] sm:$0xff] %v5820
      %5833 = vst [vmem:[#allocation2 + $0xd8] sm:$0xff] %v5821
      %5834 = vst [vmem:[#allocation2 + $0x128] sm:$0xff] %v5822
      %5835 = vst [vmem:[#allocation2 + $0x130] sm:$0xff] %v5823
      %5836 = vst [vmem:[#allocation2 + $0x138] sm:$0xff] %v5824
      %v5837 = vld [vmem:[#allocation2] sm:$0xff]
      %v5838 = vld [vmem:[#allocation2 + $0x8] sm:$0xff]
      %v5839 = vld [vmem:[#allocation2 + $0x10] sm:$0xff]
      %v5840 = vld [vmem:[#allocation2 + $0x18] sm:$0xff]
      %v5841 = vld [vmem:[#allocation2 + $0x60] sm:$0xff]
      %v5842 = vld [vmem:[#allocation2 + $0x68] sm:$0xff]
      %v5843 = vld [vmem:[#allocation2 + $0x70] sm:$0xff]
      %v5844 = vld [vmem:[#allocation2 + $0x78] sm:$0xff]
      %v5845 = vld [vmem:[#allocation2 + $0xc0] sm:$0xff]
      %v5846 = vld [vmem:[#allocation2 + $0xc8] sm:$0xff]
      %v5847 = vld [vmem:[#allocation2 + $0xd0] sm:$0xff]
      %v5848 = vld [vmem:[#allocation2 + $0xd8] sm:$0xff]
      %v5849 = vld [vmem:[#allocation2 + $0x120] sm:$0xff]
      %v5850 = vld [vmem:[#allocation2 + $0x128] sm:$0xff]
      %v5851 = vld [vmem:[#allocation2 + $0x130] sm:$0xff]
      %v5852 = vld [vmem:[#allocation2 + $0x138] sm:$0xff]
      %5869 = vrot.lane.b32.xlu0 %v5837, 19
      %v5870 = vpop.permute.xlu0 %5869
      %5871 = vrot.lane.b32.xlu0 %v5838, 19
      %v5872 = vpop.permute.xlu0 %5871
      %5873 = vrot.lane.b32.xlu0 %v5839, 19
      %v5874 = vpop.permute.xlu0 %5873
      %5875 = vrot.lane.b32.xlu0 %v5840, 19
      %v5876 = vpop.permute.xlu0 %5875
      %5877 = vrot.lane.b32.xlu0 %v5841, 19
      %v5878 = vpop.permute.xlu0 %5877
      %5879 = vrot.lane.b32.xlu0 %v5842, 19
      %v5880 = vpop.permute.xlu0 %5879
      %5881 = vrot.lane.b32.xlu0 %v5843, 19
      %v5882 = vpop.permute.xlu0 %5881
      %5883 = vrot.lane.b32.xlu0 %v5844, 19
      %v5884 = vpop.permute.xlu0 %5883
      %5885 = vrot.lane.b32.xlu0 %v5845, 19
      %v5886 = vpop.permute.xlu0 %5885
      %5887 = vrot.lane.b32.xlu0 %v5846, 19
      %v5888 = vpop.permute.xlu0 %5887
      %5889 = vrot.lane.b32.xlu0 %v5847, 19
      %v5890 = vpop.permute.xlu0 %5889
      %5891 = vrot.lane.b32.xlu0 %v5848, 19
      %v5892 = vpop.permute.xlu0 %5891
      %5893 = vrot.lane.b32.xlu0 %v5849, 19
      %v5894 = vpop.permute.xlu0 %5893
      %5895 = vrot.lane.b32.xlu0 %v5850, 19
      %v5896 = vpop.permute.xlu0 %5895
      %5897 = vrot.lane.b32.xlu0 %v5851, 19
      %v5898 = vpop.permute.xlu0 %5897
      %5899 = vrot.lane.b32.xlu0 %v5852, 19
      %v5900 = vpop.permute.xlu0 %5899
      %v5901 = vsel %vm5168, %v5870, %v5872
      %v5902 = vsel %vm5168, %v5872, %v5874
      %v5903 = vsel %vm5168, %v5874, %v5876
      %v5904 = vsel %vm5168, %v5878, %v5880
      %v5905 = vsel %vm5168, %v5880, %v5882
      %v5906 = vsel %vm5168, %v5882, %v5884
      %v5907 = vsel %vm5168, %v5886, %v5888
      %v5908 = vsel %vm5168, %v5888, %v5890
      %v5909 = vsel %vm5168, %v5890, %v5892
      %v5910 = vsel %vm5168, %v5894, %v5896
      %v5911 = vsel %vm5168, %v5896, %v5898
      %v5912 = vsel %vm5168, %v5898, %v5900
      %5925 = vst [vmem:[#allocation3] sm:$0xff] %v5901
      %5926 = vst [vmem:[#allocation3 + $0x8] sm:$0xff] %v5902
      %5927 = vst [vmem:[#allocation3 + $0x10] sm:$0xff] %v5903
      %5928 = vst [vmem:[#allocation3 + $0x50] sm:$0xff] %v5904
      %5929 = vst [vmem:[#allocation3 + $0x58] sm:$0xff] %v5905
      %5930 = vst [vmem:[#allocation3 + $0x60] sm:$0xff] %v5906
      %5931 = vst [vmem:[#allocation3 + $0xa0] sm:$0xff] %v5907
      %5932 = vst [vmem:[#allocation3 + $0xa8] sm:$0xff] %v5908
      %5933 = vst [vmem:[#allocation3 + $0xb0] sm:$0xff] %v5909
      %5934 = vst [vmem:[#allocation3 + $0xf0] sm:$0xff] %v5910
      %5935 = vst [vmem:[#allocation3 + $0xf8] sm:$0xff] %v5911
      %5936 = vst [vmem:[#allocation3 + $0x100] sm:$0xff] %v5912
      %v5937 = vld [vmem:[#allocation2] sm:$0xff]
      %v5938 = vld [vmem:[#allocation2 + $0x8] sm:$0xff]
      %v5939 = vld [vmem:[#allocation2 + $0x10] sm:$0xff]
      %v5940 = vld [vmem:[#allocation2 + $0x18] sm:$0xff]
      %v5941 = vld [vmem:[#allocation2 + $0x60] sm:$0xff]
      %v5942 = vld [vmem:[#allocation2 + $0x68] sm:$0xff]
      %v5943 = vld [vmem:[#allocation2 + $0x70] sm:$0xff]
      %v5944 = vld [vmem:[#allocation2 + $0x78] sm:$0xff]
      %v5945 = vld [vmem:[#allocation2 + $0xc0] sm:$0xff]
      %v5946 = vld [vmem:[#allocation2 + $0xc8] sm:$0xff]
      %v5947 = vld [vmem:[#allocation2 + $0xd0] sm:$0xff]
      %v5948 = vld [vmem:[#allocation2 + $0xd8] sm:$0xff]
      %v5949 = vld [vmem:[#allocation2 + $0x120] sm:$0xff]
      %v5950 = vld [vmem:[#allocation2 + $0x128] sm:$0xff]
      %v5951 = vld [vmem:[#allocation2 + $0x130] sm:$0xff]
      %v5952 = vld [vmem:[#allocation2 + $0x138] sm:$0xff]
      %5969 = vrot.lane.b32.xlu0 %v5937, 18
      %v5970 = vpop.permute.xlu0 %5969
      %5971 = vrot.lane.b32.xlu0 %v5938, 18
      %v5972 = vpop.permute.xlu0 %5971
      %5973 = vrot.lane.b32.xlu0 %v5939, 18
      %v5974 = vpop.permute.xlu0 %5973
      %5975 = vrot.lane.b32.xlu0 %v5940, 18
      %v5976 = vpop.permute.xlu0 %5975
      %5977 = vrot.lane.b32.xlu0 %v5941, 18
      %v5978 = vpop.permute.xlu0 %5977
      %5979 = vrot.lane.b32.xlu0 %v5942, 18
      %v5980 = vpop.permute.xlu0 %5979
      %5981 = vrot.lane.b32.xlu0 %v5943, 18
      %v5982 = vpop.permute.xlu0 %5981
      %5983 = vrot.lane.b32.xlu0 %v5944, 18
      %v5984 = vpop.permute.xlu0 %5983
      %5985 = vrot.lane.b32.xlu0 %v5945, 18
      %v5986 = vpop.permute.xlu0 %5985
      %5987 = vrot.lane.b32.xlu0 %v5946, 18
      %v5988 = vpop.permute.xlu0 %5987
      %5989 = vrot.lane.b32.xlu0 %v5947, 18
      %v5990 = vpop.permute.xlu0 %5989
      %5991 = vrot.lane.b32.xlu0 %v5948, 18
      %v5992 = vpop.permute.xlu0 %5991
      %5993 = vrot.lane.b32.xlu0 %v5949, 18
      %v5994 = vpop.permute.xlu0 %5993
      %5995 = vrot.lane.b32.xlu0 %v5950, 18
      %v5996 = vpop.permute.xlu0 %5995
      %5997 = vrot.lane.b32.xlu0 %v5951, 18
      %v5998 = vpop.permute.xlu0 %5997
      %5999 = vrot.lane.b32.xlu0 %v5952, 18
      %v6000 = vpop.permute.xlu0 %5999
      %v6001 = vsel %vm5219, %v5970, %v5972
      %v6002 = vsel %vm5219, %v5972, %v5974
      %v6003 = vsel %vm5219, %v5974, %v5976
      %v6004 = vsel %vm5219, %v5978, %v5980
      %v6005 = vsel %vm5219, %v5980, %v5982
      %v6006 = vsel %vm5219, %v5982, %v5984
      %v6007 = vsel %vm5219, %v5986, %v5988
      %v6008 = vsel %vm5219, %v5988, %v5990
      %v6009 = vsel %vm5219, %v5990, %v5992
      %v6010 = vsel %vm5219, %v5994, %v5996
      %v6011 = vsel %vm5219, %v5996, %v5998
      %v6012 = vsel %vm5219, %v5998, %v6000
      %6025 = vst [vmem:[#allocation3 + $0x140] sm:$0xff] %v6001
      %6026 = vst [vmem:[#allocation3 + $0x148] sm:$0xff] %v6002
      %6027 = vst [vmem:[#allocation3 + $0x150] sm:$0xff] %v6003
      %6028 = vst [vmem:[#allocation3 + $0x190] sm:$0xff] %v6004
      %6029 = vst [vmem:[#allocation3 + $0x198] sm:$0xff] %v6005
      %6030 = vst [vmem:[#allocation3 + $0x1a0] sm:$0xff] %v6006
      %6031 = vst [vmem:[#allocation3 + $0x1e0] sm:$0xff] %v6007
      %6032 = vst [vmem:[#allocation3 + $0x1e8] sm:$0xff] %v6008
      %6033 = vst [vmem:[#allocation3 + $0x1f0] sm:$0xff] %v6009
      %6034 = vst [vmem:[#allocation3 + $0x230] sm:$0xff] %v6010
      %6035 = vst [vmem:[#allocation3 + $0x238] sm:$0xff] %v6011
      %6036 = vst [vmem:[#allocation3 + $0x240] sm:$0xff] %v6012
      %v6037 = vld [vmem:[#allocation2] sm:$0xff]
      %v6038 = vld [vmem:[#allocation2 + $0x8] sm:$0xff]
      %v6039 = vld [vmem:[#allocation2 + $0x10] sm:$0xff]
      %v6040 = vld [vmem:[#allocation2 + $0x18] sm:$0xff]
      %v6041 = vld [vmem:[#allocation2 + $0x60] sm:$0xff]
      %v6042 = vld [vmem:[#allocation2 + $0x68] sm:$0xff]
      %v6043 = vld [vmem:[#allocation2 + $0x70] sm:$0xff]
      %v6044 = vld [vmem:[#allocation2 + $0x78] sm:$0xff]
      %v6045 = vld [vmem:[#allocation2 + $0xc0] sm:$0xff]
      %v6046 = vld [vmem:[#allocation2 + $0xc8] sm:$0xff]
      %v6047 = vld [vmem:[#allocation2 + $0xd0] sm:$0xff]
      %v6048 = vld [vmem:[#allocation2 + $0xd8] sm:$0xff]
      %v6049 = vld [vmem:[#allocation2 + $0x120] sm:$0xff]
      %v6050 = vld [vmem:[#allocation2 + $0x128] sm:$0xff]
      %v6051 = vld [vmem:[#allocation2 + $0x130] sm:$0xff]
      %v6052 = vld [vmem:[#allocation2 + $0x138] sm:$0xff]
      %6069 = vrot.lane.b32.xlu0 %v6037, 17
      %v6070 = vpop.permute.xlu0 %6069
      %6071 = vrot.lane.b32.xlu0 %v6038, 17
      %v6072 = vpop.permute.xlu0 %6071
      %6073 = vrot.lane.b32.xlu0 %v6039, 17
      %v6074 = vpop.permute.xlu0 %6073
      %6075 = vrot.lane.b32.xlu0 %v6040, 17
      %v6076 = vpop.permute.xlu0 %6075
      %6077 = vrot.lane.b32.xlu0 %v6041, 17
      %v6078 = vpop.permute.xlu0 %6077
      %6079 = vrot.lane.b32.xlu0 %v6042, 17
      %v6080 = vpop.permute.xlu0 %6079
      %6081 = vrot.lane.b32.xlu0 %v6043, 17
      %v6082 = vpop.permute.xlu0 %6081
      %6083 = vrot.lane.b32.xlu0 %v6044, 17
      %v6084 = vpop.permute.xlu0 %6083
      %6085 = vrot.lane.b32.xlu0 %v6045, 17
      %v6086 = vpop.permute.xlu0 %6085
      %6087 = vrot.lane.b32.xlu0 %v6046, 17
      %v6088 = vpop.permute.xlu0 %6087
      %6089 = vrot.lane.b32.xlu0 %v6047, 17
      %v6090 = vpop.permute.xlu0 %6089
      %6091 = vrot.lane.b32.xlu0 %v6048, 17
      %v6092 = vpop.permute.xlu0 %6091
      %6093 = vrot.lane.b32.xlu0 %v6049, 17
      %v6094 = vpop.permute.xlu0 %6093
      %6095 = vrot.lane.b32.xlu0 %v6050, 17
      %v6096 = vpop.permute.xlu0 %6095
      %6097 = vrot.lane.b32.xlu0 %v6051, 17
      %v6098 = vpop.permute.xlu0 %6097
      %6099 = vrot.lane.b32.xlu0 %v6052, 17
      %v6100 = vpop.permute.xlu0 %6099
      %v6101 = vsel %vm5270, %v6070, %v6072
      %v6102 = vsel %vm5270, %v6072, %v6074
      %v6103 = vsel %vm5270, %v6074, %v6076
      %v6104 = vsel %vm5270, %v6078, %v6080
      %v6105 = vsel %vm5270, %v6080, %v6082
      %v6106 = vsel %vm5270, %v6082, %v6084
      %v6107 = vsel %vm5270, %v6086, %v6088
      %v6108 = vsel %vm5270, %v6088, %v6090
      %v6109 = vsel %vm5270, %v6090, %v6092
      %v6110 = vsel %vm5270, %v6094, %v6096
      %v6111 = vsel %vm5270, %v6096, %v6098
      %v6112 = vsel %vm5270, %v6098, %v6100
      %6125 = vst [vmem:[#allocation3 + $0x280] sm:$0xff] %v6101
      %6126 = vst [vmem:[#allocation3 + $0x288] sm:$0xff] %v6102
      %6127 = vst [vmem:[#allocation3 + $0x290] sm:$0xff] %v6103
      %6128 = vst [vmem:[#allocation3 + $0x2d0] sm:$0xff] %v6104
      %6129 = vst [vmem:[#allocation3 + $0x2d8] sm:$0xff] %v6105
      %6130 = vst [vmem:[#allocation3 + $0x2e0] sm:$0xff] %v6106
      %6131 = vst [vmem:[#allocation3 + $0x320] sm:$0xff] %v6107
      %6132 = vst [vmem:[#allocation3 + $0x328] sm:$0xff] %v6108
      %6133 = vst [vmem:[#allocation3 + $0x330] sm:$0xff] %v6109
      %6134 = vst [vmem:[#allocation3 + $0x370] sm:$0xff] %v6110
      %6135 = vst [vmem:[#allocation3 + $0x378] sm:$0xff] %v6111
      %6136 = vst [vmem:[#allocation3 + $0x380] sm:$0xff] %v6112
      %v6137 = vld [vmem:[#allocation2] sm:$0xff]
      %v6138 = vld [vmem:[#allocation2 + $0x8] sm:$0xff]
      %v6139 = vld [vmem:[#allocation2 + $0x10] sm:$0xff]
      %v6140 = vld [vmem:[#allocation2 + $0x18] sm:$0xff]
      %v6141 = vld [vmem:[#allocation2 + $0x60] sm:$0xff]
      %v6142 = vld [vmem:[#allocation2 + $0x68] sm:$0xff]
      %v6143 = vld [vmem:[#allocation2 + $0x70] sm:$0xff]
      %v6144 = vld [vmem:[#allocation2 + $0x78] sm:$0xff]
      %v6145 = vld [vmem:[#allocation2 + $0xc0] sm:$0xff]
      %v6146 = vld [vmem:[#allocation2 + $0xc8] sm:$0xff]
      %v6147 = vld [vmem:[#allocation2 + $0xd0] sm:$0xff]
      %v6148 = vld [vmem:[#allocation2 + $0xd8] sm:$0xff]
      %v6149 = vld [vmem:[#allocation2 + $0x120] sm:$0xff]
      %v6150 = vld [vmem:[#allocation2 + $0x128] sm:$0xff]
      %v6151 = vld [vmem:[#allocation2 + $0x130] sm:$0xff]
      %v6152 = vld [vmem:[#allocation2 + $0x138] sm:$0xff]
      %6169 = vrot.lane.b32.xlu0 %v6137, 1
      %v6170 = vpop.permute.xlu0 %6169
      %6171 = vrot.lane.b32.xlu0 %v6138, 1
      %v6172 = vpop.permute.xlu0 %6171
      %6173 = vrot.lane.b32.xlu0 %v6139, 1
      %v6174 = vpop.permute.xlu0 %6173
      %6175 = vrot.lane.b32.xlu0 %v6140, 1
      %v6176 = vpop.permute.xlu0 %6175
      %6177 = vrot.lane.b32.xlu0 %v6141, 1
      %v6178 = vpop.permute.xlu0 %6177
      %6179 = vrot.lane.b32.xlu0 %v6142, 1
      %v6180 = vpop.permute.xlu0 %6179
      %6181 = vrot.lane.b32.xlu0 %v6143, 1
      %v6182 = vpop.permute.xlu0 %6181
      %6183 = vrot.lane.b32.xlu0 %v6144, 1
      %v6184 = vpop.permute.xlu0 %6183
      %6185 = vrot.lane.b32.xlu0 %v6145, 1
      %v6186 = vpop.permute.xlu0 %6185
      %6187 = vrot.lane.b32.xlu0 %v6146, 1
      %v6188 = vpop.permute.xlu0 %6187
      %6189 = vrot.lane.b32.xlu0 %v6147, 1
      %v6190 = vpop.permute.xlu0 %6189
      %6191 = vrot.lane.b32.xlu0 %v6148, 1
      %v6192 = vpop.permute.xlu0 %6191
      %6193 = vrot.lane.b32.xlu0 %v6149, 1
      %v6194 = vpop.permute.xlu0 %6193
      %6195 = vrot.lane.b32.xlu0 %v6150, 1
      %v6196 = vpop.permute.xlu0 %6195
      %6197 = vrot.lane.b32.xlu0 %v6151, 1
      %v6198 = vpop.permute.xlu0 %6197
      %6199 = vrot.lane.b32.xlu0 %v6152, 1
      %v6200 = vpop.permute.xlu0 %6199
      %v6201 = vsel %vm941, %v6170, %v6172
      %v6202 = vsel %vm941, %v6172, %v6174
      %v6203 = vsel %vm941, %v6174, %v6176
      %v6204 = vsel %vm941, %v6178, %v6180
      %v6205 = vsel %vm941, %v6180, %v6182
      %v6206 = vsel %vm941, %v6182, %v6184
      %v6207 = vsel %vm941, %v6186, %v6188
      %v6208 = vsel %vm941, %v6188, %v6190
      %v6209 = vsel %vm941, %v6190, %v6192
      %v6210 = vsel %vm941, %v6194, %v6196
      %v6211 = vsel %vm941, %v6196, %v6198
      %v6212 = vsel %vm941, %v6198, %v6200
      %6225 = vst [vmem:[#allocation3 + $0x3c0] sm:$0xff] %v6201
      %6226 = vst [vmem:[#allocation3 + $0x3c8] sm:$0xff] %v6202
      %6227 = vst [vmem:[#allocation3 + $0x3d0] sm:$0xff] %v6203
      %6228 = vst [vmem:[#allocation3 + $0x410] sm:$0xff] %v6204
      %6229 = vst [vmem:[#allocation3 + $0x418] sm:$0xff] %v6205
      %6230 = vst [vmem:[#allocation3 + $0x420] sm:$0xff] %v6206
      %6231 = vst [vmem:[#allocation3 + $0x460] sm:$0xff] %v6207
      %6232 = vst [vmem:[#allocation3 + $0x468] sm:$0xff] %v6208
      %6233 = vst [vmem:[#allocation3 + $0x470] sm:$0xff] %v6209
      %6234 = vst [vmem:[#allocation3 + $0x4b0] sm:$0xff] %v6210
      %6235 = vst [vmem:[#allocation3 + $0x4b8] sm:$0xff] %v6211
      %6236 = vst [vmem:[#allocation3 + $0x4c0] sm:$0xff] %v6212
      %6237 = vst [vmem:[#allocation3 + $0x500] sm:$0xff] %v5813
      %6238 = vst [vmem:[#allocation3 + $0x508] sm:$0xff] %v5814
      %6239 = vst [vmem:[#allocation3 + $0x510] sm:$0xff] %v5815
      %6240 = vst [vmem:[#allocation3 + $0x550] sm:$0xff] %v5816
      %6241 = vst [vmem:[#allocation3 + $0x558] sm:$0xff] %v5817
      %6242 = vst [vmem:[#allocation3 + $0x560] sm:$0xff] %v5818
      %6243 = vst [vmem:[#allocation3 + $0x5a0] sm:$0xff] %v5819
      %6244 = vst [vmem:[#allocation3 + $0x5a8] sm:$0xff] %v5820
      %6245 = vst [vmem:[#allocation3 + $0x5b0] sm:$0xff] %v5821
      %6246 = vst [vmem:[#allocation3 + $0x5f0] sm:$0xff] %v5822
      %6247 = vst [vmem:[#allocation3 + $0x5f8] sm:$0xff] %v5823
      %6248 = vst [vmem:[#allocation3 + $0x600] sm:$0xff] %v5824
      %v6249 = vld [vmem:[#allocation2 + $0x8] sm:$0xff]
      %v6250 = vld [vmem:[#allocation2 + $0x10] sm:$0xff]
      %v6251 = vld [vmem:[#allocation2 + $0x18] sm:$0xff]
      %v6252 = vld [vmem:[#allocation2 + $0x20] sm:$0xff]
      %v6253 = vld [vmem:[#allocation2 + $0x68] sm:$0xff]
      %v6254 = vld [vmem:[#allocation2 + $0x70] sm:$0xff]
      %v6255 = vld [vmem:[#allocation2 + $0x78] sm:$0xff]
      %v6256 = vld [vmem:[#allocation2 + $0x80] sm:$0xff]
      %v6257 = vld [vmem:[#allocation2 + $0xc8] sm:$0xff]
      %v6258 = vld [vmem:[#allocation2 + $0xd0] sm:$0xff]
      %v6259 = vld [vmem:[#allocation2 + $0xd8] sm:$0xff]
      %v6260 = vld [vmem:[#allocation2 + $0xe0] sm:$0xff]
      %v6261 = vld [vmem:[#allocation2 + $0x128] sm:$0xff]
      %v6262 = vld [vmem:[#allocation2 + $0x130] sm:$0xff]
      %v6263 = vld [vmem:[#allocation2 + $0x138] sm:$0xff]
      %v6264 = vld [vmem:[#allocation2 + $0x140] sm:$0xff]
      %6281 = vrot.lane.b32.xlu0 %v6249, 127
      %v6282 = vpop.permute.xlu0 %6281
      %6283 = vrot.lane.b32.xlu0 %v6250, 127
      %v6284 = vpop.permute.xlu0 %6283
      %6285 = vrot.lane.b32.xlu0 %v6251, 127
      %v6286 = vpop.permute.xlu0 %6285
      %6287 = vrot.lane.b32.xlu0 %v6252, 127
      %v6288 = vpop.permute.xlu0 %6287
      %6289 = vrot.lane.b32.xlu0 %v6253, 127
      %v6290 = vpop.permute.xlu0 %6289
      %6291 = vrot.lane.b32.xlu0 %v6254, 127
      %v6292 = vpop.permute.xlu0 %6291
      %6293 = vrot.lane.b32.xlu0 %v6255, 127
      %v6294 = vpop.permute.xlu0 %6293
      %6295 = vrot.lane.b32.xlu0 %v6256, 127
      %v6296 = vpop.permute.xlu0 %6295
      %6297 = vrot.lane.b32.xlu0 %v6257, 127
      %v6298 = vpop.permute.xlu0 %6297
      %6299 = vrot.lane.b32.xlu0 %v6258, 127
      %v6300 = vpop.permute.xlu0 %6299
      %6301 = vrot.lane.b32.xlu0 %v6259, 127
      %v6302 = vpop.permute.xlu0 %6301
      %6303 = vrot.lane.b32.xlu0 %v6260, 127
      %v6304 = vpop.permute.xlu0 %6303
      %6305 = vrot.lane.b32.xlu0 %v6261, 127
      %v6306 = vpop.permute.xlu0 %6305
      %6307 = vrot.lane.b32.xlu0 %v6262, 127
      %v6308 = vpop.permute.xlu0 %6307
      %6309 = vrot.lane.b32.xlu0 %v6263, 127
      %v6310 = vpop.permute.xlu0 %6309
      %6311 = vrot.lane.b32.xlu0 %v6264, 127
      %v6312 = vpop.permute.xlu0 %6311
      %v6313 = vsel %vm1026, %v6282, %v6284
      %v6314 = vsel %vm1026, %v6284, %v6286
      %v6315 = vsel %vm1026, %v6286, %v6288
      %v6316 = vsel %vm1026, %v6290, %v6292
      %v6317 = vsel %vm1026, %v6292, %v6294
      %v6318 = vsel %vm1026, %v6294, %v6296
      %v6319 = vsel %vm1026, %v6298, %v6300
      %v6320 = vsel %vm1026, %v6300, %v6302
      %v6321 = vsel %vm1026, %v6302, %v6304
      %v6322 = vsel %vm1026, %v6306, %v6308
      %v6323 = vsel %vm1026, %v6308, %v6310
      %v6324 = vsel %vm1026, %v6310, %v6312
      %6337 = vst [vmem:[#allocation3 + $0x640] sm:$0xff] %v6313
      %6338 = vst [vmem:[#allocation3 + $0x648] sm:$0xff] %v6314
      %6339 = vst [vmem:[#allocation3 + $0x650] sm:$0xff] %v6315
      %6340 = vst [vmem:[#allocation3 + $0x690] sm:$0xff] %v6316
      %6341 = vst [vmem:[#allocation3 + $0x698] sm:$0xff] %v6317
      %6342 = vst [vmem:[#allocation3 + $0x6a0] sm:$0xff] %v6318
      %6343 = vst [vmem:[#allocation3 + $0x6e0] sm:$0xff] %v6319
      %6344 = vst [vmem:[#allocation3 + $0x6e8] sm:$0xff] %v6320
      %6345 = vst [vmem:[#allocation3 + $0x6f0] sm:$0xff] %v6321
      %6346 = vst [vmem:[#allocation3 + $0x730] sm:$0xff] %v6322
      %6347 = vst [vmem:[#allocation3 + $0x738] sm:$0xff] %v6323
      %6348 = vst [vmem:[#allocation3 + $0x740] sm:$0xff] %v6324
      %v6349 = vld [vmem:[#allocation2 + $0x8] sm:$0xff]
      %v6350 = vld [vmem:[#allocation2 + $0x10] sm:$0xff]
      %v6351 = vld [vmem:[#allocation2 + $0x18] sm:$0xff]
      %v6352 = vld [vmem:[#allocation2 + $0x20] sm:$0xff]
      %v6353 = vld [vmem:[#allocation2 + $0x68] sm:$0xff]
      %v6354 = vld [vmem:[#allocation2 + $0x70] sm:$0xff]
      %v6355 = vld [vmem:[#allocation2 + $0x78] sm:$0xff]
      %v6356 = vld [vmem:[#allocation2 + $0x80] sm:$0xff]
      %v6357 = vld [vmem:[#allocation2 + $0xc8] sm:$0xff]
      %v6358 = vld [vmem:[#allocation2 + $0xd0] sm:$0xff]
      %v6359 = vld [vmem:[#allocation2 + $0xd8] sm:$0xff]
      %v6360 = vld [vmem:[#allocation2 + $0xe0] sm:$0xff]
      %v6361 = vld [vmem:[#allocation2 + $0x128] sm:$0xff]
      %v6362 = vld [vmem:[#allocation2 + $0x130] sm:$0xff]
      %v6363 = vld [vmem:[#allocation2 + $0x138] sm:$0xff]
      %v6364 = vld [vmem:[#allocation2 + $0x140] sm:$0xff]
      %6381 = vrot.lane.b32.xlu0 %v6349, 111
      %v6382 = vpop.permute.xlu0 %6381
      %6383 = vrot.lane.b32.xlu0 %v6350, 111
      %v6384 = vpop.permute.xlu0 %6383
      %6385 = vrot.lane.b32.xlu0 %v6351, 111
      %v6386 = vpop.permute.xlu0 %6385
      %6387 = vrot.lane.b32.xlu0 %v6352, 111
      %v6388 = vpop.permute.xlu0 %6387
      %6389 = vrot.lane.b32.xlu0 %v6353, 111
      %v6390 = vpop.permute.xlu0 %6389
      %6391 = vrot.lane.b32.xlu0 %v6354, 111
      %v6392 = vpop.permute.xlu0 %6391
      %6393 = vrot.lane.b32.xlu0 %v6355, 111
      %v6394 = vpop.permute.xlu0 %6393
      %6395 = vrot.lane.b32.xlu0 %v6356, 111
      %v6396 = vpop.permute.xlu0 %6395
      %6397 = vrot.lane.b32.xlu0 %v6357, 111
      %v6398 = vpop.permute.xlu0 %6397
      %6399 = vrot.lane.b32.xlu0 %v6358, 111
      %v6400 = vpop.permute.xlu0 %6399
      %6401 = vrot.lane.b32.xlu0 %v6359, 111
      %v6402 = vpop.permute.xlu0 %6401
      %6403 = vrot.lane.b32.xlu0 %v6360, 111
      %v6404 = vpop.permute.xlu0 %6403
      %6405 = vrot.lane.b32.xlu0 %v6361, 111
      %v6406 = vpop.permute.xlu0 %6405
      %6407 = vrot.lane.b32.xlu0 %v6362, 111
      %v6408 = vpop.permute.xlu0 %6407
      %6409 = vrot.lane.b32.xlu0 %v6363, 111
      %v6410 = vpop.permute.xlu0 %6409
      %6411 = vrot.lane.b32.xlu0 %v6364, 111
      %v6412 = vpop.permute.xlu0 %6411
      %v6413 = vsel %vm5427, %v6382, %v6384
      %v6414 = vsel %vm5427, %v6384, %v6386
      %v6415 = vsel %vm5427, %v6386, %v6388
      %v6416 = vsel %vm5427, %v6390, %v6392
      %v6417 = vsel %vm5427, %v6392, %v6394
      %v6418 = vsel %vm5427, %v6394, %v6396
      %v6419 = vsel %vm5427, %v6398, %v6400
      %v6420 = vsel %vm5427, %v6400, %v6402
      %v6421 = vsel %vm5427, %v6402, %v6404
      %v6422 = vsel %vm5427, %v6406, %v6408
      %v6423 = vsel %vm5427, %v6408, %v6410
      %v6424 = vsel %vm5427, %v6410, %v6412
      %6437 = vst [vmem:[#allocation3 + $0x780] sm:$0xff] %v6413
      %6438 = vst [vmem:[#allocation3 + $0x788] sm:$0xff] %v6414
      %6439 = vst [vmem:[#allocation3 + $0x790] sm:$0xff] %v6415
      %6440 = vst [vmem:[#allocation3 + $0x7d0] sm:$0xff] %v6416
      %6441 = vst [vmem:[#allocation3 + $0x7d8] sm:$0xff] %v6417
      %6442 = vst [vmem:[#allocation3 + $0x7e0] sm:$0xff] %v6418
      %6443 = vst [vmem:[#allocation3 + $0x820] sm:$0xff] %v6419
      %6444 = vst [vmem:[#allocation3 + $0x828] sm:$0xff] %v6420
      %6445 = vst [vmem:[#allocation3 + $0x830] sm:$0xff] %v6421
      %6446 = vst [vmem:[#allocation3 + $0x870] sm:$0xff] %v6422
      %6447 = vst [vmem:[#allocation3 + $0x878] sm:$0xff] %v6423
      %6448 = vst [vmem:[#allocation3 + $0x880] sm:$0xff] %v6424
      %v6449 = vld [vmem:[#allocation2 + $0x8] sm:$0xff]
      %v6450 = vld [vmem:[#allocation2 + $0x10] sm:$0xff]
      %v6451 = vld [vmem:[#allocation2 + $0x18] sm:$0xff]
      %v6452 = vld [vmem:[#allocation2 + $0x20] sm:$0xff]
      %v6453 = vld [vmem:[#allocation2 + $0x68] sm:$0xff]
      %v6454 = vld [vmem:[#allocation2 + $0x70] sm:$0xff]
      %v6455 = vld [vmem:[#allocation2 + $0x78] sm:$0xff]
      %v6456 = vld [vmem:[#allocation2 + $0x80] sm:$0xff]
      %v6457 = vld [vmem:[#allocation2 + $0xc8] sm:$0xff]
      %v6458 = vld [vmem:[#allocation2 + $0xd0] sm:$0xff]
      %v6459 = vld [vmem:[#allocation2 + $0xd8] sm:$0xff]
      %v6460 = vld [vmem:[#allocation2 + $0xe0] sm:$0xff]
      %v6461 = vld [vmem:[#allocation2 + $0x128] sm:$0xff]
      %v6462 = vld [vmem:[#allocation2 + $0x130] sm:$0xff]
      %v6463 = vld [vmem:[#allocation2 + $0x138] sm:$0xff]
      %v6464 = vld [vmem:[#allocation2 + $0x140] sm:$0xff]
      %6481 = vrot.lane.b32.xlu0 %v6449, 110
      %v6482 = vpop.permute.xlu0 %6481
      %6483 = vrot.lane.b32.xlu0 %v6450, 110
      %v6484 = vpop.permute.xlu0 %6483
      %6485 = vrot.lane.b32.xlu0 %v6451, 110
      %v6486 = vpop.permute.xlu0 %6485
      %6487 = vrot.lane.b32.xlu0 %v6452, 110
      %v6488 = vpop.permute.xlu0 %6487
      %6489 = vrot.lane.b32.xlu0 %v6453, 110
      %v6490 = vpop.permute.xlu0 %6489
      %6491 = vrot.lane.b32.xlu0 %v6454, 110
      %v6492 = vpop.permute.xlu0 %6491
      %6493 = vrot.lane.b32.xlu0 %v6455, 110
      %v6494 = vpop.permute.xlu0 %6493
      %6495 = vrot.lane.b32.xlu0 %v6456, 110
      %v6496 = vpop.permute.xlu0 %6495
      %6497 = vrot.lane.b32.xlu0 %v6457, 110
      %v6498 = vpop.permute.xlu0 %6497
      %6499 = vrot.lane.b32.xlu0 %v6458, 110
      %v6500 = vpop.permute.xlu0 %6499
      %6501 = vrot.lane.b32.xlu0 %v6459, 110
      %v6502 = vpop.permute.xlu0 %6501
      %6503 = vrot.lane.b32.xlu0 %v6460, 110
      %v6504 = vpop.permute.xlu0 %6503
      %6505 = vrot.lane.b32.xlu0 %v6461, 110
      %v6506 = vpop.permute.xlu0 %6505
      %6507 = vrot.lane.b32.xlu0 %v6462, 110
      %v6508 = vpop.permute.xlu0 %6507
      %6509 = vrot.lane.b32.xlu0 %v6463, 110
      %v6510 = vpop.permute.xlu0 %6509
      %6511 = vrot.lane.b32.xlu0 %v6464, 110
      %v6512 = vpop.permute.xlu0 %6511
      %v6513 = vsel %vm5478, %v6482, %v6484
      %v6514 = vsel %vm5478, %v6484, %v6486
      %v6515 = vsel %vm5478, %v6486, %v6488
      %v6516 = vsel %vm5478, %v6490, %v6492
      %v6517 = vsel %vm5478, %v6492, %v6494
      %v6518 = vsel %vm5478, %v6494, %v6496
      %v6519 = vsel %vm5478, %v6498, %v6500
      %v6520 = vsel %vm5478, %v6500, %v6502
      %v6521 = vsel %vm5478, %v6502, %v6504
      %v6522 = vsel %vm5478, %v6506, %v6508
      %v6523 = vsel %vm5478, %v6508, %v6510
      %v6524 = vsel %vm5478, %v6510, %v6512
      %6537 = vst [vmem:[#allocation3 + $0x8c0] sm:$0xff] %v6513
      %6538 = vst [vmem:[#allocation3 + $0x8c8] sm:$0xff] %v6514
      %6539 = vst [vmem:[#allocation3 + $0x8d0] sm:$0xff] %v6515
      %6540 = vst [vmem:[#allocation3 + $0x910] sm:$0xff] %v6516
      %6541 = vst [vmem:[#allocation3 + $0x918] sm:$0xff] %v6517
      %6542 = vst [vmem:[#allocation3 + $0x920] sm:$0xff] %v6518
      %6543 = vst [vmem:[#allocation3 + $0x960] sm:$0xff] %v6519
      %6544 = vst [vmem:[#allocation3 + $0x968] sm:$0xff] %v6520
      %6545 = vst [vmem:[#allocation3 + $0x970] sm:$0xff] %v6521
      %6546 = vst [vmem:[#allocation3 + $0x9b0] sm:$0xff] %v6522
      %6547 = vst [vmem:[#allocation3 + $0x9b8] sm:$0xff] %v6523
      %6548 = vst [vmem:[#allocation3 + $0x9c0] sm:$0xff] %v6524
      %v6549 = vld [vmem:[#allocation2 + $0x8] sm:$0xff]
      %v6550 = vld [vmem:[#allocation2 + $0x10] sm:$0xff]
      %v6551 = vld [vmem:[#allocation2 + $0x18] sm:$0xff]
      %v6552 = vld [vmem:[#allocation2 + $0x20] sm:$0xff]
      %v6553 = vld [vmem:[#allocation2 + $0x68] sm:$0xff]
      %v6554 = vld [vmem:[#allocation2 + $0x70] sm:$0xff]
      %v6555 = vld [vmem:[#allocation2 + $0x78] sm:$0xff]
      %v6556 = vld [vmem:[#allocation2 + $0x80] sm:$0xff]
      %v6557 = vld [vmem:[#allocation2 + $0xc8] sm:$0xff]
      %v6558 = vld [vmem:[#allocation2 + $0xd0] sm:$0xff]
      %v6559 = vld [vmem:[#allocation2 + $0xd8] sm:$0xff]
      %v6560 = vld [vmem:[#allocation2 + $0xe0] sm:$0xff]
      %v6561 = vld [vmem:[#allocation2 + $0x128] sm:$0xff]
      %v6562 = vld [vmem:[#allocation2 + $0x130] sm:$0xff]
      %v6563 = vld [vmem:[#allocation2 + $0x138] sm:$0xff]
      %v6564 = vld [vmem:[#allocation2 + $0x140] sm:$0xff]
      %6581 = vrot.lane.b32.xlu0 %v6549, 109
      %v6582 = vpop.permute.xlu0 %6581
      %6583 = vrot.lane.b32.xlu0 %v6550, 109
      %v6584 = vpop.permute.xlu0 %6583
      %6585 = vrot.lane.b32.xlu0 %v6551, 109
      %v6586 = vpop.permute.xlu0 %6585
      %6587 = vrot.lane.b32.xlu0 %v6552, 109
      %v6588 = vpop.permute.xlu0 %6587
      %6589 = vrot.lane.b32.xlu0 %v6553, 109
      %v6590 = vpop.permute.xlu0 %6589
      %6591 = vrot.lane.b32.xlu0 %v6554, 109
      %v6592 = vpop.permute.xlu0 %6591
      %6593 = vrot.lane.b32.xlu0 %v6555, 109
      %v6594 = vpop.permute.xlu0 %6593
      %6595 = vrot.lane.b32.xlu0 %v6556, 109
      %v6596 = vpop.permute.xlu0 %6595
      %6597 = vrot.lane.b32.xlu0 %v6557, 109
      %v6598 = vpop.permute.xlu0 %6597
      %6599 = vrot.lane.b32.xlu0 %v6558, 109
      %v6600 = vpop.permute.xlu0 %6599
      %6601 = vrot.lane.b32.xlu0 %v6559, 109
      %v6602 = vpop.permute.xlu0 %6601
      %6603 = vrot.lane.b32.xlu0 %v6560, 109
      %v6604 = vpop.permute.xlu0 %6603
      %6605 = vrot.lane.b32.xlu0 %v6561, 109
      %v6606 = vpop.permute.xlu0 %6605
      %6607 = vrot.lane.b32.xlu0 %v6562, 109
      %v6608 = vpop.permute.xlu0 %6607
      %6609 = vrot.lane.b32.xlu0 %v6563, 109
      %v6610 = vpop.permute.xlu0 %6609
      %6611 = vrot.lane.b32.xlu0 %v6564, 109
      %v6612 = vpop.permute.xlu0 %6611
      %v6613 = vsel %vm5529, %v6582, %v6584
      %v6614 = vsel %vm5529, %v6584, %v6586
      %v6615 = vsel %vm5529, %v6586, %v6588
      %v6616 = vsel %vm5529, %v6590, %v6592
      %v6617 = vsel %vm5529, %v6592, %v6594
      %v6618 = vsel %vm5529, %v6594, %v6596
      %v6619 = vsel %vm5529, %v6598, %v6600
      %v6620 = vsel %vm5529, %v6600, %v6602
      %v6621 = vsel %vm5529, %v6602, %v6604
      %v6622 = vsel %vm5529, %v6606, %v6608
      %v6623 = vsel %vm5529, %v6608, %v6610
      %v6624 = vsel %vm5529, %v6610, %v6612
      %6637 = vst [vmem:[#allocation3 + $0xa00] sm:$0xff] %v6613
      %6638 = vst [vmem:[#allocation3 + $0xa08] sm:$0xff] %v6614
      %6639 = vst [vmem:[#allocation3 + $0xa10] sm:$0xff] %v6615
      %6640 = vst [vmem:[#allocation3 + $0xa50] sm:$0xff] %v6616
      %6641 = vst [vmem:[#allocation3 + $0xa58] sm:$0xff] %v6617
      %6642 = vst [vmem:[#allocation3 + $0xa60] sm:$0xff] %v6618
      %6643 = vst [vmem:[#allocation3 + $0xaa0] sm:$0xff] %v6619
      %6644 = vst [vmem:[#allocation3 + $0xaa8] sm:$0xff] %v6620
      %6645 = vst [vmem:[#allocation3 + $0xab0] sm:$0xff] %v6621
      %6646 = vst [vmem:[#allocation3 + $0xaf0] sm:$0xff] %v6622
      %6647 = vst [vmem:[#allocation3 + $0xaf8] sm:$0xff] %v6623
      %6648 = vst [vmem:[#allocation3 + $0xb00] sm:$0xff] %v6624
      %v6649 = vld [vmem:[%s7] sm:$0xff]
      %v6650 = vld [vmem:[%s7 + $0x8] sm:$0xf]
      %v6651 = vld [vmem:[%s7 + $0xc] sm:$0xff]
      %v6652 = vld [vmem:[%s7 + $0x14] sm:$0xf]
      %v6653 = vld [vmem:[%s7 + $0x18] sm:$0xff]
      %v6654 = vld [vmem:[%s7 + $0x20] sm:$0xf]
      %v6655 = vld [vmem:[%s7 + $0x24] sm:$0xff]
      %v6656 = vld [vmem:[%s7 + $0x2c] sm:$0xf]
      %v6657 = vld [vmem:[#allocation3] sm:$0xff]
      %v6658 = vld [vmem:[#allocation3 + $0x8] sm:$0xff]
      %v6659 = vld [vmem:[#allocation3 + $0x10] sm:$0xff]
      %v6660 = vld [vmem:[#allocation3 + $0x50] sm:$0xff]
      %v6661 = vld [vmem:[#allocation3 + $0x58] sm:$0xff]
      %v6662 = vld [vmem:[#allocation3 + $0x60] sm:$0xff]
      %v6663 = vld [vmem:[#allocation3 + $0xa0] sm:$0xff]
      %v6664 = vld [vmem:[#allocation3 + $0xa8] sm:$0xff]
      %v6665 = vld [vmem:[#allocation3 + $0xb0] sm:$0xff]
      %v6666 = vld [vmem:[#allocation3 + $0xf0] sm:$0xff]
      %v6667 = vld [vmem:[#allocation3 + $0xf8] sm:$0xff]
      %v6668 = vld [vmem:[#allocation3 + $0x100] sm:$0xff]
      %v6669 = vld [vmem:[#allocation3 + $0x140] sm:$0xff]
      %v6670 = vld [vmem:[#allocation3 + $0x148] sm:$0xff]
      %v6671 = vld [vmem:[#allocation3 + $0x150] sm:$0xff]
      %v6672 = vld [vmem:[#allocation3 + $0x190] sm:$0xff]
      %v6673 = vld [vmem:[#allocation3 + $0x198] sm:$0xff]
      %v6674 = vld [vmem:[#allocation3 + $0x1a0] sm:$0xff]
      %v6675 = vld [vmem:[#allocation3 + $0x1e0] sm:$0xff]
      %v6676 = vld [vmem:[#allocation3 + $0x1e8] sm:$0xff]
      %v6677 = vld [vmem:[#allocation3 + $0x1f0] sm:$0xff]
      %v6678 = vld [vmem:[#allocation3 + $0x230] sm:$0xff]
      %v6679 = vld [vmem:[#allocation3 + $0x238] sm:$0xff]
      %v6680 = vld [vmem:[#allocation3 + $0x240] sm:$0xff]
      %v6681 = vld [vmem:[#allocation3 + $0x280] sm:$0xff]
      %v6682 = vld [vmem:[#allocation3 + $0x288] sm:$0xff]
      %v6683 = vld [vmem:[#allocation3 + $0x290] sm:$0xff]
      %v6684 = vld [vmem:[#allocation3 + $0x2d0] sm:$0xff]
      %v6685 = vld [vmem:[#allocation3 + $0x2d8] sm:$0xff]
      %v6686 = vld [vmem:[#allocation3 + $0x2e0] sm:$0xff]
      %v6687 = vld [vmem:[#allocation3 + $0x320] sm:$0xff]
      %v6688 = vld [vmem:[#allocation3 + $0x328] sm:$0xff]
      %v6689 = vld [vmem:[#allocation3 + $0x330] sm:$0xff]
      %v6690 = vld [vmem:[#allocation3 + $0x370] sm:$0xff]
      %v6691 = vld [vmem:[#allocation3 + $0x378] sm:$0xff]
      %v6692 = vld [vmem:[#allocation3 + $0x380] sm:$0xff]
      %v6693 = vld [vmem:[#allocation3 + $0x3c0] sm:$0xff]
      %v6694 = vld [vmem:[#allocation3 + $0x3c8] sm:$0xff]
      %v6695 = vld [vmem:[#allocation3 + $0x3d0] sm:$0xff]
      %v6696 = vld [vmem:[#allocation3 + $0x410] sm:$0xff]
      %v6697 = vld [vmem:[#allocation3 + $0x418] sm:$0xff]
      %v6698 = vld [vmem:[#allocation3 + $0x420] sm:$0xff]
      %v6699 = vld [vmem:[#allocation3 + $0x460] sm:$0xff]
      %v6700 = vld [vmem:[#allocation3 + $0x468] sm:$0xff]
      %v6701 = vld [vmem:[#allocation3 + $0x470] sm:$0xff]
      %v6702 = vld [vmem:[#allocation3 + $0x4b0] sm:$0xff]
      %v6703 = vld [vmem:[#allocation3 + $0x4b8] sm:$0xff]
      %v6704 = vld [vmem:[#allocation3 + $0x4c0] sm:$0xff]
      %v6705 = vld [vmem:[#allocation3 + $0x500] sm:$0xff]
      %v6706 = vld [vmem:[#allocation3 + $0x508] sm:$0xff]
      %v6707 = vld [vmem:[#allocation3 + $0x510] sm:$0xff]
      %v6708 = vld [vmem:[#allocation3 + $0x550] sm:$0xff]
      %v6709 = vld [vmem:[#allocation3 + $0x558] sm:$0xff]
      %v6710 = vld [vmem:[#allocation3 + $0x560] sm:$0xff]
      %v6711 = vld [vmem:[#allocation3 + $0x5a0] sm:$0xff]
      %v6712 = vld [vmem:[#allocation3 + $0x5a8] sm:$0xff]
      %v6713 = vld [vmem:[#allocation3 + $0x5b0] sm:$0xff]
      %v6714 = vld [vmem:[#allocation3 + $0x5f0] sm:$0xff]
      %v6715 = vld [vmem:[#allocation3 + $0x5f8] sm:$0xff]
      %v6716 = vld [vmem:[#allocation3 + $0x600] sm:$0xff]
      %v6717 = vld [vmem:[#allocation3 + $0x640] sm:$0xff]
      %v6718 = vld [vmem:[#allocation3 + $0x648] sm:$0xff]
      %v6719 = vld [vmem:[#allocation3 + $0x650] sm:$0xff]
      %v6720 = vld [vmem:[#allocation3 + $0x690] sm:$0xff]
      %v6721 = vld [vmem:[#allocation3 + $0x698] sm:$0xff]
      %v6722 = vld [vmem:[#allocation3 + $0x6a0] sm:$0xff]
      %v6723 = vld [vmem:[#allocation3 + $0x6e0] sm:$0xff]
      %v6724 = vld [vmem:[#allocation3 + $0x6e8] sm:$0xff]
      %v6725 = vld [vmem:[#allocation3 + $0x6f0] sm:$0xff]
      %v6726 = vld [vmem:[#allocation3 + $0x730] sm:$0xff]
      %v6727 = vld [vmem:[#allocation3 + $0x738] sm:$0xff]
      %v6728 = vld [vmem:[#allocation3 + $0x740] sm:$0xff]
      %v6729 = vld [vmem:[#allocation3 + $0x780] sm:$0xff]
      %v6730 = vld [vmem:[#allocation3 + $0x788] sm:$0xff]
      %v6731 = vld [vmem:[#allocation3 + $0x790] sm:$0xff]
      %v6732 = vld [vmem:[#allocation3 + $0x7d0] sm:$0xff]
      %v6733 = vld [vmem:[#allocation3 + $0x7d8] sm:$0xff]
      %v6734 = vld [vmem:[#allocation3 + $0x7e0] sm:$0xff]
      %v6735 = vld [vmem:[#allocation3 + $0x820] sm:$0xff]
      %v6736 = vld [vmem:[#allocation3 + $0x828] sm:$0xff]
      %v6737 = vld [vmem:[#allocation3 + $0x830] sm:$0xff]
      %v6738 = vld [vmem:[#allocation3 + $0x870] sm:$0xff]
      %v6739 = vld [vmem:[#allocation3 + $0x878] sm:$0xff]
      %v6740 = vld [vmem:[#allocation3 + $0x880] sm:$0xff]
      %v6741 = vld [vmem:[#allocation3 + $0x8c0] sm:$0xff]
      %v6742 = vld [vmem:[#allocation3 + $0x8c8] sm:$0xff]
      %v6743 = vld [vmem:[#allocation3 + $0x8d0] sm:$0xff]
      %v6744 = vld [vmem:[#allocation3 + $0x910] sm:$0xff]
      %v6745 = vld [vmem:[#allocation3 + $0x918] sm:$0xff]
      %v6746 = vld [vmem:[#allocation3 + $0x920] sm:$0xff]
      %v6747 = vld [vmem:[#allocation3 + $0x960] sm:$0xff]
      %v6748 = vld [vmem:[#allocation3 + $0x968] sm:$0xff]
      %v6749 = vld [vmem:[#allocation3 + $0x970] sm:$0xff]
      %v6750 = vld [vmem:[#allocation3 + $0x9b0] sm:$0xff]
      %v6751 = vld [vmem:[#allocation3 + $0x9b8] sm:$0xff]
      %v6752 = vld [vmem:[#allocation3 + $0x9c0] sm:$0xff]
      %v6753 = vld [vmem:[#allocation3 + $0xa00] sm:$0xff]
      %v6754 = vld [vmem:[#allocation3 + $0xa08] sm:$0xff]
      %v6755 = vld [vmem:[#allocation3 + $0xa10] sm:$0xff]
      %v6756 = vld [vmem:[#allocation3 + $0xa50] sm:$0xff]
      %v6757 = vld [vmem:[#allocation3 + $0xa58] sm:$0xff]
      %v6758 = vld [vmem:[#allocation3 + $0xa60] sm:$0xff]
      %v6759 = vld [vmem:[#allocation3 + $0xaa0] sm:$0xff]
      %v6760 = vld [vmem:[#allocation3 + $0xaa8] sm:$0xff]
      %v6761 = vld [vmem:[#allocation3 + $0xab0] sm:$0xff]
      %v6762 = vld [vmem:[#allocation3 + $0xaf0] sm:$0xff]
      %v6763 = vld [vmem:[#allocation3 + $0xaf8] sm:$0xff]
      %v6764 = vld [vmem:[#allocation3 + $0xb00] sm:$0xff]
      %v6765 = vpack.c.bf16 %v6660, %v6657
      %v6766 = vpack.c.bf16 %v6661, %v6658
      %v6767 = vpack.c.bf16 %v6662, %v6659
      %v6768 = vpack.c.bf16 %v6666, %v6663
      %v6769 = vpack.c.bf16 %v6667, %v6664
      %v6770 = vpack.c.bf16 %v6668, %v6665
      %v6771 = vpack.c.bf16 %v6672, %v6669
      %v6772 = vpack.c.bf16 %v6673, %v6670
      %v6773 = vpack.c.bf16 %v6674, %v6671
      %v6774 = vpack.c.bf16 %v6678, %v6675
      %v6775 = vpack.c.bf16 %v6679, %v6676
      %v6776 = vpack.c.bf16 %v6680, %v6677
      %v6777 = vpack.c.bf16 %v6684, %v6681
      %v6778 = vpack.c.bf16 %v6685, %v6682
      %v6779 = vpack.c.bf16 %v6686, %v6683
      %v6780 = vpack.c.bf16 %v6690, %v6687
      %v6781 = vpack.c.bf16 %v6691, %v6688
      %v6782 = vpack.c.bf16 %v6692, %v6689
      %v6783 = vpack.c.bf16 %v6696, %v6693
      %v6784 = vpack.c.bf16 %v6697, %v6694
      %v6785 = vpack.c.bf16 %v6698, %v6695
      %v6786 = vpack.c.bf16 %v6702, %v6699
      %v6787 = vpack.c.bf16 %v6703, %v6700
      %v6788 = vpack.c.bf16 %v6704, %v6701
      %v6789 = vpack.c.bf16 %v6708, %v6705
      %v6790 = vpack.c.bf16 %v6709, %v6706
      %v6791 = vpack.c.bf16 %v6710, %v6707
      %v6792 = vpack.c.bf16 %v6714, %v6711
      %v6793 = vpack.c.bf16 %v6715, %v6712
      %v6794 = vpack.c.bf16 %v6716, %v6713
      %v6795 = vpack.c.bf16 %v6720, %v6717
      %v6796 = vpack.c.bf16 %v6721, %v6718
      %v6797 = vpack.c.bf16 %v6722, %v6719
      %v6798 = vpack.c.bf16 %v6726, %v6723
      %v6799 = vpack.c.bf16 %v6727, %v6724
      %v6800 = vpack.c.bf16 %v6728, %v6725
      %v6801 = vpack.c.bf16 %v6732, %v6729
      %v6802 = vpack.c.bf16 %v6733, %v6730
      %v6803 = vpack.c.bf16 %v6734, %v6731
      %v6804 = vpack.c.bf16 %v6738, %v6735
      %v6805 = vpack.c.bf16 %v6739, %v6736
      %v6806 = vpack.c.bf16 %v6740, %v6737
      %v6807 = vpack.c.bf16 %v6744, %v6741
      %v6808 = vpack.c.bf16 %v6745, %v6742
      %v6809 = vpack.c.bf16 %v6746, %v6743
      %v6810 = vpack.c.bf16 %v6750, %v6747
      %v6811 = vpack.c.bf16 %v6751, %v6748
      %v6812 = vpack.c.bf16 %v6752, %v6749
      %v6813 = vpack.c.bf16 %v6756, %v6753
      %v6814 = vpack.c.bf16 %v6757, %v6754
      %v6815 = vpack.c.bf16 %v6758, %v6755
      %v6816 = vpack.c.bf16 %v6762, %v6759
      %v6817 = vpack.c.bf16 %v6763, %v6760
      %v6818 = vpack.c.bf16 %v6764, %v6761
      %v6819 = vld [vmem:[%s8] sm:$0xff]
      %v6820 = vld [vmem:[%s8 + $0x8] sm:$0xff]
      %v6821 = vld [vmem:[%s8 + $0x10] sm:$0xff]
      %v6822 = vld [vmem:[%s8 + $0x18] sm:$0xff]
      %6824 = vset.pattern.permute.xlu0 0
      %6825 = vperm.xlu0 %6824, %v6819
      %v6826 = vpop.permute.xlu0 %6825
      %6829 = vset.pattern.permute.xlu0 0
      %6830 = vperm.xlu0 %6829, %v6820
      %v6831 = vpop.permute.xlu0 %6830
      %6834 = vset.pattern.permute.xlu0 0
      %6835 = vperm.xlu0 %6834, %v6821
      %v6836 = vpop.permute.xlu0 %6835
      %6839 = vset.pattern.permute.xlu0 0
      %6840 = vperm.xlu0 %6839, %v6822
      %v6841 = vpop.permute.xlu0 %6840
      %v6851 = vunpack.c.l.b16 %v6649
      %v6852 = vunpack.c.h.b16 %v6649
      %v6853 = vunpack.c.l.b16 %v6650
      %v6854 = vunpack.c.l.b16 %v6651
      %v6855 = vunpack.c.h.b16 %v6651
      %v6856 = vunpack.c.l.b16 %v6652
      %v6857 = vunpack.c.l.b16 %v6653
      %v6858 = vunpack.c.h.b16 %v6653
      %v6859 = vunpack.c.l.b16 %v6654
      %v6860 = vunpack.c.l.b16 %v6655
      %v6861 = vunpack.c.h.b16 %v6655
      %v6862 = vunpack.c.l.b16 %v6656
      %v6863 = vpack.c.b16 %v6854, %v6851
      %v6864 = vpack.c.b16 %v6855, %v6852
      %v6865 = vpack.c.b16 %v6856, %v6853
      %v6866 = vpack.c.b16 %v6860, %v6857
      %v6867 = vpack.c.b16 %v6861, %v6858
      %v6868 = vpack.c.b16 %v6862, %v6859
      %vm6873 = vcmask 261120
      %v6875 = vsel %vm6873, %v6865, 0
      %v6878 = vsel %vm6873, %v6868, 0
      %6880 = vmatprep.subr.bf16.mxu0 %v6766
      %6881 = vmatpush1.bf16.msra.mxu0 %v6765
      %6882 = vmatprep.subr.bf16.mxu0 %v6769
      %6883 = vmatpush1.bf16.msra.mxu0 %v6768
      %6884 = vmatprep.subr.bf16.mxu0 %v6772
      %6885 = vmatpush1.bf16.msra.mxu0 %v6771
      %6886 = vmatprep.subr.bf16.mxu0 %v6775
      %6887 = vmatpush1.bf16.msra.mxu0 %v6774
      %6888 = vmatprep.subr.bf16.mxu0 %v6778
      %6889 = vmatpush1.bf16.msra.mxu0 %v6777
      %6890 = vmatprep.subr.bf16.mxu0 %v6781
      %6891 = vmatpush1.bf16.msra.mxu0 %v6780
      %6892 = vmatprep.subr.bf16.mxu0 %v6784
      %6893 = vmatpush1.bf16.msra.mxu0 %v6783
      %6894 = vmatprep.subr.bf16.mxu0 %v6787
      %6895 = vmatpush1.bf16.msra.mxu0 %v6786
      %6896 = vmatprep.subr.bf16.mxu0 %v6790
      %6897 = vmatpush1.bf16.msra.mxu0 %v6789
      %6898 = vmatprep.subr.bf16.mxu0 %v6793
      %6899 = vmatpush1.bf16.msra.mxu0 %v6792
      %6900 = vmatprep.subr.bf16.mxu0 %v6796
      %6901 = vmatpush1.bf16.msra.mxu0 %v6795
      %6902 = vmatprep.subr.bf16.mxu0 %v6799
      %6903 = vmatpush1.bf16.msra.mxu0 %v6798
      %6904 = vmatprep.subr.bf16.mxu0 %v6802
      %6905 = vmatpush1.bf16.msra.mxu0 %v6801
      %6906 = vmatprep.subr.bf16.mxu0 %v6805
      %6907 = vmatpush1.bf16.msra.mxu0 %v6804
      %6908 = vmatprep.subr.bf16.mxu0 %v6808
      %6909 = vmatpush1.bf16.msra.mxu0 %v6807
      %6910 = vmatprep.subr.bf16.mxu0 %v6811
      %6911 = vmatpush1.bf16.msra.mxu0 %v6810
      %6912 = vmatprep.mubr.bf16.mxu0 %v6864
      %6913 = vmatmul.mubr.bf16.gmra.mrb[0].mxu0 %v6863
      %v6914 = vpop.f32.mrb[0].mxu0
      %v6915 = vadd.f32 %v6826, %v6914
      %v6916 = vpop.f32.mrb[0].mxu0
      %v6917 = vadd.f32 %v6826, %v6916
      %v6918 = vpop.f32.mrb[0].mxu0
      %v6919 = vadd.f32 %v6831, %v6918
      %v6920 = vpop.f32.mrb[0].mxu0
      %v6921 = vadd.f32 %v6831, %v6920
      %6922 = vmatprep.mubr.bf16.mxu0 %v6867
      %6923 = vmatmul.mubr.bf16.gmra.mrb[0].mxu0 %v6866
      %v6924 = vpop.f32.mrb[0].mxu0
      %v6925 = vadd.f32 %v6836, %v6924
      %v6926 = vpop.f32.mrb[0].mxu0
      %v6927 = vadd.f32 %v6836, %v6926
      %v6928 = vpop.f32.mrb[0].mxu0
      %v6929 = vadd.f32 %v6841, %v6928
      %v6930 = vpop.f32.mrb[0].mxu0
      %v6931 = vadd.f32 %v6841, %v6930
      %6932 = vdwg.mxu0
      %6933 = vmatprep.subr.bf16.mxu0 %v6814
      %6934 = vmatpush1.bf16.msra.mxu0 %v6813
      %6935 = vmatprep.subr.bf16.mxu0 %v6817
      %6936 = vmatpush1.bf16.msra.mxu0 %v6816
      %6937 = vmatprep.subr.bf16.mxu0 0
      %6938 = vmatpush1.bf16.msra.mxu0 0
      %6939 = vmatprep.subr.bf16.mxu0 0
      %6940 = vmatpush1.bf16.msra.mxu0 0
      %6941 = vmatprep.subr.bf16.mxu0 0
      %6942 = vmatpush1.bf16.msra.mxu0 0
      %6943 = vmatprep.subr.bf16.mxu0 0
      %6944 = vmatpush1.bf16.msra.mxu0 0
      %6945 = vmatprep.subr.bf16.mxu0 0
      %6946 = vmatpush1.bf16.msra.mxu0 0
      %6947 = vmatprep.subr.bf16.mxu0 0
      %6948 = vmatpush1.bf16.msra.mxu0 0
      %6949 = vmatprep.subr.bf16.mxu0 0
      %6950 = vmatpush1.bf16.msra.mxu0 0
      %6951 = vmatprep.subr.bf16.mxu0 0
      %6952 = vmatpush1.bf16.msra.mxu0 0
      %6953 = vmatprep.subr.bf16.mxu0 0
      %6954 = vmatpush1.bf16.msra.mxu0 0
      %6955 = vmatprep.subr.bf16.mxu0 0
      %6956 = vmatpush1.bf16.msra.mxu0 0
      %6957 = vmatprep.subr.bf16.mxu0 0
      %6958 = vmatpush1.bf16.msra.mxu0 0
      %6959 = vmatprep.subr.bf16.mxu0 0
      %6960 = vmatpush1.bf16.msra.mxu0 0
      %6961 = vmatprep.subr.bf16.mxu0 0
      %6962 = vmatpush1.bf16.msra.mxu0 0
      %6963 = vmatprep.subr.bf16.mxu0 0
      %6964 = vmatpush1.bf16.msra.mxu0 0
      %6965 = vmatprep.mubr.bf16.mxu0 0
      %6966 = vmatmul.mubr.bf16.gmra.mrb[0].mxu0 %v6875
      %v6967 = vpop.f32.mrb[0].mxu0
      %v6968 = vadd.f32 %v6915, %v6967
      %v6969 = vpop.f32.mrb[0].mxu0
      %v6970 = vadd.f32 %v6917, %v6969
      %v6971 = vpop.f32.mrb[0].mxu0
      %v6972 = vadd.f32 %v6919, %v6971
      %v6973 = vpop.f32.mrb[0].mxu0
      %v6974 = vadd.f32 %v6921, %v6973
      %6975 = vmatprep.mubr.bf16.mxu0 0
      %6976 = vmatmul.mubr.bf16.gmra.mrb[0].mxu0 %v6878
      %v6977 = vpop.f32.mrb[0].mxu0
      %v6978 = vadd.f32 %v6925, %v6977
      %v6979 = vpop.f32.mrb[0].mxu0
      %v6980 = vadd.f32 %v6927, %v6979
      %v6981 = vpop.f32.mrb[0].mxu0
      %v6982 = vadd.f32 %v6929, %v6981
      %v6983 = vpop.f32.mrb[0].mxu0
      %v6984 = vadd.f32 %v6931, %v6983
      %6985 = vdwg.mxu0
      %6986 = vmatprep.subr.bf16.mxu0 0
      %6987 = vmatpush1.bf16.msra.mxu0 %v6767
      %6988 = vmatprep.subr.bf16.mxu0 0
      %6989 = vmatpush1.bf16.msra.mxu0 %v6770
      %6990 = vmatprep.subr.bf16.mxu0 0
      %6991 = vmatpush1.bf16.msra.mxu0 %v6773
      %6992 = vmatprep.subr.bf16.mxu0 0
      %6993 = vmatpush1.bf16.msra.mxu0 %v6776
      %6994 = vmatprep.subr.bf16.mxu0 0
      %6995 = vmatpush1.bf16.msra.mxu0 %v6779
      %6996 = vmatprep.subr.bf16.mxu0 0
      %6997 = vmatpush1.bf16.msra.mxu0 %v6782
      %6998 = vmatprep.subr.bf16.mxu0 0
      %6999 = vmatpush1.bf16.msra.mxu0 %v6785
      %7000 = vmatprep.subr.bf16.mxu0 0
      %7001 = vmatpush1.bf16.msra.mxu0 %v6788
      %7002 = vmatprep.subr.bf16.mxu0 0
      %7003 = vmatpush1.bf16.msra.mxu0 %v6791
      %7004 = vmatprep.subr.bf16.mxu0 0
      %7005 = vmatpush1.bf16.msra.mxu0 %v6794
      %7006 = vmatprep.subr.bf16.mxu0 0
      %7007 = vmatpush1.bf16.msra.mxu0 %v6797
      %7008 = vmatprep.subr.bf16.mxu0 0
      %7009 = vmatpush1.bf16.msra.mxu0 %v6800
      %7010 = vmatprep.subr.bf16.mxu0 0
      %7011 = vmatpush1.bf16.msra.mxu0 %v6803
      %7012 = vmatprep.subr.bf16.mxu0 0
      %7013 = vmatpush1.bf16.msra.mxu0 %v6806
      %7014 = vmatprep.subr.bf16.mxu0 0
      %7015 = vmatpush1.bf16.msra.mxu0 %v6809
      %7016 = vmatprep.subr.bf16.mxu0 0
      %7017 = vmatpush1.bf16.msra.mxu0 %v6812
      %7018 = vmatprep.mubr.bf16.mxu0 %v6864
      %7019 = vmatmul.mubr.bf16.gmra.mrb[0].mxu0 %v6863
      %v7020 = vpop.f32.mrb[0].mxu0
      %v7021 = vadd.f32 %v6826, %v7020
      %v7022 = vpop.f32.mrb[0].mxu0
      %v7023 = vpop.f32.mrb[0].mxu0
      %v7024 = vadd.f32 %v6831, %v7023
      %v7025 = vpop.f32.mrb[0].mxu0
      %7026 = vmatprep.mubr.bf16.mxu0 %v6867
      %7027 = vmatmul.mubr.bf16.gmra.mrb[0].mxu0 %v6866
      %v7028 = vpop.f32.mrb[0].mxu0
      %v7029 = vadd.f32 %v6836, %v7028
      %v7030 = vpop.f32.mrb[0].mxu0
      %v7031 = vpop.f32.mrb[0].mxu0
      %v7032 = vadd.f32 %v6841, %v7031
      %v7033 = vpop.f32.mrb[0].mxu0
      %7034 = vdwg.mxu0
      %7035 = vmatprep.subr.bf16.mxu0 0
      %7036 = vmatpush1.bf16.msra.mxu0 %v6815
      %7037 = vmatprep.subr.bf16.mxu0 0
      %7038 = vmatpush1.bf16.msra.mxu0 %v6818
      %7039 = vmatprep.subr.bf16.mxu0 0
      %7040 = vmatpush1.bf16.msra.mxu0 0
      %7041 = vmatprep.subr.bf16.mxu0 0
      %7042 = vmatpush1.bf16.msra.mxu0 0
      %7043 = vmatprep.subr.bf16.mxu0 0
      %7044 = vmatpush1.bf16.msra.mxu0 0
      %7045 = vmatprep.subr.bf16.mxu0 0
      %7046 = vmatpush1.bf16.msra.mxu0 0
      %7047 = vmatprep.subr.bf16.mxu0 0
      %7048 = vmatpush1.bf16.msra.mxu0 0
      %7049 = vmatprep.subr.bf16.mxu0 0
      %7050 = vmatpush1.bf16.msra.mxu0 0
      %7051 = vmatprep.subr.bf16.mxu0 0
      %7052 = vmatpush1.bf16.msra.mxu0 0
      %7053 = vmatprep.subr.bf16.mxu0 0
      %7054 = vmatpush1.bf16.msra.mxu0 0
      %7055 = vmatprep.subr.bf16.mxu0 0
      %7056 = vmatpush1.bf16.msra.mxu0 0
      %7057 = vmatprep.subr.bf16.mxu0 0
      %7058 = vmatpush1.bf16.msra.mxu0 0
      %7059 = vmatprep.subr.bf16.mxu0 0
      %7060 = vmatpush1.bf16.msra.mxu0 0
      %7061 = vmatprep.subr.bf16.mxu0 0
      %7062 = vmatpush1.bf16.msra.mxu0 0
      %7063 = vmatprep.subr.bf16.mxu0 0
      %7064 = vmatpush1.bf16.msra.mxu0 0
      %7065 = vmatprep.subr.bf16.mxu0 0
      %7066 = vmatpush1.bf16.msra.mxu0 0
      %7067 = vmatprep.mubr.bf16.mxu0 0
      %7068 = vmatmul.mubr.bf16.gmra.mrb[0].mxu0 %v6875
      %v7069 = vpop.f32.mrb[0].mxu0
      %v7070 = vadd.f32 %v7021, %v7069
      %v7071 = vpop.f32.mrb[0].mxu0
      %v7072 = vpop.f32.mrb[0].mxu0
      %v7073 = vadd.f32 %v7024, %v7072
      %v7074 = vpop.f32.mrb[0].mxu0
      %7075 = vmatprep.mubr.bf16.mxu0 0
      %7076 = vmatmul.mubr.bf16.gmra.mrb[0].mxu0 %v6878
      %v7077 = vpop.f32.mrb[0].mxu0
      %v7078 = vadd.f32 %v7029, %v7077
      %v7079 = vpop.f32.mrb[0].mxu0
      %v7080 = vpop.f32.mrb[0].mxu0
      %v7081 = vadd.f32 %v7032, %v7080
      %v7082 = vpop.f32.mrb[0].mxu0
      %7083 = vdwg.mxu0
      %v7084 = vmax.f32 %v6968, 0.0
      %v7085 = vmax.f32 %v6970, 0.0
      %v7086 = vmax.f32 %v7070, 0.0
      %v7087 = vmax.f32 %v6972, 0.0
      %v7088 = vmax.f32 %v6974, 0.0
      %v7089 = vmax.f32 %v7073, 0.0
      %v7090 = vmax.f32 %v6978, 0.0
      %v7091 = vmax.f32 %v6980, 0.0
      %v7092 = vmax.f32 %v7078, 0.0
      %v7093 = vmax.f32 %v6982, 0.0
      %v7094 = vmax.f32 %v6984, 0.0
      %v7095 = vmax.f32 %v7081, 0.0
      %7096 = vst [vmem:[#allocation2 + $0x8] sm:$0xff] %v7084
      %7097 = vst [vmem:[#allocation2 + $0x10] sm:$0xff] %v7085
      %7098 = vst [vmem:[#allocation2 + $0x18] sm:$0xff] %v7086
      %7099 = vst [vmem:[#allocation2 + $0x68] sm:$0xff] %v7087
      %7100 = vst [vmem:[#allocation2 + $0x70] sm:$0xff] %v7088
      %7101 = vst [vmem:[#allocation2 + $0x78] sm:$0xff] %v7089
      %7102 = vst [vmem:[#allocation2 + $0xc8] sm:$0xff] %v7090
      %7103 = vst [vmem:[#allocation2 + $0xd0] sm:$0xff] %v7091
      %7104 = vst [vmem:[#allocation2 + $0xd8] sm:$0xff] %v7092
      %7105 = vst [vmem:[#allocation2 + $0x128] sm:$0xff] %v7093
      %7106 = vst [vmem:[#allocation2 + $0x130] sm:$0xff] %v7094
      %7107 = vst [vmem:[#allocation2 + $0x138] sm:$0xff] %v7095
      %v7108 = vld [vmem:[#allocation2 + $0x8] sm:$0xff]
      %v7109 = vld [vmem:[#allocation2 + $0x10] sm:$0xff]
      %v7110 = vld [vmem:[#allocation2 + $0x18] sm:$0xff]
      %v7111 = vld [vmem:[#allocation2 + $0x20] sm:$0xff]
      %v7112 = vld [vmem:[#allocation2 + $0x68] sm:$0xff]
      %v7113 = vld [vmem:[#allocation2 + $0x70] sm:$0xff]
      %v7114 = vld [vmem:[#allocation2 + $0x78] sm:$0xff]
      %v7115 = vld [vmem:[#allocation2 + $0x80] sm:$0xff]
      %v7116 = vld [vmem:[#allocation2 + $0xc8] sm:$0xff]
      %v7117 = vld [vmem:[#allocation2 + $0xd0] sm:$0xff]
      %v7118 = vld [vmem:[#allocation2 + $0xd8] sm:$0xff]
      %v7119 = vld [vmem:[#allocation2 + $0xe0] sm:$0xff]
      %v7120 = vld [vmem:[#allocation2 + $0x128] sm:$0xff]
      %v7121 = vld [vmem:[#allocation2 + $0x130] sm:$0xff]
      %v7122 = vld [vmem:[#allocation2 + $0x138] sm:$0xff]
      %v7123 = vld [vmem:[#allocation2 + $0x140] sm:$0xff]
      %7140 = vrot.lane.b32.xlu0 %v7108, 127
      %v7141 = vpop.permute.xlu0 %7140
      %7142 = vrot.lane.b32.xlu0 %v7109, 127
      %v7143 = vpop.permute.xlu0 %7142
      %7144 = vrot.lane.b32.xlu0 %v7110, 127
      %v7145 = vpop.permute.xlu0 %7144
      %7146 = vrot.lane.b32.xlu0 %v7111, 127
      %v7147 = vpop.permute.xlu0 %7146
      %7148 = vrot.lane.b32.xlu0 %v7112, 127
      %v7149 = vpop.permute.xlu0 %7148
      %7150 = vrot.lane.b32.xlu0 %v7113, 127
      %v7151 = vpop.permute.xlu0 %7150
      %7152 = vrot.lane.b32.xlu0 %v7114, 127
      %v7153 = vpop.permute.xlu0 %7152
      %7154 = vrot.lane.b32.xlu0 %v7115, 127
      %v7155 = vpop.permute.xlu0 %7154
      %7156 = vrot.lane.b32.xlu0 %v7116, 127
      %v7157 = vpop.permute.xlu0 %7156
      %7158 = vrot.lane.b32.xlu0 %v7117, 127
      %v7159 = vpop.permute.xlu0 %7158
      %7160 = vrot.lane.b32.xlu0 %v7118, 127
      %v7161 = vpop.permute.xlu0 %7160
      %7162 = vrot.lane.b32.xlu0 %v7119, 127
      %v7163 = vpop.permute.xlu0 %7162
      %7164 = vrot.lane.b32.xlu0 %v7120, 127
      %v7165 = vpop.permute.xlu0 %7164
      %7166 = vrot.lane.b32.xlu0 %v7121, 127
      %v7167 = vpop.permute.xlu0 %7166
      %7168 = vrot.lane.b32.xlu0 %v7122, 127
      %v7169 = vpop.permute.xlu0 %7168
      %7170 = vrot.lane.b32.xlu0 %v7123, 127
      %v7171 = vpop.permute.xlu0 %7170
      %v7172 = vsel %vm1026, %v7141, %v7143
      %v7173 = vsel %vm1026, %v7143, %v7145
      %v7174 = vsel %vm1026, %v7145, %v7147
      %v7175 = vsel %vm1026, %v7149, %v7151
      %v7176 = vsel %vm1026, %v7151, %v7153
      %v7177 = vsel %vm1026, %v7153, %v7155
      %v7178 = vsel %vm1026, %v7157, %v7159
      %v7179 = vsel %vm1026, %v7159, %v7161
      %v7180 = vsel %vm1026, %v7161, %v7163
      %v7181 = vsel %vm1026, %v7165, %v7167
      %v7182 = vsel %vm1026, %v7167, %v7169
      %v7183 = vsel %vm1026, %v7169, %v7171
      %v7196 = vmax.f32 %v7084, %v7172
      %v7197 = vmax.f32 %v7085, %v7173
      %v7198 = vmax.f32 %v7086, %v7174
      %v7199 = vmax.f32 %v7087, %v7175
      %v7200 = vmax.f32 %v7088, %v7176
      %v7201 = vmax.f32 %v7089, %v7177
      %v7202 = vmax.f32 %v7090, %v7178
      %v7203 = vmax.f32 %v7091, %v7179
      %v7204 = vmax.f32 %v7092, %v7180
      %v7205 = vmax.f32 %v7093, %v7181
      %v7206 = vmax.f32 %v7094, %v7182
      %v7207 = vmax.f32 %v7095, %v7183
      %v7212 = vmax.f32 %v7108, %v7172
      %v7213 = vmax.f32 %v7109, %v7173
      %v7214 = vmax.f32 %v7110, %v7174
      %v7215 = vmax.f32 %v7111, %v7147
      %v7216 = vmax.f32 %v7112, %v7175
      %v7217 = vmax.f32 %v7113, %v7176
      %v7218 = vmax.f32 %v7114, %v7177
      %v7219 = vmax.f32 %v7115, %v7155
      %v7220 = vmax.f32 %v7116, %v7178
      %v7221 = vmax.f32 %v7117, %v7179
      %v7222 = vmax.f32 %v7118, %v7180
      %v7223 = vmax.f32 %v7119, %v7163
      %v7224 = vmax.f32 %v7120, %v7181
      %v7225 = vmax.f32 %v7121, %v7182
      %v7226 = vmax.f32 %v7122, %v7183
      %v7227 = vmax.f32 %v7123, %v7171
      %7244 = vrot.lane.b32.xlu0 %v7212, 110
      %v7245 = vpop.permute.xlu0 %7244
      %7246 = vrot.lane.b32.xlu0 %v7213, 110
      %v7247 = vpop.permute.xlu0 %7246
      %7248 = vrot.lane.b32.xlu0 %v7214, 110
      %v7249 = vpop.permute.xlu0 %7248
      %7250 = vrot.lane.b32.xlu0 %v7215, 110
      %v7251 = vpop.permute.xlu0 %7250
      %7252 = vrot.lane.b32.xlu0 %v7216, 110
      %v7253 = vpop.permute.xlu0 %7252
      %7254 = vrot.lane.b32.xlu0 %v7217, 110
      %v7255 = vpop.permute.xlu0 %7254
      %7256 = vrot.lane.b32.xlu0 %v7218, 110
      %v7257 = vpop.permute.xlu0 %7256
      %7258 = vrot.lane.b32.xlu0 %v7219, 110
      %v7259 = vpop.permute.xlu0 %7258
      %7260 = vrot.lane.b32.xlu0 %v7220, 110
      %v7261 = vpop.permute.xlu0 %7260
      %7262 = vrot.lane.b32.xlu0 %v7221, 110
      %v7263 = vpop.permute.xlu0 %7262
      %7264 = vrot.lane.b32.xlu0 %v7222, 110
      %v7265 = vpop.permute.xlu0 %7264
      %7266 = vrot.lane.b32.xlu0 %v7223, 110
      %v7267 = vpop.permute.xlu0 %7266
      %7268 = vrot.lane.b32.xlu0 %v7224, 110
      %v7269 = vpop.permute.xlu0 %7268
      %7270 = vrot.lane.b32.xlu0 %v7225, 110
      %v7271 = vpop.permute.xlu0 %7270
      %7272 = vrot.lane.b32.xlu0 %v7226, 110
      %v7273 = vpop.permute.xlu0 %7272
      %7274 = vrot.lane.b32.xlu0 %v7227, 110
      %v7275 = vpop.permute.xlu0 %7274
      %v7276 = vsel %vm5478, %v7245, %v7247
      %v7277 = vsel %vm5478, %v7247, %v7249
      %v7278 = vsel %vm5478, %v7249, %v7251
      %v7279 = vsel %vm5478, %v7253, %v7255
      %v7280 = vsel %vm5478, %v7255, %v7257
      %v7281 = vsel %vm5478, %v7257, %v7259
      %v7282 = vsel %vm5478, %v7261, %v7263
      %v7283 = vsel %vm5478, %v7263, %v7265
      %v7284 = vsel %vm5478, %v7265, %v7267
      %v7285 = vsel %vm5478, %v7269, %v7271
      %v7286 = vsel %vm5478, %v7271, %v7273
      %v7287 = vsel %vm5478, %v7273, %v7275
      %v7300 = vmax.f32 %v7196, %v7276
      %v7301 = vmax.f32 %v7197, %v7277
      %v7302 = vmax.f32 %v7198, %v7278
      %v7303 = vmax.f32 %v7199, %v7279
      %v7304 = vmax.f32 %v7200, %v7280
      %v7305 = vmax.f32 %v7201, %v7281
      %v7306 = vmax.f32 %v7202, %v7282
      %v7307 = vmax.f32 %v7203, %v7283
      %v7308 = vmax.f32 %v7204, %v7284
      %v7309 = vmax.f32 %v7205, %v7285
      %v7310 = vmax.f32 %v7206, %v7286
      %v7311 = vmax.f32 %v7207, %v7287
      %v7312 = vpack.c.bf16 %v7303, %v7300
      %v7313 = vpack.c.bf16 %v7304, %v7301
      %v7314 = vpack.c.bf16 %v7305, %v7302
      %v7315 = vpack.c.bf16 %v7309, %v7306
      %v7316 = vpack.c.bf16 %v7310, %v7307
      %v7317 = vpack.c.bf16 %v7311, %v7308
      %v7318 = vld [vmem:[%s17] sm:$0xf]
      %v7319 = vld [vmem:[%s17 + $0x4] sm:$0xf]
      %v7320 = vld [vmem:[%s17 + $0x8] sm:$0xf]
      %v7321 = vld [vmem:[%s17 + $0xc] sm:$0xf]
      %v7322 = vld [vmem:[%s17 + $0x10] sm:$0xf]
      %v7323 = vld [vmem:[%s17 + $0x14] sm:$0xf]
      %v7324 = vld [vmem:[%s17 + $0x18] sm:$0xf]
      %v7325 = vld [vmem:[%s17 + $0x1c] sm:$0xf]
      %v7326 = vld [vmem:[%s17 + $0x20] sm:$0xf]
      %v7327 = vld [vmem:[%s17 + $0x24] sm:$0xf]
      %v7328 = vld [vmem:[%s17 + $0x28] sm:$0xf]
      %v7329 = vld [vmem:[%s17 + $0x2c] sm:$0xf]
      %v7330 = vld [vmem:[%s17 + $0x30] sm:$0xf]
      %v7331 = vld [vmem:[%s17 + $0x34] sm:$0xf]
      %v7332 = vld [vmem:[%s17 + $0x38] sm:$0xf]
      %v7333 = vld [vmem:[%s17 + $0x3c] sm:$0xf]
      %v7334 = vld [vmem:[%s17 + $0x40] sm:$0xf]
      %v7335 = vld [vmem:[%s17 + $0x44] sm:$0xf]
      %v7336 = vld [vmem:[%s17 + $0x48] sm:$0xf]
      %v7337 = vld [vmem:[%s17 + $0x4c] sm:$0xf]
      %v7338 = vld [vmem:[%s17 + $0x50] sm:$0xf]
      %v7339 = vld [vmem:[%s17 + $0x54] sm:$0xf]
      %v7340 = vld [vmem:[%s17 + $0x58] sm:$0xf]
      %v7341 = vld [vmem:[%s17 + $0x5c] sm:$0xf]
      %v7342 = vld [vmem:[%s17 + $0x60] sm:$0xf]
      %v7343 = vld [vmem:[%s17 + $0x64] sm:$0xf]
      %v7344 = vld [vmem:[%s17 + $0x68] sm:$0xf]
      %v7345 = vld [vmem:[%s17 + $0x6c] sm:$0xf]
      %v7346 = vld [vmem:[%s17 + $0x70] sm:$0xf]
      %v7347 = vld [vmem:[%s17 + $0x74] sm:$0xf]
      %v7348 = vld [vmem:[%s17 + $0x78] sm:$0xf]
      %v7349 = vld [vmem:[%s17 + $0x7c] sm:$0xf]
      %v7350 = vld [vmem:[%s17 + $0x80] sm:$0xf]
      %v7351 = vld [vmem:[%s17 + $0x84] sm:$0xf]
      %v7352 = vld [vmem:[%s17 + $0x88] sm:$0xf]
      %v7353 = vld [vmem:[%s17 + $0x8c] sm:$0xf]
      %v7354 = vld [vmem:[%s17 + $0x90] sm:$0xf]
      %v7355 = vld [vmem:[%s17 + $0x94] sm:$0xf]
      %v7356 = vld [vmem:[%s17 + $0x98] sm:$0xf]
      %v7357 = vld [vmem:[%s17 + $0x9c] sm:$0xf]
      %v7358 = vld [vmem:[%s17 + $0xa0] sm:$0xf]
      %v7359 = vld [vmem:[%s17 + $0xa4] sm:$0xf]
      %v7360 = vld [vmem:[%s17 + $0xa8] sm:$0xf]
      %v7361 = vld [vmem:[%s17 + $0xac] sm:$0xf]
      %v7362 = vld [vmem:[%s17 + $0xb0] sm:$0xf]
      %v7363 = vld [vmem:[%s17 + $0xb4] sm:$0xf]
      %v7364 = vld [vmem:[%s17 + $0xb8] sm:$0xf]
      %v7365 = vld [vmem:[%s17 + $0xbc] sm:$0xf]
      %v7414 = vunpack.c.l.b16 %v7318
      %v7415 = vunpack.c.l.b16 %v7319
      %v7416 = vunpack.c.l.b16 %v7320
      %v7417 = vunpack.c.l.b16 %v7321
      %v7418 = vunpack.c.l.b16 %v7322
      %v7419 = vunpack.c.l.b16 %v7323
      %v7420 = vunpack.c.l.b16 %v7324
      %v7421 = vunpack.c.l.b16 %v7325
      %v7422 = vunpack.c.l.b16 %v7326
      %v7423 = vunpack.c.l.b16 %v7327
      %v7424 = vunpack.c.l.b16 %v7328
      %v7425 = vunpack.c.l.b16 %v7329
      %v7426 = vunpack.c.l.b16 %v7330
      %v7427 = vunpack.c.l.b16 %v7331
      %v7428 = vunpack.c.l.b16 %v7332
      %v7429 = vunpack.c.l.b16 %v7333
      %v7430 = vunpack.c.l.b16 %v7334
      %v7431 = vunpack.c.l.b16 %v7335
      %v7432 = vunpack.c.l.b16 %v7336
      %v7433 = vunpack.c.l.b16 %v7337
      %v7434 = vunpack.c.l.b16 %v7338
      %v7435 = vunpack.c.l.b16 %v7339
      %v7436 = vunpack.c.l.b16 %v7340
      %v7437 = vunpack.c.l.b16 %v7341
      %v7438 = vunpack.c.l.b16 %v7342
      %v7439 = vunpack.c.l.b16 %v7343
      %v7440 = vunpack.c.l.b16 %v7344
      %v7441 = vunpack.c.l.b16 %v7345
      %v7442 = vunpack.c.l.b16 %v7346
      %v7443 = vunpack.c.l.b16 %v7347
      %v7444 = vunpack.c.l.b16 %v7348
      %v7445 = vunpack.c.l.b16 %v7349
      %v7446 = vunpack.c.l.b16 %v7350
      %v7447 = vunpack.c.l.b16 %v7351
      %v7448 = vunpack.c.l.b16 %v7352
      %v7449 = vunpack.c.l.b16 %v7353
      %v7450 = vunpack.c.l.b16 %v7354
      %v7451 = vunpack.c.l.b16 %v7355
      %v7452 = vunpack.c.l.b16 %v7356
      %v7453 = vunpack.c.l.b16 %v7357
      %v7454 = vunpack.c.l.b16 %v7358
      %v7455 = vunpack.c.l.b16 %v7359
      %v7456 = vunpack.c.l.b16 %v7360
      %v7457 = vunpack.c.l.b16 %v7361
      %v7458 = vunpack.c.l.b16 %v7362
      %v7459 = vunpack.c.l.b16 %v7363
      %v7460 = vunpack.c.l.b16 %v7364
      %v7461 = vunpack.c.l.b16 %v7365
      %v7462 = vpack.c.b16 %v7415, %v7414
      %v7463 = vpack.c.b16 %v7417, %v7416
      %v7464 = vpack.c.b16 %v7419, %v7418
      %v7465 = vpack.c.b16 %v7421, %v7420
      %v7466 = vpack.c.b16 %v7423, %v7422
      %v7467 = vpack.c.b16 %v7425, %v7424
      %v7468 = vpack.c.b16 %v7427, %v7426
      %v7469 = vpack.c.b16 %v7429, %v7428
      %v7470 = vpack.c.b16 %v7431, %v7430
      %v7471 = vpack.c.b16 %v7433, %v7432
      %v7472 = vpack.c.b16 %v7435, %v7434
      %v7473 = vpack.c.b16 %v7437, %v7436
      %v7474 = vpack.c.b16 %v7439, %v7438
      %v7475 = vpack.c.b16 %v7441, %v7440
      %v7476 = vpack.c.b16 %v7443, %v7442
      %v7477 = vpack.c.b16 %v7445, %v7444
      %v7478 = vpack.c.b16 %v7447, %v7446
      %v7479 = vpack.c.b16 %v7449, %v7448
      %v7480 = vpack.c.b16 %v7451, %v7450
      %v7481 = vpack.c.b16 %v7453, %v7452
      %v7482 = vpack.c.b16 %v7455, %v7454
      %v7483 = vpack.c.b16 %v7457, %v7456
      %v7484 = vpack.c.b16 %v7459, %v7458
      %v7485 = vpack.c.b16 %v7461, %v7460
      %7510 = vmatprep.subr.bf16.mxu0 0
      %7511 = vmatpush1.bf16.msra.mxu0 %v7462
      %7512 = vmatprep.subr.bf16.mxu0 0
      %7513 = vmatpush1.bf16.msra.mxu0 %v7463
      %7514 = vmatprep.subr.bf16.mxu0 0
      %7515 = vmatpush1.bf16.msra.mxu0 %v7464
      %7516 = vmatprep.subr.bf16.mxu0 0
      %7517 = vmatpush1.bf16.msra.mxu0 %v7465
      %7518 = vmatprep.subr.bf16.mxu0 0
      %7519 = vmatpush1.bf16.msra.mxu0 %v7466
      %7520 = vmatprep.subr.bf16.mxu0 0
      %7521 = vmatpush1.bf16.msra.mxu0 %v7467
      %7522 = vmatprep.subr.bf16.mxu0 0
      %7523 = vmatpush1.bf16.msra.mxu0 %v7468
      %7524 = vmatprep.subr.bf16.mxu0 0
      %7525 = vmatpush1.bf16.msra.mxu0 %v7469
      %7526 = vmatprep.subr.bf16.mxu0 0
      %7527 = vmatpush1.bf16.msra.mxu0 %v7470
      %7528 = vmatprep.subr.bf16.mxu0 0
      %7529 = vmatpush1.bf16.msra.mxu0 %v7471
      %7530 = vmatprep.subr.bf16.mxu0 0
      %7531 = vmatpush1.bf16.msra.mxu0 %v7472
      %7532 = vmatprep.subr.bf16.mxu0 0
      %7533 = vmatpush1.bf16.msra.mxu0 %v7473
      %7534 = vmatprep.subr.bf16.mxu0 0
      %7535 = vmatpush1.bf16.msra.mxu0 %v7474
      %7536 = vmatprep.subr.bf16.mxu0 0
      %7537 = vmatpush1.bf16.msra.mxu0 %v7475
      %7538 = vmatprep.subr.bf16.mxu0 0
      %7539 = vmatpush1.bf16.msra.mxu0 %v7476
      %7540 = vmatprep.subr.bf16.mxu0 0
      %7541 = vmatpush1.bf16.msra.mxu0 %v7477
      %7542 = vmatprep.mubr.bf16.mxu0 %v7313
      %7543 = vmatmul.mubr.bf16.gmra.mrb[0].mxu0 %v7312
      %v7544 = vpop.f32.mrb[0].mxu0
      %v7545 = vadd.f32 0.0, %v7544
      %v7546 = vpop.f32.mrb[0].mxu0
      %v7547 = vpop.f32.mrb[0].mxu0
      %v7548 = vadd.f32 0.0, %v7547
      %v7549 = vpop.f32.mrb[0].mxu0
      %7550 = vmatprep.mubr.bf16.mxu0 %v7316
      %7551 = vmatmul.mubr.bf16.gmra.mrb[0].mxu0 %v7315
      %v7552 = vpop.f32.mrb[0].mxu0
      %v7553 = vadd.f32 0.0, %v7552
      %v7554 = vpop.f32.mrb[0].mxu0
      %v7555 = vpop.f32.mrb[0].mxu0
      %v7556 = vadd.f32 0.0, %v7555
      %v7557 = vpop.f32.mrb[0].mxu0
      %7558 = vdwg.mxu0
      %7559 = vmatprep.subr.bf16.mxu0 0
      %7560 = vmatpush1.bf16.msra.mxu0 %v7478
      %7561 = vmatprep.subr.bf16.mxu0 0
      %7562 = vmatpush1.bf16.msra.mxu0 %v7479
      %7563 = vmatprep.subr.bf16.mxu0 0
      %7564 = vmatpush1.bf16.msra.mxu0 %v7480
      %7565 = vmatprep.subr.bf16.mxu0 0
      %7566 = vmatpush1.bf16.msra.mxu0 %v7481
      %7567 = vmatprep.subr.bf16.mxu0 0
      %7568 = vmatpush1.bf16.msra.mxu0 %v7482
      %7569 = vmatprep.subr.bf16.mxu0 0
      %7570 = vmatpush1.bf16.msra.mxu0 %v7483
      %7571 = vmatprep.subr.bf16.mxu0 0
      %7572 = vmatpush1.bf16.msra.mxu0 %v7484
      %7573 = vmatprep.subr.bf16.mxu0 0
      %7574 = vmatpush1.bf16.msra.mxu0 %v7485
      %7575 = vmatprep.subr.bf16.mxu0 0
      %7576 = vmatpush1.bf16.msra.mxu0 0
      %7577 = vmatprep.subr.bf16.mxu0 0
      %7578 = vmatpush1.bf16.msra.mxu0 0
      %7579 = vmatprep.subr.bf16.mxu0 0
      %7580 = vmatpush1.bf16.msra.mxu0 0
      %7581 = vmatprep.subr.bf16.mxu0 0
      %7582 = vmatpush1.bf16.msra.mxu0 0
      %7583 = vmatprep.subr.bf16.mxu0 0
      %7584 = vmatpush1.bf16.msra.mxu0 0
      %7585 = vmatprep.subr.bf16.mxu0 0
      %7586 = vmatpush1.bf16.msra.mxu0 0
      %7587 = vmatprep.subr.bf16.mxu0 0
      %7588 = vmatpush1.bf16.msra.mxu0 0
      %7589 = vmatprep.subr.bf16.mxu0 0
      %7590 = vmatpush1.bf16.msra.mxu0 0
      %7591 = vmatprep.mubr.bf16.mxu0 0
      %7592 = vmatmul.mubr.bf16.gmra.mrb[0].mxu0 %v7314
      %v7593 = vpop.f32.mrb[0].mxu0
      %v7594 = vadd.f32 %v7545, %v7593
      %v7595 = vpop.f32.mrb[0].mxu0
      %v7596 = vpop.f32.mrb[0].mxu0
      %v7597 = vadd.f32 %v7548, %v7596
      %v7598 = vpop.f32.mrb[0].mxu0
      %7599 = vmatprep.mubr.bf16.mxu0 0
      %7600 = vmatmul.mubr.bf16.gmra.mrb[0].mxu0 %v7317
      %v7601 = vpop.f32.mrb[0].mxu0
      %v7602 = vadd.f32 %v7553, %v7601
      %v7603 = vpop.f32.mrb[0].mxu0
      %v7604 = vpop.f32.mrb[0].mxu0
      %v7605 = vadd.f32 %v7556, %v7604
      %v7606 = vpop.f32.mrb[0].mxu0
      %7607 = vdwg.mxu0
      %7608 = vst [vmem:[#allocation2 + $0x8] sm:$0xff] %v7594
      %7609 = vst [vmem:[#allocation2 + $0x68] sm:$0xff] %v7597
      %7610 = vst [vmem:[#allocation2 + $0xc8] sm:$0xff] %v7602
      %7611 = vst [vmem:[#allocation2 + $0x128] sm:$0xff] %v7605
      %v7612 = vld [vmem:[#allocation2] sm:$0xff]
      %v7613 = vld [vmem:[#allocation2 + $0x8] sm:$0xff]
      %v7614 = vld [vmem:[#allocation2 + $0x60] sm:$0xff]
      %v7615 = vld [vmem:[#allocation2 + $0x68] sm:$0xff]
      %v7616 = vld [vmem:[#allocation2 + $0xc0] sm:$0xff]
      %v7617 = vld [vmem:[#allocation2 + $0xc8] sm:$0xff]
      %v7618 = vld [vmem:[#allocation2 + $0x120] sm:$0xff]
      %v7619 = vld [vmem:[#allocation2 + $0x128] sm:$0xff]
      %7628 = vrot.lane.b32.xlu0 %v7612, 11
      %v7629 = vpop.permute.xlu0 %7628
      %7630 = vrot.lane.b32.xlu0 %v7613, 11
      %v7631 = vpop.permute.xlu0 %7630
      %7632 = vrot.lane.b32.xlu0 %v7614, 11
      %v7633 = vpop.permute.xlu0 %7632
      %7634 = vrot.lane.b32.xlu0 %v7615, 11
      %v7635 = vpop.permute.xlu0 %7634
      %7636 = vrot.lane.b32.xlu0 %v7616, 11
      %v7637 = vpop.permute.xlu0 %7636
      %7638 = vrot.lane.b32.xlu0 %v7617, 11
      %v7639 = vpop.permute.xlu0 %7638
      %7640 = vrot.lane.b32.xlu0 %v7618, 11
      %v7641 = vpop.permute.xlu0 %7640
      %7642 = vrot.lane.b32.xlu0 %v7619, 11
      %v7643 = vpop.permute.xlu0 %7642
      %vm7644 = vcmask 89088
      %v7645 = vsel %vm7644, %v7629, %v7631
      %v7646 = vsel %vm7644, %v7633, %v7635
      %v7647 = vsel %vm7644, %v7637, %v7639
      %v7648 = vsel %vm7644, %v7641, %v7643
      %7653 = vst [vmem:[#allocation3] sm:$0xff] %v7645
      %7654 = vst [vmem:[#allocation3 + $0x50] sm:$0xff] %v7646
      %7655 = vst [vmem:[#allocation3 + $0xa0] sm:$0xff] %v7647
      %7656 = vst [vmem:[#allocation3 + $0xf0] sm:$0xff] %v7648
      %v7657 = vld [vmem:[#allocation2] sm:$0xff]
      %v7658 = vld [vmem:[#allocation2 + $0x8] sm:$0xff]
      %v7659 = vld [vmem:[#allocation2 + $0x60] sm:$0xff]
      %v7660 = vld [vmem:[#allocation2 + $0x68] sm:$0xff]
      %v7661 = vld [vmem:[#allocation2 + $0xc0] sm:$0xff]
      %v7662 = vld [vmem:[#allocation2 + $0xc8] sm:$0xff]
      %v7663 = vld [vmem:[#allocation2 + $0x120] sm:$0xff]
      %v7664 = vld [vmem:[#allocation2 + $0x128] sm:$0xff]
      %7673 = vrot.lane.b32.xlu0 %v7657, 10
      %v7674 = vpop.permute.xlu0 %7673
      %7675 = vrot.lane.b32.xlu0 %v7658, 10
      %v7676 = vpop.permute.xlu0 %7675
      %7677 = vrot.lane.b32.xlu0 %v7659, 10
      %v7678 = vpop.permute.xlu0 %7677
      %7679 = vrot.lane.b32.xlu0 %v7660, 10
      %v7680 = vpop.permute.xlu0 %7679
      %7681 = vrot.lane.b32.xlu0 %v7661, 10
      %v7682 = vpop.permute.xlu0 %7681
      %7683 = vrot.lane.b32.xlu0 %v7662, 10
      %v7684 = vpop.permute.xlu0 %7683
      %7685 = vrot.lane.b32.xlu0 %v7663, 10
      %v7686 = vpop.permute.xlu0 %7685
      %7687 = vrot.lane.b32.xlu0 %v7664, 10
      %v7688 = vpop.permute.xlu0 %7687
      %vm7689 = vcmask 80896
      %v7690 = vsel %vm7689, %v7674, %v7676
      %v7691 = vsel %vm7689, %v7678, %v7680
      %v7692 = vsel %vm7689, %v7682, %v7684
      %v7693 = vsel %vm7689, %v7686, %v7688
      %7698 = vst [vmem:[#allocation3 + $0x140] sm:$0xff] %v7690
      %7699 = vst [vmem:[#allocation3 + $0x190] sm:$0xff] %v7691
      %7700 = vst [vmem:[#allocation3 + $0x1e0] sm:$0xff] %v7692
      %7701 = vst [vmem:[#allocation3 + $0x230] sm:$0xff] %v7693
      %v7702 = vld [vmem:[#allocation2] sm:$0xff]
      %v7703 = vld [vmem:[#allocation2 + $0x8] sm:$0xff]
      %v7704 = vld [vmem:[#allocation2 + $0x60] sm:$0xff]
      %v7705 = vld [vmem:[#allocation2 + $0x68] sm:$0xff]
      %v7706 = vld [vmem:[#allocation2 + $0xc0] sm:$0xff]
      %v7707 = vld [vmem:[#allocation2 + $0xc8] sm:$0xff]
      %v7708 = vld [vmem:[#allocation2 + $0x120] sm:$0xff]
      %v7709 = vld [vmem:[#allocation2 + $0x128] sm:$0xff]
      %7718 = vrot.lane.b32.xlu0 %v7702, 9
      %v7719 = vpop.permute.xlu0 %7718
      %7720 = vrot.lane.b32.xlu0 %v7703, 9
      %v7721 = vpop.permute.xlu0 %7720
      %7722 = vrot.lane.b32.xlu0 %v7704, 9
      %v7723 = vpop.permute.xlu0 %7722
      %7724 = vrot.lane.b32.xlu0 %v7705, 9
      %v7725 = vpop.permute.xlu0 %7724
      %7726 = vrot.lane.b32.xlu0 %v7706, 9
      %v7727 = vpop.permute.xlu0 %7726
      %7728 = vrot.lane.b32.xlu0 %v7707, 9
      %v7729 = vpop.permute.xlu0 %7728
      %7730 = vrot.lane.b32.xlu0 %v7708, 9
      %v7731 = vpop.permute.xlu0 %7730
      %7732 = vrot.lane.b32.xlu0 %v7709, 9
      %v7733 = vpop.permute.xlu0 %7732
      %vm7734 = vcmask 72704
      %v7735 = vsel %vm7734, %v7719, %v7721
      %v7736 = vsel %vm7734, %v7723, %v7725
      %v7737 = vsel %vm7734, %v7727, %v7729
      %v7738 = vsel %vm7734, %v7731, %v7733
      %7743 = vst [vmem:[#allocation3 + $0x280] sm:$0xff] %v7735
      %7744 = vst [vmem:[#allocation3 + $0x2d0] sm:$0xff] %v7736
      %7745 = vst [vmem:[#allocation3 + $0x320] sm:$0xff] %v7737
      %7746 = vst [vmem:[#allocation3 + $0x370] sm:$0xff] %v7738
      %v7747 = vld [vmem:[#allocation2] sm:$0xff]
      %v7748 = vld [vmem:[#allocation2 + $0x8] sm:$0xff]
      %v7749 = vld [vmem:[#allocation2 + $0x60] sm:$0xff]
      %v7750 = vld [vmem:[#allocation2 + $0x68] sm:$0xff]
      %v7751 = vld [vmem:[#allocation2 + $0xc0] sm:$0xff]
      %v7752 = vld [vmem:[#allocation2 + $0xc8] sm:$0xff]
      %v7753 = vld [vmem:[#allocation2 + $0x120] sm:$0xff]
      %v7754 = vld [vmem:[#allocation2 + $0x128] sm:$0xff]
      %7763 = vrot.lane.b32.xlu0 %v7747, 1
      %v7764 = vpop.permute.xlu0 %7763
      %7765 = vrot.lane.b32.xlu0 %v7748, 1
      %v7766 = vpop.permute.xlu0 %7765
      %7767 = vrot.lane.b32.xlu0 %v7749, 1
      %v7768 = vpop.permute.xlu0 %7767
      %7769 = vrot.lane.b32.xlu0 %v7750, 1
      %v7770 = vpop.permute.xlu0 %7769
      %7771 = vrot.lane.b32.xlu0 %v7751, 1
      %v7772 = vpop.permute.xlu0 %7771
      %7773 = vrot.lane.b32.xlu0 %v7752, 1
      %v7774 = vpop.permute.xlu0 %7773
      %7775 = vrot.lane.b32.xlu0 %v7753, 1
      %v7776 = vpop.permute.xlu0 %7775
      %7777 = vrot.lane.b32.xlu0 %v7754, 1
      %v7778 = vpop.permute.xlu0 %7777
      %v7779 = vsel %vm941, %v7764, %v7766
      %v7780 = vsel %vm941, %v7768, %v7770
      %v7781 = vsel %vm941, %v7772, %v7774
      %v7782 = vsel %vm941, %v7776, %v7778
      %7787 = vst [vmem:[#allocation3 + $0x3c0] sm:$0xff] %v7779
      %7788 = vst [vmem:[#allocation3 + $0x410] sm:$0xff] %v7780
      %7789 = vst [vmem:[#allocation3 + $0x460] sm:$0xff] %v7781
      %7790 = vst [vmem:[#allocation3 + $0x4b0] sm:$0xff] %v7782
      %7791 = vst [vmem:[#allocation3 + $0x500] sm:$0xff] %v7594
      %7792 = vst [vmem:[#allocation3 + $0x550] sm:$0xff] %v7597
      %7793 = vst [vmem:[#allocation3 + $0x5a0] sm:$0xff] %v7602
      %7794 = vst [vmem:[#allocation3 + $0x5f0] sm:$0xff] %v7605
      %v7795 = vld [vmem:[#allocation2 + $0x8] sm:$0xff]
      %v7796 = vld [vmem:[#allocation2 + $0x10] sm:$0xff]
      %v7797 = vld [vmem:[#allocation2 + $0x68] sm:$0xff]
      %v7798 = vld [vmem:[#allocation2 + $0x70] sm:$0xff]
      %v7799 = vld [vmem:[#allocation2 + $0xc8] sm:$0xff]
      %v7800 = vld [vmem:[#allocation2 + $0xd0] sm:$0xff]
      %v7801 = vld [vmem:[#allocation2 + $0x128] sm:$0xff]
      %v7802 = vld [vmem:[#allocation2 + $0x130] sm:$0xff]
      %7811 = vrot.lane.b32.xlu0 %v7795, 127
      %v7812 = vpop.permute.xlu0 %7811
      %7813 = vrot.lane.b32.xlu0 %v7796, 127
      %v7814 = vpop.permute.xlu0 %7813
      %7815 = vrot.lane.b32.xlu0 %v7797, 127
      %v7816 = vpop.permute.xlu0 %7815
      %7817 = vrot.lane.b32.xlu0 %v7798, 127
      %v7818 = vpop.permute.xlu0 %7817
      %7819 = vrot.lane.b32.xlu0 %v7799, 127
      %v7820 = vpop.permute.xlu0 %7819
      %7821 = vrot.lane.b32.xlu0 %v7800, 127
      %v7822 = vpop.permute.xlu0 %7821
      %7823 = vrot.lane.b32.xlu0 %v7801, 127
      %v7824 = vpop.permute.xlu0 %7823
      %7825 = vrot.lane.b32.xlu0 %v7802, 127
      %v7826 = vpop.permute.xlu0 %7825
      %v7827 = vsel %vm1026, %v7812, %v7814
      %v7828 = vsel %vm1026, %v7816, %v7818
      %v7829 = vsel %vm1026, %v7820, %v7822
      %v7830 = vsel %vm1026, %v7824, %v7826
      %7835 = vst [vmem:[#allocation3 + $0x640] sm:$0xff] %v7827
      %7836 = vst [vmem:[#allocation3 + $0x690] sm:$0xff] %v7828
      %7837 = vst [vmem:[#allocation3 + $0x6e0] sm:$0xff] %v7829
      %7838 = vst [vmem:[#allocation3 + $0x730] sm:$0xff] %v7830
      %v7839 = vld [vmem:[#allocation2 + $0x8] sm:$0xff]
      %v7840 = vld [vmem:[#allocation2 + $0x10] sm:$0xff]
      %v7841 = vld [vmem:[#allocation2 + $0x68] sm:$0xff]
      %v7842 = vld [vmem:[#allocation2 + $0x70] sm:$0xff]
      %v7843 = vld [vmem:[#allocation2 + $0xc8] sm:$0xff]
      %v7844 = vld [vmem:[#allocation2 + $0xd0] sm:$0xff]
      %v7845 = vld [vmem:[#allocation2 + $0x128] sm:$0xff]
      %v7846 = vld [vmem:[#allocation2 + $0x130] sm:$0xff]
      %7855 = vrot.lane.b32.xlu0 %v7839, 119
      %v7856 = vpop.permute.xlu0 %7855
      %7857 = vrot.lane.b32.xlu0 %v7840, 119
      %v7858 = vpop.permute.xlu0 %7857
      %7859 = vrot.lane.b32.xlu0 %v7841, 119
      %v7860 = vpop.permute.xlu0 %7859
      %7861 = vrot.lane.b32.xlu0 %v7842, 119
      %v7862 = vpop.permute.xlu0 %7861
      %7863 = vrot.lane.b32.xlu0 %v7843, 119
      %v7864 = vpop.permute.xlu0 %7863
      %7865 = vrot.lane.b32.xlu0 %v7844, 119
      %v7866 = vpop.permute.xlu0 %7865
      %7867 = vrot.lane.b32.xlu0 %v7845, 119
      %v7868 = vpop.permute.xlu0 %7867
      %7869 = vrot.lane.b32.xlu0 %v7846, 119
      %v7870 = vpop.permute.xlu0 %7869
      %vm7871 = vcmask 973824
      %v7872 = vsel %vm7871, %v7856, %v7858
      %v7873 = vsel %vm7871, %v7860, %v7862
      %v7874 = vsel %vm7871, %v7864, %v7866
      %v7875 = vsel %vm7871, %v7868, %v7870
      %7880 = vst [vmem:[#allocation3 + $0x780] sm:$0xff] %v7872
      %7881 = vst [vmem:[#allocation3 + $0x7d0] sm:$0xff] %v7873
      %7882 = vst [vmem:[#allocation3 + $0x820] sm:$0xff] %v7874
      %7883 = vst [vmem:[#allocation3 + $0x870] sm:$0xff] %v7875
      %v7884 = vld [vmem:[#allocation2 + $0x8] sm:$0xff]
      %v7885 = vld [vmem:[#allocation2 + $0x10] sm:$0xff]
      %v7886 = vld [vmem:[#allocation2 + $0x68] sm:$0xff]
      %v7887 = vld [vmem:[#allocation2 + $0x70] sm:$0xff]
      %v7888 = vld [vmem:[#allocation2 + $0xc8] sm:$0xff]
      %v7889 = vld [vmem:[#allocation2 + $0xd0] sm:$0xff]
      %v7890 = vld [vmem:[#allocation2 + $0x128] sm:$0xff]
      %v7891 = vld [vmem:[#allocation2 + $0x130] sm:$0xff]
      %7900 = vrot.lane.b32.xlu0 %v7884, 118
      %v7901 = vpop.permute.xlu0 %7900
      %7902 = vrot.lane.b32.xlu0 %v7885, 118
      %v7903 = vpop.permute.xlu0 %7902
      %7904 = vrot.lane.b32.xlu0 %v7886, 118
      %v7905 = vpop.permute.xlu0 %7904
      %7906 = vrot.lane.b32.xlu0 %v7887, 118
      %v7907 = vpop.permute.xlu0 %7906
      %7908 = vrot.lane.b32.xlu0 %v7888, 118
      %v7909 = vpop.permute.xlu0 %7908
      %7910 = vrot.lane.b32.xlu0 %v7889, 118
      %v7911 = vpop.permute.xlu0 %7910
      %7912 = vrot.lane.b32.xlu0 %v7890, 118
      %v7913 = vpop.permute.xlu0 %7912
      %7914 = vrot.lane.b32.xlu0 %v7891, 118
      %v7915 = vpop.permute.xlu0 %7914
      %vm7916 = vcmask 965632
      %v7917 = vsel %vm7916, %v7901, %v7903
      %v7918 = vsel %vm7916, %v7905, %v7907
      %v7919 = vsel %vm7916, %v7909, %v7911
      %v7920 = vsel %vm7916, %v7913, %v7915
      %7925 = vst [vmem:[#allocation3 + $0x8c0] sm:$0xff] %v7917
      %7926 = vst [vmem:[#allocation3 + $0x910] sm:$0xff] %v7918
      %7927 = vst [vmem:[#allocation3 + $0x960] sm:$0xff] %v7919
      %7928 = vst [vmem:[#allocation3 + $0x9b0] sm:$0xff] %v7920
      %v7929 = vld [vmem:[#allocation2 + $0x8] sm:$0xff]
      %v7930 = vld [vmem:[#allocation2 + $0x10] sm:$0xff]
      %v7931 = vld [vmem:[#allocation2 + $0x68] sm:$0xff]
      %v7932 = vld [vmem:[#allocation2 + $0x70] sm:$0xff]
      %v7933 = vld [vmem:[#allocation2 + $0xc8] sm:$0xff]
      %v7934 = vld [vmem:[#allocation2 + $0xd0] sm:$0xff]
      %v7935 = vld [vmem:[#allocation2 + $0x128] sm:$0xff]
      %v7936 = vld [vmem:[#allocation2 + $0x130] sm:$0xff]
      %7945 = vrot.lane.b32.xlu0 %v7929, 117
      %v7946 = vpop.permute.xlu0 %7945
      %7947 = vrot.lane.b32.xlu0 %v7930, 117
      %v7948 = vpop.permute.xlu0 %7947
      %7949 = vrot.lane.b32.xlu0 %v7931, 117
      %v7950 = vpop.permute.xlu0 %7949
      %7951 = vrot.lane.b32.xlu0 %v7932, 117
      %v7952 = vpop.permute.xlu0 %7951
      %7953 = vrot.lane.b32.xlu0 %v7933, 117
      %v7954 = vpop.permute.xlu0 %7953
      %7955 = vrot.lane.b32.xlu0 %v7934, 117
      %v7956 = vpop.permute.xlu0 %7955
      %7957 = vrot.lane.b32.xlu0 %v7935, 117
      %v7958 = vpop.permute.xlu0 %7957
      %7959 = vrot.lane.b32.xlu0 %v7936, 117
      %v7960 = vpop.permute.xlu0 %7959
      %vm7961 = vcmask 957440
      %v7962 = vsel %vm7961, %v7946, %v7948
      %v7963 = vsel %vm7961, %v7950, %v7952
      %v7964 = vsel %vm7961, %v7954, %v7956
      %v7965 = vsel %vm7961, %v7958, %v7960
      %7970 = vst [vmem:[#allocation3 + $0xa00] sm:$0xff] %v7962
      %7971 = vst [vmem:[#allocation3 + $0xa50] sm:$0xff] %v7963
      %7972 = vst [vmem:[#allocation3 + $0xaa0] sm:$0xff] %v7964
      %7973 = vst [vmem:[#allocation3 + $0xaf0] sm:$0xff] %v7965
      %v7974 = vld [vmem:[%s9] sm:$0xff]
      %v7975 = vld [vmem:[%s9 + $0x8] sm:$0xf]
      %v7976 = vld [vmem:[%s9 + $0xc] sm:$0xff]
      %v7977 = vld [vmem:[%s9 + $0x14] sm:$0xf]
      %v7978 = vld [vmem:[%s9 + $0x18] sm:$0xff]
      %v7979 = vld [vmem:[%s9 + $0x20] sm:$0xf]
      %v7980 = vld [vmem:[%s9 + $0x24] sm:$0xff]
      %v7981 = vld [vmem:[%s9 + $0x2c] sm:$0xf]
      %v7982 = vld [vmem:[#allocation3] sm:$0xff]
      %v7983 = vld [vmem:[#allocation3 + $0x50] sm:$0xff]
      %v7984 = vld [vmem:[#allocation3 + $0xa0] sm:$0xff]
      %v7985 = vld [vmem:[#allocation3 + $0xf0] sm:$0xff]
      %v7986 = vld [vmem:[#allocation3 + $0x140] sm:$0xff]
      %v7987 = vld [vmem:[#allocation3 + $0x190] sm:$0xff]
      %v7988 = vld [vmem:[#allocation3 + $0x1e0] sm:$0xff]
      %v7989 = vld [vmem:[#allocation3 + $0x230] sm:$0xff]
      %v7990 = vld [vmem:[#allocation3 + $0x280] sm:$0xff]
      %v7991 = vld [vmem:[#allocation3 + $0x2d0] sm:$0xff]
      %v7992 = vld [vmem:[#allocation3 + $0x320] sm:$0xff]
      %v7993 = vld [vmem:[#allocation3 + $0x370] sm:$0xff]
      %v7994 = vld [vmem:[#allocation3 + $0x3c0] sm:$0xff]
      %v7995 = vld [vmem:[#allocation3 + $0x410] sm:$0xff]
      %v7996 = vld [vmem:[#allocation3 + $0x460] sm:$0xff]
      %v7997 = vld [vmem:[#allocation3 + $0x4b0] sm:$0xff]
      %v7998 = vld [vmem:[#allocation3 + $0x500] sm:$0xff]
      %v7999 = vld [vmem:[#allocation3 + $0x550] sm:$0xff]
      %v8000 = vld [vmem:[#allocation3 + $0x5a0] sm:$0xff]
      %v8001 = vld [vmem:[#allocation3 + $0x5f0] sm:$0xff]
      %v8002 = vld [vmem:[#allocation3 + $0x640] sm:$0xff]
      %v8003 = vld [vmem:[#allocation3 + $0x690] sm:$0xff]
      %v8004 = vld [vmem:[#allocation3 + $0x6e0] sm:$0xff]
      %v8005 = vld [vmem:[#allocation3 + $0x730] sm:$0xff]
      %v8006 = vld [vmem:[#allocation3 + $0x780] sm:$0xff]
      %v8007 = vld [vmem:[#allocation3 + $0x7d0] sm:$0xff]
      %v8008 = vld [vmem:[#allocation3 + $0x820] sm:$0xff]
      %v8009 = vld [vmem:[#allocation3 + $0x870] sm:$0xff]
      %v8010 = vld [vmem:[#allocation3 + $0x8c0] sm:$0xff]
      %v8011 = vld [vmem:[#allocation3 + $0x910] sm:$0xff]
      %v8012 = vld [vmem:[#allocation3 + $0x960] sm:$0xff]
      %v8013 = vld [vmem:[#allocation3 + $0x9b0] sm:$0xff]
      %v8014 = vld [vmem:[#allocation3 + $0xa00] sm:$0xff]
      %v8015 = vld [vmem:[#allocation3 + $0xa50] sm:$0xff]
      %v8016 = vld [vmem:[#allocation3 + $0xaa0] sm:$0xff]
      %v8017 = vld [vmem:[#allocation3 + $0xaf0] sm:$0xff]
      %v8018 = vpack.c.bf16 %v7983, %v7982
      %v8019 = vpack.c.bf16 %v7985, %v7984
      %v8020 = vpack.c.bf16 %v7987, %v7986
      %v8021 = vpack.c.bf16 %v7989, %v7988
      %v8022 = vpack.c.bf16 %v7991, %v7990
      %v8023 = vpack.c.bf16 %v7993, %v7992
      %v8024 = vpack.c.bf16 %v7995, %v7994
      %v8025 = vpack.c.bf16 %v7997, %v7996
      %v8026 = vpack.c.bf16 %v7999, %v7998
      %v8027 = vpack.c.bf16 %v8001, %v8000
      %v8028 = vpack.c.bf16 %v8003, %v8002
      %v8029 = vpack.c.bf16 %v8005, %v8004
      %v8030 = vpack.c.bf16 %v8007, %v8006
      %v8031 = vpack.c.bf16 %v8009, %v8008
      %v8032 = vpack.c.bf16 %v8011, %v8010
      %v8033 = vpack.c.bf16 %v8013, %v8012
      %v8034 = vpack.c.bf16 %v8015, %v8014
      %v8035 = vpack.c.bf16 %v8017, %v8016
      %v8036 = vld [vmem:[%s10] sm:$0xff]
      %v8037 = vld [vmem:[%s10 + $0x8] sm:$0xff]
      %v8038 = vld [vmem:[%s10 + $0x10] sm:$0xff]
      %v8039 = vld [vmem:[%s10 + $0x18] sm:$0xff]
      %8041 = vset.pattern.permute.xlu0 0
      %8042 = vperm.xlu0 %8041, %v8036
      %v8043 = vpop.permute.xlu0 %8042
      %8046 = vset.pattern.permute.xlu0 0
      %8047 = vperm.xlu0 %8046, %v8037
      %v8048 = vpop.permute.xlu0 %8047
      %8051 = vset.pattern.permute.xlu0 0
      %8052 = vperm.xlu0 %8051, %v8038
      %v8053 = vpop.permute.xlu0 %8052
      %8056 = vset.pattern.permute.xlu0 0
      %8057 = vperm.xlu0 %8056, %v8039
      %v8058 = vpop.permute.xlu0 %8057
      %v8068 = vunpack.c.l.b16 %v7974
      %v8069 = vunpack.c.h.b16 %v7974
      %v8070 = vunpack.c.l.b16 %v7975
      %v8071 = vunpack.c.l.b16 %v7976
      %v8072 = vunpack.c.h.b16 %v7976
      %v8073 = vunpack.c.l.b16 %v7977
      %v8074 = vunpack.c.l.b16 %v7978
      %v8075 = vunpack.c.h.b16 %v7978
      %v8076 = vunpack.c.l.b16 %v7979
      %v8077 = vunpack.c.l.b16 %v7980
      %v8078 = vunpack.c.h.b16 %v7980
      %v8079 = vunpack.c.l.b16 %v7981
      %v8080 = vpack.c.b16 %v8071, %v8068
      %v8081 = vpack.c.b16 %v8072, %v8069
      %v8082 = vpack.c.b16 %v8073, %v8070
      %v8083 = vpack.c.b16 %v8077, %v8074
      %v8084 = vpack.c.b16 %v8078, %v8075
      %v8085 = vpack.c.b16 %v8079, %v8076
      %v8091 = vsel %vm6873, %v8082, 0
      %v8094 = vsel %vm6873, %v8085, 0
      %8096 = vmatprep.subr.bf16.mxu0 0
      %8097 = vmatpush1.bf16.msra.mxu0 %v8018
      %8098 = vmatprep.subr.bf16.mxu0 0
      %8099 = vmatpush1.bf16.msra.mxu0 %v8019
      %8100 = vmatprep.subr.bf16.mxu0 0
      %8101 = vmatpush1.bf16.msra.mxu0 %v8020
      %8102 = vmatprep.subr.bf16.mxu0 0
      %8103 = vmatpush1.bf16.msra.mxu0 %v8021
      %8104 = vmatprep.subr.bf16.mxu0 0
      %8105 = vmatpush1.bf16.msra.mxu0 %v8022
      %8106 = vmatprep.subr.bf16.mxu0 0
      %8107 = vmatpush1.bf16.msra.mxu0 %v8023
      %8108 = vmatprep.subr.bf16.mxu0 0
      %8109 = vmatpush1.bf16.msra.mxu0 %v8024
      %8110 = vmatprep.subr.bf16.mxu0 0
      %8111 = vmatpush1.bf16.msra.mxu0 %v8025
      %8112 = vmatprep.subr.bf16.mxu0 0
      %8113 = vmatpush1.bf16.msra.mxu0 %v8026
      %8114 = vmatprep.subr.bf16.mxu0 0
      %8115 = vmatpush1.bf16.msra.mxu0 %v8027
      %8116 = vmatprep.subr.bf16.mxu0 0
      %8117 = vmatpush1.bf16.msra.mxu0 %v8028
      %8118 = vmatprep.subr.bf16.mxu0 0
      %8119 = vmatpush1.bf16.msra.mxu0 %v8029
      %8120 = vmatprep.subr.bf16.mxu0 0
      %8121 = vmatpush1.bf16.msra.mxu0 %v8030
      %8122 = vmatprep.subr.bf16.mxu0 0
      %8123 = vmatpush1.bf16.msra.mxu0 %v8031
      %8124 = vmatprep.subr.bf16.mxu0 0
      %8125 = vmatpush1.bf16.msra.mxu0 %v8032
      %8126 = vmatprep.subr.bf16.mxu0 0
      %8127 = vmatpush1.bf16.msra.mxu0 %v8033
      %8128 = vmatprep.mubr.bf16.mxu0 %v8081
      %8129 = vmatmul.mubr.bf16.gmra.mrb[0].mxu0 %v8080
      %v8130 = vpop.f32.mrb[0].mxu0
      %v8131 = vadd.f32 %v8043, %v8130
      %v8132 = vpop.f32.mrb[0].mxu0
      %v8133 = vpop.f32.mrb[0].mxu0
      %v8134 = vadd.f32 %v8048, %v8133
      %v8135 = vpop.f32.mrb[0].mxu0
      %8136 = vmatprep.mubr.bf16.mxu0 %v8084
      %8137 = vmatmul.mubr.bf16.gmra.mrb[0].mxu0 %v8083
      %v8138 = vpop.f32.mrb[0].mxu0
      %v8139 = vadd.f32 %v8053, %v8138
      %v8140 = vpop.f32.mrb[0].mxu0
      %v8141 = vpop.f32.mrb[0].mxu0
      %v8142 = vadd.f32 %v8058, %v8141
      %v8143 = vpop.f32.mrb[0].mxu0
      %8144 = vdwg.mxu0
      %8145 = vmatprep.subr.bf16.mxu0 0
      %8146 = vmatpush1.bf16.msra.mxu0 %v8034
      %8147 = vmatprep.subr.bf16.mxu0 0
      %8148 = vmatpush1.bf16.msra.mxu0 %v8035
      %8149 = vmatprep.subr.bf16.mxu0 0
      %8150 = vmatpush1.bf16.msra.mxu0 0
      %8151 = vmatprep.subr.bf16.mxu0 0
      %8152 = vmatpush1.bf16.msra.mxu0 0
      %8153 = vmatprep.subr.bf16.mxu0 0
      %8154 = vmatpush1.bf16.msra.mxu0 0
      %8155 = vmatprep.subr.bf16.mxu0 0
      %8156 = vmatpush1.bf16.msra.mxu0 0
      %8157 = vmatprep.subr.bf16.mxu0 0
      %8158 = vmatpush1.bf16.msra.mxu0 0
      %8159 = vmatprep.subr.bf16.mxu0 0
      %8160 = vmatpush1.bf16.msra.mxu0 0
      %8161 = vmatprep.subr.bf16.mxu0 0
      %8162 = vmatpush1.bf16.msra.mxu0 0
      %8163 = vmatprep.subr.bf16.mxu0 0
      %8164 = vmatpush1.bf16.msra.mxu0 0
      %8165 = vmatprep.subr.bf16.mxu0 0
      %8166 = vmatpush1.bf16.msra.mxu0 0
      %8167 = vmatprep.subr.bf16.mxu0 0
      %8168 = vmatpush1.bf16.msra.mxu0 0
      %8169 = vmatprep.subr.bf16.mxu0 0
      %8170 = vmatpush1.bf16.msra.mxu0 0
      %8171 = vmatprep.subr.bf16.mxu0 0
      %8172 = vmatpush1.bf16.msra.mxu0 0
      %8173 = vmatprep.subr.bf16.mxu0 0
      %8174 = vmatpush1.bf16.msra.mxu0 0
      %8175 = vmatprep.subr.bf16.mxu0 0
      %8176 = vmatpush1.bf16.msra.mxu0 0
      %8177 = vmatprep.mubr.bf16.mxu0 0
      %8178 = vmatmul.mubr.bf16.gmra.mrb[0].mxu0 %v8091
      %v8179 = vpop.f32.mrb[0].mxu0
      %v8180 = vadd.f32 %v8131, %v8179
      %v8181 = vpop.f32.mrb[0].mxu0
      %v8182 = vpop.f32.mrb[0].mxu0
      %v8183 = vadd.f32 %v8134, %v8182
      %v8184 = vpop.f32.mrb[0].mxu0
      %8185 = vmatprep.mubr.bf16.mxu0 0
      %8186 = vmatmul.mubr.bf16.gmra.mrb[0].mxu0 %v8094
      %v8187 = vpop.f32.mrb[0].mxu0
      %v8188 = vadd.f32 %v8139, %v8187
      %v8189 = vpop.f32.mrb[0].mxu0
      %v8190 = vpop.f32.mrb[0].mxu0
      %v8191 = vadd.f32 %v8142, %v8190
      %v8192 = vpop.f32.mrb[0].mxu0
      %8193 = vdwg.mxu0
      %v8194 = vmax.f32 %v8180, 0.0
      %v8195 = vmax.f32 %v8183, 0.0
      %v8196 = vmax.f32 %v8188, 0.0
      %v8197 = vmax.f32 %v8191, 0.0
      %v8198 = vld [vmem:[%s15] sm:$0x1]
      %v8200 = vlaneseq
      %v8201 = vshrl.u32 %v8200, 7
      %v8202 = vsub.s32 0, %v8201
      %v8203 = vrot.slane %v8198, %v8202
      %v8205 = vmul.f32 %v8194, %v8203
      %v8206 = vmul.f32 %v8195, %v8203
      %v8207 = vmul.f32 %v8196, %v8203
      %v8208 = vmul.f32 %v8197, %v8203
      %8209 = vst [vmem:[#allocation2 + $0x8] sm:$0xff] %v8205
      %8210 = vst [vmem:[#allocation2 + $0x68] sm:$0xff] %v8206
      %8211 = vst [vmem:[#allocation2 + $0xc8] sm:$0xff] %v8207
      %8212 = vst [vmem:[#allocation2 + $0x128] sm:$0xff] %v8208
      %v8213 = vld [vmem:[#allocation2] sm:$0xff]
      %v8214 = vld [vmem:[#allocation2 + $0x8] sm:$0xff]
      %v8215 = vld [vmem:[#allocation2 + $0x60] sm:$0xff]
      %v8216 = vld [vmem:[#allocation2 + $0x68] sm:$0xff]
      %v8217 = vld [vmem:[#allocation2 + $0xc0] sm:$0xff]
      %v8218 = vld [vmem:[#allocation2 + $0xc8] sm:$0xff]
      %v8219 = vld [vmem:[#allocation2 + $0x120] sm:$0xff]
      %v8220 = vld [vmem:[#allocation2 + $0x128] sm:$0xff]
      %8229 = vrot.lane.b32.xlu0 %v8213, 11
      %v8230 = vpop.permute.xlu0 %8229
      %8231 = vrot.lane.b32.xlu0 %v8214, 11
      %v8232 = vpop.permute.xlu0 %8231
      %8233 = vrot.lane.b32.xlu0 %v8215, 11
      %v8234 = vpop.permute.xlu0 %8233
      %8235 = vrot.lane.b32.xlu0 %v8216, 11
      %v8236 = vpop.permute.xlu0 %8235
      %8237 = vrot.lane.b32.xlu0 %v8217, 11
      %v8238 = vpop.permute.xlu0 %8237
      %8239 = vrot.lane.b32.xlu0 %v8218, 11
      %v8240 = vpop.permute.xlu0 %8239
      %8241 = vrot.lane.b32.xlu0 %v8219, 11
      %v8242 = vpop.permute.xlu0 %8241
      %8243 = vrot.lane.b32.xlu0 %v8220, 11
      %v8244 = vpop.permute.xlu0 %8243
      %v8245 = vsel %vm7644, %v8230, %v8232
      %v8246 = vsel %vm7644, %v8234, %v8236
      %v8247 = vsel %vm7644, %v8238, %v8240
      %v8248 = vsel %vm7644, %v8242, %v8244
      %8253 = vst [vmem:[#allocation3] sm:$0xff] %v8245
      %8254 = vst [vmem:[#allocation3 + $0x50] sm:$0xff] %v8246
      %8255 = vst [vmem:[#allocation3 + $0xa0] sm:$0xff] %v8247
      %8256 = vst [vmem:[#allocation3 + $0xf0] sm:$0xff] %v8248
      %v8257 = vld [vmem:[#allocation2] sm:$0xff]
      %v8258 = vld [vmem:[#allocation2 + $0x8] sm:$0xff]
      %v8259 = vld [vmem:[#allocation2 + $0x60] sm:$0xff]
      %v8260 = vld [vmem:[#allocation2 + $0x68] sm:$0xff]
      %v8261 = vld [vmem:[#allocation2 + $0xc0] sm:$0xff]
      %v8262 = vld [vmem:[#allocation2 + $0xc8] sm:$0xff]
      %v8263 = vld [vmem:[#allocation2 + $0x120] sm:$0xff]
      %v8264 = vld [vmem:[#allocation2 + $0x128] sm:$0xff]
      %8273 = vrot.lane.b32.xlu0 %v8257, 10
      %v8274 = vpop.permute.xlu0 %8273
      %8275 = vrot.lane.b32.xlu0 %v8258, 10
      %v8276 = vpop.permute.xlu0 %8275
      %8277 = vrot.lane.b32.xlu0 %v8259, 10
      %v8278 = vpop.permute.xlu0 %8277
      %8279 = vrot.lane.b32.xlu0 %v8260, 10
      %v8280 = vpop.permute.xlu0 %8279
      %8281 = vrot.lane.b32.xlu0 %v8261, 10
      %v8282 = vpop.permute.xlu0 %8281
      %8283 = vrot.lane.b32.xlu0 %v8262, 10
      %v8284 = vpop.permute.xlu0 %8283
      %8285 = vrot.lane.b32.xlu0 %v8263, 10
      %v8286 = vpop.permute.xlu0 %8285
      %8287 = vrot.lane.b32.xlu0 %v8264, 10
      %v8288 = vpop.permute.xlu0 %8287
      %v8289 = vsel %vm7689, %v8274, %v8276
      %v8290 = vsel %vm7689, %v8278, %v8280
      %v8291 = vsel %vm7689, %v8282, %v8284
      %v8292 = vsel %vm7689, %v8286, %v8288
      %8297 = vst [vmem:[#allocation3 + $0x140] sm:$0xff] %v8289
      %8298 = vst [vmem:[#allocation3 + $0x190] sm:$0xff] %v8290
      %8299 = vst [vmem:[#allocation3 + $0x1e0] sm:$0xff] %v8291
      %8300 = vst [vmem:[#allocation3 + $0x230] sm:$0xff] %v8292
      %v8301 = vld [vmem:[#allocation2] sm:$0xff]
      %v8302 = vld [vmem:[#allocation2 + $0x8] sm:$0xff]
      %v8303 = vld [vmem:[#allocation2 + $0x60] sm:$0xff]
      %v8304 = vld [vmem:[#allocation2 + $0x68] sm:$0xff]
      %v8305 = vld [vmem:[#allocation2 + $0xc0] sm:$0xff]
      %v8306 = vld [vmem:[#allocation2 + $0xc8] sm:$0xff]
      %v8307 = vld [vmem:[#allocation2 + $0x120] sm:$0xff]
      %v8308 = vld [vmem:[#allocation2 + $0x128] sm:$0xff]
      %8317 = vrot.lane.b32.xlu0 %v8301, 9
      %v8318 = vpop.permute.xlu0 %8317
      %8319 = vrot.lane.b32.xlu0 %v8302, 9
      %v8320 = vpop.permute.xlu0 %8319
      %8321 = vrot.lane.b32.xlu0 %v8303, 9
      %v8322 = vpop.permute.xlu0 %8321
      %8323 = vrot.lane.b32.xlu0 %v8304, 9
      %v8324 = vpop.permute.xlu0 %8323
      %8325 = vrot.lane.b32.xlu0 %v8305, 9
      %v8326 = vpop.permute.xlu0 %8325
      %8327 = vrot.lane.b32.xlu0 %v8306, 9
      %v8328 = vpop.permute.xlu0 %8327
      %8329 = vrot.lane.b32.xlu0 %v8307, 9
      %v8330 = vpop.permute.xlu0 %8329
      %8331 = vrot.lane.b32.xlu0 %v8308, 9
      %v8332 = vpop.permute.xlu0 %8331
      %v8333 = vsel %vm7734, %v8318, %v8320
      %v8334 = vsel %vm7734, %v8322, %v8324
      %v8335 = vsel %vm7734, %v8326, %v8328
      %v8336 = vsel %vm7734, %v8330, %v8332
      %8341 = vst [vmem:[#allocation3 + $0x280] sm:$0xff] %v8333
      %8342 = vst [vmem:[#allocation3 + $0x2d0] sm:$0xff] %v8334
      %8343 = vst [vmem:[#allocation3 + $0x320] sm:$0xff] %v8335
      %8344 = vst [vmem:[#allocation3 + $0x370] sm:$0xff] %v8336
      %v8345 = vld [vmem:[#allocation2] sm:$0xff]
      %v8346 = vld [vmem:[#allocation2 + $0x8] sm:$0xff]
      %v8347 = vld [vmem:[#allocation2 + $0x60] sm:$0xff]
      %v8348 = vld [vmem:[#allocation2 + $0x68] sm:$0xff]
      %v8349 = vld [vmem:[#allocation2 + $0xc0] sm:$0xff]
      %v8350 = vld [vmem:[#allocation2 + $0xc8] sm:$0xff]
      %v8351 = vld [vmem:[#allocation2 + $0x120] sm:$0xff]
      %v8352 = vld [vmem:[#allocation2 + $0x128] sm:$0xff]
      %8361 = vrot.lane.b32.xlu0 %v8345, 1
      %v8362 = vpop.permute.xlu0 %8361
      %8363 = vrot.lane.b32.xlu0 %v8346, 1
      %v8364 = vpop.permute.xlu0 %8363
      %8365 = vrot.lane.b32.xlu0 %v8347, 1
      %v8366 = vpop.permute.xlu0 %8365
      %8367 = vrot.lane.b32.xlu0 %v8348, 1
      %v8368 = vpop.permute.xlu0 %8367
      %8369 = vrot.lane.b32.xlu0 %v8349, 1
      %v8370 = vpop.permute.xlu0 %8369
      %8371 = vrot.lane.b32.xlu0 %v8350, 1
      %v8372 = vpop.permute.xlu0 %8371
      %8373 = vrot.lane.b32.xlu0 %v8351, 1
      %v8374 = vpop.permute.xlu0 %8373
      %8375 = vrot.lane.b32.xlu0 %v8352, 1
      %v8376 = vpop.permute.xlu0 %8375
      %v8377 = vsel %vm941, %v8362, %v8364
      %v8378 = vsel %vm941, %v8366, %v8368
      %v8379 = vsel %vm941, %v8370, %v8372
      %v8380 = vsel %vm941, %v8374, %v8376
      %8385 = vst [vmem:[#allocation3 + $0x3c0] sm:$0xff] %v8377
      %8386 = vst [vmem:[#allocation3 + $0x410] sm:$0xff] %v8378
      %8387 = vst [vmem:[#allocation3 + $0x460] sm:$0xff] %v8379
      %8388 = vst [vmem:[#allocation3 + $0x4b0] sm:$0xff] %v8380
      %8389 = vst [vmem:[#allocation3 + $0x500] sm:$0xff] %v8205
      %8390 = vst [vmem:[#allocation3 + $0x550] sm:$0xff] %v8206
      %8391 = vst [vmem:[#allocation3 + $0x5a0] sm:$0xff] %v8207
      %8392 = vst [vmem:[#allocation3 + $0x5f0] sm:$0xff] %v8208
      %v8393 = vld [vmem:[#allocation2 + $0x8] sm:$0xff]
      %v8394 = vld [vmem:[#allocation2 + $0x10] sm:$0xff]
      %v8395 = vld [vmem:[#allocation2 + $0x68] sm:$0xff]
      %v8396 = vld [vmem:[#allocation2 + $0x70] sm:$0xff]
      %v8397 = vld [vmem:[#allocation2 + $0xc8] sm:$0xff]
      %v8398 = vld [vmem:[#allocation2 + $0xd0] sm:$0xff]
      %v8399 = vld [vmem:[#allocation2 + $0x128] sm:$0xff]
      %v8400 = vld [vmem:[#allocation2 + $0x130] sm:$0xff]
      %8409 = vrot.lane.b32.xlu0 %v8393, 127
      %v8410 = vpop.permute.xlu0 %8409
      %8411 = vrot.lane.b32.xlu0 %v8394, 127
      %v8412 = vpop.permute.xlu0 %8411
      %8413 = vrot.lane.b32.xlu0 %v8395, 127
      %v8414 = vpop.permute.xlu0 %8413
      %8415 = vrot.lane.b32.xlu0 %v8396, 127
      %v8416 = vpop.permute.xlu0 %8415
      %8417 = vrot.lane.b32.xlu0 %v8397, 127
      %v8418 = vpop.permute.xlu0 %8417
      %8419 = vrot.lane.b32.xlu0 %v8398, 127
      %v8420 = vpop.permute.xlu0 %8419
      %8421 = vrot.lane.b32.xlu0 %v8399, 127
      %v8422 = vpop.permute.xlu0 %8421
      %8423 = vrot.lane.b32.xlu0 %v8400, 127
      %v8424 = vpop.permute.xlu0 %8423
      %v8425 = vsel %vm1026, %v8410, %v8412
      %v8426 = vsel %vm1026, %v8414, %v8416
      %v8427 = vsel %vm1026, %v8418, %v8420
      %v8428 = vsel %vm1026, %v8422, %v8424
      %8433 = vst [vmem:[#allocation3 + $0x640] sm:$0xff] %v8425
      %8434 = vst [vmem:[#allocation3 + $0x690] sm:$0xff] %v8426
      %8435 = vst [vmem:[#allocation3 + $0x6e0] sm:$0xff] %v8427
      %8436 = vst [vmem:[#allocation3 + $0x730] sm:$0xff] %v8428
      %v8437 = vld [vmem:[#allocation2 + $0x8] sm:$0xff]
      %v8438 = vld [vmem:[#allocation2 + $0x10] sm:$0xff]
      %v8439 = vld [vmem:[#allocation2 + $0x68] sm:$0xff]
      %v8440 = vld [vmem:[#allocation2 + $0x70] sm:$0xff]
      %v8441 = vld [vmem:[#allocation2 + $0xc8] sm:$0xff]
      %v8442 = vld [vmem:[#allocation2 + $0xd0] sm:$0xff]
      %v8443 = vld [vmem:[#allocation2 + $0x128] sm:$0xff]
      %v8444 = vld [vmem:[#allocation2 + $0x130] sm:$0xff]
      %8453 = vrot.lane.b32.xlu0 %v8437, 119
      %v8454 = vpop.permute.xlu0 %8453
      %8455 = vrot.lane.b32.xlu0 %v8438, 119
      %v8456 = vpop.permute.xlu0 %8455
      %8457 = vrot.lane.b32.xlu0 %v8439, 119
      %v8458 = vpop.permute.xlu0 %8457
      %8459 = vrot.lane.b32.xlu0 %v8440, 119
      %v8460 = vpop.permute.xlu0 %8459
      %8461 = vrot.lane.b32.xlu0 %v8441, 119
      %v8462 = vpop.permute.xlu0 %8461
      %8463 = vrot.lane.b32.xlu0 %v8442, 119
      %v8464 = vpop.permute.xlu0 %8463
      %8465 = vrot.lane.b32.xlu0 %v8443, 119
      %v8466 = vpop.permute.xlu0 %8465
      %8467 = vrot.lane.b32.xlu0 %v8444, 119
      %v8468 = vpop.permute.xlu0 %8467
      %v8469 = vsel %vm7871, %v8454, %v8456
      %v8470 = vsel %vm7871, %v8458, %v8460
      %v8471 = vsel %vm7871, %v8462, %v8464
      %v8472 = vsel %vm7871, %v8466, %v8468
      %8477 = vst [vmem:[#allocation3 + $0x780] sm:$0xff] %v8469
      %8478 = vst [vmem:[#allocation3 + $0x7d0] sm:$0xff] %v8470
      %8479 = vst [vmem:[#allocation3 + $0x820] sm:$0xff] %v8471
      %8480 = vst [vmem:[#allocation3 + $0x870] sm:$0xff] %v8472
      %v8481 = vld [vmem:[#allocation2 + $0x8] sm:$0xff]
      %v8482 = vld [vmem:[#allocation2 + $0x10] sm:$0xff]
      %v8483 = vld [vmem:[#allocation2 + $0x68] sm:$0xff]
      %v8484 = vld [vmem:[#allocation2 + $0x70] sm:$0xff]
      %v8485 = vld [vmem:[#allocation2 + $0xc8] sm:$0xff]
      %v8486 = vld [vmem:[#allocation2 + $0xd0] sm:$0xff]
      %v8487 = vld [vmem:[#allocation2 + $0x128] sm:$0xff]
      %v8488 = vld [vmem:[#allocation2 + $0x130] sm:$0xff]
      %8497 = vrot.lane.b32.xlu0 %v8481, 118
      %v8498 = vpop.permute.xlu0 %8497
      %8499 = vrot.lane.b32.xlu0 %v8482, 118
      %v8500 = vpop.permute.xlu0 %8499
      %8501 = vrot.lane.b32.xlu0 %v8483, 118
      %v8502 = vpop.permute.xlu0 %8501
      %8503 = vrot.lane.b32.xlu0 %v8484, 118
      %v8504 = vpop.permute.xlu0 %8503
      %8505 = vrot.lane.b32.xlu0 %v8485, 118
      %v8506 = vpop.permute.xlu0 %8505
      %8507 = vrot.lane.b32.xlu0 %v8486, 118
      %v8508 = vpop.permute.xlu0 %8507
      %8509 = vrot.lane.b32.xlu0 %v8487, 118
      %v8510 = vpop.permute.xlu0 %8509
      %8511 = vrot.lane.b32.xlu0 %v8488, 118
      %v8512 = vpop.permute.xlu0 %8511
      %v8513 = vsel %vm7916, %v8498, %v8500
      %v8514 = vsel %vm7916, %v8502, %v8504
      %v8515 = vsel %vm7916, %v8506, %v8508
      %v8516 = vsel %vm7916, %v8510, %v8512
      %8521 = vst [vmem:[#allocation3 + $0x8c0] sm:$0xff] %v8513
      %8522 = vst [vmem:[#allocation3 + $0x910] sm:$0xff] %v8514
      %8523 = vst [vmem:[#allocation3 + $0x960] sm:$0xff] %v8515
      %8524 = vst [vmem:[#allocation3 + $0x9b0] sm:$0xff] %v8516
      %v8525 = vld [vmem:[#allocation2 + $0x8] sm:$0xff]
      %v8526 = vld [vmem:[#allocation2 + $0x10] sm:$0xff]
      %v8527 = vld [vmem:[#allocation2 + $0x68] sm:$0xff]
      %v8528 = vld [vmem:[#allocation2 + $0x70] sm:$0xff]
      %v8529 = vld [vmem:[#allocation2 + $0xc8] sm:$0xff]
      %v8530 = vld [vmem:[#allocation2 + $0xd0] sm:$0xff]
      %v8531 = vld [vmem:[#allocation2 + $0x128] sm:$0xff]
      %v8532 = vld [vmem:[#allocation2 + $0x130] sm:$0xff]
      %8541 = vrot.lane.b32.xlu0 %v8525, 117
      %v8542 = vpop.permute.xlu0 %8541
      %8543 = vrot.lane.b32.xlu0 %v8526, 117
      %v8544 = vpop.permute.xlu0 %8543
      %8545 = vrot.lane.b32.xlu0 %v8527, 117
      %v8546 = vpop.permute.xlu0 %8545
      %8547 = vrot.lane.b32.xlu0 %v8528, 117
      %v8548 = vpop.permute.xlu0 %8547
      %8549 = vrot.lane.b32.xlu0 %v8529, 117
      %v8550 = vpop.permute.xlu0 %8549
      %8551 = vrot.lane.b32.xlu0 %v8530, 117
      %v8552 = vpop.permute.xlu0 %8551
      %8553 = vrot.lane.b32.xlu0 %v8531, 117
      %v8554 = vpop.permute.xlu0 %8553
      %8555 = vrot.lane.b32.xlu0 %v8532, 117
      %v8556 = vpop.permute.xlu0 %8555
      %v8557 = vsel %vm7961, %v8542, %v8544
      %v8558 = vsel %vm7961, %v8546, %v8548
      %v8559 = vsel %vm7961, %v8550, %v8552
      %v8560 = vsel %vm7961, %v8554, %v8556
      %8565 = vst [vmem:[#allocation3 + $0xa00] sm:$0xff] %v8557
      %8566 = vst [vmem:[#allocation3 + $0xa50] sm:$0xff] %v8558
      %8567 = vst [vmem:[#allocation3 + $0xaa0] sm:$0xff] %v8559
      %8568 = vst [vmem:[#allocation3 + $0xaf0] sm:$0xff] %v8560
      %v8569 = vld [vmem:[%s11] sm:$0xff]
      %v8570 = vld [vmem:[%s11 + $0x8] sm:$0xf]
      %v8571 = vld [vmem:[%s11 + $0xc] sm:$0xff]
      %v8572 = vld [vmem:[%s11 + $0x14] sm:$0xf]
      %v8573 = vld [vmem:[%s11 + $0x18] sm:$0xff]
      %v8574 = vld [vmem:[%s11 + $0x20] sm:$0xf]
      %v8575 = vld [vmem:[%s11 + $0x24] sm:$0xff]
      %v8576 = vld [vmem:[%s11 + $0x2c] sm:$0xf]
      %v8577 = vld [vmem:[#allocation3] sm:$0xff]
      %v8578 = vld [vmem:[#allocation3 + $0x50] sm:$0xff]
      %v8579 = vld [vmem:[#allocation3 + $0xa0] sm:$0xff]
      %v8580 = vld [vmem:[#allocation3 + $0xf0] sm:$0xff]
      %v8581 = vld [vmem:[#allocation3 + $0x140] sm:$0xff]
      %v8582 = vld [vmem:[#allocation3 + $0x190] sm:$0xff]
      %v8583 = vld [vmem:[#allocation3 + $0x1e0] sm:$0xff]
      %v8584 = vld [vmem:[#allocation3 + $0x230] sm:$0xff]
      %v8585 = vld [vmem:[#allocation3 + $0x280] sm:$0xff]
      %v8586 = vld [vmem:[#allocation3 + $0x2d0] sm:$0xff]
      %v8587 = vld [vmem:[#allocation3 + $0x320] sm:$0xff]
      %v8588 = vld [vmem:[#allocation3 + $0x370] sm:$0xff]
      %v8589 = vld [vmem:[#allocation3 + $0x3c0] sm:$0xff]
      %v8590 = vld [vmem:[#allocation3 + $0x410] sm:$0xff]
      %v8591 = vld [vmem:[#allocation3 + $0x460] sm:$0xff]
      %v8592 = vld [vmem:[#allocation3 + $0x4b0] sm:$0xff]
      %v8593 = vld [vmem:[#allocation3 + $0x500] sm:$0xff]
      %v8594 = vld [vmem:[#allocation3 + $0x550] sm:$0xff]
      %v8595 = vld [vmem:[#allocation3 + $0x5a0] sm:$0xff]
      %v8596 = vld [vmem:[#allocation3 + $0x5f0] sm:$0xff]
      %v8597 = vld [vmem:[#allocation3 + $0x640] sm:$0xff]
      %v8598 = vld [vmem:[#allocation3 + $0x690] sm:$0xff]
      %v8599 = vld [vmem:[#allocation3 + $0x6e0] sm:$0xff]
      %v8600 = vld [vmem:[#allocation3 + $0x730] sm:$0xff]
      %v8601 = vld [vmem:[#allocation3 + $0x780] sm:$0xff]
      %v8602 = vld [vmem:[#allocation3 + $0x7d0] sm:$0xff]
      %v8603 = vld [vmem:[#allocation3 + $0x820] sm:$0xff]
      %v8604 = vld [vmem:[#allocation3 + $0x870] sm:$0xff]
      %v8605 = vld [vmem:[#allocation3 + $0x8c0] sm:$0xff]
      %v8606 = vld [vmem:[#allocation3 + $0x910] sm:$0xff]
      %v8607 = vld [vmem:[#allocation3 + $0x960] sm:$0xff]
      %v8608 = vld [vmem:[#allocation3 + $0x9b0] sm:$0xff]
      %v8609 = vld [vmem:[#allocation3 + $0xa00] sm:$0xff]
      %v8610 = vld [vmem:[#allocation3 + $0xa50] sm:$0xff]
      %v8611 = vld [vmem:[#allocation3 + $0xaa0] sm:$0xff]
      %v8612 = vld [vmem:[#allocation3 + $0xaf0] sm:$0xff]
      %v8613 = vpack.c.bf16 %v8578, %v8577
      %v8614 = vpack.c.bf16 %v8580, %v8579
      %v8615 = vpack.c.bf16 %v8582, %v8581
      %v8616 = vpack.c.bf16 %v8584, %v8583
      %v8617 = vpack.c.bf16 %v8586, %v8585
      %v8618 = vpack.c.bf16 %v8588, %v8587
      %v8619 = vpack.c.bf16 %v8590, %v8589
      %v8620 = vpack.c.bf16 %v8592, %v8591
      %v8621 = vpack.c.bf16 %v8594, %v8593
      %v8622 = vpack.c.bf16 %v8596, %v8595
      %v8623 = vpack.c.bf16 %v8598, %v8597
      %v8624 = vpack.c.bf16 %v8600, %v8599
      %v8625 = vpack.c.bf16 %v8602, %v8601
      %v8626 = vpack.c.bf16 %v8604, %v8603
      %v8627 = vpack.c.bf16 %v8606, %v8605
      %v8628 = vpack.c.bf16 %v8608, %v8607
      %v8629 = vpack.c.bf16 %v8610, %v8609
      %v8630 = vpack.c.bf16 %v8612, %v8611
      %v8631 = vld [vmem:[%s12] sm:$0xff]
      %v8632 = vld [vmem:[%s12 + $0x8] sm:$0xff]
      %v8633 = vld [vmem:[%s12 + $0x10] sm:$0xff]
      %v8634 = vld [vmem:[%s12 + $0x18] sm:$0xff]
      %8636 = vset.pattern.permute.xlu0 0
      %8637 = vperm.xlu0 %8636, %v8631
      %v8638 = vpop.permute.xlu0 %8637
      %8641 = vset.pattern.permute.xlu0 0
      %8642 = vperm.xlu0 %8641, %v8632
      %v8643 = vpop.permute.xlu0 %8642
      %8646 = vset.pattern.permute.xlu0 0
      %8647 = vperm.xlu0 %8646, %v8633
      %v8648 = vpop.permute.xlu0 %8647
      %8651 = vset.pattern.permute.xlu0 0
      %8652 = vperm.xlu0 %8651, %v8634
      %v8653 = vpop.permute.xlu0 %8652
      %v8663 = vunpack.c.l.b16 %v8569
      %v8664 = vunpack.c.h.b16 %v8569
      %v8665 = vunpack.c.l.b16 %v8570
      %v8666 = vunpack.c.l.b16 %v8571
      %v8667 = vunpack.c.h.b16 %v8571
      %v8668 = vunpack.c.l.b16 %v8572
      %v8669 = vunpack.c.l.b16 %v8573
      %v8670 = vunpack.c.h.b16 %v8573
      %v8671 = vunpack.c.l.b16 %v8574
      %v8672 = vunpack.c.l.b16 %v8575
      %v8673 = vunpack.c.h.b16 %v8575
      %v8674 = vunpack.c.l.b16 %v8576
      %v8675 = vpack.c.b16 %v8666, %v8663
      %v8676 = vpack.c.b16 %v8667, %v8664
      %v8677 = vpack.c.b16 %v8668, %v8665
      %v8678 = vpack.c.b16 %v8672, %v8669
      %v8679 = vpack.c.b16 %v8673, %v8670
      %v8680 = vpack.c.b16 %v8674, %v8671
      %v8686 = vsel %vm6873, %v8677, 0
      %v8689 = vsel %vm6873, %v8680, 0
      %8691 = vmatprep.subr.bf16.mxu0 0
      %8692 = vmatpush1.bf16.msra.mxu0 %v8613
      %8693 = vmatprep.subr.bf16.mxu0 0
      %8694 = vmatpush1.bf16.msra.mxu0 %v8614
      %8695 = vmatprep.subr.bf16.mxu0 0
      %8696 = vmatpush1.bf16.msra.mxu0 %v8615
      %8697 = vmatprep.subr.bf16.mxu0 0
      %8698 = vmatpush1.bf16.msra.mxu0 %v8616
      %8699 = vmatprep.subr.bf16.mxu0 0
      %8700 = vmatpush1.bf16.msra.mxu0 %v8617
      %8701 = vmatprep.subr.bf16.mxu0 0
      %8702 = vmatpush1.bf16.msra.mxu0 %v8618
      %8703 = vmatprep.subr.bf16.mxu0 0
      %8704 = vmatpush1.bf16.msra.mxu0 %v8619
      %8705 = vmatprep.subr.bf16.mxu0 0
      %8706 = vmatpush1.bf16.msra.mxu0 %v8620
      %8707 = vmatprep.subr.bf16.mxu0 0
      %8708 = vmatpush1.bf16.msra.mxu0 %v8621
      %8709 = vmatprep.subr.bf16.mxu0 0
      %8710 = vmatpush1.bf16.msra.mxu0 %v8622
      %8711 = vmatprep.subr.bf16.mxu0 0
      %8712 = vmatpush1.bf16.msra.mxu0 %v8623
      %8713 = vmatprep.subr.bf16.mxu0 0
      %8714 = vmatpush1.bf16.msra.mxu0 %v8624
      %8715 = vmatprep.subr.bf16.mxu0 0
      %8716 = vmatpush1.bf16.msra.mxu0 %v8625
      %8717 = vmatprep.subr.bf16.mxu0 0
      %8718 = vmatpush1.bf16.msra.mxu0 %v8626
      %8719 = vmatprep.subr.bf16.mxu0 0
      %8720 = vmatpush1.bf16.msra.mxu0 %v8627
      %8721 = vmatprep.subr.bf16.mxu0 0
      %8722 = vmatpush1.bf16.msra.mxu0 %v8628
      %8723 = vmatprep.mubr.bf16.mxu0 %v8676
      %8724 = vmatmul.mubr.bf16.gmra.mrb[0].mxu0 %v8675
      %v8725 = vpop.f32.mrb[0].mxu0
      %v8726 = vadd.f32 %v8638, %v8725
      %v8727 = vpop.f32.mrb[0].mxu0
      %v8728 = vpop.f32.mrb[0].mxu0
      %v8729 = vadd.f32 %v8643, %v8728
      %v8730 = vpop.f32.mrb[0].mxu0
      %8731 = vmatprep.mubr.bf16.mxu0 %v8679
      %8732 = vmatmul.mubr.bf16.gmra.mrb[0].mxu0 %v8678
      %v8733 = vpop.f32.mrb[0].mxu0
      %v8734 = vadd.f32 %v8648, %v8733
      %v8735 = vpop.f32.mrb[0].mxu0
      %v8736 = vpop.f32.mrb[0].mxu0
      %v8737 = vadd.f32 %v8653, %v8736
      %v8738 = vpop.f32.mrb[0].mxu0
      %8739 = vdwg.mxu0
      %8740 = vmatprep.subr.bf16.mxu0 0
      %8741 = vmatpush1.bf16.msra.mxu0 %v8629
      %8742 = vmatprep.subr.bf16.mxu0 0
      %8743 = vmatpush1.bf16.msra.mxu0 %v8630
      %8744 = vmatprep.subr.bf16.mxu0 0
      %8745 = vmatpush1.bf16.msra.mxu0 0
      %8746 = vmatprep.subr.bf16.mxu0 0
      %8747 = vmatpush1.bf16.msra.mxu0 0
      %8748 = vmatprep.subr.bf16.mxu0 0
      %8749 = vmatpush1.bf16.msra.mxu0 0
      %8750 = vmatprep.subr.bf16.mxu0 0
      %8751 = vmatpush1.bf16.msra.mxu0 0
      %8752 = vmatprep.subr.bf16.mxu0 0
      %8753 = vmatpush1.bf16.msra.mxu0 0
      %8754 = vmatprep.subr.bf16.mxu0 0
      %8755 = vmatpush1.bf16.msra.mxu0 0
      %8756 = vmatprep.subr.bf16.mxu0 0
      %8757 = vmatpush1.bf16.msra.mxu0 0
      %8758 = vmatprep.subr.bf16.mxu0 0
      %8759 = vmatpush1.bf16.msra.mxu0 0
      %8760 = vmatprep.subr.bf16.mxu0 0
      %8761 = vmatpush1.bf16.msra.mxu0 0
      %8762 = vmatprep.subr.bf16.mxu0 0
      %8763 = vmatpush1.bf16.msra.mxu0 0
      %8764 = vmatprep.subr.bf16.mxu0 0
      %8765 = vmatpush1.bf16.msra.mxu0 0
      %8766 = vmatprep.subr.bf16.mxu0 0
      %8767 = vmatpush1.bf16.msra.mxu0 0
      %8768 = vmatprep.subr.bf16.mxu0 0
      %8769 = vmatpush1.bf16.msra.mxu0 0
      %8770 = vmatprep.subr.bf16.mxu0 0
      %8771 = vmatpush1.bf16.msra.mxu0 0
      %8772 = vmatprep.mubr.bf16.mxu0 0
      %8773 = vmatmul.mubr.bf16.gmra.mrb[0].mxu0 %v8686
      %v8774 = vpop.f32.mrb[0].mxu0
      %v8775 = vadd.f32 %v8726, %v8774
      %v8776 = vpop.f32.mrb[0].mxu0
      %v8777 = vpop.f32.mrb[0].mxu0
      %v8778 = vadd.f32 %v8729, %v8777
      %v8779 = vpop.f32.mrb[0].mxu0
      %8780 = vmatprep.mubr.bf16.mxu0 0
      %8781 = vmatmul.mubr.bf16.gmra.mrb[0].mxu0 %v8689
      %v8782 = vpop.f32.mrb[0].mxu0
      %v8783 = vadd.f32 %v8734, %v8782
      %v8784 = vpop.f32.mrb[0].mxu0
      %v8785 = vpop.f32.mrb[0].mxu0
      %v8786 = vadd.f32 %v8737, %v8785
      %v8787 = vpop.f32.mrb[0].mxu0
      %8788 = vdwg.mxu0
      %v8789 = vmax.f32 %v8775, 0.0
      %v8790 = vmax.f32 %v8778, 0.0
      %v8791 = vmax.f32 %v8783, 0.0
      %v8792 = vmax.f32 %v8786, 0.0
      %8793 = vst [vmem:[#allocation2 + $0x8] sm:$0xff] %v8789
      %8794 = vst [vmem:[#allocation2 + $0x68] sm:$0xff] %v8790
      %8795 = vst [vmem:[#allocation2 + $0xc8] sm:$0xff] %v8791
      %8796 = vst [vmem:[#allocation2 + $0x128] sm:$0xff] %v8792
      %v8797 = vld [vmem:[#allocation2 + $0x8] sm:$0xff]
      %v8798 = vld [vmem:[#allocation2 + $0x10] sm:$0xff]
      %v8799 = vld [vmem:[#allocation2 + $0x68] sm:$0xff]
      %v8800 = vld [vmem:[#allocation2 + $0x70] sm:$0xff]
      %v8801 = vld [vmem:[#allocation2 + $0xc8] sm:$0xff]
      %v8802 = vld [vmem:[#allocation2 + $0xd0] sm:$0xff]
      %v8803 = vld [vmem:[#allocation2 + $0x128] sm:$0xff]
      %v8804 = vld [vmem:[#allocation2 + $0x130] sm:$0xff]
      %8813 = vrot.lane.b32.xlu0 %v8797, 127
      %v8814 = vpop.permute.xlu0 %8813
      %8815 = vrot.lane.b32.xlu0 %v8798, 127
      %v8816 = vpop.permute.xlu0 %8815
      %8817 = vrot.lane.b32.xlu0 %v8799, 127
      %v8818 = vpop.permute.xlu0 %8817
      %8819 = vrot.lane.b32.xlu0 %v8800, 127
      %v8820 = vpop.permute.xlu0 %8819
      %8821 = vrot.lane.b32.xlu0 %v8801, 127
      %v8822 = vpop.permute.xlu0 %8821
      %8823 = vrot.lane.b32.xlu0 %v8802, 127
      %v8824 = vpop.permute.xlu0 %8823
      %8825 = vrot.lane.b32.xlu0 %v8803, 127
      %v8826 = vpop.permute.xlu0 %8825
      %8827 = vrot.lane.b32.xlu0 %v8804, 127
      %v8828 = vpop.permute.xlu0 %8827
      %v8829 = vsel %vm1026, %v8814, %v8816
      %v8830 = vsel %vm1026, %v8818, %v8820
      %v8831 = vsel %vm1026, %v8822, %v8824
      %v8832 = vsel %vm1026, %v8826, %v8828
      %v8837 = vmax.f32 %v8789, %v8829
      %v8838 = vmax.f32 %v8790, %v8830
      %v8839 = vmax.f32 %v8791, %v8831
      %v8840 = vmax.f32 %v8792, %v8832
      %v8845 = vmax.f32 %v8797, %v8829
      %v8846 = vmax.f32 %v8798, %v8816
      %v8847 = vmax.f32 %v8799, %v8830
      %v8848 = vmax.f32 %v8800, %v8820
      %v8849 = vmax.f32 %v8801, %v8831
      %v8850 = vmax.f32 %v8802, %v8824
      %v8851 = vmax.f32 %v8803, %v8832
      %v8852 = vmax.f32 %v8804, %v8828
      %8861 = vrot.lane.b32.xlu0 %v8845, 118
      %v8862 = vpop.permute.xlu0 %8861
      %8863 = vrot.lane.b32.xlu0 %v8846, 118
      %v8864 = vpop.permute.xlu0 %8863
      %8865 = vrot.lane.b32.xlu0 %v8847, 118
      %v8866 = vpop.permute.xlu0 %8865
      %8867 = vrot.lane.b32.xlu0 %v8848, 118
      %v8868 = vpop.permute.xlu0 %8867
      %8869 = vrot.lane.b32.xlu0 %v8849, 118
      %v8870 = vpop.permute.xlu0 %8869
      %8871 = vrot.lane.b32.xlu0 %v8850, 118
      %v8872 = vpop.permute.xlu0 %8871
      %8873 = vrot.lane.b32.xlu0 %v8851, 118
      %v8874 = vpop.permute.xlu0 %8873
      %8875 = vrot.lane.b32.xlu0 %v8852, 118
      %v8876 = vpop.permute.xlu0 %8875
      %v8877 = vsel %vm7916, %v8862, %v8864
      %v8878 = vsel %vm7916, %v8866, %v8868
      %v8879 = vsel %vm7916, %v8870, %v8872
      %v8880 = vsel %vm7916, %v8874, %v8876
      %v8885 = vmax.f32 %v8837, %v8877
      %v8886 = vmax.f32 %v8838, %v8878
      %v8887 = vmax.f32 %v8839, %v8879
      %v8888 = vmax.f32 %v8840, %v8880
      %v8889 = vpack.c.bf16 %v8886, %v8885
      %v8890 = vpack.c.bf16 %v8888, %v8887
      %v8891 = vld [vmem:[%s18] sm:$0xf]
      %v8892 = vld [vmem:[%s18 + $0x4] sm:$0xf]
      %v8893 = vld [vmem:[%s18 + $0x8] sm:$0xf]
      %v8894 = vld [vmem:[%s18 + $0xc] sm:$0xf]
      %v8895 = vld [vmem:[%s18 + $0x10] sm:$0xf]
      %v8896 = vld [vmem:[%s18 + $0x14] sm:$0xf]
      %v8897 = vld [vmem:[%s18 + $0x18] sm:$0xf]
      %v8898 = vld [vmem:[%s18 + $0x1c] sm:$0xf]
      %v8899 = vld [vmem:[%s18 + $0x20] sm:$0xf]
      %v8900 = vld [vmem:[%s18 + $0x24] sm:$0xf]
      %v8901 = vld [vmem:[%s18 + $0x28] sm:$0xf]
      %v8902 = vld [vmem:[%s18 + $0x2c] sm:$0xf]
      %v8903 = vld [vmem:[%s18 + $0x30] sm:$0xf]
      %v8904 = vld [vmem:[%s18 + $0x34] sm:$0xf]
      %v8905 = vld [vmem:[%s18 + $0x38] sm:$0xf]
      %v8906 = vld [vmem:[%s18 + $0x3c] sm:$0xf]
      %v8923 = vunpack.c.l.b16 %v8891
      %v8924 = vunpack.c.l.b16 %v8892
      %v8925 = vunpack.c.l.b16 %v8893
      %v8926 = vunpack.c.l.b16 %v8894
      %v8927 = vunpack.c.l.b16 %v8895
      %v8928 = vunpack.c.l.b16 %v8896
      %v8929 = vunpack.c.l.b16 %v8897
      %v8930 = vunpack.c.l.b16 %v8898
      %v8931 = vunpack.c.l.b16 %v8899
      %v8932 = vunpack.c.l.b16 %v8900
      %v8933 = vunpack.c.l.b16 %v8901
      %v8934 = vunpack.c.l.b16 %v8902
      %v8935 = vunpack.c.l.b16 %v8903
      %v8936 = vunpack.c.l.b16 %v8904
      %v8937 = vunpack.c.l.b16 %v8905
      %v8938 = vunpack.c.l.b16 %v8906
      %v8939 = vpack.c.b16 %v8924, %v8923
      %v8940 = vpack.c.b16 %v8926, %v8925
      %v8941 = vpack.c.b16 %v8928, %v8927
      %v8942 = vpack.c.b16 %v8930, %v8929
      %v8943 = vpack.c.b16 %v8932, %v8931
      %v8944 = vpack.c.b16 %v8934, %v8933
      %v8945 = vpack.c.b16 %v8936, %v8935
      %v8946 = vpack.c.b16 %v8938, %v8937
      %8955 = vmatprep.subr.bf16.mxu0 0
      %8956 = vmatpush1.bf16.msra.mxu0 %v8939
      %8957 = vmatprep.subr.bf16.mxu0 0
      %8958 = vmatpush1.bf16.msra.mxu0 %v8940
      %8959 = vmatprep.subr.bf16.mxu0 0
      %8960 = vmatpush1.bf16.msra.mxu0 %v8941
      %8961 = vmatprep.subr.bf16.mxu0 0
      %8962 = vmatpush1.bf16.msra.mxu0 %v8942
      %8963 = vmatprep.subr.bf16.mxu0 0
      %8964 = vmatpush1.bf16.msra.mxu0 %v8943
      %8965 = vmatprep.subr.bf16.mxu0 0
      %8966 = vmatpush1.bf16.msra.mxu0 %v8944
      %8967 = vmatprep.subr.bf16.mxu0 0
      %8968 = vmatpush1.bf16.msra.mxu0 %v8945
      %8969 = vmatprep.subr.bf16.mxu0 0
      %8970 = vmatpush1.bf16.msra.mxu0 %v8946
      %8971 = vmatprep.subr.bf16.mxu0 0
      %8972 = vmatpush1.bf16.msra.mxu0 0
      %8973 = vmatprep.subr.bf16.mxu0 0
      %8974 = vmatpush1.bf16.msra.mxu0 0
      %8975 = vmatprep.subr.bf16.mxu0 0
      %8976 = vmatpush1.bf16.msra.mxu0 0
      %8977 = vmatprep.subr.bf16.mxu0 0
      %8978 = vmatpush1.bf16.msra.mxu0 0
      %8979 = vmatprep.subr.bf16.mxu0 0
      %8980 = vmatpush1.bf16.msra.mxu0 0
      %8981 = vmatprep.subr.bf16.mxu0 0
      %8982 = vmatpush1.bf16.msra.mxu0 0
      %8983 = vmatprep.subr.bf16.mxu0 0
      %8984 = vmatpush1.bf16.msra.mxu0 0
      %8985 = vmatprep.subr.bf16.mxu0 0
      %8986 = vmatpush1.bf16.msra.mxu0 0
      %8987 = vmatprep.mubr.bf16.mxu0 0
      %8988 = vmatmul.mubr.bf16.gmra.mrb[0].mxu0 %v8889
      %v8989 = vpop.f32.mrb[0].mxu0
      %v8990 = vadd.f32 0.0, %v8989
      %v8991 = vpop.f32.mrb[0].mxu0
      %v8992 = vpop.f32.mrb[0].mxu0
      %v8993 = vadd.f32 0.0, %v8992
      %v8994 = vpop.f32.mrb[0].mxu0
      %8995 = vmatprep.mubr.bf16.mxu0 0
      %8996 = vmatmul.mubr.bf16.gmra.mrb[0].mxu0 %v8890
      %v8997 = vpop.f32.mrb[0].mxu0
      %v8998 = vadd.f32 0.0, %v8997
      %v8999 = vpop.f32.mrb[0].mxu0
      %v9000 = vpop.f32.mrb[0].mxu0
      %v9001 = vadd.f32 0.0, %v9000
      %v9002 = vpop.f32.mrb[0].mxu0
      %9003 = vdwg.mxu0
      %9004 = vst.msk [vmem:[%s602] sm:$0xff] %vm5675, %v8990
      %9005 = vst.msk [vmem:[%s602 + $0x8] sm:$0xff] %vm5675, %v8993
      %9006 = vst.msk [vmem:[%s602 + $0x10] sm:$0xff] %vm5675, %v8998
      %9007 = vst.msk [vmem:[%s602 + $0x18] sm:$0xff] %vm5675, %v9001
      %p9008 = scmp.lt.s32.totalorder %s30, 1
      %s9009 = scalar_select %p9008, %s30, 1
      %s9010 = smul.addr %s9009, 4
      %s9011 = smul.addr %s9010, 8
      %s9012 = scalar_lea.vmem %s19, %s9011
      // Predicated region
      $region97: #{small_vgg_forward.2} parent=95 // pred_check
        %p9013 = pneg %p452
      $region98: #{small_vgg_forward.2} parent=95 // pred_check_branch
        %9015 = sbr.rel (%p9013) target = $region100
      $region99: #{small_vgg_forward.2} parent=95 // pred_region
        _
      $region100: #{small_vgg_forward.2} parent=95 // pred_fallthru
        _
    $region96: #{small_vgg_forward.2} parent=5 // pred_fallthru
      _
    %p9016 = scmp.le.s32.totalorder 2, %s25
    // Predicated region
    $region101: #{small_vgg_forward.2} parent=5 // pred_check
      %p9017 = pneg %p9016
    $region102: #{small_vgg_forward.2} parent=5 // pred_check_branch
      %9019 = sbr.rel (%p9017) target = $region104
    $region103: #{small_vgg_forward.2} parent=5 // pred_region
      %s9020 = ssub.s32 %s25, 2
      // Predicated region
      $region105: #{small_vgg_forward.2} parent=103 // pred_check
        %p9021 = pneg %p458
      $region106: #{small_vgg_forward.2} parent=103 // pred_check_branch
        %9023 = sbr.rel (%p9021) target = $region108
      $region107: #{small_vgg_forward.2} parent=103 // pred_region
        %p9024 = scmp.lt.s32.totalorder %s31, 1
        %s9025 = scalar_select %p9024, %s31, 1
        %s9026 = smul.addr %s9025, 4
        %s9027 = smul.addr %s9026, 8
        %s9028 = scalar_lea.vmem %s19, %s9027
      $region108: #{small_vgg_forward.2} parent=103 // pred_fallthru
        _
    $region104: #{small_vgg_forward.2} parent=5 // pred_fallthru
      _
  $region6: #{small_vgg_forward.2} parent=0 // loop_footer
    %s29 = sadd.s32 1, %s25
  $region7: #{small_vgg_forward.2} parent=0 // loop_footer_branch
    %24 = sbr.rel target = $region3
  $region8: #{small_vgg_forward.2} parent=0 // loop_exit
    _

</llo_original>
